<compile_context>
chip_gen: v7x
topology: tpu7x:2x2x1
jax: 0.10.0
libtpu: 0.0.40
codegen_flags: <defaults>
</compile_context>

<pallas_src>
import functools

import jax
import jax.numpy as jnp
from jax import lax
from jax.experimental import pallas as pl
from jax.experimental.pallas import tpu as pltpu


_XOFF = 8  # sublane-aligned column offset of the conv interior inside the halo scratch


# ------------------------------------------------------------------ kernels ---

def _conv3x3_from_pad(pad_ref, w_ref, H, W):
    """9-tap 3x3 'SAME' conv reading a pre-padded activation held in VMEM scratch.

    pad_ref : (H + 2, W + 2*_XOFF, C) f32; interior at [1:H+1, _XOFF:_XOFF+W, :],
              zeros everywhere the halo ring is read.
    w_ref   : (9, Cin, Cout)  (BN scale already folded in)
    returns : (H * W, Cout) f32 accumulator.
    """
    cout = w_ref.shape[-1]
    acc = jnp.zeros((H * W, cout), jnp.float32)
    for dy in range(3):
        for dx in range(3):
            tap = pad_ref[dy:dy + H, _XOFF - 1 + dx:_XOFF - 1 + dx + W, :]
            acc += jnp.dot(tap.reshape(H * W, tap.shape[-1]), w_ref[dy * 3 + dx],
                           preferred_element_type=jnp.float32)
    return acc


def _upblock_kernel(x_ref, w1_ref, b1_ref, w2_ref, b2_ref, o_ref, pad_ref, *, H, W):
    """Fused non-upsample UPBlock: relu(bn2(conv2(relu(bn1(conv1(x))))) + x)."""
    # Zero the halo scratch every step (cheap; megacore-safe, unlike zeroing only
    # when program_id(0) == 0, which never runs on the second TensorCore).
    pad_ref[...] = jnp.zeros_like(pad_ref)
    x = x_ref[0].astype(jnp.float32)                                     # (H, W, C)

    # conv1 + BN1 (scale folded into w1) + ReLU — ReLU applied once, not per tap.
    pad_ref[1:H + 1, _XOFF:_XOFF + W, :] = x
    h = jnp.maximum(_conv3x3_from_pad(pad_ref, w1_ref, H, W) + b1_ref[...], 0.0)

    # conv2 + BN2 + residual + ReLU; the intermediate `h` never leaves VMEM.
    pad_ref[1:H + 1, _XOFF:_XOFF + W, :] = h.reshape(H, W, h.shape[-1])
    out = _conv3x3_from_pad(pad_ref, w2_ref, H, W) + b2_ref[...]
    out = jnp.maximum(out + x.reshape(H * W, x.shape[-1]), 0.0)
    o_ref[0] = out.reshape(H, W, o_ref.shape[-1]).astype(o_ref.dtype)


def _upblock_upsample_kernel(x_ref, u_ref, wup_ref, bup_ref, w2_ref, b2_ref,
                             o_ref, pad_ref, *, Hin, Win, Hout, Wout):
    """Fused upsample UPBlock:
       identity = bn_up(conv1x1(bilinear_x2(x)))
       out      = relu(bn2(conv2(relu(identity))) + identity)
    """
    Cin = x_ref.shape[-1]
    Cout = wup_ref.shape[-1]
    pad_ref[...] = jnp.zeros_like(pad_ref)

    x2 = x_ref[0].astype(jnp.float32).reshape(Hin * Win, Cin)
    # Bilinear x2 upsample (align_corners=True) as a dense interpolation matrix,
    # then the 1x1 conv with folded BN scale, plus BN bias.
    up = jnp.dot(u_ref[...], x2, preferred_element_type=jnp.float32)        # (Hout*Wout, Cin)
    identity = jnp.dot(up, wup_ref[...],
                       preferred_element_type=jnp.float32) + bup_ref[...]    # (Hout*Wout, Cout)

    h = jnp.maximum(identity, 0.0)
    pad_ref[1:Hout + 1, _XOFF:_XOFF + Wout, :] = h.reshape(Hout, Wout, Cout)
    out = _conv3x3_from_pad(pad_ref, w2_ref, Hout, Wout) + b2_ref[...]
    out = jnp.maximum(out + identity, 0.0)
    o_ref[0] = out.reshape(Hout, Wout, Cout).astype(o_ref.dtype)


# ------------------------------------------------------------------ helpers ---

def bilinear_matrix(n_in, n_out):
    """1-D bilinear interpolation matrix, align_corners=True (PyTorch Upsample)."""
    if n_in == 1:
        return jnp.ones((n_out, 1), jnp.float32)
    src = jnp.arange(n_out, dtype=jnp.float32) * (n_in - 1) / (n_out - 1)
    i0 = jnp.clip(jnp.floor(src).astype(jnp.int32), 0, n_in - 1)
    i1 = jnp.clip(i0 + 1, 0, n_in - 1)
    frac = src - i0.astype(jnp.float32)
    rows = jnp.arange(n_out)
    A = jnp.zeros((n_out, n_in), jnp.float32)
    A = A.at[rows, i0].add(1.0 - frac)
    A = A.at[rows, i1].add(frac)
    return A


def fold_bn(gamma, beta, mean, var, eps=1e-5):
    scale = gamma / jnp.sqrt(var + eps)
    return scale, beta - mean * scale


def bn_init(key, c):
    k1, k2, k3, k4 = jax.random.split(key, 4)
    gamma = 1.0 + 0.1 * jax.random.normal(k1, (c,), jnp.float32)
    beta = 0.1 * jax.random.normal(k2, (c,), jnp.float32)
    mean = 0.1 * jax.random.normal(k3, (c,), jnp.float32)
    var = 1.0 + 0.1 * jax.random.uniform(k4, (c,), jnp.float32)
    return gamma, beta, mean, var


def init_upblock_params(key, ich, och, *, upsample):
    ks = jax.random.split(key, 6)
    p = {}
    if upsample:
        p["w_up"] = 0.1 * jax.random.normal(ks[0], (ich, och), jnp.float32)   # 1x1 conv
        p["bn_up"] = bn_init(ks[1], och)
    else:
        p["w1"] = 0.1 * jax.random.normal(ks[2], (9, ich, och), jnp.float32)  # 3x3 conv
        p["bn1"] = bn_init(ks[3], och)
    p["w2"] = 0.1 * jax.random.normal(ks[4], (9, och, och), jnp.float32)      # 3x3 conv
    p["bn2"] = bn_init(ks[5], och)
    return p


# ------------------------------------------------------------------ forward ---

def upblock_forward(x, params, *, upsample):
    """UPBlock.forward, NHWC; one fused pallas_call (grid over the batch)."""
    if upsample:
        N, Hin, Win, Cin = x.shape
        Hout, Wout = 2 * Hin, 2 * Win
        Cout = params["w_up"].shape[-1]

        Ah = bilinear_matrix(Hin, Hout)
        Aw = bilinear_matrix(Win, Wout)
        U = jnp.kron(Ah, Aw)                       # (Hout*Wout, Hin*Win) — tiny at test sizes

        s_up, b_up = fold_bn(*params["bn_up"])
        s2, b2 = fold_bn(*params["bn2"])
        wup_s = params["w_up"] * s_up[None, :]     # fold BN scale into 1x1 conv weights
        w2_s = params["w2"] * s2[None, None, :]    # fold BN scale into 3x3 conv weights

        kern = functools.partial(_upblock_upsample_kernel,
                                 Hin=Hin, Win=Win, Hout=Hout, Wout=Wout)
        return pl.pallas_call(
            kern,
            out_shape=jax.ShapeDtypeStruct((N, Hout, Wout, Cout), x.dtype),
            grid=(N,),
            in_specs=[
                pl.BlockSpec((1, Hin, Win, Cin), lambda n: (n, 0, 0, 0)),
                pl.BlockSpec((Hout * Wout, Hin * Win), lambda n: (0, 0)),
                pl.BlockSpec((Cin, Cout), lambda n: (0, 0)),
                pl.BlockSpec((1, Cout), lambda n: (0, 0)),
                pl.BlockSpec((9, Cout, Cout), lambda n: (0, 0, 0)),
                pl.BlockSpec((1, Cout), lambda n: (0, 0)),
            ],
            out_specs=pl.BlockSpec((1, Hout, Wout, Cout), lambda n: (n, 0, 0, 0)),
            scratch_shapes=[pltpu.VMEM((Hout + 2, Wout + 2 * _XOFF, Cout), jnp.float32)],
            compiler_params=pltpu.CompilerParams(dimension_semantics=("parallel",)),
        )(x, U, wup_s, b_up.reshape(1, Cout), w2_s, b2.reshape(1, Cout))

    # ---- non-upsample path ----
    N, H, W, Cin = x.shape
    Cout = params["w2"].shape[-1]
    assert Cin == Cout, "non-upsample UPBlock residual requires ich == och"
    s1, b1 = fold_bn(*params["bn1"])
    s2, b2 = fold_bn(*params["bn2"])
    w1_s = params["w1"] * s1[None, None, :]
    w2_s = params["w2"] * s2[None, None, :]

    kern = functools.partial(_upblock_kernel, H=H, W=W)
    return pl.pallas_call(
        kern,
        out_shape=jax.ShapeDtypeStruct((N, H, W, Cout), x.dtype),
        grid=(N,),
        in_specs=[
            pl.BlockSpec((1, H, W, Cin), lambda n: (n, 0, 0, 0)),
            pl.BlockSpec((9, Cin, Cout), lambda n: (0, 0, 0)),
            pl.BlockSpec((1, Cout), lambda n: (0, 0)),
            pl.BlockSpec((9, Cout, Cout), lambda n: (0, 0, 0)),
            pl.BlockSpec((1, Cout), lambda n: (0, 0)),
        ],
        out_specs=pl.BlockSpec((1, H, W, Cout), lambda n: (n, 0, 0, 0)),
        scratch_shapes=[pltpu.VMEM((H + 2, W + 2 * _XOFF, Cout), jnp.float32)],
        compiler_params=pltpu.CompilerParams(dimension_semantics=("parallel",)),
    )(x, w1_s, b1.reshape(1, Cout), w2_s, b2.reshape(1, Cout))


# -------------------------------------------------------- pure-JAX reference ---

def _ref_conv3x3(x, w_flat):
    w = w_flat.reshape(3, 3, w_flat.shape[1], w_flat.shape[2])
    return lax.conv_general_dilated(x, w, (1, 1), "SAME",
                                    dimension_numbers=("NHWC", "HWIO", "NHWC"))


def ref_forward(x, params, *, upsample):
    if upsample:
        N, Hin, Win, Cin = x.shape
        Ah = bilinear_matrix(Hin, 2 * Hin)
        Aw = bilinear_matrix(Win, 2 * Win)
        up = jnp.einsum("ph,qw,nhwc->npqc", Ah, Aw, x)
        s, b = fold_bn(*params["bn_up"])
        identity = jnp.einsum("npqc,cd->npqd", up, params["w_up"]) * s + b
        out = jnp.maximum(identity, 0.0)
    else:
        identity = x
        s1, b1 = fold_bn(*params["bn1"])
        out = jnp.maximum(_ref_conv3x3(x, params["w1"]) * s1 + b1, 0.0)
    s2, b2 = fold_bn(*params["bn2"])
    out = _ref_conv3x3(out, params["w2"]) * s2 + b2
    return jnp.maximum(out + identity, 0.0)


# --------------------------------------------------------------------- main ---

if __name__ == "__main__":
    key = jax.random.PRNGKey(0)
    kx1, kx2, kp1, kp2 = jax.random.split(key, 4)

    # Case 1: upsample=False (residual add requires ich == och)
    ich = och = 8
    x1 = jax.random.normal(kx1, (2, 16, 16, ich), jnp.float32)
    p1 = init_upblock_params(kp1, ich, och, upsample=False)
    y1 = jax.block_until_ready(upblock_forward(x1, p1, upsample=False))
    r1 = ref_forward(x1, p1, upsample=False)
    assert y1.shape == (2, 16, 16, och)
    assert jnp.allclose(y1, r1, rtol=1e-4, atol=1e-4), float(jnp.max(jnp.abs(y1 - r1)))

    # Case 2: upsample=True (ich -> och, spatial doubles)
    ich2, och2 = 8, 16
    x2 = jax.random.normal(kx2, (2, 8, 8, ich2), jnp.float32)
    p2 = init_upblock_params(kp2, ich2, och2, upsample=True)
    y2 = jax.block_until_ready(upblock_forward(x2, p2, upsample=True))
    r2 = ref_forward(x2, p2, upsample=True)
    assert y2.shape == (2, 16, 16, och2)
    assert jnp.allclose(y2, r2, rtol=1e-4, atol=1e-4), float(jnp.max(jnp.abs(y2 - r2)))

    print("KERNEL_OK")
</pallas_src>

<mosaic_0001>
module attributes {stable_mosaic.version = 11 : i64} {
  func.func @_upblock_kernel(%arg0: i32, %arg1: memref<1x16x16x8xf32, #tpu.memory_space<vmem>>, %arg2: memref<9x8x8xf32, #tpu.memory_space<vmem>>, %arg3: memref<1x8xf32, #tpu.memory_space<vmem>>, %arg4: memref<9x8x8xf32, #tpu.memory_space<vmem>>, %arg5: memref<1x8xf32, #tpu.memory_space<vmem>>, %arg6: memref<1x16x16x8xf32, #tpu.memory_space<vmem>>, %arg7: memref<18x32x8xf32, #tpu.memory_space<vmem>>) attributes {dimension_semantics = [#tpu.dimension_semantics<parallel>], iteration_bounds = array<i64: 2>, scalar_prefetch = 0 : i64, scratch_operands = 1 : i64, tpu.core_type = #tpu.core_type<tc>, window_params = [{transform_indices = @transform_0, window_bounds = array<i64: 1, 16, 16, 8>}, {pipeline_mode = #tpu.pipeline_mode<synchronous>, transform_indices = @transform_1, window_bounds = array<i64: 9, 8, 8>}, {pipeline_mode = #tpu.pipeline_mode<synchronous>, transform_indices = @transform_2, window_bounds = array<i64: 1, 8>}, {pipeline_mode = #tpu.pipeline_mode<synchronous>, transform_indices = @transform_3, window_bounds = array<i64: 9, 8, 8>}, {pipeline_mode = #tpu.pipeline_mode<synchronous>, transform_indices = @transform_4, window_bounds = array<i64: 1, 8>}, {transform_indices = @transform_5, window_bounds = array<i64: 1, 16, 16, 8>}]} {
    %cst = arith.constant 0.000000e+00 : f32
    %0 = vector.broadcast %cst : f32 to vector<18x32x8xf32>
    %c0 = arith.constant 0 : index
    %c0_0 = arith.constant 0 : index
    %c0_1 = arith.constant 0 : index
    %1 = vector.load %arg7[%c0, %c0_0, %c0_1] : memref<18x32x8xf32, #tpu.memory_space<vmem>>, vector<18x32x8xf32>
    tpu.vector_store %arg7[%c0, %c0_0, %c0_1], %0 {strides = array<i32>} : memref<18x32x8xf32, #tpu.memory_space<vmem>>, vector<18x32x8xf32>,
    %c0_2 = arith.constant 0 : index
    %c0_3 = arith.constant 0 : index
    %c0_4 = arith.constant 0 : index
    %c0_5 = arith.constant 0 : index
    %2 = vector.load %arg1[%c0_2, %c0_3, %c0_4, %c0_5] : memref<1x16x16x8xf32, #tpu.memory_space<vmem>>, vector<1x16x16x8xf32>
    %3 = vector.shape_cast %2 : vector<1x16x16x8xf32> to vector<16x16x8xf32>
    %c1 = arith.constant 1 : index
    %c8 = arith.constant 8 : index
    %c0_6 = arith.constant 0 : index
    %4 = vector.load %arg7[%c1, %c8, %c0_6] : memref<18x32x8xf32, #tpu.memory_space<vmem>>, vector<16x16x8xf32>
    tpu.vector_store %arg7[%c1, %c8, %c0_6], %3 {strides = array<i32>} : memref<18x32x8xf32, #tpu.memory_space<vmem>>, vector<16x16x8xf32>,
    %cst_7 = arith.constant 0.000000e+00 : f32
    %5 = vector.broadcast %cst_7 : f32 to vector<256x8xf32>
    %c0_8 = arith.constant 0 : index
    %c7 = arith.constant 7 : index
    %c0_9 = arith.constant 0 : index
    %6 = vector.load %arg7[%c0_8, %c7, %c0_9] : memref<18x32x8xf32, #tpu.memory_space<vmem>>, vector<16x16x8xf32>
    %7 = vector.shape_cast %6 : vector<16x16x8xf32> to vector<256x8xf32>
    %c0_10 = arith.constant 0 : index
    %c0_11 = arith.constant 0 : index
    %c0_12 = arith.constant 0 : index
    %8 = vector.load %arg2[%c0_10, %c0_11, %c0_12] : memref<9x8x8xf32, #tpu.memory_space<vmem>>, vector<1x8x8xf32>
    %9 = vector.shape_cast %8 : vector<1x8x8xf32> to vector<8x8xf32>
    %cst_13 = arith.constant dense<0.000000e+00> : vector<256x8xf32>
    %10 = tpu.matmul %7, %9, %cst_13 {dimension_numbers = #tpu.dot_dimension_numbers<[1], [0], [0], [1], [0, 0, 1, 1], [], []>} : vector<256x8xf32>, vector<8x8xf32>, vector<256x8xf32> -> vector<256x8xf32>
    %11 = arith.addf %5, %10 : vector<256x8xf32>
    %c0_14 = arith.constant 0 : index
    %c8_15 = arith.constant 8 : index
    %c0_16 = arith.constant 0 : index
    %12 = vector.load %arg7[%c0_14, %c8_15, %c0_16] : memref<18x32x8xf32, #tpu.memory_space<vmem>>, vector<16x16x8xf32>
    %13 = vector.shape_cast %12 : vector<16x16x8xf32> to vector<256x8xf32>
    %c1_17 = arith.constant 1 : index
    %c0_18 = arith.constant 0 : index
    %c0_19 = arith.constant 0 : index
    %14 = vector.load %arg2[%c1_17, %c0_18, %c0_19] : memref<9x8x8xf32, #tpu.memory_space<vmem>>, vector<1x8x8xf32>
    %15 = vector.shape_cast %14 : vector<1x8x8xf32> to vector<8x8xf32>
    %cst_20 = arith.constant dense<0.000000e+00> : vector<256x8xf32>
    %16 = tpu.matmul %13, %15, %cst_20 {dimension_numbers = #tpu.dot_dimension_numbers<[1], [0], [0], [1], [0, 0, 1, 1], [], []>} : vector<256x8xf32>, vector<8x8xf32>, vector<256x8xf32> -> vector<256x8xf32>
    %17 = arith.addf %11, %16 : vector<256x8xf32>
    %c0_21 = arith.constant 0 : index
    %c9 = arith.constant 9 : index
    %c0_22 = arith.constant 0 : index
    %18 = vector.load %arg7[%c0_21, %c9, %c0_22] : memref<18x32x8xf32, #tpu.memory_space<vmem>>, vector<16x16x8xf32>
    %19 = vector.shape_cast %18 : vector<16x16x8xf32> to vector<256x8xf32>
    %c2 = arith.constant 2 : index
    %c0_23 = arith.constant 0 : index
    %c0_24 = arith.constant 0 : index
    %20 = vector.load %arg2[%c2, %c0_23, %c0_24] : memref<9x8x8xf32, #tpu.memory_space<vmem>>, vector<1x8x8xf32>
    %21 = vector.shape_cast %20 : vector<1x8x8xf32> to vector<8x8xf32>
    %cst_25 = arith.constant dense<0.000000e+00> : vector<256x8xf32>
    %22 = tpu.matmul %19, %21, %cst_25 {dimension_numbers = #tpu.dot_dimension_numbers<[1], [0], [0], [1], [0, 0, 1, 1], [], []>} : vector<256x8xf32>, vector<8x8xf32>, vector<256x8xf32> -> vector<256x8xf32>
    %23 = arith.addf %17, %22 : vector<256x8xf32>
    %c1_26 = arith.constant 1 : index
    %c7_27 = arith.constant 7 : index
    %c0_28 = arith.constant 0 : index
    %24 = vector.load %arg7[%c1_26, %c7_27, %c0_28] : memref<18x32x8xf32, #tpu.memory_space<vmem>>, vector<16x16x8xf32>
    %25 = vector.shape_cast %24 : vector<16x16x8xf32> to vector<256x8xf32>
    %c3 = arith.constant 3 : index
    %c0_29 = arith.constant 0 : index
    %c0_30 = arith.constant 0 : index
    %26 = vector.load %arg2[%c3, %c0_29, %c0_30] : memref<9x8x8xf32, #tpu.memory_space<vmem>>, vector<1x8x8xf32>
    %27 = vector.shape_cast %26 : vector<1x8x8xf32> to vector<8x8xf32>
    %cst_31 = arith.constant dense<0.000000e+00> : vector<256x8xf32>
    %28 = tpu.matmul %25, %27, %cst_31 {dimension_numbers = #tpu.dot_dimension_numbers<[1], [0], [0], [1], [0, 0, 1, 1], [], []>} : vector<256x8xf32>, vector<8x8xf32>, vector<256x8xf32> -> vector<256x8xf32>
    %29 = arith.addf %23, %28 : vector<256x8xf32>
    %c1_32 = arith.constant 1 : index
    %c8_33 = arith.constant 8 : index
    %c0_34 = arith.constant 0 : index
    %30 = vector.load %arg7[%c1_32, %c8_33, %c0_34] : memref<18x32x8xf32, #tpu.memory_space<vmem>>, vector<16x16x8xf32>
    %31 = vector.shape_cast %30 : vector<16x16x8xf32> to vector<256x8xf32>
    %c4 = arith.constant 4 : index
    %c0_35 = arith.constant 0 : index
    %c0_36 = arith.constant 0 : index
    %32 = vector.load %arg2[%c4, %c0_35, %c0_36] : memref<9x8x8xf32, #tpu.memory_space<vmem>>, vector<1x8x8xf32>
    %33 = vector.shape_cast %32 : vector<1x8x8xf32> to vector<8x8xf32>
    %cst_37 = arith.constant dense<0.000000e+00> : vector<256x8xf32>
    %34 = tpu.matmul %31, %33, %cst_37 {dimension_numbers = #tpu.dot_dimension_numbers<[1], [0], [0], [1], [0, 0, 1, 1], [], []>} : vector<256x8xf32>, vector<8x8xf32>, vector<256x8xf32> -> vector<256x8xf32>
    %35 = arith.addf %29, %34 : vector<256x8xf32>
    %c1_38 = arith.constant 1 : index
    %c9_39 = arith.constant 9 : index
    %c0_40 = arith.constant 0 : index
    %36 = vector.load %arg7[%c1_38, %c9_39, %c0_40] : memref<18x32x8xf32, #tpu.memory_space<vmem>>, vector<16x16x8xf32>
    %37 = vector.shape_cast %36 : vector<16x16x8xf32> to vector<256x8xf32>
    %c5 = arith.constant 5 : index
    %c0_41 = arith.constant 0 : index
    %c0_42 = arith.constant 0 : index
    %38 = vector.load %arg2[%c5, %c0_41, %c0_42] : memref<9x8x8xf32, #tpu.memory_space<vmem>>, vector<1x8x8xf32>
    %39 = vector.shape_cast %38 : vector<1x8x8xf32> to vector<8x8xf32>
    %cst_43 = arith.constant dense<0.000000e+00> : vector<256x8xf32>
    %40 = tpu.matmul %37, %39, %cst_43 {dimension_numbers = #tpu.dot_dimension_numbers<[1], [0], [0], [1], [0, 0, 1, 1], [], []>} : vector<256x8xf32>, vector<8x8xf32>, vector<256x8xf32> -> vector<256x8xf32>
    %41 = arith.addf %35, %40 : vector<256x8xf32>
    %c2_44 = arith.constant 2 : index
    %c7_45 = arith.constant 7 : index
    %c0_46 = arith.constant 0 : index
    %42 = vector.load %arg7[%c2_44, %c7_45, %c0_46] : memref<18x32x8xf32, #tpu.memory_space<vmem>>, vector<16x16x8xf32>
    %43 = vector.shape_cast %42 : vector<16x16x8xf32> to vector<256x8xf32>
    %c6 = arith.constant 6 : index
    %c0_47 = arith.constant 0 : index
    %c0_48 = arith.constant 0 : index
    %44 = vector.load %arg2[%c6, %c0_47, %c0_48] : memref<9x8x8xf32, #tpu.memory_space<vmem>>, vector<1x8x8xf32>
    %45 = vector.shape_cast %44 : vector<1x8x8xf32> to vector<8x8xf32>
    %cst_49 = arith.constant dense<0.000000e+00> : vector<256x8xf32>
    %46 = tpu.matmul %43, %45, %cst_49 {dimension_numbers = #tpu.dot_dimension_numbers<[1], [0], [0], [1], [0, 0, 1, 1], [], []>} : vector<256x8xf32>, vector<8x8xf32>, vector<256x8xf32> -> vector<256x8xf32>
    %47 = arith.addf %41, %46 : vector<256x8xf32>
    %c2_50 = arith.constant 2 : index
    %c8_51 = arith.constant 8 : index
    %c0_52 = arith.constant 0 : index
    %48 = vector.load %arg7[%c2_50, %c8_51, %c0_52] : memref<18x32x8xf32, #tpu.memory_space<vmem>>, vector<16x16x8xf32>
    %49 = vector.shape_cast %48 : vector<16x16x8xf32> to vector<256x8xf32>
    %c7_53 = arith.constant 7 : index
    %c0_54 = arith.constant 0 : index
    %c0_55 = arith.constant 0 : index
    %50 = vector.load %arg2[%c7_53, %c0_54, %c0_55] : memref<9x8x8xf32, #tpu.memory_space<vmem>>, vector<1x8x8xf32>
    %51 = vector.shape_cast %50 : vector<1x8x8xf32> to vector<8x8xf32>
    %cst_56 = arith.constant dense<0.000000e+00> : vector<256x8xf32>
    %52 = tpu.matmul %49, %51, %cst_56 {dimension_numbers = #tpu.dot_dimension_numbers<[1], [0], [0], [1], [0, 0, 1, 1], [], []>} : vector<256x8xf32>, vector<8x8xf32>, vector<256x8xf32> -> vector<256x8xf32>
    %53 = arith.addf %47, %52 : vector<256x8xf32>
    %c2_57 = arith.constant 2 : index
    %c9_58 = arith.constant 9 : index
    %c0_59 = arith.constant 0 : index
    %54 = vector.load %arg7[%c2_57, %c9_58, %c0_59] : memref<18x32x8xf32, #tpu.memory_space<vmem>>, vector<16x16x8xf32>
    %55 = vector.shape_cast %54 : vector<16x16x8xf32> to vector<256x8xf32>
    %c8_60 = arith.constant 8 : index
    %c0_61 = arith.constant 0 : index
    %c0_62 = arith.constant 0 : index
    %56 = vector.load %arg2[%c8_60, %c0_61, %c0_62] : memref<9x8x8xf32, #tpu.memory_space<vmem>>, vector<1x8x8xf32>
    %57 = vector.shape_cast %56 : vector<1x8x8xf32> to vector<8x8xf32>
    %cst_63 = arith.constant dense<0.000000e+00> : vector<256x8xf32>
    %58 = tpu.matmul %55, %57, %cst_63 {dimension_numbers = #tpu.dot_dimension_numbers<[1], [0], [0], [1], [0, 0, 1, 1], [], []>} : vector<256x8xf32>, vector<8x8xf32>, vector<256x8xf32> -> vector<256x8xf32>
    %59 = arith.addf %53, %58 : vector<256x8xf32>
    %c0_64 = arith.constant 0 : index
    %c0_65 = arith.constant 0 : index
    %60 = vector.load %arg3[%c0_64, %c0_65] : memref<1x8xf32, #tpu.memory_space<vmem>>, vector<1x8xf32>
    %61 = vector.broadcast %60 : vector<1x8xf32> to vector<256x8xf32>
    %62 = arith.addf %59, %61 : vector<256x8xf32>
    %cst_66 = arith.constant 0.000000e+00 : f32
    %63 = vector.broadcast %cst_66 : f32 to vector<256x8xf32>
    %64 = arith.maximumf %62, %63 : vector<256x8xf32>
    %65 = vector.shape_cast %64 : vector<256x8xf32> to vector<16x16x8xf32>
    %c1_67 = arith.constant 1 : index
    %c8_68 = arith.constant 8 : index
    %c0_69 = arith.constant 0 : index
    %66 = vector.load %arg7[%c1_67, %c8_68, %c0_69] : memref<18x32x8xf32, #tpu.memory_space<vmem>>, vector<16x16x8xf32>
    tpu.vector_store %arg7[%c1_67, %c8_68, %c0_69], %65 {strides = array<i32>} : memref<18x32x8xf32, #tpu.memory_space<vmem>>, vector<16x16x8xf32>,
    %cst_70 = arith.constant 0.000000e+00 : f32
    %67 = vector.broadcast %cst_70 : f32 to vector<256x8xf32>
    %c0_71 = arith.constant 0 : index
    %c7_72 = arith.constant 7 : index
    %c0_73 = arith.constant 0 : index
    %68 = vector.load %arg7[%c0_71, %c7_72, %c0_73] : memref<18x32x8xf32, #tpu.memory_space<vmem>>, vector<16x16x8xf32>
    %69 = vector.shape_cast %68 : vector<16x16x8xf32> to vector<256x8xf32>
    %c0_74 = arith.constant 0 : index
    %c0_75 = arith.constant 0 : index
    %c0_76 = arith.constant 0 : index
    %70 = vector.load %arg4[%c0_74, %c0_75, %c0_76] : memref<9x8x8xf32, #tpu.memory_space<vmem>>, vector<1x8x8xf32>
    %71 = vector.shape_cast %70 : vector<1x8x8xf32> to vector<8x8xf32>
    %cst_77 = arith.constant dense<0.000000e+00> : vector<256x8xf32>
    %72 = tpu.matmul %69, %71, %cst_77 {dimension_numbers = #tpu.dot_dimension_numbers<[1], [0], [0], [1], [0, 0, 1, 1], [], []>} : vector<256x8xf32>, vector<8x8xf32>, vector<256x8xf32> -> vector<256x8xf32>
    %73 = arith.addf %67, %72 : vector<256x8xf32>
    %c0_78 = arith.constant 0 : index
    %c8_79 = arith.constant 8 : index
    %c0_80 = arith.constant 0 : index
    %74 = vector.load %arg7[%c0_78, %c8_79, %c0_80] : memref<18x32x8xf32, #tpu.memory_space<vmem>>, vector<16x16x8xf32>
    %75 = vector.shape_cast %74 : vector<16x16x8xf32> to vector<256x8xf32>
    %c1_81 = arith.constant 1 : index
    %c0_82 = arith.constant 0 : index
    %c0_83 = arith.constant 0 : index
    %76 = vector.load %arg4[%c1_81, %c0_82, %c0_83] : memref<9x8x8xf32, #tpu.memory_space<vmem>>, vector<1x8x8xf32>
    %77 = vector.shape_cast %76 : vector<1x8x8xf32> to vector<8x8xf32>
    %cst_84 = arith.constant dense<0.000000e+00> : vector<256x8xf32>
    %78 = tpu.matmul %75, %77, %cst_84 {dimension_numbers = #tpu.dot_dimension_numbers<[1], [0], [0], [1], [0, 0, 1, 1], [], []>} : vector<256x8xf32>, vector<8x8xf32>, vector<256x8xf32> -> vector<256x8xf32>
    %79 = arith.addf %73, %78 : vector<256x8xf32>
    %c0_85 = arith.constant 0 : index
    %c9_86 = arith.constant 9 : index
    %c0_87 = arith.constant 0 : index
    %80 = vector.load %arg7[%c0_85, %c9_86, %c0_87] : memref<18x32x8xf32, #tpu.memory_space<vmem>>, vector<16x16x8xf32>
    %81 = vector.shape_cast %80 : vector<16x16x8xf32> to vector<256x8xf32>
    %c2_88 = arith.constant 2 : index
    %c0_89 = arith.constant 0 : index
    %c0_90 = arith.constant 0 : index
    %82 = vector.load %arg4[%c2_88, %c0_89, %c0_90] : memref<9x8x8xf32, #tpu.memory_space<vmem>>, vector<1x8x8xf32>
    %83 = vector.shape_cast %82 : vector<1x8x8xf32> to vector<8x8xf32>
    %cst_91 = arith.constant dense<0.000000e+00> : vector<256x8xf32>
    %84 = tpu.matmul %81, %83, %cst_91 {dimension_numbers = #tpu.dot_dimension_numbers<[1], [0], [0], [1], [0, 0, 1, 1], [], []>} : vector<256x8xf32>, vector<8x8xf32>, vector<256x8xf32> -> vector<256x8xf32>
    %85 = arith.addf %79, %84 : vector<256x8xf32>
    %c1_92 = arith.constant 1 : index
    %c7_93 = arith.constant 7 : index
    %c0_94 = arith.constant 0 : index
    %86 = vector.load %arg7[%c1_92, %c7_93, %c0_94] : memref<18x32x8xf32, #tpu.memory_space<vmem>>, vector<16x16x8xf32>
    %87 = vector.shape_cast %86 : vector<16x16x8xf32> to vector<256x8xf32>
    %c3_95 = arith.constant 3 : index
    %c0_96 = arith.constant 0 : index
    %c0_97 = arith.constant 0 : index
    %88 = vector.load %arg4[%c3_95, %c0_96, %c0_97] : memref<9x8x8xf32, #tpu.memory_space<vmem>>, vector<1x8x8xf32>
    %89 = vector.shape_cast %88 : vector<1x8x8xf32> to vector<8x8xf32>
    %cst_98 = arith.constant dense<0.000000e+00> : vector<256x8xf32>
    %90 = tpu.matmul %87, %89, %cst_98 {dimension_numbers = #tpu.dot_dimension_numbers<[1], [0], [0], [1], [0, 0, 1, 1], [], []>} : vector<256x8xf32>, vector<8x8xf32>, vector<256x8xf32> -> vector<256x8xf32>
    %91 = arith.addf %85, %90 : vector<256x8xf32>
    %c1_99 = arith.constant 1 : index
    %c8_100 = arith.constant 8 : index
    %c0_101 = arith.constant 0 : index
    %92 = vector.load %arg7[%c1_99, %c8_100, %c0_101] : memref<18x32x8xf32, #tpu.memory_space<vmem>>, vector<16x16x8xf32>
    %93 = vector.shape_cast %92 : vector<16x16x8xf32> to vector<256x8xf32>
    %c4_102 = arith.constant 4 : index
    %c0_103 = arith.constant 0 : index
    %c0_104 = arith.constant 0 : index
    %94 = vector.load %arg4[%c4_102, %c0_103, %c0_104] : memref<9x8x8xf32, #tpu.memory_space<vmem>>, vector<1x8x8xf32>
    %95 = vector.shape_cast %94 : vector<1x8x8xf32> to vector<8x8xf32>
    %cst_105 = arith.constant dense<0.000000e+00> : vector<256x8xf32>
    %96 = tpu.matmul %93, %95, %cst_105 {dimension_numbers = #tpu.dot_dimension_numbers<[1], [0], [0], [1], [0, 0, 1, 1], [], []>} : vector<256x8xf32>, vector<8x8xf32>, vector<256x8xf32> -> vector<256x8xf32>
    %97 = arith.addf %91, %96 : vector<256x8xf32>
    %c1_106 = arith.constant 1 : index
    %c9_107 = arith.constant 9 : index
    %c0_108 = arith.constant 0 : index
    %98 = vector.load %arg7[%c1_106, %c9_107, %c0_108] : memref<18x32x8xf32, #tpu.memory_space<vmem>>, vector<16x16x8xf32>
    %99 = vector.shape_cast %98 : vector<16x16x8xf32> to vector<256x8xf32>
    %c5_109 = arith.constant 5 : index
    %c0_110 = arith.constant 0 : index
    %c0_111 = arith.constant 0 : index
    %100 = vector.load %arg4[%c5_109, %c0_110, %c0_111] : memref<9x8x8xf32, #tpu.memory_space<vmem>>, vector<1x8x8xf32>
    %101 = vector.shape_cast %100 : vector<1x8x8xf32> to vector<8x8xf32>
    %cst_112 = arith.constant dense<0.000000e+00> : vector<256x8xf32>
    %102 = tpu.matmul %99, %101, %cst_112 {dimension_numbers = #tpu.dot_dimension_numbers<[1], [0], [0], [1], [0, 0, 1, 1], [], []>} : vector<256x8xf32>, vector<8x8xf32>, vector<256x8xf32> -> vector<256x8xf32>
    %103 = arith.addf %97, %102 : vector<256x8xf32>
    %c2_113 = arith.constant 2 : index
    %c7_114 = arith.constant 7 : index
    %c0_115 = arith.constant 0 : index
    %104 = vector.load %arg7[%c2_113, %c7_114, %c0_115] : memref<18x32x8xf32, #tpu.memory_space<vmem>>, vector<16x16x8xf32>
    %105 = vector.shape_cast %104 : vector<16x16x8xf32> to vector<256x8xf32>
    %c6_116 = arith.constant 6 : index
    %c0_117 = arith.constant 0 : index
    %c0_118 = arith.constant 0 : index
    %106 = vector.load %arg4[%c6_116, %c0_117, %c0_118] : memref<9x8x8xf32, #tpu.memory_space<vmem>>, vector<1x8x8xf32>
    %107 = vector.shape_cast %106 : vector<1x8x8xf32> to vector<8x8xf32>
    %cst_119 = arith.constant dense<0.000000e+00> : vector<256x8xf32>
    %108 = tpu.matmul %105, %107, %cst_119 {dimension_numbers = #tpu.dot_dimension_numbers<[1], [0], [0], [1], [0, 0, 1, 1], [], []>} : vector<256x8xf32>, vector<8x8xf32>, vector<256x8xf32> -> vector<256x8xf32>
    %109 = arith.addf %103, %108 : vector<256x8xf32>
    %c2_120 = arith.constant 2 : index
    %c8_121 = arith.constant 8 : index
    %c0_122 = arith.constant 0 : index
    %110 = vector.load %arg7[%c2_120, %c8_121, %c0_122] : memref<18x32x8xf32, #tpu.memory_space<vmem>>, vector<16x16x8xf32>
    %111 = vector.shape_cast %110 : vector<16x16x8xf32> to vector<256x8xf32>
    %c7_123 = arith.constant 7 : index
    %c0_124 = arith.constant 0 : index
    %c0_125 = arith.constant 0 : index
    %112 = vector.load %arg4[%c7_123, %c0_124, %c0_125] : memref<9x8x8xf32, #tpu.memory_space<vmem>>, vector<1x8x8xf32>
    %113 = vector.shape_cast %112 : vector<1x8x8xf32> to vector<8x8xf32>
    %cst_126 = arith.constant dense<0.000000e+00> : vector<256x8xf32>
    %114 = tpu.matmul %111, %113, %cst_126 {dimension_numbers = #tpu.dot_dimension_numbers<[1], [0], [0], [1], [0, 0, 1, 1], [], []>} : vector<256x8xf32>, vector<8x8xf32>, vector<256x8xf32> -> vector<256x8xf32>
    %115 = arith.addf %109, %114 : vector<256x8xf32>
    %c2_127 = arith.constant 2 : index
    %c9_128 = arith.constant 9 : index
    %c0_129 = arith.constant 0 : index
    %116 = vector.load %arg7[%c2_127, %c9_128, %c0_129] : memref<18x32x8xf32, #tpu.memory_space<vmem>>, vector<16x16x8xf32>
    %117 = vector.shape_cast %116 : vector<16x16x8xf32> to vector<256x8xf32>
    %c8_130 = arith.constant 8 : index
    %c0_131 = arith.constant 0 : index
    %c0_132 = arith.constant 0 : index
    %118 = vector.load %arg4[%c8_130, %c0_131, %c0_132] : memref<9x8x8xf32, #tpu.memory_space<vmem>>, vector<1x8x8xf32>
    %119 = vector.shape_cast %118 : vector<1x8x8xf32> to vector<8x8xf32>
    %cst_133 = arith.constant dense<0.000000e+00> : vector<256x8xf32>
    %120 = tpu.matmul %117, %119, %cst_133 {dimension_numbers = #tpu.dot_dimension_numbers<[1], [0], [0], [1], [0, 0, 1, 1], [], []>} : vector<256x8xf32>, vector<8x8xf32>, vector<256x8xf32> -> vector<256x8xf32>
    %121 = arith.addf %115, %120 : vector<256x8xf32>
    %c0_134 = arith.constant 0 : index
    %c0_135 = arith.constant 0 : index
    %122 = vector.load %arg5[%c0_134, %c0_135] : memref<1x8xf32, #tpu.memory_space<vmem>>, vector<1x8xf32>
    %123 = vector.broadcast %122 : vector<1x8xf32> to vector<256x8xf32>
    %124 = arith.addf %121, %123 : vector<256x8xf32>
    %125 = vector.shape_cast %3 : vector<16x16x8xf32> to vector<256x8xf32>
    %126 = arith.addf %124, %125 : vector<256x8xf32>
    %cst_136 = arith.constant 0.000000e+00 : f32
    %127 = vector.broadcast %cst_136 : f32 to vector<256x8xf32>
    %128 = arith.maximumf %126, %127 : vector<256x8xf32>
    %129 = vector.shape_cast %128 : vector<256x8xf32> to vector<16x16x8xf32>
    %c0_137 = arith.constant 0 : index
    %c0_138 = arith.constant 0 : index
    %c0_139 = arith.constant 0 : index
    %c0_140 = arith.constant 0 : index
    %130 = vector.load %arg6[%c0_137, %c0_138, %c0_139, %c0_140] : memref<1x16x16x8xf32, #tpu.memory_space<vmem>>, vector<1x16x16x8xf32>
    %131 = vector.shape_cast %130 : vector<1x16x16x8xf32> to vector<16x16x8xf32>
    %132 = vector.shape_cast %129 : vector<16x16x8xf32> to vector<1x16x16x8xf32>
    tpu.vector_store %arg6[%c0_137, %c0_138, %c0_139, %c0_140], %132 {strides = array<i32>} : memref<1x16x16x8xf32, #tpu.memory_space<vmem>>, vector<1x16x16x8xf32>,
    return
  }
  func.func @transform_0(%arg0: i32) -> (i32, i32, i32, i32) {
    %c0_i32 = arith.constant 0 : i32
    %c0_i32_0 = arith.constant 0 : i32
    %c0_i32_1 = arith.constant 0 : i32
    %c0_i32_2 = arith.constant 0 : i32
    return %arg0, %c0_i32, %c0_i32_0, %c0_i32_1 : i32, i32, i32, i32
  }
  func.func @transform_1(%arg0: i32) -> (i32, i32, i32) {
    %c0_i32 = arith.constant 0 : i32
    %c0_i32_0 = arith.constant 0 : i32
    %c0_i32_1 = arith.constant 0 : i32
    %c0_i32_2 = arith.constant 0 : i32
    return %c0_i32, %c0_i32_0, %c0_i32_1 : i32, i32, i32
  }
  func.func @transform_2(%arg0: i32) -> (i32, i32) {
    %c0_i32 = arith.constant 0 : i32
    %c0_i32_0 = arith.constant 0 : i32
    %c0_i32_1 = arith.constant 0 : i32
    return %c0_i32, %c0_i32_0 : i32, i32
  }
  func.func @transform_3(%arg0: i32) -> (i32, i32, i32) {
    %c0_i32 = arith.constant 0 : i32
    %c0_i32_0 = arith.constant 0 : i32
    %c0_i32_1 = arith.constant 0 : i32
    %c0_i32_2 = arith.constant 0 : i32
    return %c0_i32, %c0_i32_0, %c0_i32_1 : i32, i32, i32
  }
  func.func @transform_4(%arg0: i32) -> (i32, i32) {
    %c0_i32 = arith.constant 0 : i32
    %c0_i32_0 = arith.constant 0 : i32
    %c0_i32_1 = arith.constant 0 : i32
    return %c0_i32, %c0_i32_0 : i32, i32
  }
  func.func @transform_5(%arg0: i32) -> (i32, i32, i32, i32) {
    %c0_i32 = arith.constant 0 : i32
    %c0_i32_0 = arith.constant 0 : i32
    %c0_i32_1 = arith.constant 0 : i32
    %c0_i32_2 = arith.constant 0 : i32
    return %arg0, %c0_i32, %c0_i32_0, %c0_i32_1 : i32, i32, i32, i32
  }
}

</mosaic_0001>

<llo_original>
// kernel: tpu_custom_call.1
$region0: #{tpu_custom_call.1}
  #allocation0 [shape = 'u32[]', space=smem, size = 0x4, offset = 0x4, fixed_abs, tag = 'smem constant byte address 0x4 - core index']
  #allocation1 [shape = 'u32[144,128]{1,0:T(1,128)}', space=vmem, size = 0x12000, scoped, tag = 'internal scratch']
  #allocation2 [shape = 'f32[18,32,8]{2,1,0:T(8,128)}', space=vmem, size = 0x48000, scoped, tag = 'scratch operand']
  %s0 = inlined_call_operand.vmem [shape: f32[2,16,16,8], index: 0, kind: input, shape index: {}]
  %s1 = inlined_call_operand.vmem [shape: f32[9,8,8], index: 1, kind: input, shape index: {}]
  %s2 = inlined_call_operand.vmem [shape: f32[1,8], index: 2, kind: input, shape index: {}]
  %s3 = inlined_call_operand.vmem [shape: f32[9,8,8], index: 3, kind: input, shape index: {}]
  %s4 = inlined_call_operand.vmem [shape: f32[1,8], index: 4, kind: input, shape index: {}]
  %s5 = inlined_call_operand.vmem [shape: f32[2,16,16,8], index: 5, kind: output, shape index: {}]
  %s6 = sld [smem:[#allocation0]]
  $region53: #{tpu_custom_call.1} parent=0
    _
  %s8 = ssub.s32 1, %s6
  %s9 = scalar_select 0, %s8, %s6
  loop: start=0, step=1, limit=4
  $region2: #{tpu_custom_call.1} parent=0 // loop_pre_header
    _
  $region3: #{tpu_custom_call.1} parent=0 // loop_header
    %s11 = sphi 0, %s15
    %p12 = scmp.ge.s32.totalorder %s11, 4
    %s21 = sphi 0, %s23
    %s24 = sphi 0, %s21
    %s25 = sphi 0, %s24
    %s41 = sphi 0, %s25
    %s45 = sphi 0, %s45
    %s47 = sphi 0, %s45
    %s48 = sphi 0, %s47
    %s62 = sphi 0, %s48
    %s66 = sphi 0, %s66
    %s68 = sphi 0, %s66
    %s69 = sphi 0, %s68
    %s83 = sphi 0, %s69
    %s87 = sphi 0, %s87
    %s89 = sphi 0, %s87
    %s90 = sphi 0, %s89
    %s104 = sphi 0, %s90
    %s108 = sphi 0, %s108
    %s110 = sphi 0, %s108
    %s111 = sphi 0, %s110
    %s125 = sphi 0, %s111
    %s131 = sphi 0, %s133
    %s134 = sphi 0, %s131
    %s135 = sphi 0, %s134
    %s151 = sphi 0, %s135
  $region4: #{tpu_custom_call.1} parent=0 // loop_header_branch
    %14 = sbr.rel (%p12) target = $region8
  $region5: #{tpu_custom_call.1} parent=0 // loop_body
    %s16 = ssub.s32 %s11, 1
    %s17 = ssub.s32 %s11, 2
    %s18 = sadd.s32 %s11, 1
    %s19 = ssub.s32 %s11, %s18
    %p20 = scmp.eq.s32.totalorder %s19, 0
    %s22 = sadd.s32 %s21, 1
    %s23 = scalar_select %p20, %s21, %s22
    %p26 = pneg %p20
    %p27 = scmp.eq.s32.totalorder %s11, 1
    %p28 = por %p26, %p27
    %p29 = scmp.ne.s32.totalorder %s21, %s24
    %p30 = scmp.eq.s32.totalorder %s11, 0
    %p31 = por %p29, %p30
    %p32 = scmp.ne.s32.totalorder %s21, %s24
    %p33 = scmp.eq.s32.totalorder %s16, 1
    %p34 = por %p32, %p33
    %p35 = scmp.ne.s32.totalorder %s24, %s25
    %p36 = scmp.eq.s32.totalorder %s16, 0
    %p37 = por %p35, %p36
    %p38 = scmp.ne.s32.totalorder %s24, %s25
    %p39 = scmp.eq.s32.totalorder %s17, 1
    %p40 = por %p38, %p39
    %p42 = scmp.ne.s32.totalorder %s25, %s41
    %p43 = scmp.eq.s32.totalorder %s17, 0
    %p44 = por %p42, %p43
    %s46 = sadd.s32 %s45, 1
    %p49 = scmp.eq.s32.totalorder %s11, 1
    %p50 = scmp.ne.s32.totalorder %s45, %s47
    %p51 = scmp.eq.s32.totalorder %s11, 0
    %p52 = por %p50, %p51
    %p53 = scmp.ne.s32.totalorder %s45, %s47
    %p54 = scmp.eq.s32.totalorder %s16, 1
    %p55 = por %p53, %p54
    %p56 = scmp.ne.s32.totalorder %s47, %s48
    %p57 = scmp.eq.s32.totalorder %s16, 0
    %p58 = por %p56, %p57
    %p59 = scmp.ne.s32.totalorder %s47, %s48
    %p60 = scmp.eq.s32.totalorder %s17, 1
    %p61 = por %p59, %p60
    %p63 = scmp.ne.s32.totalorder %s48, %s62
    %p64 = scmp.eq.s32.totalorder %s17, 0
    %p65 = por %p63, %p64
    %s67 = sadd.s32 %s66, 1
    %p70 = scmp.eq.s32.totalorder %s11, 1
    %p71 = scmp.ne.s32.totalorder %s66, %s68
    %p72 = scmp.eq.s32.totalorder %s11, 0
    %p73 = por %p71, %p72
    %p74 = scmp.ne.s32.totalorder %s66, %s68
    %p75 = scmp.eq.s32.totalorder %s16, 1
    %p76 = por %p74, %p75
    %p77 = scmp.ne.s32.totalorder %s68, %s69
    %p78 = scmp.eq.s32.totalorder %s16, 0
    %p79 = por %p77, %p78
    %p80 = scmp.ne.s32.totalorder %s68, %s69
    %p81 = scmp.eq.s32.totalorder %s17, 1
    %p82 = por %p80, %p81
    %p84 = scmp.ne.s32.totalorder %s69, %s83
    %p85 = scmp.eq.s32.totalorder %s17, 0
    %p86 = por %p84, %p85
    %s88 = sadd.s32 %s87, 1
    %p91 = scmp.eq.s32.totalorder %s11, 1
    %p92 = scmp.ne.s32.totalorder %s87, %s89
    %p93 = scmp.eq.s32.totalorder %s11, 0
    %p94 = por %p92, %p93
    %p95 = scmp.ne.s32.totalorder %s87, %s89
    %p96 = scmp.eq.s32.totalorder %s16, 1
    %p97 = por %p95, %p96
    %p98 = scmp.ne.s32.totalorder %s89, %s90
    %p99 = scmp.eq.s32.totalorder %s16, 0
    %p100 = por %p98, %p99
    %p101 = scmp.ne.s32.totalorder %s89, %s90
    %p102 = scmp.eq.s32.totalorder %s17, 1
    %p103 = por %p101, %p102
    %p105 = scmp.ne.s32.totalorder %s90, %s104
    %p106 = scmp.eq.s32.totalorder %s17, 0
    %p107 = por %p105, %p106
    %s109 = sadd.s32 %s108, 1
    %p112 = scmp.eq.s32.totalorder %s11, 1
    %p113 = scmp.ne.s32.totalorder %s108, %s110
    %p114 = scmp.eq.s32.totalorder %s11, 0
    %p115 = por %p113, %p114
    %p116 = scmp.ne.s32.totalorder %s108, %s110
    %p117 = scmp.eq.s32.totalorder %s16, 1
    %p118 = por %p116, %p117
    %p119 = scmp.ne.s32.totalorder %s110, %s111
    %p120 = scmp.eq.s32.totalorder %s16, 0
    %p121 = por %p119, %p120
    %p122 = scmp.ne.s32.totalorder %s110, %s111
    %p123 = scmp.eq.s32.totalorder %s17, 1
    %p124 = por %p122, %p123
    %p126 = scmp.ne.s32.totalorder %s111, %s125
    %p127 = scmp.eq.s32.totalorder %s17, 0
    %p128 = por %p126, %p127
    %s129 = ssub.s32 %s11, %s18
    %p130 = scmp.eq.s32.totalorder %s129, 0
    %s132 = sadd.s32 %s131, 1
    %s133 = scalar_select %p130, %s131, %s132
    %p136 = pneg %p130
    %p137 = scmp.eq.s32.totalorder %s11, 1
    %p138 = por %p136, %p137
    %p139 = scmp.ne.s32.totalorder %s131, %s134
    %p140 = scmp.eq.s32.totalorder %s11, 0
    %p141 = por %p139, %p140
    %p142 = scmp.ne.s32.totalorder %s131, %s134
    %p143 = scmp.eq.s32.totalorder %s16, 1
    %p144 = por %p142, %p143
    %p145 = scmp.ne.s32.totalorder %s134, %s135
    %p146 = scmp.eq.s32.totalorder %s16, 0
    %p147 = por %p145, %p146
    %p148 = scmp.ne.s32.totalorder %s134, %s135
    %p149 = scmp.eq.s32.totalorder %s17, 1
    %p150 = por %p148, %p149
    %p152 = scmp.ne.s32.totalorder %s135, %s151
    %p153 = scmp.eq.s32.totalorder %s17, 0
    %p154 = por %p152, %p153
    %p155 = scmp.le.s32.totalorder 1, %s11
    %p156 = scmp.lt.s32.totalorder %s11, 3
    %p157 = pnand %p155, %p156
    %p158 = pneg %p157
    // Predicated region
    $region9: #{tpu_custom_call.1} parent=5 // pred_check
      _
    $region10: #{tpu_custom_call.1} parent=5 // pred_check_branch
      %160 = sbr.rel (%p157) target = $region12
    $region11: #{tpu_custom_call.1} parent=5 // pred_region
      %s161 = ssub.s32 %s11, 1
      // Predicated region
      $region13: #{tpu_custom_call.1} parent=11 // pred_check
        %p162 = pneg %p58
      $region14: #{tpu_custom_call.1} parent=11 // pred_check_branch
        %164 = sbr.rel (%p162) target = $region16
      $region15: #{tpu_custom_call.1} parent=11 // pred_region
        _
      $region16: #{tpu_custom_call.1} parent=11 // pred_fallthru
        _
      // Predicated region
      $region17: #{tpu_custom_call.1} parent=11 // pred_check
        %p165 = pneg %p79
      $region18: #{tpu_custom_call.1} parent=11 // pred_check_branch
        %167 = sbr.rel (%p165) target = $region20
      $region19: #{tpu_custom_call.1} parent=11 // pred_region
        _
      $region20: #{tpu_custom_call.1} parent=11 // pred_fallthru
        _
      // Predicated region
      $region21: #{tpu_custom_call.1} parent=11 // pred_check
        %p168 = pneg %p100
      $region22: #{tpu_custom_call.1} parent=11 // pred_check_branch
        %170 = sbr.rel (%p168) target = $region24
      $region23: #{tpu_custom_call.1} parent=11 // pred_region
        _
      $region24: #{tpu_custom_call.1} parent=11 // pred_fallthru
        _
      // Predicated region
      $region25: #{tpu_custom_call.1} parent=11 // pred_check
        %p171 = pneg %p121
      $region26: #{tpu_custom_call.1} parent=11 // pred_check_branch
        %173 = sbr.rel (%p171) target = $region28
      $region27: #{tpu_custom_call.1} parent=11 // pred_region
        _
      $region28: #{tpu_custom_call.1} parent=11 // pred_fallthru
        _
    $region12: #{tpu_custom_call.1} parent=5 // pred_fallthru
      _
    %p174 = scmp.lt.s32.totalorder %s11, 2
    // Predicated region
    $region29: #{tpu_custom_call.1} parent=5 // pred_check
      %p175 = pneg %p174
    $region30: #{tpu_custom_call.1} parent=5 // pred_check_branch
      %177 = sbr.rel (%p175) target = $region32
    $region31: #{tpu_custom_call.1} parent=5 // pred_region
      // Predicated region
      $region33: #{tpu_custom_call.1} parent=31 // pred_check
        %p178 = pneg %p31
      $region34: #{tpu_custom_call.1} parent=31 // pred_check_branch
        %180 = sbr.rel (%p178) target = $region36
      $region35: #{tpu_custom_call.1} parent=31 // pred_region
        %p181 = scmp.lt.s32.totalorder %s11, 1
        %s182 = scalar_select %p181, %s11, 1
        %s183 = smul.addr %s182, 32
        %s184 = smul.addr %s183, 8
        %s185 = scalar_lea.vmem %s0, %s184
      $region36: #{tpu_custom_call.1} parent=31 // pred_fallthru
        _
    $region32: #{tpu_custom_call.1} parent=5 // pred_fallthru
      _
    %p186 = scmp.le.s32.totalorder 1, %s11
    %p187 = scmp.lt.s32.totalorder %s11, 3
    %p188 = pnand %p186, %p187
    %p189 = pneg %p188
    // Predicated region
    $region37: #{tpu_custom_call.1} parent=5 // pred_check
      _
    $region38: #{tpu_custom_call.1} parent=5 // pred_check_branch
      %191 = sbr.rel (%p188) target = $region40
    $region39: #{tpu_custom_call.1} parent=5 // pred_region
      %s192 = ssub.s32 %s11, 1
      %p193 = scmp.lt.s32.totalorder %s16, 1
      %s194 = scalar_select %p193, %s16, 1
      %s195 = smul.addr %s194, 32
      %s196 = smul.addr %s195, 8
      %s197 = scalar_lea.vmem %s0, %s196
      %p198 = pneg %p37
      %p199 = pneg %p34
      %p200 = pneg %p58
      %p201 = pneg %p55
      %p202 = pneg %p79
      %p203 = pneg %p76
      %p204 = pneg %p100
      %p205 = pneg %p97
      %p206 = pneg %p121
      %p207 = pneg %p118
      %p208 = pneg %p147
      %p209 = pneg %p144
      %p210 = scmp.lt.s32.totalorder %s16, 1
      %s211 = scalar_select %p210, %s16, 1
      %s212 = smul.addr %s211, 32
      %s213 = smul.addr %s212, 8
      %s214 = scalar_lea.vmem %s5, %s213
      %p215 = scmp.lt.s32.totalorder %s16, 1
      %s216 = scalar_select %p215, %s16, 1
      %s217 = smul.addr %s216, 32
      %s218 = smul.addr %s217, 8
      %s219 = scalar_lea.vmem %s0, %s218
      %p220 = scmp.lt.s32.totalorder %s16, 1
      %s221 = scalar_select %p220, %s16, 1
      %s222 = smul.addr %s221, 32
      %s223 = smul.addr %s222, 8
      %s224 = scalar_lea.vmem %s5, %s223
      %vm225 = vcmask 64512
      %226 = vst.msk [vmem:[#allocation2] sm:$0xff] %vm225, 0.0
      %227 = vst.msk [vmem:[#allocation2 + $0x8] sm:$0xff] %vm225, 0.0
      %228 = vst.msk [vmem:[#allocation2 + $0x10] sm:$0xff] %vm225, 0.0
      %229 = vst.msk [vmem:[#allocation2 + $0x18] sm:$0xff] %vm225, 0.0
      %230 = vst.msk [vmem:[#allocation2 + $0x20] sm:$0xff] %vm225, 0.0
      %231 = vst.msk [vmem:[#allocation2 + $0x28] sm:$0xff] %vm225, 0.0
      %232 = vst.msk [vmem:[#allocation2 + $0x30] sm:$0xff] %vm225, 0.0
      %233 = vst.msk [vmem:[#allocation2 + $0x38] sm:$0xff] %vm225, 0.0
      %234 = vst.msk [vmem:[#allocation2 + $0x40] sm:$0xff] %vm225, 0.0
      %235 = vst.msk [vmem:[#allocation2 + $0x48] sm:$0xff] %vm225, 0.0
      %236 = vst.msk [vmem:[#allocation2 + $0x50] sm:$0xff] %vm225, 0.0
      %237 = vst.msk [vmem:[#allocation2 + $0x58] sm:$0xff] %vm225, 0.0
      %238 = vst.msk [vmem:[#allocation2 + $0x60] sm:$0xff] %vm225, 0.0
      %239 = vst.msk [vmem:[#allocation2 + $0x68] sm:$0xff] %vm225, 0.0
      %240 = vst.msk [vmem:[#allocation2 + $0x70] sm:$0xff] %vm225, 0.0
      %241 = vst.msk [vmem:[#allocation2 + $0x78] sm:$0xff] %vm225, 0.0
      %242 = vst.msk [vmem:[#allocation2 + $0x80] sm:$0xff] %vm225, 0.0
      %243 = vst.msk [vmem:[#allocation2 + $0x88] sm:$0xff] %vm225, 0.0
      %244 = vst.msk [vmem:[#allocation2 + $0x90] sm:$0xff] %vm225, 0.0
      %245 = vst.msk [vmem:[#allocation2 + $0x98] sm:$0xff] %vm225, 0.0
      %246 = vst.msk [vmem:[#allocation2 + $0xa0] sm:$0xff] %vm225, 0.0
      %247 = vst.msk [vmem:[#allocation2 + $0xa8] sm:$0xff] %vm225, 0.0
      %248 = vst.msk [vmem:[#allocation2 + $0xb0] sm:$0xff] %vm225, 0.0
      %249 = vst.msk [vmem:[#allocation2 + $0xb8] sm:$0xff] %vm225, 0.0
      %250 = vst.msk [vmem:[#allocation2 + $0xc0] sm:$0xff] %vm225, 0.0
      %251 = vst.msk [vmem:[#allocation2 + $0xc8] sm:$0xff] %vm225, 0.0
      %252 = vst.msk [vmem:[#allocation2 + $0xd0] sm:$0xff] %vm225, 0.0
      %253 = vst.msk [vmem:[#allocation2 + $0xd8] sm:$0xff] %vm225, 0.0
      %254 = vst.msk [vmem:[#allocation2 + $0xe0] sm:$0xff] %vm225, 0.0
      %255 = vst.msk [vmem:[#allocation2 + $0xe8] sm:$0xff] %vm225, 0.0
      %256 = vst.msk [vmem:[#allocation2 + $0xf0] sm:$0xff] %vm225, 0.0
      %257 = vst.msk [vmem:[#allocation2 + $0xf8] sm:$0xff] %vm225, 0.0
      %258 = vst.msk [vmem:[#allocation2 + $0x100] sm:$0xff] %vm225, 0.0
      %259 = vst.msk [vmem:[#allocation2 + $0x108] sm:$0xff] %vm225, 0.0
      %260 = vst.msk [vmem:[#allocation2 + $0x110] sm:$0xff] %vm225, 0.0
      %261 = vst.msk [vmem:[#allocation2 + $0x118] sm:$0xff] %vm225, 0.0
      %262 = vst.msk [vmem:[#allocation2 + $0x120] sm:$0xff] %vm225, 0.0
      %263 = vst.msk [vmem:[#allocation2 + $0x128] sm:$0xff] %vm225, 0.0
      %264 = vst.msk [vmem:[#allocation2 + $0x130] sm:$0xff] %vm225, 0.0
      %265 = vst.msk [vmem:[#allocation2 + $0x138] sm:$0xff] %vm225, 0.0
      %266 = vst.msk [vmem:[#allocation2 + $0x140] sm:$0xff] %vm225, 0.0
      %267 = vst.msk [vmem:[#allocation2 + $0x148] sm:$0xff] %vm225, 0.0
      %268 = vst.msk [vmem:[#allocation2 + $0x150] sm:$0xff] %vm225, 0.0
      %269 = vst.msk [vmem:[#allocation2 + $0x158] sm:$0xff] %vm225, 0.0
      %270 = vst.msk [vmem:[#allocation2 + $0x160] sm:$0xff] %vm225, 0.0
      %271 = vst.msk [vmem:[#allocation2 + $0x168] sm:$0xff] %vm225, 0.0
      %272 = vst.msk [vmem:[#allocation2 + $0x170] sm:$0xff] %vm225, 0.0
      %273 = vst.msk [vmem:[#allocation2 + $0x178] sm:$0xff] %vm225, 0.0
      %274 = vst.msk [vmem:[#allocation2 + $0x180] sm:$0xff] %vm225, 0.0
      %275 = vst.msk [vmem:[#allocation2 + $0x188] sm:$0xff] %vm225, 0.0
      %276 = vst.msk [vmem:[#allocation2 + $0x190] sm:$0xff] %vm225, 0.0
      %277 = vst.msk [vmem:[#allocation2 + $0x198] sm:$0xff] %vm225, 0.0
      %278 = vst.msk [vmem:[#allocation2 + $0x1a0] sm:$0xff] %vm225, 0.0
      %279 = vst.msk [vmem:[#allocation2 + $0x1a8] sm:$0xff] %vm225, 0.0
      %280 = vst.msk [vmem:[#allocation2 + $0x1b0] sm:$0xff] %vm225, 0.0
      %281 = vst.msk [vmem:[#allocation2 + $0x1b8] sm:$0xff] %vm225, 0.0
      %282 = vst.msk [vmem:[#allocation2 + $0x1c0] sm:$0xff] %vm225, 0.0
      %283 = vst.msk [vmem:[#allocation2 + $0x1c8] sm:$0xff] %vm225, 0.0
      %284 = vst.msk [vmem:[#allocation2 + $0x1d0] sm:$0xff] %vm225, 0.0
      %285 = vst.msk [vmem:[#allocation2 + $0x1d8] sm:$0xff] %vm225, 0.0
      %286 = vst.msk [vmem:[#allocation2 + $0x1e0] sm:$0xff] %vm225, 0.0
      %287 = vst.msk [vmem:[#allocation2 + $0x1e8] sm:$0xff] %vm225, 0.0
      %288 = vst.msk [vmem:[#allocation2 + $0x1f0] sm:$0xff] %vm225, 0.0
      %289 = vst.msk [vmem:[#allocation2 + $0x1f8] sm:$0xff] %vm225, 0.0
      %290 = vst.msk [vmem:[#allocation2 + $0x200] sm:$0xff] %vm225, 0.0
      %291 = vst.msk [vmem:[#allocation2 + $0x208] sm:$0xff] %vm225, 0.0
      %292 = vst.msk [vmem:[#allocation2 + $0x210] sm:$0xff] %vm225, 0.0
      %293 = vst.msk [vmem:[#allocation2 + $0x218] sm:$0xff] %vm225, 0.0
      %294 = vst.msk [vmem:[#allocation2 + $0x220] sm:$0xff] %vm225, 0.0
      %295 = vst.msk [vmem:[#allocation2 + $0x228] sm:$0xff] %vm225, 0.0
      %296 = vst.msk [vmem:[#allocation2 + $0x230] sm:$0xff] %vm225, 0.0
      %297 = vst.msk [vmem:[#allocation2 + $0x238] sm:$0xff] %vm225, 0.0
      %v298 = vld [vmem:[%s219] sm:$0xff]
      %v299 = vld [vmem:[%s219 + $0x8] sm:$0xff]
      %v300 = vld [vmem:[%s219 + $0x10] sm:$0xff]
      %v301 = vld [vmem:[%s219 + $0x18] sm:$0xff]
      %v302 = vld [vmem:[%s219 + $0x20] sm:$0xff]
      %v303 = vld [vmem:[%s219 + $0x28] sm:$0xff]
      %v304 = vld [vmem:[%s219 + $0x30] sm:$0xff]
      %v305 = vld [vmem:[%s219 + $0x38] sm:$0xff]
      %v306 = vld [vmem:[%s219 + $0x40] sm:$0xff]
      %v307 = vld [vmem:[%s219 + $0x48] sm:$0xff]
      %v308 = vld [vmem:[%s219 + $0x50] sm:$0xff]
      %v309 = vld [vmem:[%s219 + $0x58] sm:$0xff]
      %v310 = vld [vmem:[%s219 + $0x60] sm:$0xff]
      %v311 = vld [vmem:[%s219 + $0x68] sm:$0xff]
      %v312 = vld [vmem:[%s219 + $0x70] sm:$0xff]
      %v313 = vld [vmem:[%s219 + $0x78] sm:$0xff]
      %v314 = vld [vmem:[%s219 + $0x80] sm:$0xff]
      %v315 = vld [vmem:[%s219 + $0x88] sm:$0xff]
      %v316 = vld [vmem:[%s219 + $0x90] sm:$0xff]
      %v317 = vld [vmem:[%s219 + $0x98] sm:$0xff]
      %v318 = vld [vmem:[%s219 + $0xa0] sm:$0xff]
      %v319 = vld [vmem:[%s219 + $0xa8] sm:$0xff]
      %v320 = vld [vmem:[%s219 + $0xb0] sm:$0xff]
      %v321 = vld [vmem:[%s219 + $0xb8] sm:$0xff]
      %v322 = vld [vmem:[%s219 + $0xc0] sm:$0xff]
      %v323 = vld [vmem:[%s219 + $0xc8] sm:$0xff]
      %v324 = vld [vmem:[%s219 + $0xd0] sm:$0xff]
      %v325 = vld [vmem:[%s219 + $0xd8] sm:$0xff]
      %v326 = vld [vmem:[%s219 + $0xe0] sm:$0xff]
      %v327 = vld [vmem:[%s219 + $0xe8] sm:$0xff]
      %v328 = vld [vmem:[%s219 + $0xf0] sm:$0xff]
      %v329 = vld [vmem:[%s219 + $0xf8] sm:$0xff]
      %s330 = scalar_lea.vmem [#allocation2], 32
      %331 = vst.msk [vmem:[%s330 + $0x8] sm:$0xff] %vm225, %v298
      %332 = vst.msk [vmem:[%s330 + $0x10] sm:$0xff] %vm225, %v299
      %333 = vst.msk [vmem:[%s330 + $0x28] sm:$0xff] %vm225, %v300
      %334 = vst.msk [vmem:[%s330 + $0x30] sm:$0xff] %vm225, %v301
      %335 = vst.msk [vmem:[%s330 + $0x48] sm:$0xff] %vm225, %v302
      %336 = vst.msk [vmem:[%s330 + $0x50] sm:$0xff] %vm225, %v303
      %337 = vst.msk [vmem:[%s330 + $0x68] sm:$0xff] %vm225, %v304
      %338 = vst.msk [vmem:[%s330 + $0x70] sm:$0xff] %vm225, %v305
      %339 = vst.msk [vmem:[%s330 + $0x88] sm:$0xff] %vm225, %v306
      %340 = vst.msk [vmem:[%s330 + $0x90] sm:$0xff] %vm225, %v307
      %341 = vst.msk [vmem:[%s330 + $0xa8] sm:$0xff] %vm225, %v308
      %342 = vst.msk [vmem:[%s330 + $0xb0] sm:$0xff] %vm225, %v309
      %343 = vst.msk [vmem:[%s330 + $0xc8] sm:$0xff] %vm225, %v310
      %344 = vst.msk [vmem:[%s330 + $0xd0] sm:$0xff] %vm225, %v311
      %345 = vst.msk [vmem:[%s330 + $0xe8] sm:$0xff] %vm225, %v312
      %346 = vst.msk [vmem:[%s330 + $0xf0] sm:$0xff] %vm225, %v313
      %347 = vst.msk [vmem:[%s330 + $0x108] sm:$0xff] %vm225, %v314
      %348 = vst.msk [vmem:[%s330 + $0x110] sm:$0xff] %vm225, %v315
      %349 = vst.msk [vmem:[%s330 + $0x128] sm:$0xff] %vm225, %v316
      %350 = vst.msk [vmem:[%s330 + $0x130] sm:$0xff] %vm225, %v317
      %351 = vst.msk [vmem:[%s330 + $0x148] sm:$0xff] %vm225, %v318
      %352 = vst.msk [vmem:[%s330 + $0x150] sm:$0xff] %vm225, %v319
      %353 = vst.msk [vmem:[%s330 + $0x168] sm:$0xff] %vm225, %v320
      %354 = vst.msk [vmem:[%s330 + $0x170] sm:$0xff] %vm225, %v321
      %355 = vst.msk [vmem:[%s330 + $0x188] sm:$0xff] %vm225, %v322
      %356 = vst.msk [vmem:[%s330 + $0x190] sm:$0xff] %vm225, %v323
      %357 = vst.msk [vmem:[%s330 + $0x1a8] sm:$0xff] %vm225, %v324
      %358 = vst.msk [vmem:[%s330 + $0x1b0] sm:$0xff] %vm225, %v325
      %359 = vst.msk [vmem:[%s330 + $0x1c8] sm:$0xff] %vm225, %v326
      %360 = vst.msk [vmem:[%s330 + $0x1d0] sm:$0xff] %vm225, %v327
      %361 = vst.msk [vmem:[%s330 + $0x1e8] sm:$0xff] %vm225, %v328
      %362 = vst.msk [vmem:[%s330 + $0x1f0] sm:$0xff] %vm225, %v329
      %v363 = vld [vmem:[#allocation2 + $0x7] sm:$0xff]
      %v364 = vld [vmem:[#allocation2 + $0xf] sm:$0xff]
      %v365 = vld [vmem:[#allocation2 + $0x27] sm:$0xff]
      %v366 = vld [vmem:[#allocation2 + $0x2f] sm:$0xff]
      %v367 = vld [vmem:[#allocation2 + $0x47] sm:$0xff]
      %v368 = vld [vmem:[#allocation2 + $0x4f] sm:$0xff]
      %v369 = vld [vmem:[#allocation2 + $0x67] sm:$0xff]
      %v370 = vld [vmem:[#allocation2 + $0x6f] sm:$0xff]
      %v371 = vld [vmem:[#allocation2 + $0x87] sm:$0xff]
      %v372 = vld [vmem:[#allocation2 + $0x8f] sm:$0xff]
      %v373 = vld [vmem:[#allocation2 + $0xa7] sm:$0xff]
      %v374 = vld [vmem:[#allocation2 + $0xaf] sm:$0xff]
      %v375 = vld [vmem:[#allocation2 + $0xc7] sm:$0xff]
      %v376 = vld [vmem:[#allocation2 + $0xcf] sm:$0xff]
      %v377 = vld [vmem:[#allocation2 + $0xe7] sm:$0xff]
      %v378 = vld [vmem:[#allocation2 + $0xef] sm:$0xff]
      %v379 = vld [vmem:[#allocation2 + $0x107] sm:$0xff]
      %v380 = vld [vmem:[#allocation2 + $0x10f] sm:$0xff]
      %v381 = vld [vmem:[#allocation2 + $0x127] sm:$0xff]
      %v382 = vld [vmem:[#allocation2 + $0x12f] sm:$0xff]
      %v383 = vld [vmem:[#allocation2 + $0x147] sm:$0xff]
      %v384 = vld [vmem:[#allocation2 + $0x14f] sm:$0xff]
      %v385 = vld [vmem:[#allocation2 + $0x167] sm:$0xff]
      %v386 = vld [vmem:[#allocation2 + $0x16f] sm:$0xff]
      %v387 = vld [vmem:[#allocation2 + $0x187] sm:$0xff]
      %v388 = vld [vmem:[#allocation2 + $0x18f] sm:$0xff]
      %v389 = vld [vmem:[#allocation2 + $0x1a7] sm:$0xff]
      %v390 = vld [vmem:[#allocation2 + $0x1af] sm:$0xff]
      %v391 = vld [vmem:[#allocation2 + $0x1c7] sm:$0xff]
      %v392 = vld [vmem:[#allocation2 + $0x1cf] sm:$0xff]
      %v393 = vld [vmem:[#allocation2 + $0x1e7] sm:$0xff]
      %v394 = vld [vmem:[#allocation2 + $0x1ef] sm:$0xff]
      %v395 = vld [vmem:[%s1] sm:$0xff]
      %v396 = vld [vmem:[#allocation2 + $0x8] sm:$0xff]
      %v397 = vld [vmem:[#allocation2 + $0x10] sm:$0xff]
      %v398 = vld [vmem:[#allocation2 + $0x28] sm:$0xff]
      %v399 = vld [vmem:[#allocation2 + $0x30] sm:$0xff]
      %v400 = vld [vmem:[#allocation2 + $0x48] sm:$0xff]
      %v401 = vld [vmem:[#allocation2 + $0x50] sm:$0xff]
      %v402 = vld [vmem:[#allocation2 + $0x68] sm:$0xff]
      %v403 = vld [vmem:[#allocation2 + $0x70] sm:$0xff]
      %v404 = vld [vmem:[#allocation2 + $0x88] sm:$0xff]
      %v405 = vld [vmem:[#allocation2 + $0x90] sm:$0xff]
      %v406 = vld [vmem:[#allocation2 + $0xa8] sm:$0xff]
      %v407 = vld [vmem:[#allocation2 + $0xb0] sm:$0xff]
      %v408 = vld [vmem:[#allocation2 + $0xc8] sm:$0xff]
      %v409 = vld [vmem:[#allocation2 + $0xd0] sm:$0xff]
      %v410 = vld [vmem:[#allocation2 + $0xe8] sm:$0xff]
      %v411 = vld [vmem:[#allocation2 + $0xf0] sm:$0xff]
      %v412 = vld [vmem:[#allocation2 + $0x108] sm:$0xff]
      %v413 = vld [vmem:[#allocation2 + $0x110] sm:$0xff]
      %v414 = vld [vmem:[#allocation2 + $0x128] sm:$0xff]
      %v415 = vld [vmem:[#allocation2 + $0x130] sm:$0xff]
      %v416 = vld [vmem:[#allocation2 + $0x148] sm:$0xff]
      %v417 = vld [vmem:[#allocation2 + $0x150] sm:$0xff]
      %v418 = vld [vmem:[#allocation2 + $0x168] sm:$0xff]
      %v419 = vld [vmem:[#allocation2 + $0x170] sm:$0xff]
      %v420 = vld [vmem:[#allocation2 + $0x188] sm:$0xff]
      %v421 = vld [vmem:[#allocation2 + $0x190] sm:$0xff]
      %v422 = vld [vmem:[#allocation2 + $0x1a8] sm:$0xff]
      %v423 = vld [vmem:[#allocation2 + $0x1b0] sm:$0xff]
      %v424 = vld [vmem:[#allocation2 + $0x1c8] sm:$0xff]
      %v425 = vld [vmem:[#allocation2 + $0x1d0] sm:$0xff]
      %v426 = vld [vmem:[#allocation2 + $0x1e8] sm:$0xff]
      %v427 = vld [vmem:[#allocation2 + $0x1f0] sm:$0xff]
      %s428 = scalar_lea.vmem %s1, 8
      %v429 = vld [vmem:[%s428] sm:$0xff]
      %v431 = vsel %vm225, %v396, 0
      %v434 = vsel %vm225, %v397, 0
      %v437 = vsel %vm225, %v398, 0
      %v440 = vsel %vm225, %v399, 0
      %v443 = vsel %vm225, %v400, 0
      %v446 = vsel %vm225, %v401, 0
      %v449 = vsel %vm225, %v402, 0
      %v452 = vsel %vm225, %v403, 0
      %v455 = vsel %vm225, %v404, 0
      %v458 = vsel %vm225, %v405, 0
      %v461 = vsel %vm225, %v406, 0
      %v464 = vsel %vm225, %v407, 0
      %v467 = vsel %vm225, %v408, 0
      %v470 = vsel %vm225, %v409, 0
      %v473 = vsel %vm225, %v410, 0
      %v476 = vsel %vm225, %v411, 0
      %v479 = vsel %vm225, %v412, 0
      %v482 = vsel %vm225, %v413, 0
      %v485 = vsel %vm225, %v414, 0
      %v488 = vsel %vm225, %v415, 0
      %v491 = vsel %vm225, %v416, 0
      %v494 = vsel %vm225, %v417, 0
      %v497 = vsel %vm225, %v418, 0
      %v500 = vsel %vm225, %v419, 0
      %v503 = vsel %vm225, %v420, 0
      %v506 = vsel %vm225, %v421, 0
      %v509 = vsel %vm225, %v422, 0
      %v512 = vsel %vm225, %v423, 0
      %v515 = vsel %vm225, %v424, 0
      %v518 = vsel %vm225, %v425, 0
      %v521 = vsel %vm225, %v426, 0
      %v524 = vsel %vm225, %v427, 0
      %526 = vmatprep.subr.mxu0 0.0
      %527 = vmatpush1.msra.mxu0 %v429
      %528 = vmatprep.subr.mxu0 0.0
      %529 = vmatpush1.msra.mxu0 0.0
      %530 = vmatprep.subr.mxu0 0.0
      %531 = vmatpush1.msra.mxu0 0.0
      %532 = vmatprep.subr.mxu0 0.0
      %533 = vmatpush1.msra.mxu0 0.0
      %534 = vmatprep.subr.mxu0 0.0
      %535 = vmatpush1.msra.mxu0 0.0
      %536 = vmatprep.subr.mxu0 0.0
      %537 = vmatpush1.msra.mxu0 0.0
      %538 = vmatprep.subr.mxu0 0.0
      %539 = vmatpush1.msra.mxu0 0.0
      %540 = vmatprep.subr.mxu0 0.0
      %541 = vmatpush1.msra.mxu0 0.0
      %542 = vmatprep.subr.mxu0 0.0
      %543 = vmatpush1.msra.mxu0 0.0
      %544 = vmatprep.subr.mxu0 0.0
      %545 = vmatpush1.msra.mxu0 0.0
      %546 = vmatprep.subr.mxu0 0.0
      %547 = vmatpush1.msra.mxu0 0.0
      %548 = vmatprep.subr.mxu0 0.0
      %549 = vmatpush1.msra.mxu0 0.0
      %550 = vmatprep.subr.mxu0 0.0
      %551 = vmatpush1.msra.mxu0 0.0
      %552 = vmatprep.subr.mxu0 0.0
      %553 = vmatpush1.msra.mxu0 0.0
      %554 = vmatprep.subr.mxu0 0.0
      %555 = vmatpush1.msra.mxu0 0.0
      %556 = vmatprep.subr.mxu0 0.0
      %557 = vmatpush1.msra.mxu0 0.0
      %558 = vmatprep.subr.mxu0 0.0
      %559 = vmatpush1.msra.mxu0 0.0
      %560 = vmatprep.subr.mxu0 0.0
      %561 = vmatpush1.msra.mxu0 0.0
      %562 = vmatprep.subr.mxu0 0.0
      %563 = vmatpush1.msra.mxu0 0.0
      %564 = vmatprep.subr.mxu0 0.0
      %565 = vmatpush1.msra.mxu0 0.0
      %566 = vmatprep.subr.mxu0 0.0
      %567 = vmatpush1.msra.mxu0 0.0
      %568 = vmatprep.subr.mxu0 0.0
      %569 = vmatpush1.msra.mxu0 0.0
      %570 = vmatprep.subr.mxu0 0.0
      %571 = vmatpush1.msra.mxu0 0.0
      %572 = vmatprep.subr.mxu0 0.0
      %573 = vmatpush1.msra.mxu0 0.0
      %574 = vmatprep.subr.mxu0 0.0
      %575 = vmatpush1.msra.mxu0 0.0
      %576 = vmatprep.subr.mxu0 0.0
      %577 = vmatpush1.msra.mxu0 0.0
      %578 = vmatprep.subr.mxu0 0.0
      %579 = vmatpush1.msra.mxu0 0.0
      %580 = vmatprep.subr.mxu0 0.0
      %581 = vmatpush1.msra.mxu0 0.0
      %582 = vmatprep.subr.mxu0 0.0
      %583 = vmatpush1.msra.mxu0 0.0
      %584 = vmatprep.subr.mxu0 0.0
      %585 = vmatpush1.msra.mxu0 0.0
      %586 = vmatprep.subr.mxu0 0.0
      %587 = vmatpush1.msra.mxu0 0.0
      %588 = vmatprep.subr.mxu0 0.0
      %589 = vmatpush1.msra.mxu0 0.0
      %590 = vmatprep.mubr.f32.mxu0 0.0
      %591 = vmatmul.mubr.f32.gmra.mrb[0].mxu0 %v431
      %v592 = vpop.f32.mrb[0].mxu0
      %v593 = vadd.f32 0.0, %v592
      %v594 = vpop.f32.mrb[0].mxu0
      %595 = vmatprep.mubr.f32.mxu0 0.0
      %596 = vmatmul.mubr.f32.gmra.mrb[0].mxu0 %v434
      %v597 = vpop.f32.mrb[0].mxu0
      %v598 = vadd.f32 0.0, %v597
      %v599 = vpop.f32.mrb[0].mxu0
      %600 = vmatprep.mubr.f32.mxu0 0.0
      %601 = vmatmul.mubr.f32.gmra.mrb[0].mxu0 %v437
      %v602 = vpop.f32.mrb[0].mxu0
      %v603 = vadd.f32 0.0, %v602
      %v604 = vpop.f32.mrb[0].mxu0
      %605 = vmatprep.mubr.f32.mxu0 0.0
      %606 = vmatmul.mubr.f32.gmra.mrb[0].mxu0 %v440
      %v607 = vpop.f32.mrb[0].mxu0
      %v608 = vadd.f32 0.0, %v607
      %v609 = vpop.f32.mrb[0].mxu0
      %610 = vmatprep.mubr.f32.mxu0 0.0
      %611 = vmatmul.mubr.f32.gmra.mrb[0].mxu0 %v443
      %v612 = vpop.f32.mrb[0].mxu0
      %v613 = vadd.f32 0.0, %v612
      %v614 = vpop.f32.mrb[0].mxu0
      %615 = vmatprep.mubr.f32.mxu0 0.0
      %616 = vmatmul.mubr.f32.gmra.mrb[0].mxu0 %v446
      %v617 = vpop.f32.mrb[0].mxu0
      %v618 = vadd.f32 0.0, %v617
      %v619 = vpop.f32.mrb[0].mxu0
      %620 = vmatprep.mubr.f32.mxu0 0.0
      %621 = vmatmul.mubr.f32.gmra.mrb[0].mxu0 %v449
      %v622 = vpop.f32.mrb[0].mxu0
      %v623 = vadd.f32 0.0, %v622
      %v624 = vpop.f32.mrb[0].mxu0
      %625 = vmatprep.mubr.f32.mxu0 0.0
      %626 = vmatmul.mubr.f32.gmra.mrb[0].mxu0 %v452
      %v627 = vpop.f32.mrb[0].mxu0
      %v628 = vadd.f32 0.0, %v627
      %v629 = vpop.f32.mrb[0].mxu0
      %630 = vmatprep.mubr.f32.mxu0 0.0
      %631 = vmatmul.mubr.f32.gmra.mrb[0].mxu0 %v455
      %v632 = vpop.f32.mrb[0].mxu0
      %v633 = vadd.f32 0.0, %v632
      %v634 = vpop.f32.mrb[0].mxu0
      %635 = vmatprep.mubr.f32.mxu0 0.0
      %636 = vmatmul.mubr.f32.gmra.mrb[0].mxu0 %v458
      %v637 = vpop.f32.mrb[0].mxu0
      %v638 = vadd.f32 0.0, %v637
      %v639 = vpop.f32.mrb[0].mxu0
      %640 = vmatprep.mubr.f32.mxu0 0.0
      %641 = vmatmul.mubr.f32.gmra.mrb[0].mxu0 %v461
      %v642 = vpop.f32.mrb[0].mxu0
      %v643 = vadd.f32 0.0, %v642
      %v644 = vpop.f32.mrb[0].mxu0
      %645 = vmatprep.mubr.f32.mxu0 0.0
      %646 = vmatmul.mubr.f32.gmra.mrb[0].mxu0 %v464
      %v647 = vpop.f32.mrb[0].mxu0
      %v648 = vadd.f32 0.0, %v647
      %v649 = vpop.f32.mrb[0].mxu0
      %650 = vmatprep.mubr.f32.mxu0 0.0
      %651 = vmatmul.mubr.f32.gmra.mrb[0].mxu0 %v467
      %v652 = vpop.f32.mrb[0].mxu0
      %v653 = vadd.f32 0.0, %v652
      %v654 = vpop.f32.mrb[0].mxu0
      %655 = vmatprep.mubr.f32.mxu0 0.0
      %656 = vmatmul.mubr.f32.gmra.mrb[0].mxu0 %v470
      %v657 = vpop.f32.mrb[0].mxu0
      %v658 = vadd.f32 0.0, %v657
      %v659 = vpop.f32.mrb[0].mxu0
      %660 = vmatprep.mubr.f32.mxu0 0.0
      %661 = vmatmul.mubr.f32.gmra.mrb[0].mxu0 %v473
      %v662 = vpop.f32.mrb[0].mxu0
      %v663 = vadd.f32 0.0, %v662
      %v664 = vpop.f32.mrb[0].mxu0
      %665 = vmatprep.mubr.f32.mxu0 0.0
      %666 = vmatmul.mubr.f32.gmra.mrb[0].mxu0 %v476
      %v667 = vpop.f32.mrb[0].mxu0
      %v668 = vadd.f32 0.0, %v667
      %v669 = vpop.f32.mrb[0].mxu0
      %670 = vmatprep.mubr.f32.mxu0 0.0
      %671 = vmatmul.mubr.f32.gmra.mrb[0].mxu0 %v479
      %v672 = vpop.f32.mrb[0].mxu0
      %v673 = vadd.f32 0.0, %v672
      %v674 = vpop.f32.mrb[0].mxu0
      %675 = vmatprep.mubr.f32.mxu0 0.0
      %676 = vmatmul.mubr.f32.gmra.mrb[0].mxu0 %v482
      %v677 = vpop.f32.mrb[0].mxu0
      %v678 = vadd.f32 0.0, %v677
      %v679 = vpop.f32.mrb[0].mxu0
      %680 = vmatprep.mubr.f32.mxu0 0.0
      %681 = vmatmul.mubr.f32.gmra.mrb[0].mxu0 %v485
      %v682 = vpop.f32.mrb[0].mxu0
      %v683 = vadd.f32 0.0, %v682
      %v684 = vpop.f32.mrb[0].mxu0
      %685 = vmatprep.mubr.f32.mxu0 0.0
      %686 = vmatmul.mubr.f32.gmra.mrb[0].mxu0 %v488
      %v687 = vpop.f32.mrb[0].mxu0
      %v688 = vadd.f32 0.0, %v687
      %v689 = vpop.f32.mrb[0].mxu0
      %690 = vmatprep.mubr.f32.mxu0 0.0
      %691 = vmatmul.mubr.f32.gmra.mrb[0].mxu0 %v491
      %v692 = vpop.f32.mrb[0].mxu0
      %v693 = vadd.f32 0.0, %v692
      %v694 = vpop.f32.mrb[0].mxu0
      %695 = vmatprep.mubr.f32.mxu0 0.0
      %696 = vmatmul.mubr.f32.gmra.mrb[0].mxu0 %v494
      %v697 = vpop.f32.mrb[0].mxu0
      %v698 = vadd.f32 0.0, %v697
      %v699 = vpop.f32.mrb[0].mxu0
      %700 = vmatprep.mubr.f32.mxu0 0.0
      %701 = vmatmul.mubr.f32.gmra.mrb[0].mxu0 %v497
      %v702 = vpop.f32.mrb[0].mxu0
      %v703 = vadd.f32 0.0, %v702
      %v704 = vpop.f32.mrb[0].mxu0
      %705 = vmatprep.mubr.f32.mxu0 0.0
      %706 = vmatmul.mubr.f32.gmra.mrb[0].mxu0 %v500
      %v707 = vpop.f32.mrb[0].mxu0
      %v708 = vadd.f32 0.0, %v707
      %v709 = vpop.f32.mrb[0].mxu0
      %710 = vmatprep.mubr.f32.mxu0 0.0
      %711 = vmatmul.mubr.f32.gmra.mrb[0].mxu0 %v503
      %v712 = vpop.f32.mrb[0].mxu0
      %v713 = vadd.f32 0.0, %v712
      %v714 = vpop.f32.mrb[0].mxu0
      %715 = vmatprep.mubr.f32.mxu0 0.0
      %716 = vmatmul.mubr.f32.gmra.mrb[0].mxu0 %v506
      %v717 = vpop.f32.mrb[0].mxu0
      %v718 = vadd.f32 0.0, %v717
      %v719 = vpop.f32.mrb[0].mxu0
      %720 = vmatprep.mubr.f32.mxu0 0.0
      %721 = vmatmul.mubr.f32.gmra.mrb[0].mxu0 %v509
      %v722 = vpop.f32.mrb[0].mxu0
      %v723 = vadd.f32 0.0, %v722
      %v724 = vpop.f32.mrb[0].mxu0
      %725 = vmatprep.mubr.f32.mxu0 0.0
      %726 = vmatmul.mubr.f32.gmra.mrb[0].mxu0 %v512
      %v727 = vpop.f32.mrb[0].mxu0
      %v728 = vadd.f32 0.0, %v727
      %v729 = vpop.f32.mrb[0].mxu0
      %730 = vmatprep.mubr.f32.mxu0 0.0
      %731 = vmatmul.mubr.f32.gmra.mrb[0].mxu0 %v515
      %v732 = vpop.f32.mrb[0].mxu0
      %v733 = vadd.f32 0.0, %v732
      %v734 = vpop.f32.mrb[0].mxu0
      %735 = vmatprep.mubr.f32.mxu0 0.0
      %736 = vmatmul.mubr.f32.gmra.mrb[0].mxu0 %v518
      %v737 = vpop.f32.mrb[0].mxu0
      %v738 = vadd.f32 0.0, %v737
      %v739 = vpop.f32.mrb[0].mxu0
      %740 = vmatprep.mubr.f32.mxu0 0.0
      %741 = vmatmul.mubr.f32.gmra.mrb[0].mxu0 %v521
      %v742 = vpop.f32.mrb[0].mxu0
      %v743 = vadd.f32 0.0, %v742
      %v744 = vpop.f32.mrb[0].mxu0
      %745 = vmatprep.mubr.f32.mxu0 0.0
      %746 = vmatmul.mubr.f32.gmra.mrb[0].mxu0 %v524
      %v747 = vpop.f32.mrb[0].mxu0
      %v748 = vadd.f32 0.0, %v747
      %v749 = vpop.f32.mrb[0].mxu0
      %750 = vdwg.mxu0
      %v752 = vsel %vm225, %v363, 0
      %v755 = vsel %vm225, %v364, 0
      %v758 = vsel %vm225, %v365, 0
      %v761 = vsel %vm225, %v366, 0
      %v764 = vsel %vm225, %v367, 0
      %v767 = vsel %vm225, %v368, 0
      %v770 = vsel %vm225, %v369, 0
      %v773 = vsel %vm225, %v370, 0
      %v776 = vsel %vm225, %v371, 0
      %v779 = vsel %vm225, %v372, 0
      %v782 = vsel %vm225, %v373, 0
      %v785 = vsel %vm225, %v374, 0
      %v788 = vsel %vm225, %v375, 0
      %v791 = vsel %vm225, %v376, 0
      %v794 = vsel %vm225, %v377, 0
      %v797 = vsel %vm225, %v378, 0
      %v800 = vsel %vm225, %v379, 0
      %v803 = vsel %vm225, %v380, 0
      %v806 = vsel %vm225, %v381, 0
      %v809 = vsel %vm225, %v382, 0
      %v812 = vsel %vm225, %v383, 0
      %v815 = vsel %vm225, %v384, 0
      %v818 = vsel %vm225, %v385, 0
      %v821 = vsel %vm225, %v386, 0
      %v824 = vsel %vm225, %v387, 0
      %v827 = vsel %vm225, %v388, 0
      %v830 = vsel %vm225, %v389, 0
      %v833 = vsel %vm225, %v390, 0
      %v836 = vsel %vm225, %v391, 0
      %v839 = vsel %vm225, %v392, 0
      %v842 = vsel %vm225, %v393, 0
      %v845 = vsel %vm225, %v394, 0
      %847 = vmatprep.subr.mxu0 0.0
      %848 = vmatpush1.msra.mxu0 %v395
      %849 = vmatprep.subr.mxu0 0.0
      %850 = vmatpush1.msra.mxu0 0.0
      %851 = vmatprep.subr.mxu0 0.0
      %852 = vmatpush1.msra.mxu0 0.0
      %853 = vmatprep.subr.mxu0 0.0
      %854 = vmatpush1.msra.mxu0 0.0
      %855 = vmatprep.subr.mxu0 0.0
      %856 = vmatpush1.msra.mxu0 0.0
      %857 = vmatprep.subr.mxu0 0.0
      %858 = vmatpush1.msra.mxu0 0.0
      %859 = vmatprep.subr.mxu0 0.0
      %860 = vmatpush1.msra.mxu0 0.0
      %861 = vmatprep.subr.mxu0 0.0
      %862 = vmatpush1.msra.mxu0 0.0
      %863 = vmatprep.subr.mxu0 0.0
      %864 = vmatpush1.msra.mxu0 0.0
      %865 = vmatprep.subr.mxu0 0.0
      %866 = vmatpush1.msra.mxu0 0.0
      %867 = vmatprep.subr.mxu0 0.0
      %868 = vmatpush1.msra.mxu0 0.0
      %869 = vmatprep.subr.mxu0 0.0
      %870 = vmatpush1.msra.mxu0 0.0
      %871 = vmatprep.subr.mxu0 0.0
      %872 = vmatpush1.msra.mxu0 0.0
      %873 = vmatprep.subr.mxu0 0.0
      %874 = vmatpush1.msra.mxu0 0.0
      %875 = vmatprep.subr.mxu0 0.0
      %876 = vmatpush1.msra.mxu0 0.0
      %877 = vmatprep.subr.mxu0 0.0
      %878 = vmatpush1.msra.mxu0 0.0
      %879 = vmatprep.subr.mxu0 0.0
      %880 = vmatpush1.msra.mxu0 0.0
      %881 = vmatprep.subr.mxu0 0.0
      %882 = vmatpush1.msra.mxu0 0.0
      %883 = vmatprep.subr.mxu0 0.0
      %884 = vmatpush1.msra.mxu0 0.0
      %885 = vmatprep.subr.mxu0 0.0
      %886 = vmatpush1.msra.mxu0 0.0
      %887 = vmatprep.subr.mxu0 0.0
      %888 = vmatpush1.msra.mxu0 0.0
      %889 = vmatprep.subr.mxu0 0.0
      %890 = vmatpush1.msra.mxu0 0.0
      %891 = vmatprep.subr.mxu0 0.0
      %892 = vmatpush1.msra.mxu0 0.0
      %893 = vmatprep.subr.mxu0 0.0
      %894 = vmatpush1.msra.mxu0 0.0
      %895 = vmatprep.subr.mxu0 0.0
      %896 = vmatpush1.msra.mxu0 0.0
      %897 = vmatprep.subr.mxu0 0.0
      %898 = vmatpush1.msra.mxu0 0.0
      %899 = vmatprep.subr.mxu0 0.0
      %900 = vmatpush1.msra.mxu0 0.0
      %901 = vmatprep.subr.mxu0 0.0
      %902 = vmatpush1.msra.mxu0 0.0
      %903 = vmatprep.subr.mxu0 0.0
      %904 = vmatpush1.msra.mxu0 0.0
      %905 = vmatprep.subr.mxu0 0.0
      %906 = vmatpush1.msra.mxu0 0.0
      %907 = vmatprep.subr.mxu0 0.0
      %908 = vmatpush1.msra.mxu0 0.0
      %909 = vmatprep.subr.mxu0 0.0
      %910 = vmatpush1.msra.mxu0 0.0
      %911 = vmatprep.mubr.f32.mxu0 0.0
      %912 = vmatmul.mubr.f32.gmra.mrb[0].mxu0 %v752
      %v913 = vpop.f32.mrb[0].mxu0
      %v914 = vadd.f32 %v593, %v913
      %v915 = vpop.f32.mrb[0].mxu0
      %916 = vmatprep.mubr.f32.mxu0 0.0
      %917 = vmatmul.mubr.f32.gmra.mrb[0].mxu0 %v755
      %v918 = vpop.f32.mrb[0].mxu0
      %v919 = vadd.f32 %v598, %v918
      %v920 = vpop.f32.mrb[0].mxu0
      %921 = vmatprep.mubr.f32.mxu0 0.0
      %922 = vmatmul.mubr.f32.gmra.mrb[0].mxu0 %v758
      %v923 = vpop.f32.mrb[0].mxu0
      %v924 = vadd.f32 %v603, %v923
      %v925 = vpop.f32.mrb[0].mxu0
      %926 = vmatprep.mubr.f32.mxu0 0.0
      %927 = vmatmul.mubr.f32.gmra.mrb[0].mxu0 %v761
      %v928 = vpop.f32.mrb[0].mxu0
      %v929 = vadd.f32 %v608, %v928
      %v930 = vpop.f32.mrb[0].mxu0
      %931 = vmatprep.mubr.f32.mxu0 0.0
      %932 = vmatmul.mubr.f32.gmra.mrb[0].mxu0 %v764
      %v933 = vpop.f32.mrb[0].mxu0
      %v934 = vadd.f32 %v613, %v933
      %v935 = vpop.f32.mrb[0].mxu0
      %936 = vmatprep.mubr.f32.mxu0 0.0
      %937 = vmatmul.mubr.f32.gmra.mrb[0].mxu0 %v767
      %v938 = vpop.f32.mrb[0].mxu0
      %v939 = vadd.f32 %v618, %v938
      %v940 = vpop.f32.mrb[0].mxu0
      %941 = vmatprep.mubr.f32.mxu0 0.0
      %942 = vmatmul.mubr.f32.gmra.mrb[0].mxu0 %v770
      %v943 = vpop.f32.mrb[0].mxu0
      %v944 = vadd.f32 %v623, %v943
      %v945 = vpop.f32.mrb[0].mxu0
      %946 = vmatprep.mubr.f32.mxu0 0.0
      %947 = vmatmul.mubr.f32.gmra.mrb[0].mxu0 %v773
      %v948 = vpop.f32.mrb[0].mxu0
      %v949 = vadd.f32 %v628, %v948
      %v950 = vpop.f32.mrb[0].mxu0
      %951 = vmatprep.mubr.f32.mxu0 0.0
      %952 = vmatmul.mubr.f32.gmra.mrb[0].mxu0 %v776
      %v953 = vpop.f32.mrb[0].mxu0
      %v954 = vadd.f32 %v633, %v953
      %v955 = vpop.f32.mrb[0].mxu0
      %956 = vmatprep.mubr.f32.mxu0 0.0
      %957 = vmatmul.mubr.f32.gmra.mrb[0].mxu0 %v779
      %v958 = vpop.f32.mrb[0].mxu0
      %v959 = vadd.f32 %v638, %v958
      %v960 = vpop.f32.mrb[0].mxu0
      %961 = vmatprep.mubr.f32.mxu0 0.0
      %962 = vmatmul.mubr.f32.gmra.mrb[0].mxu0 %v782
      %v963 = vpop.f32.mrb[0].mxu0
      %v964 = vadd.f32 %v643, %v963
      %v965 = vpop.f32.mrb[0].mxu0
      %966 = vmatprep.mubr.f32.mxu0 0.0
      %967 = vmatmul.mubr.f32.gmra.mrb[0].mxu0 %v785
      %v968 = vpop.f32.mrb[0].mxu0
      %v969 = vadd.f32 %v648, %v968
      %v970 = vpop.f32.mrb[0].mxu0
      %971 = vmatprep.mubr.f32.mxu0 0.0
      %972 = vmatmul.mubr.f32.gmra.mrb[0].mxu0 %v788
      %v973 = vpop.f32.mrb[0].mxu0
      %v974 = vadd.f32 %v653, %v973
      %v975 = vpop.f32.mrb[0].mxu0
      %976 = vmatprep.mubr.f32.mxu0 0.0
      %977 = vmatmul.mubr.f32.gmra.mrb[0].mxu0 %v791
      %v978 = vpop.f32.mrb[0].mxu0
      %v979 = vadd.f32 %v658, %v978
      %v980 = vpop.f32.mrb[0].mxu0
      %981 = vmatprep.mubr.f32.mxu0 0.0
      %982 = vmatmul.mubr.f32.gmra.mrb[0].mxu0 %v794
      %v983 = vpop.f32.mrb[0].mxu0
      %v984 = vadd.f32 %v663, %v983
      %v985 = vpop.f32.mrb[0].mxu0
      %986 = vmatprep.mubr.f32.mxu0 0.0
      %987 = vmatmul.mubr.f32.gmra.mrb[0].mxu0 %v797
      %v988 = vpop.f32.mrb[0].mxu0
      %v989 = vadd.f32 %v668, %v988
      %v990 = vpop.f32.mrb[0].mxu0
      %991 = vmatprep.mubr.f32.mxu0 0.0
      %992 = vmatmul.mubr.f32.gmra.mrb[0].mxu0 %v800
      %v993 = vpop.f32.mrb[0].mxu0
      %v994 = vadd.f32 %v673, %v993
      %v995 = vpop.f32.mrb[0].mxu0
      %996 = vmatprep.mubr.f32.mxu0 0.0
      %997 = vmatmul.mubr.f32.gmra.mrb[0].mxu0 %v803
      %v998 = vpop.f32.mrb[0].mxu0
      %v999 = vadd.f32 %v678, %v998
      %v1000 = vpop.f32.mrb[0].mxu0
      %1001 = vmatprep.mubr.f32.mxu0 0.0
      %1002 = vmatmul.mubr.f32.gmra.mrb[0].mxu0 %v806
      %v1003 = vpop.f32.mrb[0].mxu0
      %v1004 = vadd.f32 %v683, %v1003
      %v1005 = vpop.f32.mrb[0].mxu0
      %1006 = vmatprep.mubr.f32.mxu0 0.0
      %1007 = vmatmul.mubr.f32.gmra.mrb[0].mxu0 %v809
      %v1008 = vpop.f32.mrb[0].mxu0
      %v1009 = vadd.f32 %v688, %v1008
      %v1010 = vpop.f32.mrb[0].mxu0
      %1011 = vmatprep.mubr.f32.mxu0 0.0
      %1012 = vmatmul.mubr.f32.gmra.mrb[0].mxu0 %v812
      %v1013 = vpop.f32.mrb[0].mxu0
      %v1014 = vadd.f32 %v693, %v1013
      %v1015 = vpop.f32.mrb[0].mxu0
      %1016 = vmatprep.mubr.f32.mxu0 0.0
      %1017 = vmatmul.mubr.f32.gmra.mrb[0].mxu0 %v815
      %v1018 = vpop.f32.mrb[0].mxu0
      %v1019 = vadd.f32 %v698, %v1018
      %v1020 = vpop.f32.mrb[0].mxu0
      %1021 = vmatprep.mubr.f32.mxu0 0.0
      %1022 = vmatmul.mubr.f32.gmra.mrb[0].mxu0 %v818
      %v1023 = vpop.f32.mrb[0].mxu0
      %v1024 = vadd.f32 %v703, %v1023
      %v1025 = vpop.f32.mrb[0].mxu0
      %1026 = vmatprep.mubr.f32.mxu0 0.0
      %1027 = vmatmul.mubr.f32.gmra.mrb[0].mxu0 %v821
      %v1028 = vpop.f32.mrb[0].mxu0
      %v1029 = vadd.f32 %v708, %v1028
      %v1030 = vpop.f32.mrb[0].mxu0
      %1031 = vmatprep.mubr.f32.mxu0 0.0
      %1032 = vmatmul.mubr.f32.gmra.mrb[0].mxu0 %v824
      %v1033 = vpop.f32.mrb[0].mxu0
      %v1034 = vadd.f32 %v713, %v1033
      %v1035 = vpop.f32.mrb[0].mxu0
      %1036 = vmatprep.mubr.f32.mxu0 0.0
      %1037 = vmatmul.mubr.f32.gmra.mrb[0].mxu0 %v827
      %v1038 = vpop.f32.mrb[0].mxu0
      %v1039 = vadd.f32 %v718, %v1038
      %v1040 = vpop.f32.mrb[0].mxu0
      %1041 = vmatprep.mubr.f32.mxu0 0.0
      %1042 = vmatmul.mubr.f32.gmra.mrb[0].mxu0 %v830
      %v1043 = vpop.f32.mrb[0].mxu0
      %v1044 = vadd.f32 %v723, %v1043
      %v1045 = vpop.f32.mrb[0].mxu0
      %1046 = vmatprep.mubr.f32.mxu0 0.0
      %1047 = vmatmul.mubr.f32.gmra.mrb[0].mxu0 %v833
      %v1048 = vpop.f32.mrb[0].mxu0
      %v1049 = vadd.f32 %v728, %v1048
      %v1050 = vpop.f32.mrb[0].mxu0
      %1051 = vmatprep.mubr.f32.mxu0 0.0
      %1052 = vmatmul.mubr.f32.gmra.mrb[0].mxu0 %v836
      %v1053 = vpop.f32.mrb[0].mxu0
      %v1054 = vadd.f32 %v733, %v1053
      %v1055 = vpop.f32.mrb[0].mxu0
      %1056 = vmatprep.mubr.f32.mxu0 0.0
      %1057 = vmatmul.mubr.f32.gmra.mrb[0].mxu0 %v839
      %v1058 = vpop.f32.mrb[0].mxu0
      %v1059 = vadd.f32 %v738, %v1058
      %v1060 = vpop.f32.mrb[0].mxu0
      %1061 = vmatprep.mubr.f32.mxu0 0.0
      %1062 = vmatmul.mubr.f32.gmra.mrb[0].mxu0 %v842
      %v1063 = vpop.f32.mrb[0].mxu0
      %v1064 = vadd.f32 %v743, %v1063
      %v1065 = vpop.f32.mrb[0].mxu0
      %1066 = vmatprep.mubr.f32.mxu0 0.0
      %1067 = vmatmul.mubr.f32.gmra.mrb[0].mxu0 %v845
      %v1068 = vpop.f32.mrb[0].mxu0
      %v1069 = vadd.f32 %v748, %v1068
      %v1070 = vpop.f32.mrb[0].mxu0
      %1071 = vdwg.mxu0
      %v1072 = vld [vmem:[#allocation2 + $0x9] sm:$0xff]
      %v1073 = vld [vmem:[#allocation2 + $0x11] sm:$0xff]
      %v1074 = vld [vmem:[#allocation2 + $0x29] sm:$0xff]
      %v1075 = vld [vmem:[#allocation2 + $0x31] sm:$0xff]
      %v1076 = vld [vmem:[#allocation2 + $0x49] sm:$0xff]
      %v1077 = vld [vmem:[#allocation2 + $0x51] sm:$0xff]
      %v1078 = vld [vmem:[#allocation2 + $0x69] sm:$0xff]
      %v1079 = vld [vmem:[#allocation2 + $0x71] sm:$0xff]
      %v1080 = vld [vmem:[#allocation2 + $0x89] sm:$0xff]
      %v1081 = vld [vmem:[#allocation2 + $0x91] sm:$0xff]
      %v1082 = vld [vmem:[#allocation2 + $0xa9] sm:$0xff]
      %v1083 = vld [vmem:[#allocation2 + $0xb1] sm:$0xff]
      %v1084 = vld [vmem:[#allocation2 + $0xc9] sm:$0xff]
      %v1085 = vld [vmem:[#allocation2 + $0xd1] sm:$0xff]
      %v1086 = vld [vmem:[#allocation2 + $0xe9] sm:$0xff]
      %v1087 = vld [vmem:[#allocation2 + $0xf1] sm:$0xff]
      %v1088 = vld [vmem:[#allocation2 + $0x109] sm:$0xff]
      %v1089 = vld [vmem:[#allocation2 + $0x111] sm:$0xff]
      %v1090 = vld [vmem:[#allocation2 + $0x129] sm:$0xff]
      %v1091 = vld [vmem:[#allocation2 + $0x131] sm:$0xff]
      %v1092 = vld [vmem:[#allocation2 + $0x149] sm:$0xff]
      %v1093 = vld [vmem:[#allocation2 + $0x151] sm:$0xff]
      %v1094 = vld [vmem:[#allocation2 + $0x169] sm:$0xff]
      %v1095 = vld [vmem:[#allocation2 + $0x171] sm:$0xff]
      %v1096 = vld [vmem:[#allocation2 + $0x189] sm:$0xff]
      %v1097 = vld [vmem:[#allocation2 + $0x191] sm:$0xff]
      %v1098 = vld [vmem:[#allocation2 + $0x1a9] sm:$0xff]
      %v1099 = vld [vmem:[#allocation2 + $0x1b1] sm:$0xff]
      %v1100 = vld [vmem:[#allocation2 + $0x1c9] sm:$0xff]
      %v1101 = vld [vmem:[#allocation2 + $0x1d1] sm:$0xff]
      %v1102 = vld [vmem:[#allocation2 + $0x1e9] sm:$0xff]
      %v1103 = vld [vmem:[#allocation2 + $0x1f1] sm:$0xff]
      %s1104 = scalar_lea.vmem %s1, 16
      %v1105 = vld [vmem:[%s1104] sm:$0xff]
      %v1107 = vsel %vm225, %v1072, 0
      %v1110 = vsel %vm225, %v1073, 0
      %v1113 = vsel %vm225, %v1074, 0
      %v1116 = vsel %vm225, %v1075, 0
      %v1119 = vsel %vm225, %v1076, 0
      %v1122 = vsel %vm225, %v1077, 0
      %v1125 = vsel %vm225, %v1078, 0
      %v1128 = vsel %vm225, %v1079, 0
      %v1131 = vsel %vm225, %v1080, 0
      %v1134 = vsel %vm225, %v1081, 0
      %v1137 = vsel %vm225, %v1082, 0
      %v1140 = vsel %vm225, %v1083, 0
      %v1143 = vsel %vm225, %v1084, 0
      %v1146 = vsel %vm225, %v1085, 0
      %v1149 = vsel %vm225, %v1086, 0
      %v1152 = vsel %vm225, %v1087, 0
      %v1155 = vsel %vm225, %v1088, 0
      %v1158 = vsel %vm225, %v1089, 0
      %v1161 = vsel %vm225, %v1090, 0
      %v1164 = vsel %vm225, %v1091, 0
      %v1167 = vsel %vm225, %v1092, 0
      %v1170 = vsel %vm225, %v1093, 0
      %v1173 = vsel %vm225, %v1094, 0
      %v1176 = vsel %vm225, %v1095, 0
      %v1179 = vsel %vm225, %v1096, 0
      %v1182 = vsel %vm225, %v1097, 0
      %v1185 = vsel %vm225, %v1098, 0
      %v1188 = vsel %vm225, %v1099, 0
      %v1191 = vsel %vm225, %v1100, 0
      %v1194 = vsel %vm225, %v1101, 0
      %v1197 = vsel %vm225, %v1102, 0
      %v1200 = vsel %vm225, %v1103, 0
      %1202 = vmatprep.subr.mxu0 0.0
      %1203 = vmatpush1.msra.mxu0 %v1105
      %1204 = vmatprep.subr.mxu0 0.0
      %1205 = vmatpush1.msra.mxu0 0.0
      %1206 = vmatprep.subr.mxu0 0.0
      %1207 = vmatpush1.msra.mxu0 0.0
      %1208 = vmatprep.subr.mxu0 0.0
      %1209 = vmatpush1.msra.mxu0 0.0
      %1210 = vmatprep.subr.mxu0 0.0
      %1211 = vmatpush1.msra.mxu0 0.0
      %1212 = vmatprep.subr.mxu0 0.0
      %1213 = vmatpush1.msra.mxu0 0.0
      %1214 = vmatprep.subr.mxu0 0.0
      %1215 = vmatpush1.msra.mxu0 0.0
      %1216 = vmatprep.subr.mxu0 0.0
      %1217 = vmatpush1.msra.mxu0 0.0
      %1218 = vmatprep.subr.mxu0 0.0
      %1219 = vmatpush1.msra.mxu0 0.0
      %1220 = vmatprep.subr.mxu0 0.0
      %1221 = vmatpush1.msra.mxu0 0.0
      %1222 = vmatprep.subr.mxu0 0.0
      %1223 = vmatpush1.msra.mxu0 0.0
      %1224 = vmatprep.subr.mxu0 0.0
      %1225 = vmatpush1.msra.mxu0 0.0
      %1226 = vmatprep.subr.mxu0 0.0
      %1227 = vmatpush1.msra.mxu0 0.0
      %1228 = vmatprep.subr.mxu0 0.0
      %1229 = vmatpush1.msra.mxu0 0.0
      %1230 = vmatprep.subr.mxu0 0.0
      %1231 = vmatpush1.msra.mxu0 0.0
      %1232 = vmatprep.subr.mxu0 0.0
      %1233 = vmatpush1.msra.mxu0 0.0
      %1234 = vmatprep.subr.mxu0 0.0
      %1235 = vmatpush1.msra.mxu0 0.0
      %1236 = vmatprep.subr.mxu0 0.0
      %1237 = vmatpush1.msra.mxu0 0.0
      %1238 = vmatprep.subr.mxu0 0.0
      %1239 = vmatpush1.msra.mxu0 0.0
      %1240 = vmatprep.subr.mxu0 0.0
      %1241 = vmatpush1.msra.mxu0 0.0
      %1242 = vmatprep.subr.mxu0 0.0
      %1243 = vmatpush1.msra.mxu0 0.0
      %1244 = vmatprep.subr.mxu0 0.0
      %1245 = vmatpush1.msra.mxu0 0.0
      %1246 = vmatprep.subr.mxu0 0.0
      %1247 = vmatpush1.msra.mxu0 0.0
      %1248 = vmatprep.subr.mxu0 0.0
      %1249 = vmatpush1.msra.mxu0 0.0
      %1250 = vmatprep.subr.mxu0 0.0
      %1251 = vmatpush1.msra.mxu0 0.0
      %1252 = vmatprep.subr.mxu0 0.0
      %1253 = vmatpush1.msra.mxu0 0.0
      %1254 = vmatprep.subr.mxu0 0.0
      %1255 = vmatpush1.msra.mxu0 0.0
      %1256 = vmatprep.subr.mxu0 0.0
      %1257 = vmatpush1.msra.mxu0 0.0
      %1258 = vmatprep.subr.mxu0 0.0
      %1259 = vmatpush1.msra.mxu0 0.0
      %1260 = vmatprep.subr.mxu0 0.0
      %1261 = vmatpush1.msra.mxu0 0.0
      %1262 = vmatprep.subr.mxu0 0.0
      %1263 = vmatpush1.msra.mxu0 0.0
      %1264 = vmatprep.subr.mxu0 0.0
      %1265 = vmatpush1.msra.mxu0 0.0
      %1266 = vmatprep.mubr.f32.mxu0 0.0
      %1267 = vmatmul.mubr.f32.gmra.mrb[0].mxu0 %v1107
      %v1268 = vpop.f32.mrb[0].mxu0
      %v1269 = vadd.f32 0.0, %v1268
      %v1270 = vpop.f32.mrb[0].mxu0
      %1271 = vmatprep.mubr.f32.mxu0 0.0
      %1272 = vmatmul.mubr.f32.gmra.mrb[0].mxu0 %v1110
      %v1273 = vpop.f32.mrb[0].mxu0
      %v1274 = vadd.f32 0.0, %v1273
      %v1275 = vpop.f32.mrb[0].mxu0
      %1276 = vmatprep.mubr.f32.mxu0 0.0
      %1277 = vmatmul.mubr.f32.gmra.mrb[0].mxu0 %v1113
      %v1278 = vpop.f32.mrb[0].mxu0
      %v1279 = vadd.f32 0.0, %v1278
      %v1280 = vpop.f32.mrb[0].mxu0
      %1281 = vmatprep.mubr.f32.mxu0 0.0
      %1282 = vmatmul.mubr.f32.gmra.mrb[0].mxu0 %v1116
      %v1283 = vpop.f32.mrb[0].mxu0
      %v1284 = vadd.f32 0.0, %v1283
      %v1285 = vpop.f32.mrb[0].mxu0
      %1286 = vmatprep.mubr.f32.mxu0 0.0
      %1287 = vmatmul.mubr.f32.gmra.mrb[0].mxu0 %v1119
      %v1288 = vpop.f32.mrb[0].mxu0
      %v1289 = vadd.f32 0.0, %v1288
      %v1290 = vpop.f32.mrb[0].mxu0
      %1291 = vmatprep.mubr.f32.mxu0 0.0
      %1292 = vmatmul.mubr.f32.gmra.mrb[0].mxu0 %v1122
      %v1293 = vpop.f32.mrb[0].mxu0
      %v1294 = vadd.f32 0.0, %v1293
      %v1295 = vpop.f32.mrb[0].mxu0
      %1296 = vmatprep.mubr.f32.mxu0 0.0
      %1297 = vmatmul.mubr.f32.gmra.mrb[0].mxu0 %v1125
      %v1298 = vpop.f32.mrb[0].mxu0
      %v1299 = vadd.f32 0.0, %v1298
      %v1300 = vpop.f32.mrb[0].mxu0
      %1301 = vmatprep.mubr.f32.mxu0 0.0
      %1302 = vmatmul.mubr.f32.gmra.mrb[0].mxu0 %v1128
      %v1303 = vpop.f32.mrb[0].mxu0
      %v1304 = vadd.f32 0.0, %v1303
      %v1305 = vpop.f32.mrb[0].mxu0
      %1306 = vmatprep.mubr.f32.mxu0 0.0
      %1307 = vmatmul.mubr.f32.gmra.mrb[0].mxu0 %v1131
      %v1308 = vpop.f32.mrb[0].mxu0
      %v1309 = vadd.f32 0.0, %v1308
      %v1310 = vpop.f32.mrb[0].mxu0
      %1311 = vmatprep.mubr.f32.mxu0 0.0
      %1312 = vmatmul.mubr.f32.gmra.mrb[0].mxu0 %v1134
      %v1313 = vpop.f32.mrb[0].mxu0
      %v1314 = vadd.f32 0.0, %v1313
      %v1315 = vpop.f32.mrb[0].mxu0
      %1316 = vmatprep.mubr.f32.mxu0 0.0
      %1317 = vmatmul.mubr.f32.gmra.mrb[0].mxu0 %v1137
      %v1318 = vpop.f32.mrb[0].mxu0
      %v1319 = vadd.f32 0.0, %v1318
      %v1320 = vpop.f32.mrb[0].mxu0
      %1321 = vmatprep.mubr.f32.mxu0 0.0
      %1322 = vmatmul.mubr.f32.gmra.mrb[0].mxu0 %v1140
      %v1323 = vpop.f32.mrb[0].mxu0
      %v1324 = vadd.f32 0.0, %v1323
      %v1325 = vpop.f32.mrb[0].mxu0
      %1326 = vmatprep.mubr.f32.mxu0 0.0
      %1327 = vmatmul.mubr.f32.gmra.mrb[0].mxu0 %v1143
      %v1328 = vpop.f32.mrb[0].mxu0
      %v1329 = vadd.f32 0.0, %v1328
      %v1330 = vpop.f32.mrb[0].mxu0
      %1331 = vmatprep.mubr.f32.mxu0 0.0
      %1332 = vmatmul.mubr.f32.gmra.mrb[0].mxu0 %v1146
      %v1333 = vpop.f32.mrb[0].mxu0
      %v1334 = vadd.f32 0.0, %v1333
      %v1335 = vpop.f32.mrb[0].mxu0
      %1336 = vmatprep.mubr.f32.mxu0 0.0
      %1337 = vmatmul.mubr.f32.gmra.mrb[0].mxu0 %v1149
      %v1338 = vpop.f32.mrb[0].mxu0
      %v1339 = vadd.f32 0.0, %v1338
      %v1340 = vpop.f32.mrb[0].mxu0
      %1341 = vmatprep.mubr.f32.mxu0 0.0
      %1342 = vmatmul.mubr.f32.gmra.mrb[0].mxu0 %v1152
      %v1343 = vpop.f32.mrb[0].mxu0
      %v1344 = vadd.f32 0.0, %v1343
      %v1345 = vpop.f32.mrb[0].mxu0
      %1346 = vmatprep.mubr.f32.mxu0 0.0
      %1347 = vmatmul.mubr.f32.gmra.mrb[0].mxu0 %v1155
      %v1348 = vpop.f32.mrb[0].mxu0
      %v1349 = vadd.f32 0.0, %v1348
      %v1350 = vpop.f32.mrb[0].mxu0
      %1351 = vmatprep.mubr.f32.mxu0 0.0
      %1352 = vmatmul.mubr.f32.gmra.mrb[0].mxu0 %v1158
      %v1353 = vpop.f32.mrb[0].mxu0
      %v1354 = vadd.f32 0.0, %v1353
      %v1355 = vpop.f32.mrb[0].mxu0
      %1356 = vmatprep.mubr.f32.mxu0 0.0
      %1357 = vmatmul.mubr.f32.gmra.mrb[0].mxu0 %v1161
      %v1358 = vpop.f32.mrb[0].mxu0
      %v1359 = vadd.f32 0.0, %v1358
      %v1360 = vpop.f32.mrb[0].mxu0
      %1361 = vmatprep.mubr.f32.mxu0 0.0
      %1362 = vmatmul.mubr.f32.gmra.mrb[0].mxu0 %v1164
      %v1363 = vpop.f32.mrb[0].mxu0
      %v1364 = vadd.f32 0.0, %v1363
      %v1365 = vpop.f32.mrb[0].mxu0
      %1366 = vmatprep.mubr.f32.mxu0 0.0
      %1367 = vmatmul.mubr.f32.gmra.mrb[0].mxu0 %v1167
      %v1368 = vpop.f32.mrb[0].mxu0
      %v1369 = vadd.f32 0.0, %v1368
      %v1370 = vpop.f32.mrb[0].mxu0
      %1371 = vmatprep.mubr.f32.mxu0 0.0
      %1372 = vmatmul.mubr.f32.gmra.mrb[0].mxu0 %v1170
      %v1373 = vpop.f32.mrb[0].mxu0
      %v1374 = vadd.f32 0.0, %v1373
      %v1375 = vpop.f32.mrb[0].mxu0
      %1376 = vmatprep.mubr.f32.mxu0 0.0
      %1377 = vmatmul.mubr.f32.gmra.mrb[0].mxu0 %v1173
      %v1378 = vpop.f32.mrb[0].mxu0
      %v1379 = vadd.f32 0.0, %v1378
      %v1380 = vpop.f32.mrb[0].mxu0
      %1381 = vmatprep.mubr.f32.mxu0 0.0
      %1382 = vmatmul.mubr.f32.gmra.mrb[0].mxu0 %v1176
      %v1383 = vpop.f32.mrb[0].mxu0
      %v1384 = vadd.f32 0.0, %v1383
      %v1385 = vpop.f32.mrb[0].mxu0
      %1386 = vmatprep.mubr.f32.mxu0 0.0
      %1387 = vmatmul.mubr.f32.gmra.mrb[0].mxu0 %v1179
      %v1388 = vpop.f32.mrb[0].mxu0
      %v1389 = vadd.f32 0.0, %v1388
      %v1390 = vpop.f32.mrb[0].mxu0
      %1391 = vmatprep.mubr.f32.mxu0 0.0
      %1392 = vmatmul.mubr.f32.gmra.mrb[0].mxu0 %v1182
      %v1393 = vpop.f32.mrb[0].mxu0
      %v1394 = vadd.f32 0.0, %v1393
      %v1395 = vpop.f32.mrb[0].mxu0
      %1396 = vmatprep.mubr.f32.mxu0 0.0
      %1397 = vmatmul.mubr.f32.gmra.mrb[0].mxu0 %v1185
      %v1398 = vpop.f32.mrb[0].mxu0
      %v1399 = vadd.f32 0.0, %v1398
      %v1400 = vpop.f32.mrb[0].mxu0
      %1401 = vmatprep.mubr.f32.mxu0 0.0
      %1402 = vmatmul.mubr.f32.gmra.mrb[0].mxu0 %v1188
      %v1403 = vpop.f32.mrb[0].mxu0
      %v1404 = vadd.f32 0.0, %v1403
      %v1405 = vpop.f32.mrb[0].mxu0
      %1406 = vmatprep.mubr.f32.mxu0 0.0
      %1407 = vmatmul.mubr.f32.gmra.mrb[0].mxu0 %v1191
      %v1408 = vpop.f32.mrb[0].mxu0
      %v1409 = vadd.f32 0.0, %v1408
      %v1410 = vpop.f32.mrb[0].mxu0
      %1411 = vmatprep.mubr.f32.mxu0 0.0
      %1412 = vmatmul.mubr.f32.gmra.mrb[0].mxu0 %v1194
      %v1413 = vpop.f32.mrb[0].mxu0
      %v1414 = vadd.f32 0.0, %v1413
      %v1415 = vpop.f32.mrb[0].mxu0
      %1416 = vmatprep.mubr.f32.mxu0 0.0
      %1417 = vmatmul.mubr.f32.gmra.mrb[0].mxu0 %v1197
      %v1418 = vpop.f32.mrb[0].mxu0
      %v1419 = vadd.f32 0.0, %v1418
      %v1420 = vpop.f32.mrb[0].mxu0
      %1421 = vmatprep.mubr.f32.mxu0 0.0
      %1422 = vmatmul.mubr.f32.gmra.mrb[0].mxu0 %v1200
      %v1423 = vpop.f32.mrb[0].mxu0
      %v1424 = vadd.f32 0.0, %v1423
      %v1425 = vpop.f32.mrb[0].mxu0
      %1426 = vdwg.mxu0
      %v1427 = vadd.f32 %v914, %v1269
      %v1428 = vadd.f32 %v919, %v1274
      %v1429 = vadd.f32 %v924, %v1279
      %v1430 = vadd.f32 %v929, %v1284
      %v1431 = vadd.f32 %v934, %v1289
      %v1432 = vadd.f32 %v939, %v1294
      %v1433 = vadd.f32 %v944, %v1299
      %v1434 = vadd.f32 %v949, %v1304
      %v1435 = vadd.f32 %v954, %v1309
      %v1436 = vadd.f32 %v959, %v1314
      %v1437 = vadd.f32 %v964, %v1319
      %v1438 = vadd.f32 %v969, %v1324
      %v1439 = vadd.f32 %v974, %v1329
      %v1440 = vadd.f32 %v979, %v1334
      %v1441 = vadd.f32 %v984, %v1339
      %v1442 = vadd.f32 %v989, %v1344
      %v1443 = vadd.f32 %v994, %v1349
      %v1444 = vadd.f32 %v999, %v1354
      %v1445 = vadd.f32 %v1004, %v1359
      %v1446 = vadd.f32 %v1009, %v1364
      %v1447 = vadd.f32 %v1014, %v1369
      %v1448 = vadd.f32 %v1019, %v1374
      %v1449 = vadd.f32 %v1024, %v1379
      %v1450 = vadd.f32 %v1029, %v1384
      %v1451 = vadd.f32 %v1034, %v1389
      %v1452 = vadd.f32 %v1039, %v1394
      %v1453 = vadd.f32 %v1044, %v1399
      %v1454 = vadd.f32 %v1049, %v1404
      %v1455 = vadd.f32 %v1054, %v1409
      %v1456 = vadd.f32 %v1059, %v1414
      %v1457 = vadd.f32 %v1064, %v1419
      %v1458 = vadd.f32 %v1069, %v1424
      %v1459 = vld [vmem:[%s330 + $0x7] sm:$0xff]
      %v1460 = vld [vmem:[%s330 + $0xf] sm:$0xff]
      %v1461 = vld [vmem:[%s330 + $0x27] sm:$0xff]
      %v1462 = vld [vmem:[%s330 + $0x2f] sm:$0xff]
      %v1463 = vld [vmem:[%s330 + $0x47] sm:$0xff]
      %v1464 = vld [vmem:[%s330 + $0x4f] sm:$0xff]
      %v1465 = vld [vmem:[%s330 + $0x67] sm:$0xff]
      %v1466 = vld [vmem:[%s330 + $0x6f] sm:$0xff]
      %v1467 = vld [vmem:[%s330 + $0x87] sm:$0xff]
      %v1468 = vld [vmem:[%s330 + $0x8f] sm:$0xff]
      %v1469 = vld [vmem:[%s330 + $0xa7] sm:$0xff]
      %v1470 = vld [vmem:[%s330 + $0xaf] sm:$0xff]
      %v1471 = vld [vmem:[%s330 + $0xc7] sm:$0xff]
      %v1472 = vld [vmem:[%s330 + $0xcf] sm:$0xff]
      %v1473 = vld [vmem:[%s330 + $0xe7] sm:$0xff]
      %v1474 = vld [vmem:[%s330 + $0xef] sm:$0xff]
      %v1475 = vld [vmem:[%s330 + $0x107] sm:$0xff]
      %v1476 = vld [vmem:[%s330 + $0x10f] sm:$0xff]
      %v1477 = vld [vmem:[%s330 + $0x127] sm:$0xff]
      %v1478 = vld [vmem:[%s330 + $0x12f] sm:$0xff]
      %v1479 = vld [vmem:[%s330 + $0x147] sm:$0xff]
      %v1480 = vld [vmem:[%s330 + $0x14f] sm:$0xff]
      %v1481 = vld [vmem:[%s330 + $0x167] sm:$0xff]
      %v1482 = vld [vmem:[%s330 + $0x16f] sm:$0xff]
      %v1483 = vld [vmem:[%s330 + $0x187] sm:$0xff]
      %v1484 = vld [vmem:[%s330 + $0x18f] sm:$0xff]
      %v1485 = vld [vmem:[%s330 + $0x1a7] sm:$0xff]
      %v1486 = vld [vmem:[%s330 + $0x1af] sm:$0xff]
      %v1487 = vld [vmem:[%s330 + $0x1c7] sm:$0xff]
      %v1488 = vld [vmem:[%s330 + $0x1cf] sm:$0xff]
      %v1489 = vld [vmem:[%s330 + $0x1e7] sm:$0xff]
      %v1490 = vld [vmem:[%s330 + $0x1ef] sm:$0xff]
      %s1491 = scalar_lea.vmem %s1, 24
      %v1492 = vld [vmem:[%s1491] sm:$0xff]
      %v1494 = vsel %vm225, %v1459, 0
      %v1497 = vsel %vm225, %v1460, 0
      %v1500 = vsel %vm225, %v1461, 0
      %v1503 = vsel %vm225, %v1462, 0
      %v1506 = vsel %vm225, %v1463, 0
      %v1509 = vsel %vm225, %v1464, 0
      %v1512 = vsel %vm225, %v1465, 0
      %v1515 = vsel %vm225, %v1466, 0
      %v1518 = vsel %vm225, %v1467, 0
      %v1521 = vsel %vm225, %v1468, 0
      %v1524 = vsel %vm225, %v1469, 0
      %v1527 = vsel %vm225, %v1470, 0
      %v1530 = vsel %vm225, %v1471, 0
      %v1533 = vsel %vm225, %v1472, 0
      %v1536 = vsel %vm225, %v1473, 0
      %v1539 = vsel %vm225, %v1474, 0
      %v1542 = vsel %vm225, %v1475, 0
      %v1545 = vsel %vm225, %v1476, 0
      %v1548 = vsel %vm225, %v1477, 0
      %v1551 = vsel %vm225, %v1478, 0
      %v1554 = vsel %vm225, %v1479, 0
      %v1557 = vsel %vm225, %v1480, 0
      %v1560 = vsel %vm225, %v1481, 0
      %v1563 = vsel %vm225, %v1482, 0
      %v1566 = vsel %vm225, %v1483, 0
      %v1569 = vsel %vm225, %v1484, 0
      %v1572 = vsel %vm225, %v1485, 0
      %v1575 = vsel %vm225, %v1486, 0
      %v1578 = vsel %vm225, %v1487, 0
      %v1581 = vsel %vm225, %v1488, 0
      %v1584 = vsel %vm225, %v1489, 0
      %v1587 = vsel %vm225, %v1490, 0
      %1589 = vmatprep.subr.mxu0 0.0
      %1590 = vmatpush1.msra.mxu0 %v1492
      %1591 = vmatprep.subr.mxu0 0.0
      %1592 = vmatpush1.msra.mxu0 0.0
      %1593 = vmatprep.subr.mxu0 0.0
      %1594 = vmatpush1.msra.mxu0 0.0
      %1595 = vmatprep.subr.mxu0 0.0
      %1596 = vmatpush1.msra.mxu0 0.0
      %1597 = vmatprep.subr.mxu0 0.0
      %1598 = vmatpush1.msra.mxu0 0.0
      %1599 = vmatprep.subr.mxu0 0.0
      %1600 = vmatpush1.msra.mxu0 0.0
      %1601 = vmatprep.subr.mxu0 0.0
      %1602 = vmatpush1.msra.mxu0 0.0
      %1603 = vmatprep.subr.mxu0 0.0
      %1604 = vmatpush1.msra.mxu0 0.0
      %1605 = vmatprep.subr.mxu0 0.0
      %1606 = vmatpush1.msra.mxu0 0.0
      %1607 = vmatprep.subr.mxu0 0.0
      %1608 = vmatpush1.msra.mxu0 0.0
      %1609 = vmatprep.subr.mxu0 0.0
      %1610 = vmatpush1.msra.mxu0 0.0
      %1611 = vmatprep.subr.mxu0 0.0
      %1612 = vmatpush1.msra.mxu0 0.0
      %1613 = vmatprep.subr.mxu0 0.0
      %1614 = vmatpush1.msra.mxu0 0.0
      %1615 = vmatprep.subr.mxu0 0.0
      %1616 = vmatpush1.msra.mxu0 0.0
      %1617 = vmatprep.subr.mxu0 0.0
      %1618 = vmatpush1.msra.mxu0 0.0
      %1619 = vmatprep.subr.mxu0 0.0
      %1620 = vmatpush1.msra.mxu0 0.0
      %1621 = vmatprep.subr.mxu0 0.0
      %1622 = vmatpush1.msra.mxu0 0.0
      %1623 = vmatprep.subr.mxu0 0.0
      %1624 = vmatpush1.msra.mxu0 0.0
      %1625 = vmatprep.subr.mxu0 0.0
      %1626 = vmatpush1.msra.mxu0 0.0
      %1627 = vmatprep.subr.mxu0 0.0
      %1628 = vmatpush1.msra.mxu0 0.0
      %1629 = vmatprep.subr.mxu0 0.0
      %1630 = vmatpush1.msra.mxu0 0.0
      %1631 = vmatprep.subr.mxu0 0.0
      %1632 = vmatpush1.msra.mxu0 0.0
      %1633 = vmatprep.subr.mxu0 0.0
      %1634 = vmatpush1.msra.mxu0 0.0
      %1635 = vmatprep.subr.mxu0 0.0
      %1636 = vmatpush1.msra.mxu0 0.0
      %1637 = vmatprep.subr.mxu0 0.0
      %1638 = vmatpush1.msra.mxu0 0.0
      %1639 = vmatprep.subr.mxu0 0.0
      %1640 = vmatpush1.msra.mxu0 0.0
      %1641 = vmatprep.subr.mxu0 0.0
      %1642 = vmatpush1.msra.mxu0 0.0
      %1643 = vmatprep.subr.mxu0 0.0
      %1644 = vmatpush1.msra.mxu0 0.0
      %1645 = vmatprep.subr.mxu0 0.0
      %1646 = vmatpush1.msra.mxu0 0.0
      %1647 = vmatprep.subr.mxu0 0.0
      %1648 = vmatpush1.msra.mxu0 0.0
      %1649 = vmatprep.subr.mxu0 0.0
      %1650 = vmatpush1.msra.mxu0 0.0
      %1651 = vmatprep.subr.mxu0 0.0
      %1652 = vmatpush1.msra.mxu0 0.0
      %1653 = vmatprep.mubr.f32.mxu0 0.0
      %1654 = vmatmul.mubr.f32.gmra.mrb[0].mxu0 %v1494
      %v1655 = vpop.f32.mrb[0].mxu0
      %v1656 = vadd.f32 0.0, %v1655
      %v1657 = vpop.f32.mrb[0].mxu0
      %1658 = vmatprep.mubr.f32.mxu0 0.0
      %1659 = vmatmul.mubr.f32.gmra.mrb[0].mxu0 %v1497
      %v1660 = vpop.f32.mrb[0].mxu0
      %v1661 = vadd.f32 0.0, %v1660
      %v1662 = vpop.f32.mrb[0].mxu0
      %1663 = vmatprep.mubr.f32.mxu0 0.0
      %1664 = vmatmul.mubr.f32.gmra.mrb[0].mxu0 %v1500
      %v1665 = vpop.f32.mrb[0].mxu0
      %v1666 = vadd.f32 0.0, %v1665
      %v1667 = vpop.f32.mrb[0].mxu0
      %1668 = vmatprep.mubr.f32.mxu0 0.0
      %1669 = vmatmul.mubr.f32.gmra.mrb[0].mxu0 %v1503
      %v1670 = vpop.f32.mrb[0].mxu0
      %v1671 = vadd.f32 0.0, %v1670
      %v1672 = vpop.f32.mrb[0].mxu0
      %1673 = vmatprep.mubr.f32.mxu0 0.0
      %1674 = vmatmul.mubr.f32.gmra.mrb[0].mxu0 %v1506
      %v1675 = vpop.f32.mrb[0].mxu0
      %v1676 = vadd.f32 0.0, %v1675
      %v1677 = vpop.f32.mrb[0].mxu0
      %1678 = vmatprep.mubr.f32.mxu0 0.0
      %1679 = vmatmul.mubr.f32.gmra.mrb[0].mxu0 %v1509
      %v1680 = vpop.f32.mrb[0].mxu0
      %v1681 = vadd.f32 0.0, %v1680
      %v1682 = vpop.f32.mrb[0].mxu0
      %1683 = vmatprep.mubr.f32.mxu0 0.0
      %1684 = vmatmul.mubr.f32.gmra.mrb[0].mxu0 %v1512
      %v1685 = vpop.f32.mrb[0].mxu0
      %v1686 = vadd.f32 0.0, %v1685
      %v1687 = vpop.f32.mrb[0].mxu0
      %1688 = vmatprep.mubr.f32.mxu0 0.0
      %1689 = vmatmul.mubr.f32.gmra.mrb[0].mxu0 %v1515
      %v1690 = vpop.f32.mrb[0].mxu0
      %v1691 = vadd.f32 0.0, %v1690
      %v1692 = vpop.f32.mrb[0].mxu0
      %1693 = vmatprep.mubr.f32.mxu0 0.0
      %1694 = vmatmul.mubr.f32.gmra.mrb[0].mxu0 %v1518
      %v1695 = vpop.f32.mrb[0].mxu0
      %v1696 = vadd.f32 0.0, %v1695
      %v1697 = vpop.f32.mrb[0].mxu0
      %1698 = vmatprep.mubr.f32.mxu0 0.0
      %1699 = vmatmul.mubr.f32.gmra.mrb[0].mxu0 %v1521
      %v1700 = vpop.f32.mrb[0].mxu0
      %v1701 = vadd.f32 0.0, %v1700
      %v1702 = vpop.f32.mrb[0].mxu0
      %1703 = vmatprep.mubr.f32.mxu0 0.0
      %1704 = vmatmul.mubr.f32.gmra.mrb[0].mxu0 %v1524
      %v1705 = vpop.f32.mrb[0].mxu0
      %v1706 = vadd.f32 0.0, %v1705
      %v1707 = vpop.f32.mrb[0].mxu0
      %1708 = vmatprep.mubr.f32.mxu0 0.0
      %1709 = vmatmul.mubr.f32.gmra.mrb[0].mxu0 %v1527
      %v1710 = vpop.f32.mrb[0].mxu0
      %v1711 = vadd.f32 0.0, %v1710
      %v1712 = vpop.f32.mrb[0].mxu0
      %1713 = vmatprep.mubr.f32.mxu0 0.0
      %1714 = vmatmul.mubr.f32.gmra.mrb[0].mxu0 %v1530
      %v1715 = vpop.f32.mrb[0].mxu0
      %v1716 = vadd.f32 0.0, %v1715
      %v1717 = vpop.f32.mrb[0].mxu0
      %1718 = vmatprep.mubr.f32.mxu0 0.0
      %1719 = vmatmul.mubr.f32.gmra.mrb[0].mxu0 %v1533
      %v1720 = vpop.f32.mrb[0].mxu0
      %v1721 = vadd.f32 0.0, %v1720
      %v1722 = vpop.f32.mrb[0].mxu0
      %1723 = vmatprep.mubr.f32.mxu0 0.0
      %1724 = vmatmul.mubr.f32.gmra.mrb[0].mxu0 %v1536
      %v1725 = vpop.f32.mrb[0].mxu0
      %v1726 = vadd.f32 0.0, %v1725
      %v1727 = vpop.f32.mrb[0].mxu0
      %1728 = vmatprep.mubr.f32.mxu0 0.0
      %1729 = vmatmul.mubr.f32.gmra.mrb[0].mxu0 %v1539
      %v1730 = vpop.f32.mrb[0].mxu0
      %v1731 = vadd.f32 0.0, %v1730
      %v1732 = vpop.f32.mrb[0].mxu0
      %1733 = vmatprep.mubr.f32.mxu0 0.0
      %1734 = vmatmul.mubr.f32.gmra.mrb[0].mxu0 %v1542
      %v1735 = vpop.f32.mrb[0].mxu0
      %v1736 = vadd.f32 0.0, %v1735
      %v1737 = vpop.f32.mrb[0].mxu0
      %1738 = vmatprep.mubr.f32.mxu0 0.0
      %1739 = vmatmul.mubr.f32.gmra.mrb[0].mxu0 %v1545
      %v1740 = vpop.f32.mrb[0].mxu0
      %v1741 = vadd.f32 0.0, %v1740
      %v1742 = vpop.f32.mrb[0].mxu0
      %1743 = vmatprep.mubr.f32.mxu0 0.0
      %1744 = vmatmul.mubr.f32.gmra.mrb[0].mxu0 %v1548
      %v1745 = vpop.f32.mrb[0].mxu0
      %v1746 = vadd.f32 0.0, %v1745
      %v1747 = vpop.f32.mrb[0].mxu0
      %1748 = vmatprep.mubr.f32.mxu0 0.0
      %1749 = vmatmul.mubr.f32.gmra.mrb[0].mxu0 %v1551
      %v1750 = vpop.f32.mrb[0].mxu0
      %v1751 = vadd.f32 0.0, %v1750
      %v1752 = vpop.f32.mrb[0].mxu0
      %1753 = vmatprep.mubr.f32.mxu0 0.0
      %1754 = vmatmul.mubr.f32.gmra.mrb[0].mxu0 %v1554
      %v1755 = vpop.f32.mrb[0].mxu0
      %v1756 = vadd.f32 0.0, %v1755
      %v1757 = vpop.f32.mrb[0].mxu0
      %1758 = vmatprep.mubr.f32.mxu0 0.0
      %1759 = vmatmul.mubr.f32.gmra.mrb[0].mxu0 %v1557
      %v1760 = vpop.f32.mrb[0].mxu0
      %v1761 = vadd.f32 0.0, %v1760
      %v1762 = vpop.f32.mrb[0].mxu0
      %1763 = vmatprep.mubr.f32.mxu0 0.0
      %1764 = vmatmul.mubr.f32.gmra.mrb[0].mxu0 %v1560
      %v1765 = vpop.f32.mrb[0].mxu0
      %v1766 = vadd.f32 0.0, %v1765
      %v1767 = vpop.f32.mrb[0].mxu0
      %1768 = vmatprep.mubr.f32.mxu0 0.0
      %1769 = vmatmul.mubr.f32.gmra.mrb[0].mxu0 %v1563
      %v1770 = vpop.f32.mrb[0].mxu0
      %v1771 = vadd.f32 0.0, %v1770
      %v1772 = vpop.f32.mrb[0].mxu0
      %1773 = vmatprep.mubr.f32.mxu0 0.0
      %1774 = vmatmul.mubr.f32.gmra.mrb[0].mxu0 %v1566
      %v1775 = vpop.f32.mrb[0].mxu0
      %v1776 = vadd.f32 0.0, %v1775
      %v1777 = vpop.f32.mrb[0].mxu0
      %1778 = vmatprep.mubr.f32.mxu0 0.0
      %1779 = vmatmul.mubr.f32.gmra.mrb[0].mxu0 %v1569
      %v1780 = vpop.f32.mrb[0].mxu0
      %v1781 = vadd.f32 0.0, %v1780
      %v1782 = vpop.f32.mrb[0].mxu0
      %1783 = vmatprep.mubr.f32.mxu0 0.0
      %1784 = vmatmul.mubr.f32.gmra.mrb[0].mxu0 %v1572
      %v1785 = vpop.f32.mrb[0].mxu0
      %v1786 = vadd.f32 0.0, %v1785
      %v1787 = vpop.f32.mrb[0].mxu0
      %1788 = vmatprep.mubr.f32.mxu0 0.0
      %1789 = vmatmul.mubr.f32.gmra.mrb[0].mxu0 %v1575
      %v1790 = vpop.f32.mrb[0].mxu0
      %v1791 = vadd.f32 0.0, %v1790
      %v1792 = vpop.f32.mrb[0].mxu0
      %1793 = vmatprep.mubr.f32.mxu0 0.0
      %1794 = vmatmul.mubr.f32.gmra.mrb[0].mxu0 %v1578
      %v1795 = vpop.f32.mrb[0].mxu0
      %v1796 = vadd.f32 0.0, %v1795
      %v1797 = vpop.f32.mrb[0].mxu0
      %1798 = vmatprep.mubr.f32.mxu0 0.0
      %1799 = vmatmul.mubr.f32.gmra.mrb[0].mxu0 %v1581
      %v1800 = vpop.f32.mrb[0].mxu0
      %v1801 = vadd.f32 0.0, %v1800
      %v1802 = vpop.f32.mrb[0].mxu0
      %1803 = vmatprep.mubr.f32.mxu0 0.0
      %1804 = vmatmul.mubr.f32.gmra.mrb[0].mxu0 %v1584
      %v1805 = vpop.f32.mrb[0].mxu0
      %v1806 = vadd.f32 0.0, %v1805
      %v1807 = vpop.f32.mrb[0].mxu0
      %1808 = vmatprep.mubr.f32.mxu0 0.0
      %1809 = vmatmul.mubr.f32.gmra.mrb[0].mxu0 %v1587
      %v1810 = vpop.f32.mrb[0].mxu0
      %v1811 = vadd.f32 0.0, %v1810
      %v1812 = vpop.f32.mrb[0].mxu0
      %1813 = vdwg.mxu0
      %v1814 = vadd.f32 %v1427, %v1656
      %v1815 = vadd.f32 %v1428, %v1661
      %v1816 = vadd.f32 %v1429, %v1666
      %v1817 = vadd.f32 %v1430, %v1671
      %v1818 = vadd.f32 %v1431, %v1676
      %v1819 = vadd.f32 %v1432, %v1681
      %v1820 = vadd.f32 %v1433, %v1686
      %v1821 = vadd.f32 %v1434, %v1691
      %v1822 = vadd.f32 %v1435, %v1696
      %v1823 = vadd.f32 %v1436, %v1701
      %v1824 = vadd.f32 %v1437, %v1706
      %v1825 = vadd.f32 %v1438, %v1711
      %v1826 = vadd.f32 %v1439, %v1716
      %v1827 = vadd.f32 %v1440, %v1721
      %v1828 = vadd.f32 %v1441, %v1726
      %v1829 = vadd.f32 %v1442, %v1731
      %v1830 = vadd.f32 %v1443, %v1736
      %v1831 = vadd.f32 %v1444, %v1741
      %v1832 = vadd.f32 %v1445, %v1746
      %v1833 = vadd.f32 %v1446, %v1751
      %v1834 = vadd.f32 %v1447, %v1756
      %v1835 = vadd.f32 %v1448, %v1761
      %v1836 = vadd.f32 %v1449, %v1766
      %v1837 = vadd.f32 %v1450, %v1771
      %v1838 = vadd.f32 %v1451, %v1776
      %v1839 = vadd.f32 %v1452, %v1781
      %v1840 = vadd.f32 %v1453, %v1786
      %v1841 = vadd.f32 %v1454, %v1791
      %v1842 = vadd.f32 %v1455, %v1796
      %v1843 = vadd.f32 %v1456, %v1801
      %v1844 = vadd.f32 %v1457, %v1806
      %v1845 = vadd.f32 %v1458, %v1811
      %v1846 = vld [vmem:[%s330 + $0x8] sm:$0xff]
      %v1847 = vld [vmem:[%s330 + $0x10] sm:$0xff]
      %v1848 = vld [vmem:[%s330 + $0x28] sm:$0xff]
      %v1849 = vld [vmem:[%s330 + $0x30] sm:$0xff]
      %v1850 = vld [vmem:[%s330 + $0x48] sm:$0xff]
      %v1851 = vld [vmem:[%s330 + $0x50] sm:$0xff]
      %v1852 = vld [vmem:[%s330 + $0x68] sm:$0xff]
      %v1853 = vld [vmem:[%s330 + $0x70] sm:$0xff]
      %v1854 = vld [vmem:[%s330 + $0x88] sm:$0xff]
      %v1855 = vld [vmem:[%s330 + $0x90] sm:$0xff]
      %v1856 = vld [vmem:[%s330 + $0xa8] sm:$0xff]
      %v1857 = vld [vmem:[%s330 + $0xb0] sm:$0xff]
      %v1858 = vld [vmem:[%s330 + $0xc8] sm:$0xff]
      %v1859 = vld [vmem:[%s330 + $0xd0] sm:$0xff]
      %v1860 = vld [vmem:[%s330 + $0xe8] sm:$0xff]
      %v1861 = vld [vmem:[%s330 + $0xf0] sm:$0xff]
      %v1862 = vld [vmem:[%s330 + $0x108] sm:$0xff]
      %v1863 = vld [vmem:[%s330 + $0x110] sm:$0xff]
      %v1864 = vld [vmem:[%s330 + $0x128] sm:$0xff]
      %v1865 = vld [vmem:[%s330 + $0x130] sm:$0xff]
      %v1866 = vld [vmem:[%s330 + $0x148] sm:$0xff]
      %v1867 = vld [vmem:[%s330 + $0x150] sm:$0xff]
      %v1868 = vld [vmem:[%s330 + $0x168] sm:$0xff]
      %v1869 = vld [vmem:[%s330 + $0x170] sm:$0xff]
      %v1870 = vld [vmem:[%s330 + $0x188] sm:$0xff]
      %v1871 = vld [vmem:[%s330 + $0x190] sm:$0xff]
      %v1872 = vld [vmem:[%s330 + $0x1a8] sm:$0xff]
      %v1873 = vld [vmem:[%s330 + $0x1b0] sm:$0xff]
      %v1874 = vld [vmem:[%s330 + $0x1c8] sm:$0xff]
      %v1875 = vld [vmem:[%s330 + $0x1d0] sm:$0xff]
      %v1876 = vld [vmem:[%s330 + $0x1e8] sm:$0xff]
      %v1877 = vld [vmem:[%s330 + $0x1f0] sm:$0xff]
      %s1878 = scalar_lea.vmem %s1, 32
      %v1879 = vld [vmem:[%s1878] sm:$0xff]
      %v1881 = vsel %vm225, %v1846, 0
      %v1884 = vsel %vm225, %v1847, 0
      %v1887 = vsel %vm225, %v1848, 0
      %v1890 = vsel %vm225, %v1849, 0
      %v1893 = vsel %vm225, %v1850, 0
      %v1896 = vsel %vm225, %v1851, 0
      %v1899 = vsel %vm225, %v1852, 0
      %v1902 = vsel %vm225, %v1853, 0
      %v1905 = vsel %vm225, %v1854, 0
      %v1908 = vsel %vm225, %v1855, 0
      %v1911 = vsel %vm225, %v1856, 0
      %v1914 = vsel %vm225, %v1857, 0
      %v1917 = vsel %vm225, %v1858, 0
      %v1920 = vsel %vm225, %v1859, 0
      %v1923 = vsel %vm225, %v1860, 0
      %v1926 = vsel %vm225, %v1861, 0
      %v1929 = vsel %vm225, %v1862, 0
      %v1932 = vsel %vm225, %v1863, 0
      %v1935 = vsel %vm225, %v1864, 0
      %v1938 = vsel %vm225, %v1865, 0
      %v1941 = vsel %vm225, %v1866, 0
      %v1944 = vsel %vm225, %v1867, 0
      %v1947 = vsel %vm225, %v1868, 0
      %v1950 = vsel %vm225, %v1869, 0
      %v1953 = vsel %vm225, %v1870, 0
      %v1956 = vsel %vm225, %v1871, 0
      %v1959 = vsel %vm225, %v1872, 0
      %v1962 = vsel %vm225, %v1873, 0
      %v1965 = vsel %vm225, %v1874, 0
      %v1968 = vsel %vm225, %v1875, 0
      %v1971 = vsel %vm225, %v1876, 0
      %v1974 = vsel %vm225, %v1877, 0
      %1976 = vmatprep.subr.mxu0 0.0
      %1977 = vmatpush1.msra.mxu0 %v1879
      %1978 = vmatprep.subr.mxu0 0.0
      %1979 = vmatpush1.msra.mxu0 0.0
      %1980 = vmatprep.subr.mxu0 0.0
      %1981 = vmatpush1.msra.mxu0 0.0
      %1982 = vmatprep.subr.mxu0 0.0
      %1983 = vmatpush1.msra.mxu0 0.0
      %1984 = vmatprep.subr.mxu0 0.0
      %1985 = vmatpush1.msra.mxu0 0.0
      %1986 = vmatprep.subr.mxu0 0.0
      %1987 = vmatpush1.msra.mxu0 0.0
      %1988 = vmatprep.subr.mxu0 0.0
      %1989 = vmatpush1.msra.mxu0 0.0
      %1990 = vmatprep.subr.mxu0 0.0
      %1991 = vmatpush1.msra.mxu0 0.0
      %1992 = vmatprep.subr.mxu0 0.0
      %1993 = vmatpush1.msra.mxu0 0.0
      %1994 = vmatprep.subr.mxu0 0.0
      %1995 = vmatpush1.msra.mxu0 0.0
      %1996 = vmatprep.subr.mxu0 0.0
      %1997 = vmatpush1.msra.mxu0 0.0
      %1998 = vmatprep.subr.mxu0 0.0
      %1999 = vmatpush1.msra.mxu0 0.0
      %2000 = vmatprep.subr.mxu0 0.0
      %2001 = vmatpush1.msra.mxu0 0.0
      %2002 = vmatprep.subr.mxu0 0.0
      %2003 = vmatpush1.msra.mxu0 0.0
      %2004 = vmatprep.subr.mxu0 0.0
      %2005 = vmatpush1.msra.mxu0 0.0
      %2006 = vmatprep.subr.mxu0 0.0
      %2007 = vmatpush1.msra.mxu0 0.0
      %2008 = vmatprep.subr.mxu0 0.0
      %2009 = vmatpush1.msra.mxu0 0.0
      %2010 = vmatprep.subr.mxu0 0.0
      %2011 = vmatpush1.msra.mxu0 0.0
      %2012 = vmatprep.subr.mxu0 0.0
      %2013 = vmatpush1.msra.mxu0 0.0
      %2014 = vmatprep.subr.mxu0 0.0
      %2015 = vmatpush1.msra.mxu0 0.0
      %2016 = vmatprep.subr.mxu0 0.0
      %2017 = vmatpush1.msra.mxu0 0.0
      %2018 = vmatprep.subr.mxu0 0.0
      %2019 = vmatpush1.msra.mxu0 0.0
      %2020 = vmatprep.subr.mxu0 0.0
      %2021 = vmatpush1.msra.mxu0 0.0
      %2022 = vmatprep.subr.mxu0 0.0
      %2023 = vmatpush1.msra.mxu0 0.0
      %2024 = vmatprep.subr.mxu0 0.0
      %2025 = vmatpush1.msra.mxu0 0.0
      %2026 = vmatprep.subr.mxu0 0.0
      %2027 = vmatpush1.msra.mxu0 0.0
      %2028 = vmatprep.subr.mxu0 0.0
      %2029 = vmatpush1.msra.mxu0 0.0
      %2030 = vmatprep.subr.mxu0 0.0
      %2031 = vmatpush1.msra.mxu0 0.0
      %2032 = vmatprep.subr.mxu0 0.0
      %2033 = vmatpush1.msra.mxu0 0.0
      %2034 = vmatprep.subr.mxu0 0.0
      %2035 = vmatpush1.msra.mxu0 0.0
      %2036 = vmatprep.subr.mxu0 0.0
      %2037 = vmatpush1.msra.mxu0 0.0
      %2038 = vmatprep.subr.mxu0 0.0
      %2039 = vmatpush1.msra.mxu0 0.0
      %2040 = vmatprep.mubr.f32.mxu0 0.0
      %2041 = vmatmul.mubr.f32.gmra.mrb[0].mxu0 %v1881
      %v2042 = vpop.f32.mrb[0].mxu0
      %v2043 = vadd.f32 0.0, %v2042
      %v2044 = vpop.f32.mrb[0].mxu0
      %2045 = vmatprep.mubr.f32.mxu0 0.0
      %2046 = vmatmul.mubr.f32.gmra.mrb[0].mxu0 %v1884
      %v2047 = vpop.f32.mrb[0].mxu0
      %v2048 = vadd.f32 0.0, %v2047
      %v2049 = vpop.f32.mrb[0].mxu0
      %2050 = vmatprep.mubr.f32.mxu0 0.0
      %2051 = vmatmul.mubr.f32.gmra.mrb[0].mxu0 %v1887
      %v2052 = vpop.f32.mrb[0].mxu0
      %v2053 = vadd.f32 0.0, %v2052
      %v2054 = vpop.f32.mrb[0].mxu0
      %2055 = vmatprep.mubr.f32.mxu0 0.0
      %2056 = vmatmul.mubr.f32.gmra.mrb[0].mxu0 %v1890
      %v2057 = vpop.f32.mrb[0].mxu0
      %v2058 = vadd.f32 0.0, %v2057
      %v2059 = vpop.f32.mrb[0].mxu0
      %2060 = vmatprep.mubr.f32.mxu0 0.0
      %2061 = vmatmul.mubr.f32.gmra.mrb[0].mxu0 %v1893
      %v2062 = vpop.f32.mrb[0].mxu0
      %v2063 = vadd.f32 0.0, %v2062
      %v2064 = vpop.f32.mrb[0].mxu0
      %2065 = vmatprep.mubr.f32.mxu0 0.0
      %2066 = vmatmul.mubr.f32.gmra.mrb[0].mxu0 %v1896
      %v2067 = vpop.f32.mrb[0].mxu0
      %v2068 = vadd.f32 0.0, %v2067
      %v2069 = vpop.f32.mrb[0].mxu0
      %2070 = vmatprep.mubr.f32.mxu0 0.0
      %2071 = vmatmul.mubr.f32.gmra.mrb[0].mxu0 %v1899
      %v2072 = vpop.f32.mrb[0].mxu0
      %v2073 = vadd.f32 0.0, %v2072
      %v2074 = vpop.f32.mrb[0].mxu0
      %2075 = vmatprep.mubr.f32.mxu0 0.0
      %2076 = vmatmul.mubr.f32.gmra.mrb[0].mxu0 %v1902
      %v2077 = vpop.f32.mrb[0].mxu0
      %v2078 = vadd.f32 0.0, %v2077
      %v2079 = vpop.f32.mrb[0].mxu0
      %2080 = vmatprep.mubr.f32.mxu0 0.0
      %2081 = vmatmul.mubr.f32.gmra.mrb[0].mxu0 %v1905
      %v2082 = vpop.f32.mrb[0].mxu0
      %v2083 = vadd.f32 0.0, %v2082
      %v2084 = vpop.f32.mrb[0].mxu0
      %2085 = vmatprep.mubr.f32.mxu0 0.0
      %2086 = vmatmul.mubr.f32.gmra.mrb[0].mxu0 %v1908
      %v2087 = vpop.f32.mrb[0].mxu0
      %v2088 = vadd.f32 0.0, %v2087
      %v2089 = vpop.f32.mrb[0].mxu0
      %2090 = vmatprep.mubr.f32.mxu0 0.0
      %2091 = vmatmul.mubr.f32.gmra.mrb[0].mxu0 %v1911
      %v2092 = vpop.f32.mrb[0].mxu0
      %v2093 = vadd.f32 0.0, %v2092
      %v2094 = vpop.f32.mrb[0].mxu0
      %2095 = vmatprep.mubr.f32.mxu0 0.0
      %2096 = vmatmul.mubr.f32.gmra.mrb[0].mxu0 %v1914
      %v2097 = vpop.f32.mrb[0].mxu0
      %v2098 = vadd.f32 0.0, %v2097
      %v2099 = vpop.f32.mrb[0].mxu0
      %2100 = vmatprep.mubr.f32.mxu0 0.0
      %2101 = vmatmul.mubr.f32.gmra.mrb[0].mxu0 %v1917
      %v2102 = vpop.f32.mrb[0].mxu0
      %v2103 = vadd.f32 0.0, %v2102
      %v2104 = vpop.f32.mrb[0].mxu0
      %2105 = vmatprep.mubr.f32.mxu0 0.0
      %2106 = vmatmul.mubr.f32.gmra.mrb[0].mxu0 %v1920
      %v2107 = vpop.f32.mrb[0].mxu0
      %v2108 = vadd.f32 0.0, %v2107
      %v2109 = vpop.f32.mrb[0].mxu0
      %2110 = vmatprep.mubr.f32.mxu0 0.0
      %2111 = vmatmul.mubr.f32.gmra.mrb[0].mxu0 %v1923
      %v2112 = vpop.f32.mrb[0].mxu0
      %v2113 = vadd.f32 0.0, %v2112
      %v2114 = vpop.f32.mrb[0].mxu0
      %2115 = vmatprep.mubr.f32.mxu0 0.0
      %2116 = vmatmul.mubr.f32.gmra.mrb[0].mxu0 %v1926
      %v2117 = vpop.f32.mrb[0].mxu0
      %v2118 = vadd.f32 0.0, %v2117
      %v2119 = vpop.f32.mrb[0].mxu0
      %2120 = vmatprep.mubr.f32.mxu0 0.0
      %2121 = vmatmul.mubr.f32.gmra.mrb[0].mxu0 %v1929
      %v2122 = vpop.f32.mrb[0].mxu0
      %v2123 = vadd.f32 0.0, %v2122
      %v2124 = vpop.f32.mrb[0].mxu0
      %2125 = vmatprep.mubr.f32.mxu0 0.0
      %2126 = vmatmul.mubr.f32.gmra.mrb[0].mxu0 %v1932
      %v2127 = vpop.f32.mrb[0].mxu0
      %v2128 = vadd.f32 0.0, %v2127
      %v2129 = vpop.f32.mrb[0].mxu0
      %2130 = vmatprep.mubr.f32.mxu0 0.0
      %2131 = vmatmul.mubr.f32.gmra.mrb[0].mxu0 %v1935
      %v2132 = vpop.f32.mrb[0].mxu0
      %v2133 = vadd.f32 0.0, %v2132
      %v2134 = vpop.f32.mrb[0].mxu0
      %2135 = vmatprep.mubr.f32.mxu0 0.0
      %2136 = vmatmul.mubr.f32.gmra.mrb[0].mxu0 %v1938
      %v2137 = vpop.f32.mrb[0].mxu0
      %v2138 = vadd.f32 0.0, %v2137
      %v2139 = vpop.f32.mrb[0].mxu0
      %2140 = vmatprep.mubr.f32.mxu0 0.0
      %2141 = vmatmul.mubr.f32.gmra.mrb[0].mxu0 %v1941
      %v2142 = vpop.f32.mrb[0].mxu0
      %v2143 = vadd.f32 0.0, %v2142
      %v2144 = vpop.f32.mrb[0].mxu0
      %2145 = vmatprep.mubr.f32.mxu0 0.0
      %2146 = vmatmul.mubr.f32.gmra.mrb[0].mxu0 %v1944
      %v2147 = vpop.f32.mrb[0].mxu0
      %v2148 = vadd.f32 0.0, %v2147
      %v2149 = vpop.f32.mrb[0].mxu0
      %2150 = vmatprep.mubr.f32.mxu0 0.0
      %2151 = vmatmul.mubr.f32.gmra.mrb[0].mxu0 %v1947
      %v2152 = vpop.f32.mrb[0].mxu0
      %v2153 = vadd.f32 0.0, %v2152
      %v2154 = vpop.f32.mrb[0].mxu0
      %2155 = vmatprep.mubr.f32.mxu0 0.0
      %2156 = vmatmul.mubr.f32.gmra.mrb[0].mxu0 %v1950
      %v2157 = vpop.f32.mrb[0].mxu0
      %v2158 = vadd.f32 0.0, %v2157
      %v2159 = vpop.f32.mrb[0].mxu0
      %2160 = vmatprep.mubr.f32.mxu0 0.0
      %2161 = vmatmul.mubr.f32.gmra.mrb[0].mxu0 %v1953
      %v2162 = vpop.f32.mrb[0].mxu0
      %v2163 = vadd.f32 0.0, %v2162
      %v2164 = vpop.f32.mrb[0].mxu0
      %2165 = vmatprep.mubr.f32.mxu0 0.0
      %2166 = vmatmul.mubr.f32.gmra.mrb[0].mxu0 %v1956
      %v2167 = vpop.f32.mrb[0].mxu0
      %v2168 = vadd.f32 0.0, %v2167
      %v2169 = vpop.f32.mrb[0].mxu0
      %2170 = vmatprep.mubr.f32.mxu0 0.0
      %2171 = vmatmul.mubr.f32.gmra.mrb[0].mxu0 %v1959
      %v2172 = vpop.f32.mrb[0].mxu0
      %v2173 = vadd.f32 0.0, %v2172
      %v2174 = vpop.f32.mrb[0].mxu0
      %2175 = vmatprep.mubr.f32.mxu0 0.0
      %2176 = vmatmul.mubr.f32.gmra.mrb[0].mxu0 %v1962
      %v2177 = vpop.f32.mrb[0].mxu0
      %v2178 = vadd.f32 0.0, %v2177
      %v2179 = vpop.f32.mrb[0].mxu0
      %2180 = vmatprep.mubr.f32.mxu0 0.0
      %2181 = vmatmul.mubr.f32.gmra.mrb[0].mxu0 %v1965
      %v2182 = vpop.f32.mrb[0].mxu0
      %v2183 = vadd.f32 0.0, %v2182
      %v2184 = vpop.f32.mrb[0].mxu0
      %2185 = vmatprep.mubr.f32.mxu0 0.0
      %2186 = vmatmul.mubr.f32.gmra.mrb[0].mxu0 %v1968
      %v2187 = vpop.f32.mrb[0].mxu0
      %v2188 = vadd.f32 0.0, %v2187
      %v2189 = vpop.f32.mrb[0].mxu0
      %2190 = vmatprep.mubr.f32.mxu0 0.0
      %2191 = vmatmul.mubr.f32.gmra.mrb[0].mxu0 %v1971
      %v2192 = vpop.f32.mrb[0].mxu0
      %v2193 = vadd.f32 0.0, %v2192
      %v2194 = vpop.f32.mrb[0].mxu0
      %2195 = vmatprep.mubr.f32.mxu0 0.0
      %2196 = vmatmul.mubr.f32.gmra.mrb[0].mxu0 %v1974
      %v2197 = vpop.f32.mrb[0].mxu0
      %v2198 = vadd.f32 0.0, %v2197
      %v2199 = vpop.f32.mrb[0].mxu0
      %2200 = vdwg.mxu0
      %v2201 = vadd.f32 %v1814, %v2043
      %v2202 = vadd.f32 %v1815, %v2048
      %v2203 = vadd.f32 %v1816, %v2053
      %v2204 = vadd.f32 %v1817, %v2058
      %v2205 = vadd.f32 %v1818, %v2063
      %v2206 = vadd.f32 %v1819, %v2068
      %v2207 = vadd.f32 %v1820, %v2073
      %v2208 = vadd.f32 %v1821, %v2078
      %v2209 = vadd.f32 %v1822, %v2083
      %v2210 = vadd.f32 %v1823, %v2088
      %v2211 = vadd.f32 %v1824, %v2093
      %v2212 = vadd.f32 %v1825, %v2098
      %v2213 = vadd.f32 %v1826, %v2103
      %v2214 = vadd.f32 %v1827, %v2108
      %v2215 = vadd.f32 %v1828, %v2113
      %v2216 = vadd.f32 %v1829, %v2118
      %v2217 = vadd.f32 %v1830, %v2123
      %v2218 = vadd.f32 %v1831, %v2128
      %v2219 = vadd.f32 %v1832, %v2133
      %v2220 = vadd.f32 %v1833, %v2138
      %v2221 = vadd.f32 %v1834, %v2143
      %v2222 = vadd.f32 %v1835, %v2148
      %v2223 = vadd.f32 %v1836, %v2153
      %v2224 = vadd.f32 %v1837, %v2158
      %v2225 = vadd.f32 %v1838, %v2163
      %v2226 = vadd.f32 %v1839, %v2168
      %v2227 = vadd.f32 %v1840, %v2173
      %v2228 = vadd.f32 %v1841, %v2178
      %v2229 = vadd.f32 %v1842, %v2183
      %v2230 = vadd.f32 %v1843, %v2188
      %v2231 = vadd.f32 %v1844, %v2193
      %v2232 = vadd.f32 %v1845, %v2198
      %v2233 = vld [vmem:[%s330 + $0x9] sm:$0xff]
      %v2234 = vld [vmem:[%s330 + $0x11] sm:$0xff]
      %v2235 = vld [vmem:[%s330 + $0x29] sm:$0xff]
      %v2236 = vld [vmem:[%s330 + $0x31] sm:$0xff]
      %v2237 = vld [vmem:[%s330 + $0x49] sm:$0xff]
      %v2238 = vld [vmem:[%s330 + $0x51] sm:$0xff]
      %v2239 = vld [vmem:[%s330 + $0x69] sm:$0xff]
      %v2240 = vld [vmem:[%s330 + $0x71] sm:$0xff]
      %v2241 = vld [vmem:[%s330 + $0x89] sm:$0xff]
      %v2242 = vld [vmem:[%s330 + $0x91] sm:$0xff]
      %v2243 = vld [vmem:[%s330 + $0xa9] sm:$0xff]
      %v2244 = vld [vmem:[%s330 + $0xb1] sm:$0xff]
      %v2245 = vld [vmem:[%s330 + $0xc9] sm:$0xff]
      %v2246 = vld [vmem:[%s330 + $0xd1] sm:$0xff]
      %v2247 = vld [vmem:[%s330 + $0xe9] sm:$0xff]
      %v2248 = vld [vmem:[%s330 + $0xf1] sm:$0xff]
      %v2249 = vld [vmem:[%s330 + $0x109] sm:$0xff]
      %v2250 = vld [vmem:[%s330 + $0x111] sm:$0xff]
      %v2251 = vld [vmem:[%s330 + $0x129] sm:$0xff]
      %v2252 = vld [vmem:[%s330 + $0x131] sm:$0xff]
      %v2253 = vld [vmem:[%s330 + $0x149] sm:$0xff]
      %v2254 = vld [vmem:[%s330 + $0x151] sm:$0xff]
      %v2255 = vld [vmem:[%s330 + $0x169] sm:$0xff]
      %v2256 = vld [vmem:[%s330 + $0x171] sm:$0xff]
      %v2257 = vld [vmem:[%s330 + $0x189] sm:$0xff]
      %v2258 = vld [vmem:[%s330 + $0x191] sm:$0xff]
      %v2259 = vld [vmem:[%s330 + $0x1a9] sm:$0xff]
      %v2260 = vld [vmem:[%s330 + $0x1b1] sm:$0xff]
      %v2261 = vld [vmem:[%s330 + $0x1c9] sm:$0xff]
      %v2262 = vld [vmem:[%s330 + $0x1d1] sm:$0xff]
      %v2263 = vld [vmem:[%s330 + $0x1e9] sm:$0xff]
      %v2264 = vld [vmem:[%s330 + $0x1f1] sm:$0xff]
      %s2265 = scalar_lea.vmem %s1, 40
      %v2266 = vld [vmem:[%s2265] sm:$0xff]
      %v2268 = vsel %vm225, %v2233, 0
      %v2271 = vsel %vm225, %v2234, 0
      %v2274 = vsel %vm225, %v2235, 0
      %v2277 = vsel %vm225, %v2236, 0
      %v2280 = vsel %vm225, %v2237, 0
      %v2283 = vsel %vm225, %v2238, 0
      %v2286 = vsel %vm225, %v2239, 0
      %v2289 = vsel %vm225, %v2240, 0
      %v2292 = vsel %vm225, %v2241, 0
      %v2295 = vsel %vm225, %v2242, 0
      %v2298 = vsel %vm225, %v2243, 0
      %v2301 = vsel %vm225, %v2244, 0
      %v2304 = vsel %vm225, %v2245, 0
      %v2307 = vsel %vm225, %v2246, 0
      %v2310 = vsel %vm225, %v2247, 0
      %v2313 = vsel %vm225, %v2248, 0
      %v2316 = vsel %vm225, %v2249, 0
      %v2319 = vsel %vm225, %v2250, 0
      %v2322 = vsel %vm225, %v2251, 0
      %v2325 = vsel %vm225, %v2252, 0
      %v2328 = vsel %vm225, %v2253, 0
      %v2331 = vsel %vm225, %v2254, 0
      %v2334 = vsel %vm225, %v2255, 0
      %v2337 = vsel %vm225, %v2256, 0
      %v2340 = vsel %vm225, %v2257, 0
      %v2343 = vsel %vm225, %v2258, 0
      %v2346 = vsel %vm225, %v2259, 0
      %v2349 = vsel %vm225, %v2260, 0
      %v2352 = vsel %vm225, %v2261, 0
      %v2355 = vsel %vm225, %v2262, 0
      %v2358 = vsel %vm225, %v2263, 0
      %v2361 = vsel %vm225, %v2264, 0
      %2363 = vmatprep.subr.mxu0 0.0
      %2364 = vmatpush1.msra.mxu0 %v2266
      %2365 = vmatprep.subr.mxu0 0.0
      %2366 = vmatpush1.msra.mxu0 0.0
      %2367 = vmatprep.subr.mxu0 0.0
      %2368 = vmatpush1.msra.mxu0 0.0
      %2369 = vmatprep.subr.mxu0 0.0
      %2370 = vmatpush1.msra.mxu0 0.0
      %2371 = vmatprep.subr.mxu0 0.0
      %2372 = vmatpush1.msra.mxu0 0.0
      %2373 = vmatprep.subr.mxu0 0.0
      %2374 = vmatpush1.msra.mxu0 0.0
      %2375 = vmatprep.subr.mxu0 0.0
      %2376 = vmatpush1.msra.mxu0 0.0
      %2377 = vmatprep.subr.mxu0 0.0
      %2378 = vmatpush1.msra.mxu0 0.0
      %2379 = vmatprep.subr.mxu0 0.0
      %2380 = vmatpush1.msra.mxu0 0.0
      %2381 = vmatprep.subr.mxu0 0.0
      %2382 = vmatpush1.msra.mxu0 0.0
      %2383 = vmatprep.subr.mxu0 0.0
      %2384 = vmatpush1.msra.mxu0 0.0
      %2385 = vmatprep.subr.mxu0 0.0
      %2386 = vmatpush1.msra.mxu0 0.0
      %2387 = vmatprep.subr.mxu0 0.0
      %2388 = vmatpush1.msra.mxu0 0.0
      %2389 = vmatprep.subr.mxu0 0.0
      %2390 = vmatpush1.msra.mxu0 0.0
      %2391 = vmatprep.subr.mxu0 0.0
      %2392 = vmatpush1.msra.mxu0 0.0
      %2393 = vmatprep.subr.mxu0 0.0
      %2394 = vmatpush1.msra.mxu0 0.0
      %2395 = vmatprep.subr.mxu0 0.0
      %2396 = vmatpush1.msra.mxu0 0.0
      %2397 = vmatprep.subr.mxu0 0.0
      %2398 = vmatpush1.msra.mxu0 0.0
      %2399 = vmatprep.subr.mxu0 0.0
      %2400 = vmatpush1.msra.mxu0 0.0
      %2401 = vmatprep.subr.mxu0 0.0
      %2402 = vmatpush1.msra.mxu0 0.0
      %2403 = vmatprep.subr.mxu0 0.0
      %2404 = vmatpush1.msra.mxu0 0.0
      %2405 = vmatprep.subr.mxu0 0.0
      %2406 = vmatpush1.msra.mxu0 0.0
      %2407 = vmatprep.subr.mxu0 0.0
      %2408 = vmatpush1.msra.mxu0 0.0
      %2409 = vmatprep.subr.mxu0 0.0
      %2410 = vmatpush1.msra.mxu0 0.0
      %2411 = vmatprep.subr.mxu0 0.0
      %2412 = vmatpush1.msra.mxu0 0.0
      %2413 = vmatprep.subr.mxu0 0.0
      %2414 = vmatpush1.msra.mxu0 0.0
      %2415 = vmatprep.subr.mxu0 0.0
      %2416 = vmatpush1.msra.mxu0 0.0
      %2417 = vmatprep.subr.mxu0 0.0
      %2418 = vmatpush1.msra.mxu0 0.0
      %2419 = vmatprep.subr.mxu0 0.0
      %2420 = vmatpush1.msra.mxu0 0.0
      %2421 = vmatprep.subr.mxu0 0.0
      %2422 = vmatpush1.msra.mxu0 0.0
      %2423 = vmatprep.subr.mxu0 0.0
      %2424 = vmatpush1.msra.mxu0 0.0
      %2425 = vmatprep.subr.mxu0 0.0
      %2426 = vmatpush1.msra.mxu0 0.0
      %2427 = vmatprep.mubr.f32.mxu0 0.0
      %2428 = vmatmul.mubr.f32.gmra.mrb[0].mxu0 %v2268
      %v2429 = vpop.f32.mrb[0].mxu0
      %v2430 = vadd.f32 0.0, %v2429
      %v2431 = vpop.f32.mrb[0].mxu0
      %2432 = vmatprep.mubr.f32.mxu0 0.0
      %2433 = vmatmul.mubr.f32.gmra.mrb[0].mxu0 %v2271
      %v2434 = vpop.f32.mrb[0].mxu0
      %v2435 = vadd.f32 0.0, %v2434
      %v2436 = vpop.f32.mrb[0].mxu0
      %2437 = vmatprep.mubr.f32.mxu0 0.0
      %2438 = vmatmul.mubr.f32.gmra.mrb[0].mxu0 %v2274
      %v2439 = vpop.f32.mrb[0].mxu0
      %v2440 = vadd.f32 0.0, %v2439
      %v2441 = vpop.f32.mrb[0].mxu0
      %2442 = vmatprep.mubr.f32.mxu0 0.0
      %2443 = vmatmul.mubr.f32.gmra.mrb[0].mxu0 %v2277
      %v2444 = vpop.f32.mrb[0].mxu0
      %v2445 = vadd.f32 0.0, %v2444
      %v2446 = vpop.f32.mrb[0].mxu0
      %2447 = vmatprep.mubr.f32.mxu0 0.0
      %2448 = vmatmul.mubr.f32.gmra.mrb[0].mxu0 %v2280
      %v2449 = vpop.f32.mrb[0].mxu0
      %v2450 = vadd.f32 0.0, %v2449
      %v2451 = vpop.f32.mrb[0].mxu0
      %2452 = vmatprep.mubr.f32.mxu0 0.0
      %2453 = vmatmul.mubr.f32.gmra.mrb[0].mxu0 %v2283
      %v2454 = vpop.f32.mrb[0].mxu0
      %v2455 = vadd.f32 0.0, %v2454
      %v2456 = vpop.f32.mrb[0].mxu0
      %2457 = vmatprep.mubr.f32.mxu0 0.0
      %2458 = vmatmul.mubr.f32.gmra.mrb[0].mxu0 %v2286
      %v2459 = vpop.f32.mrb[0].mxu0
      %v2460 = vadd.f32 0.0, %v2459
      %v2461 = vpop.f32.mrb[0].mxu0
      %2462 = vmatprep.mubr.f32.mxu0 0.0
      %2463 = vmatmul.mubr.f32.gmra.mrb[0].mxu0 %v2289
      %v2464 = vpop.f32.mrb[0].mxu0
      %v2465 = vadd.f32 0.0, %v2464
      %v2466 = vpop.f32.mrb[0].mxu0
      %2467 = vmatprep.mubr.f32.mxu0 0.0
      %2468 = vmatmul.mubr.f32.gmra.mrb[0].mxu0 %v2292
      %v2469 = vpop.f32.mrb[0].mxu0
      %v2470 = vadd.f32 0.0, %v2469
      %v2471 = vpop.f32.mrb[0].mxu0
      %2472 = vmatprep.mubr.f32.mxu0 0.0
      %2473 = vmatmul.mubr.f32.gmra.mrb[0].mxu0 %v2295
      %v2474 = vpop.f32.mrb[0].mxu0
      %v2475 = vadd.f32 0.0, %v2474
      %v2476 = vpop.f32.mrb[0].mxu0
      %2477 = vmatprep.mubr.f32.mxu0 0.0
      %2478 = vmatmul.mubr.f32.gmra.mrb[0].mxu0 %v2298
      %v2479 = vpop.f32.mrb[0].mxu0
      %v2480 = vadd.f32 0.0, %v2479
      %v2481 = vpop.f32.mrb[0].mxu0
      %2482 = vmatprep.mubr.f32.mxu0 0.0
      %2483 = vmatmul.mubr.f32.gmra.mrb[0].mxu0 %v2301
      %v2484 = vpop.f32.mrb[0].mxu0
      %v2485 = vadd.f32 0.0, %v2484
      %v2486 = vpop.f32.mrb[0].mxu0
      %2487 = vmatprep.mubr.f32.mxu0 0.0
      %2488 = vmatmul.mubr.f32.gmra.mrb[0].mxu0 %v2304
      %v2489 = vpop.f32.mrb[0].mxu0
      %v2490 = vadd.f32 0.0, %v2489
      %v2491 = vpop.f32.mrb[0].mxu0
      %2492 = vmatprep.mubr.f32.mxu0 0.0
      %2493 = vmatmul.mubr.f32.gmra.mrb[0].mxu0 %v2307
      %v2494 = vpop.f32.mrb[0].mxu0
      %v2495 = vadd.f32 0.0, %v2494
      %v2496 = vpop.f32.mrb[0].mxu0
      %2497 = vmatprep.mubr.f32.mxu0 0.0
      %2498 = vmatmul.mubr.f32.gmra.mrb[0].mxu0 %v2310
      %v2499 = vpop.f32.mrb[0].mxu0
      %v2500 = vadd.f32 0.0, %v2499
      %v2501 = vpop.f32.mrb[0].mxu0
      %2502 = vmatprep.mubr.f32.mxu0 0.0
      %2503 = vmatmul.mubr.f32.gmra.mrb[0].mxu0 %v2313
      %v2504 = vpop.f32.mrb[0].mxu0
      %v2505 = vadd.f32 0.0, %v2504
      %v2506 = vpop.f32.mrb[0].mxu0
      %2507 = vmatprep.mubr.f32.mxu0 0.0
      %2508 = vmatmul.mubr.f32.gmra.mrb[0].mxu0 %v2316
      %v2509 = vpop.f32.mrb[0].mxu0
      %v2510 = vadd.f32 0.0, %v2509
      %v2511 = vpop.f32.mrb[0].mxu0
      %2512 = vmatprep.mubr.f32.mxu0 0.0
      %2513 = vmatmul.mubr.f32.gmra.mrb[0].mxu0 %v2319
      %v2514 = vpop.f32.mrb[0].mxu0
      %v2515 = vadd.f32 0.0, %v2514
      %v2516 = vpop.f32.mrb[0].mxu0
      %2517 = vmatprep.mubr.f32.mxu0 0.0
      %2518 = vmatmul.mubr.f32.gmra.mrb[0].mxu0 %v2322
      %v2519 = vpop.f32.mrb[0].mxu0
      %v2520 = vadd.f32 0.0, %v2519
      %v2521 = vpop.f32.mrb[0].mxu0
      %2522 = vmatprep.mubr.f32.mxu0 0.0
      %2523 = vmatmul.mubr.f32.gmra.mrb[0].mxu0 %v2325
      %v2524 = vpop.f32.mrb[0].mxu0
      %v2525 = vadd.f32 0.0, %v2524
      %v2526 = vpop.f32.mrb[0].mxu0
      %2527 = vmatprep.mubr.f32.mxu0 0.0
      %2528 = vmatmul.mubr.f32.gmra.mrb[0].mxu0 %v2328
      %v2529 = vpop.f32.mrb[0].mxu0
      %v2530 = vadd.f32 0.0, %v2529
      %v2531 = vpop.f32.mrb[0].mxu0
      %2532 = vmatprep.mubr.f32.mxu0 0.0
      %2533 = vmatmul.mubr.f32.gmra.mrb[0].mxu0 %v2331
      %v2534 = vpop.f32.mrb[0].mxu0
      %v2535 = vadd.f32 0.0, %v2534
      %v2536 = vpop.f32.mrb[0].mxu0
      %2537 = vmatprep.mubr.f32.mxu0 0.0
      %2538 = vmatmul.mubr.f32.gmra.mrb[0].mxu0 %v2334
      %v2539 = vpop.f32.mrb[0].mxu0
      %v2540 = vadd.f32 0.0, %v2539
      %v2541 = vpop.f32.mrb[0].mxu0
      %2542 = vmatprep.mubr.f32.mxu0 0.0
      %2543 = vmatmul.mubr.f32.gmra.mrb[0].mxu0 %v2337
      %v2544 = vpop.f32.mrb[0].mxu0
      %v2545 = vadd.f32 0.0, %v2544
      %v2546 = vpop.f32.mrb[0].mxu0
      %2547 = vmatprep.mubr.f32.mxu0 0.0
      %2548 = vmatmul.mubr.f32.gmra.mrb[0].mxu0 %v2340
      %v2549 = vpop.f32.mrb[0].mxu0
      %v2550 = vadd.f32 0.0, %v2549
      %v2551 = vpop.f32.mrb[0].mxu0
      %2552 = vmatprep.mubr.f32.mxu0 0.0
      %2553 = vmatmul.mubr.f32.gmra.mrb[0].mxu0 %v2343
      %v2554 = vpop.f32.mrb[0].mxu0
      %v2555 = vadd.f32 0.0, %v2554
      %v2556 = vpop.f32.mrb[0].mxu0
      %2557 = vmatprep.mubr.f32.mxu0 0.0
      %2558 = vmatmul.mubr.f32.gmra.mrb[0].mxu0 %v2346
      %v2559 = vpop.f32.mrb[0].mxu0
      %v2560 = vadd.f32 0.0, %v2559
      %v2561 = vpop.f32.mrb[0].mxu0
      %2562 = vmatprep.mubr.f32.mxu0 0.0
      %2563 = vmatmul.mubr.f32.gmra.mrb[0].mxu0 %v2349
      %v2564 = vpop.f32.mrb[0].mxu0
      %v2565 = vadd.f32 0.0, %v2564
      %v2566 = vpop.f32.mrb[0].mxu0
      %2567 = vmatprep.mubr.f32.mxu0 0.0
      %2568 = vmatmul.mubr.f32.gmra.mrb[0].mxu0 %v2352
      %v2569 = vpop.f32.mrb[0].mxu0
      %v2570 = vadd.f32 0.0, %v2569
      %v2571 = vpop.f32.mrb[0].mxu0
      %2572 = vmatprep.mubr.f32.mxu0 0.0
      %2573 = vmatmul.mubr.f32.gmra.mrb[0].mxu0 %v2355
      %v2574 = vpop.f32.mrb[0].mxu0
      %v2575 = vadd.f32 0.0, %v2574
      %v2576 = vpop.f32.mrb[0].mxu0
      %2577 = vmatprep.mubr.f32.mxu0 0.0
      %2578 = vmatmul.mubr.f32.gmra.mrb[0].mxu0 %v2358
      %v2579 = vpop.f32.mrb[0].mxu0
      %v2580 = vadd.f32 0.0, %v2579
      %v2581 = vpop.f32.mrb[0].mxu0
      %2582 = vmatprep.mubr.f32.mxu0 0.0
      %2583 = vmatmul.mubr.f32.gmra.mrb[0].mxu0 %v2361
      %v2584 = vpop.f32.mrb[0].mxu0
      %v2585 = vadd.f32 0.0, %v2584
      %v2586 = vpop.f32.mrb[0].mxu0
      %2587 = vdwg.mxu0
      %v2588 = vadd.f32 %v2201, %v2430
      %v2589 = vadd.f32 %v2202, %v2435
      %v2590 = vadd.f32 %v2203, %v2440
      %v2591 = vadd.f32 %v2204, %v2445
      %v2592 = vadd.f32 %v2205, %v2450
      %v2593 = vadd.f32 %v2206, %v2455
      %v2594 = vadd.f32 %v2207, %v2460
      %v2595 = vadd.f32 %v2208, %v2465
      %v2596 = vadd.f32 %v2209, %v2470
      %v2597 = vadd.f32 %v2210, %v2475
      %v2598 = vadd.f32 %v2211, %v2480
      %v2599 = vadd.f32 %v2212, %v2485
      %v2600 = vadd.f32 %v2213, %v2490
      %v2601 = vadd.f32 %v2214, %v2495
      %v2602 = vadd.f32 %v2215, %v2500
      %v2603 = vadd.f32 %v2216, %v2505
      %v2604 = vadd.f32 %v2217, %v2510
      %v2605 = vadd.f32 %v2218, %v2515
      %v2606 = vadd.f32 %v2219, %v2520
      %v2607 = vadd.f32 %v2220, %v2525
      %v2608 = vadd.f32 %v2221, %v2530
      %v2609 = vadd.f32 %v2222, %v2535
      %v2610 = vadd.f32 %v2223, %v2540
      %v2611 = vadd.f32 %v2224, %v2545
      %v2612 = vadd.f32 %v2225, %v2550
      %v2613 = vadd.f32 %v2226, %v2555
      %v2614 = vadd.f32 %v2227, %v2560
      %v2615 = vadd.f32 %v2228, %v2565
      %v2616 = vadd.f32 %v2229, %v2570
      %v2617 = vadd.f32 %v2230, %v2575
      %v2618 = vadd.f32 %v2231, %v2580
      %v2619 = vadd.f32 %v2232, %v2585
      %s2620 = scalar_lea.vmem [#allocation2], 64
      %v2621 = vld [vmem:[%s2620 + $0x7] sm:$0xff]
      %v2622 = vld [vmem:[%s2620 + $0xf] sm:$0xff]
      %v2623 = vld [vmem:[%s2620 + $0x27] sm:$0xff]
      %v2624 = vld [vmem:[%s2620 + $0x2f] sm:$0xff]
      %v2625 = vld [vmem:[%s2620 + $0x47] sm:$0xff]
      %v2626 = vld [vmem:[%s2620 + $0x4f] sm:$0xff]
      %v2627 = vld [vmem:[%s2620 + $0x67] sm:$0xff]
      %v2628 = vld [vmem:[%s2620 + $0x6f] sm:$0xff]
      %v2629 = vld [vmem:[%s2620 + $0x87] sm:$0xff]
      %v2630 = vld [vmem:[%s2620 + $0x8f] sm:$0xff]
      %v2631 = vld [vmem:[%s2620 + $0xa7] sm:$0xff]
      %v2632 = vld [vmem:[%s2620 + $0xaf] sm:$0xff]
      %v2633 = vld [vmem:[%s2620 + $0xc7] sm:$0xff]
      %v2634 = vld [vmem:[%s2620 + $0xcf] sm:$0xff]
      %v2635 = vld [vmem:[%s2620 + $0xe7] sm:$0xff]
      %v2636 = vld [vmem:[%s2620 + $0xef] sm:$0xff]
      %v2637 = vld [vmem:[%s2620 + $0x107] sm:$0xff]
      %v2638 = vld [vmem:[%s2620 + $0x10f] sm:$0xff]
      %v2639 = vld [vmem:[%s2620 + $0x127] sm:$0xff]
      %v2640 = vld [vmem:[%s2620 + $0x12f] sm:$0xff]
      %v2641 = vld [vmem:[%s2620 + $0x147] sm:$0xff]
      %v2642 = vld [vmem:[%s2620 + $0x14f] sm:$0xff]
      %v2643 = vld [vmem:[%s2620 + $0x167] sm:$0xff]
      %v2644 = vld [vmem:[%s2620 + $0x16f] sm:$0xff]
      %v2645 = vld [vmem:[%s2620 + $0x187] sm:$0xff]
      %v2646 = vld [vmem:[%s2620 + $0x18f] sm:$0xff]
      %v2647 = vld [vmem:[%s2620 + $0x1a7] sm:$0xff]
      %v2648 = vld [vmem:[%s2620 + $0x1af] sm:$0xff]
      %v2649 = vld [vmem:[%s2620 + $0x1c7] sm:$0xff]
      %v2650 = vld [vmem:[%s2620 + $0x1cf] sm:$0xff]
      %v2651 = vld [vmem:[%s2620 + $0x1e7] sm:$0xff]
      %v2652 = vld [vmem:[%s2620 + $0x1ef] sm:$0xff]
      %s2653 = scalar_lea.vmem %s1, 48
      %v2654 = vld [vmem:[%s2653] sm:$0xff]
      %v2656 = vsel %vm225, %v2621, 0
      %v2659 = vsel %vm225, %v2622, 0
      %v2662 = vsel %vm225, %v2623, 0
      %v2665 = vsel %vm225, %v2624, 0
      %v2668 = vsel %vm225, %v2625, 0
      %v2671 = vsel %vm225, %v2626, 0
      %v2674 = vsel %vm225, %v2627, 0
      %v2677 = vsel %vm225, %v2628, 0
      %v2680 = vsel %vm225, %v2629, 0
      %v2683 = vsel %vm225, %v2630, 0
      %v2686 = vsel %vm225, %v2631, 0
      %v2689 = vsel %vm225, %v2632, 0
      %v2692 = vsel %vm225, %v2633, 0
      %v2695 = vsel %vm225, %v2634, 0
      %v2698 = vsel %vm225, %v2635, 0
      %v2701 = vsel %vm225, %v2636, 0
      %v2704 = vsel %vm225, %v2637, 0
      %v2707 = vsel %vm225, %v2638, 0
      %v2710 = vsel %vm225, %v2639, 0
      %v2713 = vsel %vm225, %v2640, 0
      %v2716 = vsel %vm225, %v2641, 0
      %v2719 = vsel %vm225, %v2642, 0
      %v2722 = vsel %vm225, %v2643, 0
      %v2725 = vsel %vm225, %v2644, 0
      %v2728 = vsel %vm225, %v2645, 0
      %v2731 = vsel %vm225, %v2646, 0
      %v2734 = vsel %vm225, %v2647, 0
      %v2737 = vsel %vm225, %v2648, 0
      %v2740 = vsel %vm225, %v2649, 0
      %v2743 = vsel %vm225, %v2650, 0
      %v2746 = vsel %vm225, %v2651, 0
      %v2749 = vsel %vm225, %v2652, 0
      %2751 = vmatprep.subr.mxu0 0.0
      %2752 = vmatpush1.msra.mxu0 %v2654
      %2753 = vmatprep.subr.mxu0 0.0
      %2754 = vmatpush1.msra.mxu0 0.0
      %2755 = vmatprep.subr.mxu0 0.0
      %2756 = vmatpush1.msra.mxu0 0.0
      %2757 = vmatprep.subr.mxu0 0.0
      %2758 = vmatpush1.msra.mxu0 0.0
      %2759 = vmatprep.subr.mxu0 0.0
      %2760 = vmatpush1.msra.mxu0 0.0
      %2761 = vmatprep.subr.mxu0 0.0
      %2762 = vmatpush1.msra.mxu0 0.0
      %2763 = vmatprep.subr.mxu0 0.0
      %2764 = vmatpush1.msra.mxu0 0.0
      %2765 = vmatprep.subr.mxu0 0.0
      %2766 = vmatpush1.msra.mxu0 0.0
      %2767 = vmatprep.subr.mxu0 0.0
      %2768 = vmatpush1.msra.mxu0 0.0
      %2769 = vmatprep.subr.mxu0 0.0
      %2770 = vmatpush1.msra.mxu0 0.0
      %2771 = vmatprep.subr.mxu0 0.0
      %2772 = vmatpush1.msra.mxu0 0.0
      %2773 = vmatprep.subr.mxu0 0.0
      %2774 = vmatpush1.msra.mxu0 0.0
      %2775 = vmatprep.subr.mxu0 0.0
      %2776 = vmatpush1.msra.mxu0 0.0
      %2777 = vmatprep.subr.mxu0 0.0
      %2778 = vmatpush1.msra.mxu0 0.0
      %2779 = vmatprep.subr.mxu0 0.0
      %2780 = vmatpush1.msra.mxu0 0.0
      %2781 = vmatprep.subr.mxu0 0.0
      %2782 = vmatpush1.msra.mxu0 0.0
      %2783 = vmatprep.subr.mxu0 0.0
      %2784 = vmatpush1.msra.mxu0 0.0
      %2785 = vmatprep.subr.mxu0 0.0
      %2786 = vmatpush1.msra.mxu0 0.0
      %2787 = vmatprep.subr.mxu0 0.0
      %2788 = vmatpush1.msra.mxu0 0.0
      %2789 = vmatprep.subr.mxu0 0.0
      %2790 = vmatpush1.msra.mxu0 0.0
      %2791 = vmatprep.subr.mxu0 0.0
      %2792 = vmatpush1.msra.mxu0 0.0
      %2793 = vmatprep.subr.mxu0 0.0
      %2794 = vmatpush1.msra.mxu0 0.0
      %2795 = vmatprep.subr.mxu0 0.0
      %2796 = vmatpush1.msra.mxu0 0.0
      %2797 = vmatprep.subr.mxu0 0.0
      %2798 = vmatpush1.msra.mxu0 0.0
      %2799 = vmatprep.subr.mxu0 0.0
      %2800 = vmatpush1.msra.mxu0 0.0
      %2801 = vmatprep.subr.mxu0 0.0
      %2802 = vmatpush1.msra.mxu0 0.0
      %2803 = vmatprep.subr.mxu0 0.0
      %2804 = vmatpush1.msra.mxu0 0.0
      %2805 = vmatprep.subr.mxu0 0.0
      %2806 = vmatpush1.msra.mxu0 0.0
      %2807 = vmatprep.subr.mxu0 0.0
      %2808 = vmatpush1.msra.mxu0 0.0
      %2809 = vmatprep.subr.mxu0 0.0
      %2810 = vmatpush1.msra.mxu0 0.0
      %2811 = vmatprep.subr.mxu0 0.0
      %2812 = vmatpush1.msra.mxu0 0.0
      %2813 = vmatprep.subr.mxu0 0.0
      %2814 = vmatpush1.msra.mxu0 0.0
      %2815 = vmatprep.mubr.f32.mxu0 0.0
      %2816 = vmatmul.mubr.f32.gmra.mrb[0].mxu0 %v2656
      %v2817 = vpop.f32.mrb[0].mxu0
      %v2818 = vadd.f32 0.0, %v2817
      %v2819 = vpop.f32.mrb[0].mxu0
      %2820 = vmatprep.mubr.f32.mxu0 0.0
      %2821 = vmatmul.mubr.f32.gmra.mrb[0].mxu0 %v2659
      %v2822 = vpop.f32.mrb[0].mxu0
      %v2823 = vadd.f32 0.0, %v2822
      %v2824 = vpop.f32.mrb[0].mxu0
      %2825 = vmatprep.mubr.f32.mxu0 0.0
      %2826 = vmatmul.mubr.f32.gmra.mrb[0].mxu0 %v2662
      %v2827 = vpop.f32.mrb[0].mxu0
      %v2828 = vadd.f32 0.0, %v2827
      %v2829 = vpop.f32.mrb[0].mxu0
      %2830 = vmatprep.mubr.f32.mxu0 0.0
      %2831 = vmatmul.mubr.f32.gmra.mrb[0].mxu0 %v2665
      %v2832 = vpop.f32.mrb[0].mxu0
      %v2833 = vadd.f32 0.0, %v2832
      %v2834 = vpop.f32.mrb[0].mxu0
      %2835 = vmatprep.mubr.f32.mxu0 0.0
      %2836 = vmatmul.mubr.f32.gmra.mrb[0].mxu0 %v2668
      %v2837 = vpop.f32.mrb[0].mxu0
      %v2838 = vadd.f32 0.0, %v2837
      %v2839 = vpop.f32.mrb[0].mxu0
      %2840 = vmatprep.mubr.f32.mxu0 0.0
      %2841 = vmatmul.mubr.f32.gmra.mrb[0].mxu0 %v2671
      %v2842 = vpop.f32.mrb[0].mxu0
      %v2843 = vadd.f32 0.0, %v2842
      %v2844 = vpop.f32.mrb[0].mxu0
      %2845 = vmatprep.mubr.f32.mxu0 0.0
      %2846 = vmatmul.mubr.f32.gmra.mrb[0].mxu0 %v2674
      %v2847 = vpop.f32.mrb[0].mxu0
      %v2848 = vadd.f32 0.0, %v2847
      %v2849 = vpop.f32.mrb[0].mxu0
      %2850 = vmatprep.mubr.f32.mxu0 0.0
      %2851 = vmatmul.mubr.f32.gmra.mrb[0].mxu0 %v2677
      %v2852 = vpop.f32.mrb[0].mxu0
      %v2853 = vadd.f32 0.0, %v2852
      %v2854 = vpop.f32.mrb[0].mxu0
      %2855 = vmatprep.mubr.f32.mxu0 0.0
      %2856 = vmatmul.mubr.f32.gmra.mrb[0].mxu0 %v2680
      %v2857 = vpop.f32.mrb[0].mxu0
      %v2858 = vadd.f32 0.0, %v2857
      %v2859 = vpop.f32.mrb[0].mxu0
      %2860 = vmatprep.mubr.f32.mxu0 0.0
      %2861 = vmatmul.mubr.f32.gmra.mrb[0].mxu0 %v2683
      %v2862 = vpop.f32.mrb[0].mxu0
      %v2863 = vadd.f32 0.0, %v2862
      %v2864 = vpop.f32.mrb[0].mxu0
      %2865 = vmatprep.mubr.f32.mxu0 0.0
      %2866 = vmatmul.mubr.f32.gmra.mrb[0].mxu0 %v2686
      %v2867 = vpop.f32.mrb[0].mxu0
      %v2868 = vadd.f32 0.0, %v2867
      %v2869 = vpop.f32.mrb[0].mxu0
      %2870 = vmatprep.mubr.f32.mxu0 0.0
      %2871 = vmatmul.mubr.f32.gmra.mrb[0].mxu0 %v2689
      %v2872 = vpop.f32.mrb[0].mxu0
      %v2873 = vadd.f32 0.0, %v2872
      %v2874 = vpop.f32.mrb[0].mxu0
      %2875 = vmatprep.mubr.f32.mxu0 0.0
      %2876 = vmatmul.mubr.f32.gmra.mrb[0].mxu0 %v2692
      %v2877 = vpop.f32.mrb[0].mxu0
      %v2878 = vadd.f32 0.0, %v2877
      %v2879 = vpop.f32.mrb[0].mxu0
      %2880 = vmatprep.mubr.f32.mxu0 0.0
      %2881 = vmatmul.mubr.f32.gmra.mrb[0].mxu0 %v2695
      %v2882 = vpop.f32.mrb[0].mxu0
      %v2883 = vadd.f32 0.0, %v2882
      %v2884 = vpop.f32.mrb[0].mxu0
      %2885 = vmatprep.mubr.f32.mxu0 0.0
      %2886 = vmatmul.mubr.f32.gmra.mrb[0].mxu0 %v2698
      %v2887 = vpop.f32.mrb[0].mxu0
      %v2888 = vadd.f32 0.0, %v2887
      %v2889 = vpop.f32.mrb[0].mxu0
      %2890 = vmatprep.mubr.f32.mxu0 0.0
      %2891 = vmatmul.mubr.f32.gmra.mrb[0].mxu0 %v2701
      %v2892 = vpop.f32.mrb[0].mxu0
      %v2893 = vadd.f32 0.0, %v2892
      %v2894 = vpop.f32.mrb[0].mxu0
      %2895 = vmatprep.mubr.f32.mxu0 0.0
      %2896 = vmatmul.mubr.f32.gmra.mrb[0].mxu0 %v2704
      %v2897 = vpop.f32.mrb[0].mxu0
      %v2898 = vadd.f32 0.0, %v2897
      %v2899 = vpop.f32.mrb[0].mxu0
      %2900 = vmatprep.mubr.f32.mxu0 0.0
      %2901 = vmatmul.mubr.f32.gmra.mrb[0].mxu0 %v2707
      %v2902 = vpop.f32.mrb[0].mxu0
      %v2903 = vadd.f32 0.0, %v2902
      %v2904 = vpop.f32.mrb[0].mxu0
      %2905 = vmatprep.mubr.f32.mxu0 0.0
      %2906 = vmatmul.mubr.f32.gmra.mrb[0].mxu0 %v2710
      %v2907 = vpop.f32.mrb[0].mxu0
      %v2908 = vadd.f32 0.0, %v2907
      %v2909 = vpop.f32.mrb[0].mxu0
      %2910 = vmatprep.mubr.f32.mxu0 0.0
      %2911 = vmatmul.mubr.f32.gmra.mrb[0].mxu0 %v2713
      %v2912 = vpop.f32.mrb[0].mxu0
      %v2913 = vadd.f32 0.0, %v2912
      %v2914 = vpop.f32.mrb[0].mxu0
      %2915 = vmatprep.mubr.f32.mxu0 0.0
      %2916 = vmatmul.mubr.f32.gmra.mrb[0].mxu0 %v2716
      %v2917 = vpop.f32.mrb[0].mxu0
      %v2918 = vadd.f32 0.0, %v2917
      %v2919 = vpop.f32.mrb[0].mxu0
      %2920 = vmatprep.mubr.f32.mxu0 0.0
      %2921 = vmatmul.mubr.f32.gmra.mrb[0].mxu0 %v2719
      %v2922 = vpop.f32.mrb[0].mxu0
      %v2923 = vadd.f32 0.0, %v2922
      %v2924 = vpop.f32.mrb[0].mxu0
      %2925 = vmatprep.mubr.f32.mxu0 0.0
      %2926 = vmatmul.mubr.f32.gmra.mrb[0].mxu0 %v2722
      %v2927 = vpop.f32.mrb[0].mxu0
      %v2928 = vadd.f32 0.0, %v2927
      %v2929 = vpop.f32.mrb[0].mxu0
      %2930 = vmatprep.mubr.f32.mxu0 0.0
      %2931 = vmatmul.mubr.f32.gmra.mrb[0].mxu0 %v2725
      %v2932 = vpop.f32.mrb[0].mxu0
      %v2933 = vadd.f32 0.0, %v2932
      %v2934 = vpop.f32.mrb[0].mxu0
      %2935 = vmatprep.mubr.f32.mxu0 0.0
      %2936 = vmatmul.mubr.f32.gmra.mrb[0].mxu0 %v2728
      %v2937 = vpop.f32.mrb[0].mxu0
      %v2938 = vadd.f32 0.0, %v2937
      %v2939 = vpop.f32.mrb[0].mxu0
      %2940 = vmatprep.mubr.f32.mxu0 0.0
      %2941 = vmatmul.mubr.f32.gmra.mrb[0].mxu0 %v2731
      %v2942 = vpop.f32.mrb[0].mxu0
      %v2943 = vadd.f32 0.0, %v2942
      %v2944 = vpop.f32.mrb[0].mxu0
      %2945 = vmatprep.mubr.f32.mxu0 0.0
      %2946 = vmatmul.mubr.f32.gmra.mrb[0].mxu0 %v2734
      %v2947 = vpop.f32.mrb[0].mxu0
      %v2948 = vadd.f32 0.0, %v2947
      %v2949 = vpop.f32.mrb[0].mxu0
      %2950 = vmatprep.mubr.f32.mxu0 0.0
      %2951 = vmatmul.mubr.f32.gmra.mrb[0].mxu0 %v2737
      %v2952 = vpop.f32.mrb[0].mxu0
      %v2953 = vadd.f32 0.0, %v2952
      %v2954 = vpop.f32.mrb[0].mxu0
      %2955 = vmatprep.mubr.f32.mxu0 0.0
      %2956 = vmatmul.mubr.f32.gmra.mrb[0].mxu0 %v2740
      %v2957 = vpop.f32.mrb[0].mxu0
      %v2958 = vadd.f32 0.0, %v2957
      %v2959 = vpop.f32.mrb[0].mxu0
      %2960 = vmatprep.mubr.f32.mxu0 0.0
      %2961 = vmatmul.mubr.f32.gmra.mrb[0].mxu0 %v2743
      %v2962 = vpop.f32.mrb[0].mxu0
      %v2963 = vadd.f32 0.0, %v2962
      %v2964 = vpop.f32.mrb[0].mxu0
      %2965 = vmatprep.mubr.f32.mxu0 0.0
      %2966 = vmatmul.mubr.f32.gmra.mrb[0].mxu0 %v2746
      %v2967 = vpop.f32.mrb[0].mxu0
      %v2968 = vadd.f32 0.0, %v2967
      %v2969 = vpop.f32.mrb[0].mxu0
      %2970 = vmatprep.mubr.f32.mxu0 0.0
      %2971 = vmatmul.mubr.f32.gmra.mrb[0].mxu0 %v2749
      %v2972 = vpop.f32.mrb[0].mxu0
      %v2973 = vadd.f32 0.0, %v2972
      %v2974 = vpop.f32.mrb[0].mxu0
      %2975 = vdwg.mxu0
      %v2976 = vadd.f32 %v2588, %v2818
      %v2977 = vadd.f32 %v2589, %v2823
      %v2978 = vadd.f32 %v2590, %v2828
      %v2979 = vadd.f32 %v2591, %v2833
      %v2980 = vadd.f32 %v2592, %v2838
      %v2981 = vadd.f32 %v2593, %v2843
      %v2982 = vadd.f32 %v2594, %v2848
      %v2983 = vadd.f32 %v2595, %v2853
      %v2984 = vadd.f32 %v2596, %v2858
      %v2985 = vadd.f32 %v2597, %v2863
      %v2986 = vadd.f32 %v2598, %v2868
      %v2987 = vadd.f32 %v2599, %v2873
      %v2988 = vadd.f32 %v2600, %v2878
      %v2989 = vadd.f32 %v2601, %v2883
      %v2990 = vadd.f32 %v2602, %v2888
      %v2991 = vadd.f32 %v2603, %v2893
      %v2992 = vadd.f32 %v2604, %v2898
      %v2993 = vadd.f32 %v2605, %v2903
      %v2994 = vadd.f32 %v2606, %v2908
      %v2995 = vadd.f32 %v2607, %v2913
      %v2996 = vadd.f32 %v2608, %v2918
      %v2997 = vadd.f32 %v2609, %v2923
      %v2998 = vadd.f32 %v2610, %v2928
      %v2999 = vadd.f32 %v2611, %v2933
      %v3000 = vadd.f32 %v2612, %v2938
      %v3001 = vadd.f32 %v2613, %v2943
      %v3002 = vadd.f32 %v2614, %v2948
      %v3003 = vadd.f32 %v2615, %v2953
      %v3004 = vadd.f32 %v2616, %v2958
      %v3005 = vadd.f32 %v2617, %v2963
      %v3006 = vadd.f32 %v2618, %v2968
      %v3007 = vadd.f32 %v2619, %v2973
      %v3008 = vld [vmem:[%s2620 + $0x8] sm:$0xff]
      %v3009 = vld [vmem:[%s2620 + $0x10] sm:$0xff]
      %v3010 = vld [vmem:[%s2620 + $0x28] sm:$0xff]
      %v3011 = vld [vmem:[%s2620 + $0x30] sm:$0xff]
      %v3012 = vld [vmem:[%s2620 + $0x48] sm:$0xff]
      %v3013 = vld [vmem:[%s2620 + $0x50] sm:$0xff]
      %v3014 = vld [vmem:[%s2620 + $0x68] sm:$0xff]
      %v3015 = vld [vmem:[%s2620 + $0x70] sm:$0xff]
      %v3016 = vld [vmem:[%s2620 + $0x88] sm:$0xff]
      %v3017 = vld [vmem:[%s2620 + $0x90] sm:$0xff]
      %v3018 = vld [vmem:[%s2620 + $0xa8] sm:$0xff]
      %v3019 = vld [vmem:[%s2620 + $0xb0] sm:$0xff]
      %v3020 = vld [vmem:[%s2620 + $0xc8] sm:$0xff]
      %v3021 = vld [vmem:[%s2620 + $0xd0] sm:$0xff]
      %v3022 = vld [vmem:[%s2620 + $0xe8] sm:$0xff]
      %v3023 = vld [vmem:[%s2620 + $0xf0] sm:$0xff]
      %v3024 = vld [vmem:[%s2620 + $0x108] sm:$0xff]
      %v3025 = vld [vmem:[%s2620 + $0x110] sm:$0xff]
      %v3026 = vld [vmem:[%s2620 + $0x128] sm:$0xff]
      %v3027 = vld [vmem:[%s2620 + $0x130] sm:$0xff]
      %v3028 = vld [vmem:[%s2620 + $0x148] sm:$0xff]
      %v3029 = vld [vmem:[%s2620 + $0x150] sm:$0xff]
      %v3030 = vld [vmem:[%s2620 + $0x168] sm:$0xff]
      %v3031 = vld [vmem:[%s2620 + $0x170] sm:$0xff]
      %v3032 = vld [vmem:[%s2620 + $0x188] sm:$0xff]
      %v3033 = vld [vmem:[%s2620 + $0x190] sm:$0xff]
      %v3034 = vld [vmem:[%s2620 + $0x1a8] sm:$0xff]
      %v3035 = vld [vmem:[%s2620 + $0x1b0] sm:$0xff]
      %v3036 = vld [vmem:[%s2620 + $0x1c8] sm:$0xff]
      %v3037 = vld [vmem:[%s2620 + $0x1d0] sm:$0xff]
      %v3038 = vld [vmem:[%s2620 + $0x1e8] sm:$0xff]
      %v3039 = vld [vmem:[%s2620 + $0x1f0] sm:$0xff]
      %s3040 = scalar_lea.vmem %s1, 56
      %v3041 = vld [vmem:[%s3040] sm:$0xff]
      %v3043 = vsel %vm225, %v3008, 0
      %v3046 = vsel %vm225, %v3009, 0
      %v3049 = vsel %vm225, %v3010, 0
      %v3052 = vsel %vm225, %v3011, 0
      %v3055 = vsel %vm225, %v3012, 0
      %v3058 = vsel %vm225, %v3013, 0
      %v3061 = vsel %vm225, %v3014, 0
      %v3064 = vsel %vm225, %v3015, 0
      %v3067 = vsel %vm225, %v3016, 0
      %v3070 = vsel %vm225, %v3017, 0
      %v3073 = vsel %vm225, %v3018, 0
      %v3076 = vsel %vm225, %v3019, 0
      %v3079 = vsel %vm225, %v3020, 0
      %v3082 = vsel %vm225, %v3021, 0
      %v3085 = vsel %vm225, %v3022, 0
      %v3088 = vsel %vm225, %v3023, 0
      %v3091 = vsel %vm225, %v3024, 0
      %v3094 = vsel %vm225, %v3025, 0
      %v3097 = vsel %vm225, %v3026, 0
      %v3100 = vsel %vm225, %v3027, 0
      %v3103 = vsel %vm225, %v3028, 0
      %v3106 = vsel %vm225, %v3029, 0
      %v3109 = vsel %vm225, %v3030, 0
      %v3112 = vsel %vm225, %v3031, 0
      %v3115 = vsel %vm225, %v3032, 0
      %v3118 = vsel %vm225, %v3033, 0
      %v3121 = vsel %vm225, %v3034, 0
      %v3124 = vsel %vm225, %v3035, 0
      %v3127 = vsel %vm225, %v3036, 0
      %v3130 = vsel %vm225, %v3037, 0
      %v3133 = vsel %vm225, %v3038, 0
      %v3136 = vsel %vm225, %v3039, 0
      %3138 = vmatprep.subr.mxu0 0.0
      %3139 = vmatpush1.msra.mxu0 %v3041
      %3140 = vmatprep.subr.mxu0 0.0
      %3141 = vmatpush1.msra.mxu0 0.0
      %3142 = vmatprep.subr.mxu0 0.0
      %3143 = vmatpush1.msra.mxu0 0.0
      %3144 = vmatprep.subr.mxu0 0.0
      %3145 = vmatpush1.msra.mxu0 0.0
      %3146 = vmatprep.subr.mxu0 0.0
      %3147 = vmatpush1.msra.mxu0 0.0
      %3148 = vmatprep.subr.mxu0 0.0
      %3149 = vmatpush1.msra.mxu0 0.0
      %3150 = vmatprep.subr.mxu0 0.0
      %3151 = vmatpush1.msra.mxu0 0.0
      %3152 = vmatprep.subr.mxu0 0.0
      %3153 = vmatpush1.msra.mxu0 0.0
      %3154 = vmatprep.subr.mxu0 0.0
      %3155 = vmatpush1.msra.mxu0 0.0
      %3156 = vmatprep.subr.mxu0 0.0
      %3157 = vmatpush1.msra.mxu0 0.0
      %3158 = vmatprep.subr.mxu0 0.0
      %3159 = vmatpush1.msra.mxu0 0.0
      %3160 = vmatprep.subr.mxu0 0.0
      %3161 = vmatpush1.msra.mxu0 0.0
      %3162 = vmatprep.subr.mxu0 0.0
      %3163 = vmatpush1.msra.mxu0 0.0
      %3164 = vmatprep.subr.mxu0 0.0
      %3165 = vmatpush1.msra.mxu0 0.0
      %3166 = vmatprep.subr.mxu0 0.0
      %3167 = vmatpush1.msra.mxu0 0.0
      %3168 = vmatprep.subr.mxu0 0.0
      %3169 = vmatpush1.msra.mxu0 0.0
      %3170 = vmatprep.subr.mxu0 0.0
      %3171 = vmatpush1.msra.mxu0 0.0
      %3172 = vmatprep.subr.mxu0 0.0
      %3173 = vmatpush1.msra.mxu0 0.0
      %3174 = vmatprep.subr.mxu0 0.0
      %3175 = vmatpush1.msra.mxu0 0.0
      %3176 = vmatprep.subr.mxu0 0.0
      %3177 = vmatpush1.msra.mxu0 0.0
      %3178 = vmatprep.subr.mxu0 0.0
      %3179 = vmatpush1.msra.mxu0 0.0
      %3180 = vmatprep.subr.mxu0 0.0
      %3181 = vmatpush1.msra.mxu0 0.0
      %3182 = vmatprep.subr.mxu0 0.0
      %3183 = vmatpush1.msra.mxu0 0.0
      %3184 = vmatprep.subr.mxu0 0.0
      %3185 = vmatpush1.msra.mxu0 0.0
      %3186 = vmatprep.subr.mxu0 0.0
      %3187 = vmatpush1.msra.mxu0 0.0
      %3188 = vmatprep.subr.mxu0 0.0
      %3189 = vmatpush1.msra.mxu0 0.0
      %3190 = vmatprep.subr.mxu0 0.0
      %3191 = vmatpush1.msra.mxu0 0.0
      %3192 = vmatprep.subr.mxu0 0.0
      %3193 = vmatpush1.msra.mxu0 0.0
      %3194 = vmatprep.subr.mxu0 0.0
      %3195 = vmatpush1.msra.mxu0 0.0
      %3196 = vmatprep.subr.mxu0 0.0
      %3197 = vmatpush1.msra.mxu0 0.0
      %3198 = vmatprep.subr.mxu0 0.0
      %3199 = vmatpush1.msra.mxu0 0.0
      %3200 = vmatprep.subr.mxu0 0.0
      %3201 = vmatpush1.msra.mxu0 0.0
      %3202 = vmatprep.mubr.f32.mxu0 0.0
      %3203 = vmatmul.mubr.f32.gmra.mrb[0].mxu0 %v3043
      %v3204 = vpop.f32.mrb[0].mxu0
      %v3205 = vadd.f32 0.0, %v3204
      %v3206 = vpop.f32.mrb[0].mxu0
      %3207 = vmatprep.mubr.f32.mxu0 0.0
      %3208 = vmatmul.mubr.f32.gmra.mrb[0].mxu0 %v3046
      %v3209 = vpop.f32.mrb[0].mxu0
      %v3210 = vadd.f32 0.0, %v3209
      %v3211 = vpop.f32.mrb[0].mxu0
      %3212 = vmatprep.mubr.f32.mxu0 0.0
      %3213 = vmatmul.mubr.f32.gmra.mrb[0].mxu0 %v3049
      %v3214 = vpop.f32.mrb[0].mxu0
      %v3215 = vadd.f32 0.0, %v3214
      %v3216 = vpop.f32.mrb[0].mxu0
      %3217 = vmatprep.mubr.f32.mxu0 0.0
      %3218 = vmatmul.mubr.f32.gmra.mrb[0].mxu0 %v3052
      %v3219 = vpop.f32.mrb[0].mxu0
      %v3220 = vadd.f32 0.0, %v3219
      %v3221 = vpop.f32.mrb[0].mxu0
      %3222 = vmatprep.mubr.f32.mxu0 0.0
      %3223 = vmatmul.mubr.f32.gmra.mrb[0].mxu0 %v3055
      %v3224 = vpop.f32.mrb[0].mxu0
      %v3225 = vadd.f32 0.0, %v3224
      %v3226 = vpop.f32.mrb[0].mxu0
      %3227 = vmatprep.mubr.f32.mxu0 0.0
      %3228 = vmatmul.mubr.f32.gmra.mrb[0].mxu0 %v3058
      %v3229 = vpop.f32.mrb[0].mxu0
      %v3230 = vadd.f32 0.0, %v3229
      %v3231 = vpop.f32.mrb[0].mxu0
      %3232 = vmatprep.mubr.f32.mxu0 0.0
      %3233 = vmatmul.mubr.f32.gmra.mrb[0].mxu0 %v3061
      %v3234 = vpop.f32.mrb[0].mxu0
      %v3235 = vadd.f32 0.0, %v3234
      %v3236 = vpop.f32.mrb[0].mxu0
      %3237 = vmatprep.mubr.f32.mxu0 0.0
      %3238 = vmatmul.mubr.f32.gmra.mrb[0].mxu0 %v3064
      %v3239 = vpop.f32.mrb[0].mxu0
      %v3240 = vadd.f32 0.0, %v3239
      %v3241 = vpop.f32.mrb[0].mxu0
      %3242 = vmatprep.mubr.f32.mxu0 0.0
      %3243 = vmatmul.mubr.f32.gmra.mrb[0].mxu0 %v3067
      %v3244 = vpop.f32.mrb[0].mxu0
      %v3245 = vadd.f32 0.0, %v3244
      %v3246 = vpop.f32.mrb[0].mxu0
      %3247 = vmatprep.mubr.f32.mxu0 0.0
      %3248 = vmatmul.mubr.f32.gmra.mrb[0].mxu0 %v3070
      %v3249 = vpop.f32.mrb[0].mxu0
      %v3250 = vadd.f32 0.0, %v3249
      %v3251 = vpop.f32.mrb[0].mxu0
      %3252 = vmatprep.mubr.f32.mxu0 0.0
      %3253 = vmatmul.mubr.f32.gmra.mrb[0].mxu0 %v3073
      %v3254 = vpop.f32.mrb[0].mxu0
      %v3255 = vadd.f32 0.0, %v3254
      %v3256 = vpop.f32.mrb[0].mxu0
      %3257 = vmatprep.mubr.f32.mxu0 0.0
      %3258 = vmatmul.mubr.f32.gmra.mrb[0].mxu0 %v3076
      %v3259 = vpop.f32.mrb[0].mxu0
      %v3260 = vadd.f32 0.0, %v3259
      %v3261 = vpop.f32.mrb[0].mxu0
      %3262 = vmatprep.mubr.f32.mxu0 0.0
      %3263 = vmatmul.mubr.f32.gmra.mrb[0].mxu0 %v3079
      %v3264 = vpop.f32.mrb[0].mxu0
      %v3265 = vadd.f32 0.0, %v3264
      %v3266 = vpop.f32.mrb[0].mxu0
      %3267 = vmatprep.mubr.f32.mxu0 0.0
      %3268 = vmatmul.mubr.f32.gmra.mrb[0].mxu0 %v3082
      %v3269 = vpop.f32.mrb[0].mxu0
      %v3270 = vadd.f32 0.0, %v3269
      %v3271 = vpop.f32.mrb[0].mxu0
      %3272 = vmatprep.mubr.f32.mxu0 0.0
      %3273 = vmatmul.mubr.f32.gmra.mrb[0].mxu0 %v3085
      %v3274 = vpop.f32.mrb[0].mxu0
      %v3275 = vadd.f32 0.0, %v3274
      %v3276 = vpop.f32.mrb[0].mxu0
      %3277 = vmatprep.mubr.f32.mxu0 0.0
      %3278 = vmatmul.mubr.f32.gmra.mrb[0].mxu0 %v3088
      %v3279 = vpop.f32.mrb[0].mxu0
      %v3280 = vadd.f32 0.0, %v3279
      %v3281 = vpop.f32.mrb[0].mxu0
      %3282 = vmatprep.mubr.f32.mxu0 0.0
      %3283 = vmatmul.mubr.f32.gmra.mrb[0].mxu0 %v3091
      %v3284 = vpop.f32.mrb[0].mxu0
      %v3285 = vadd.f32 0.0, %v3284
      %v3286 = vpop.f32.mrb[0].mxu0
      %3287 = vmatprep.mubr.f32.mxu0 0.0
      %3288 = vmatmul.mubr.f32.gmra.mrb[0].mxu0 %v3094
      %v3289 = vpop.f32.mrb[0].mxu0
      %v3290 = vadd.f32 0.0, %v3289
      %v3291 = vpop.f32.mrb[0].mxu0
      %3292 = vmatprep.mubr.f32.mxu0 0.0
      %3293 = vmatmul.mubr.f32.gmra.mrb[0].mxu0 %v3097
      %v3294 = vpop.f32.mrb[0].mxu0
      %v3295 = vadd.f32 0.0, %v3294
      %v3296 = vpop.f32.mrb[0].mxu0
      %3297 = vmatprep.mubr.f32.mxu0 0.0
      %3298 = vmatmul.mubr.f32.gmra.mrb[0].mxu0 %v3100
      %v3299 = vpop.f32.mrb[0].mxu0
      %v3300 = vadd.f32 0.0, %v3299
      %v3301 = vpop.f32.mrb[0].mxu0
      %3302 = vmatprep.mubr.f32.mxu0 0.0
      %3303 = vmatmul.mubr.f32.gmra.mrb[0].mxu0 %v3103
      %v3304 = vpop.f32.mrb[0].mxu0
      %v3305 = vadd.f32 0.0, %v3304
      %v3306 = vpop.f32.mrb[0].mxu0
      %3307 = vmatprep.mubr.f32.mxu0 0.0
      %3308 = vmatmul.mubr.f32.gmra.mrb[0].mxu0 %v3106
      %v3309 = vpop.f32.mrb[0].mxu0
      %v3310 = vadd.f32 0.0, %v3309
      %v3311 = vpop.f32.mrb[0].mxu0
      %3312 = vmatprep.mubr.f32.mxu0 0.0
      %3313 = vmatmul.mubr.f32.gmra.mrb[0].mxu0 %v3109
      %v3314 = vpop.f32.mrb[0].mxu0
      %v3315 = vadd.f32 0.0, %v3314
      %v3316 = vpop.f32.mrb[0].mxu0
      %3317 = vmatprep.mubr.f32.mxu0 0.0
      %3318 = vmatmul.mubr.f32.gmra.mrb[0].mxu0 %v3112
      %v3319 = vpop.f32.mrb[0].mxu0
      %v3320 = vadd.f32 0.0, %v3319
      %v3321 = vpop.f32.mrb[0].mxu0
      %3322 = vmatprep.mubr.f32.mxu0 0.0
      %3323 = vmatmul.mubr.f32.gmra.mrb[0].mxu0 %v3115
      %v3324 = vpop.f32.mrb[0].mxu0
      %v3325 = vadd.f32 0.0, %v3324
      %v3326 = vpop.f32.mrb[0].mxu0
      %3327 = vmatprep.mubr.f32.mxu0 0.0
      %3328 = vmatmul.mubr.f32.gmra.mrb[0].mxu0 %v3118
      %v3329 = vpop.f32.mrb[0].mxu0
      %v3330 = vadd.f32 0.0, %v3329
      %v3331 = vpop.f32.mrb[0].mxu0
      %3332 = vmatprep.mubr.f32.mxu0 0.0
      %3333 = vmatmul.mubr.f32.gmra.mrb[0].mxu0 %v3121
      %v3334 = vpop.f32.mrb[0].mxu0
      %v3335 = vadd.f32 0.0, %v3334
      %v3336 = vpop.f32.mrb[0].mxu0
      %3337 = vmatprep.mubr.f32.mxu0 0.0
      %3338 = vmatmul.mubr.f32.gmra.mrb[0].mxu0 %v3124
      %v3339 = vpop.f32.mrb[0].mxu0
      %v3340 = vadd.f32 0.0, %v3339
      %v3341 = vpop.f32.mrb[0].mxu0
      %3342 = vmatprep.mubr.f32.mxu0 0.0
      %3343 = vmatmul.mubr.f32.gmra.mrb[0].mxu0 %v3127
      %v3344 = vpop.f32.mrb[0].mxu0
      %v3345 = vadd.f32 0.0, %v3344
      %v3346 = vpop.f32.mrb[0].mxu0
      %3347 = vmatprep.mubr.f32.mxu0 0.0
      %3348 = vmatmul.mubr.f32.gmra.mrb[0].mxu0 %v3130
      %v3349 = vpop.f32.mrb[0].mxu0
      %v3350 = vadd.f32 0.0, %v3349
      %v3351 = vpop.f32.mrb[0].mxu0
      %3352 = vmatprep.mubr.f32.mxu0 0.0
      %3353 = vmatmul.mubr.f32.gmra.mrb[0].mxu0 %v3133
      %v3354 = vpop.f32.mrb[0].mxu0
      %v3355 = vadd.f32 0.0, %v3354
      %v3356 = vpop.f32.mrb[0].mxu0
      %3357 = vmatprep.mubr.f32.mxu0 0.0
      %3358 = vmatmul.mubr.f32.gmra.mrb[0].mxu0 %v3136
      %v3359 = vpop.f32.mrb[0].mxu0
      %v3360 = vadd.f32 0.0, %v3359
      %v3361 = vpop.f32.mrb[0].mxu0
      %3362 = vdwg.mxu0
      %v3363 = vadd.f32 %v2976, %v3205
      %v3364 = vadd.f32 %v2977, %v3210
      %v3365 = vadd.f32 %v2978, %v3215
      %v3366 = vadd.f32 %v2979, %v3220
      %v3367 = vadd.f32 %v2980, %v3225
      %v3368 = vadd.f32 %v2981, %v3230
      %v3369 = vadd.f32 %v2982, %v3235
      %v3370 = vadd.f32 %v2983, %v3240
      %v3371 = vadd.f32 %v2984, %v3245
      %v3372 = vadd.f32 %v2985, %v3250
      %v3373 = vadd.f32 %v2986, %v3255
      %v3374 = vadd.f32 %v2987, %v3260
      %v3375 = vadd.f32 %v2988, %v3265
      %v3376 = vadd.f32 %v2989, %v3270
      %v3377 = vadd.f32 %v2990, %v3275
      %v3378 = vadd.f32 %v2991, %v3280
      %v3379 = vadd.f32 %v2992, %v3285
      %v3380 = vadd.f32 %v2993, %v3290
      %v3381 = vadd.f32 %v2994, %v3295
      %v3382 = vadd.f32 %v2995, %v3300
      %v3383 = vadd.f32 %v2996, %v3305
      %v3384 = vadd.f32 %v2997, %v3310
      %v3385 = vadd.f32 %v2998, %v3315
      %v3386 = vadd.f32 %v2999, %v3320
      %v3387 = vadd.f32 %v3000, %v3325
      %v3388 = vadd.f32 %v3001, %v3330
      %v3389 = vadd.f32 %v3002, %v3335
      %v3390 = vadd.f32 %v3003, %v3340
      %v3391 = vadd.f32 %v3004, %v3345
      %v3392 = vadd.f32 %v3005, %v3350
      %v3393 = vadd.f32 %v3006, %v3355
      %v3394 = vadd.f32 %v3007, %v3360
      %v3395 = vld [vmem:[%s2620 + $0x9] sm:$0xff]
      %v3396 = vld [vmem:[%s2620 + $0x11] sm:$0xff]
      %v3397 = vld [vmem:[%s2620 + $0x29] sm:$0xff]
      %v3398 = vld [vmem:[%s2620 + $0x31] sm:$0xff]
      %v3399 = vld [vmem:[%s2620 + $0x49] sm:$0xff]
      %v3400 = vld [vmem:[%s2620 + $0x51] sm:$0xff]
      %v3401 = vld [vmem:[%s2620 + $0x69] sm:$0xff]
      %v3402 = vld [vmem:[%s2620 + $0x71] sm:$0xff]
      %v3403 = vld [vmem:[%s2620 + $0x89] sm:$0xff]
      %v3404 = vld [vmem:[%s2620 + $0x91] sm:$0xff]
      %v3405 = vld [vmem:[%s2620 + $0xa9] sm:$0xff]
      %v3406 = vld [vmem:[%s2620 + $0xb1] sm:$0xff]
      %v3407 = vld [vmem:[%s2620 + $0xc9] sm:$0xff]
      %v3408 = vld [vmem:[%s2620 + $0xd1] sm:$0xff]
      %v3409 = vld [vmem:[%s2620 + $0xe9] sm:$0xff]
      %v3410 = vld [vmem:[%s2620 + $0xf1] sm:$0xff]
      %v3411 = vld [vmem:[%s2620 + $0x109] sm:$0xff]
      %v3412 = vld [vmem:[%s2620 + $0x111] sm:$0xff]
      %v3413 = vld [vmem:[%s2620 + $0x129] sm:$0xff]
      %v3414 = vld [vmem:[%s2620 + $0x131] sm:$0xff]
      %v3415 = vld [vmem:[%s2620 + $0x149] sm:$0xff]
      %v3416 = vld [vmem:[%s2620 + $0x151] sm:$0xff]
      %v3417 = vld [vmem:[%s2620 + $0x169] sm:$0xff]
      %v3418 = vld [vmem:[%s2620 + $0x171] sm:$0xff]
      %v3419 = vld [vmem:[%s2620 + $0x189] sm:$0xff]
      %v3420 = vld [vmem:[%s2620 + $0x191] sm:$0xff]
      %v3421 = vld [vmem:[%s2620 + $0x1a9] sm:$0xff]
      %v3422 = vld [vmem:[%s2620 + $0x1b1] sm:$0xff]
      %v3423 = vld [vmem:[%s2620 + $0x1c9] sm:$0xff]
      %v3424 = vld [vmem:[%s2620 + $0x1d1] sm:$0xff]
      %v3425 = vld [vmem:[%s2620 + $0x1e9] sm:$0xff]
      %v3426 = vld [vmem:[%s2620 + $0x1f1] sm:$0xff]
      %s3427 = scalar_lea.vmem %s1, 64
      %v3428 = vld [vmem:[%s3427] sm:$0xff]
      %v3430 = vsel %vm225, %v3395, 0
      %v3433 = vsel %vm225, %v3396, 0
      %v3436 = vsel %vm225, %v3397, 0
      %v3439 = vsel %vm225, %v3398, 0
      %v3442 = vsel %vm225, %v3399, 0
      %v3445 = vsel %vm225, %v3400, 0
      %v3448 = vsel %vm225, %v3401, 0
      %v3451 = vsel %vm225, %v3402, 0
      %v3454 = vsel %vm225, %v3403, 0
      %v3457 = vsel %vm225, %v3404, 0
      %v3460 = vsel %vm225, %v3405, 0
      %v3463 = vsel %vm225, %v3406, 0
      %v3466 = vsel %vm225, %v3407, 0
      %v3469 = vsel %vm225, %v3408, 0
      %v3472 = vsel %vm225, %v3409, 0
      %v3475 = vsel %vm225, %v3410, 0
      %v3478 = vsel %vm225, %v3411, 0
      %v3481 = vsel %vm225, %v3412, 0
      %v3484 = vsel %vm225, %v3413, 0
      %v3487 = vsel %vm225, %v3414, 0
      %v3490 = vsel %vm225, %v3415, 0
      %v3493 = vsel %vm225, %v3416, 0
      %v3496 = vsel %vm225, %v3417, 0
      %v3499 = vsel %vm225, %v3418, 0
      %v3502 = vsel %vm225, %v3419, 0
      %v3505 = vsel %vm225, %v3420, 0
      %v3508 = vsel %vm225, %v3421, 0
      %v3511 = vsel %vm225, %v3422, 0
      %v3514 = vsel %vm225, %v3423, 0
      %v3517 = vsel %vm225, %v3424, 0
      %v3520 = vsel %vm225, %v3425, 0
      %v3523 = vsel %vm225, %v3426, 0
      %3525 = vmatprep.subr.mxu0 0.0
      %3526 = vmatpush1.msra.mxu0 %v3428
      %3527 = vmatprep.subr.mxu0 0.0
      %3528 = vmatpush1.msra.mxu0 0.0
      %3529 = vmatprep.subr.mxu0 0.0
      %3530 = vmatpush1.msra.mxu0 0.0
      %3531 = vmatprep.subr.mxu0 0.0
      %3532 = vmatpush1.msra.mxu0 0.0
      %3533 = vmatprep.subr.mxu0 0.0
      %3534 = vmatpush1.msra.mxu0 0.0
      %3535 = vmatprep.subr.mxu0 0.0
      %3536 = vmatpush1.msra.mxu0 0.0
      %3537 = vmatprep.subr.mxu0 0.0
      %3538 = vmatpush1.msra.mxu0 0.0
      %3539 = vmatprep.subr.mxu0 0.0
      %3540 = vmatpush1.msra.mxu0 0.0
      %3541 = vmatprep.subr.mxu0 0.0
      %3542 = vmatpush1.msra.mxu0 0.0
      %3543 = vmatprep.subr.mxu0 0.0
      %3544 = vmatpush1.msra.mxu0 0.0
      %3545 = vmatprep.subr.mxu0 0.0
      %3546 = vmatpush1.msra.mxu0 0.0
      %3547 = vmatprep.subr.mxu0 0.0
      %3548 = vmatpush1.msra.mxu0 0.0
      %3549 = vmatprep.subr.mxu0 0.0
      %3550 = vmatpush1.msra.mxu0 0.0
      %3551 = vmatprep.subr.mxu0 0.0
      %3552 = vmatpush1.msra.mxu0 0.0
      %3553 = vmatprep.subr.mxu0 0.0
      %3554 = vmatpush1.msra.mxu0 0.0
      %3555 = vmatprep.subr.mxu0 0.0
      %3556 = vmatpush1.msra.mxu0 0.0
      %3557 = vmatprep.subr.mxu0 0.0
      %3558 = vmatpush1.msra.mxu0 0.0
      %3559 = vmatprep.subr.mxu0 0.0
      %3560 = vmatpush1.msra.mxu0 0.0
      %3561 = vmatprep.subr.mxu0 0.0
      %3562 = vmatpush1.msra.mxu0 0.0
      %3563 = vmatprep.subr.mxu0 0.0
      %3564 = vmatpush1.msra.mxu0 0.0
      %3565 = vmatprep.subr.mxu0 0.0
      %3566 = vmatpush1.msra.mxu0 0.0
      %3567 = vmatprep.subr.mxu0 0.0
      %3568 = vmatpush1.msra.mxu0 0.0
      %3569 = vmatprep.subr.mxu0 0.0
      %3570 = vmatpush1.msra.mxu0 0.0
      %3571 = vmatprep.subr.mxu0 0.0
      %3572 = vmatpush1.msra.mxu0 0.0
      %3573 = vmatprep.subr.mxu0 0.0
      %3574 = vmatpush1.msra.mxu0 0.0
      %3575 = vmatprep.subr.mxu0 0.0
      %3576 = vmatpush1.msra.mxu0 0.0
      %3577 = vmatprep.subr.mxu0 0.0
      %3578 = vmatpush1.msra.mxu0 0.0
      %3579 = vmatprep.subr.mxu0 0.0
      %3580 = vmatpush1.msra.mxu0 0.0
      %3581 = vmatprep.subr.mxu0 0.0
      %3582 = vmatpush1.msra.mxu0 0.0
      %3583 = vmatprep.subr.mxu0 0.0
      %3584 = vmatpush1.msra.mxu0 0.0
      %3585 = vmatprep.subr.mxu0 0.0
      %3586 = vmatpush1.msra.mxu0 0.0
      %3587 = vmatprep.subr.mxu0 0.0
      %3588 = vmatpush1.msra.mxu0 0.0
      %3589 = vmatprep.mubr.f32.mxu0 0.0
      %3590 = vmatmul.mubr.f32.gmra.mrb[0].mxu0 %v3430
      %v3591 = vpop.f32.mrb[0].mxu0
      %v3592 = vadd.f32 0.0, %v3591
      %v3593 = vpop.f32.mrb[0].mxu0
      %3594 = vmatprep.mubr.f32.mxu0 0.0
      %3595 = vmatmul.mubr.f32.gmra.mrb[0].mxu0 %v3433
      %v3596 = vpop.f32.mrb[0].mxu0
      %v3597 = vadd.f32 0.0, %v3596
      %v3598 = vpop.f32.mrb[0].mxu0
      %3599 = vmatprep.mubr.f32.mxu0 0.0
      %3600 = vmatmul.mubr.f32.gmra.mrb[0].mxu0 %v3436
      %v3601 = vpop.f32.mrb[0].mxu0
      %v3602 = vadd.f32 0.0, %v3601
      %v3603 = vpop.f32.mrb[0].mxu0
      %3604 = vmatprep.mubr.f32.mxu0 0.0
      %3605 = vmatmul.mubr.f32.gmra.mrb[0].mxu0 %v3439
      %v3606 = vpop.f32.mrb[0].mxu0
      %v3607 = vadd.f32 0.0, %v3606
      %v3608 = vpop.f32.mrb[0].mxu0
      %3609 = vmatprep.mubr.f32.mxu0 0.0
      %3610 = vmatmul.mubr.f32.gmra.mrb[0].mxu0 %v3442
      %v3611 = vpop.f32.mrb[0].mxu0
      %v3612 = vadd.f32 0.0, %v3611
      %v3613 = vpop.f32.mrb[0].mxu0
      %3614 = vmatprep.mubr.f32.mxu0 0.0
      %3615 = vmatmul.mubr.f32.gmra.mrb[0].mxu0 %v3445
      %v3616 = vpop.f32.mrb[0].mxu0
      %v3617 = vadd.f32 0.0, %v3616
      %v3618 = vpop.f32.mrb[0].mxu0
      %3619 = vmatprep.mubr.f32.mxu0 0.0
      %3620 = vmatmul.mubr.f32.gmra.mrb[0].mxu0 %v3448
      %v3621 = vpop.f32.mrb[0].mxu0
      %v3622 = vadd.f32 0.0, %v3621
      %v3623 = vpop.f32.mrb[0].mxu0
      %3624 = vmatprep.mubr.f32.mxu0 0.0
      %3625 = vmatmul.mubr.f32.gmra.mrb[0].mxu0 %v3451
      %v3626 = vpop.f32.mrb[0].mxu0
      %v3627 = vadd.f32 0.0, %v3626
      %v3628 = vpop.f32.mrb[0].mxu0
      %3629 = vmatprep.mubr.f32.mxu0 0.0
      %3630 = vmatmul.mubr.f32.gmra.mrb[0].mxu0 %v3454
      %v3631 = vpop.f32.mrb[0].mxu0
      %v3632 = vadd.f32 0.0, %v3631
      %v3633 = vpop.f32.mrb[0].mxu0
      %3634 = vmatprep.mubr.f32.mxu0 0.0
      %3635 = vmatmul.mubr.f32.gmra.mrb[0].mxu0 %v3457
      %v3636 = vpop.f32.mrb[0].mxu0
      %v3637 = vadd.f32 0.0, %v3636
      %v3638 = vpop.f32.mrb[0].mxu0
      %3639 = vmatprep.mubr.f32.mxu0 0.0
      %3640 = vmatmul.mubr.f32.gmra.mrb[0].mxu0 %v3460
      %v3641 = vpop.f32.mrb[0].mxu0
      %v3642 = vadd.f32 0.0, %v3641
      %v3643 = vpop.f32.mrb[0].mxu0
      %3644 = vmatprep.mubr.f32.mxu0 0.0
      %3645 = vmatmul.mubr.f32.gmra.mrb[0].mxu0 %v3463
      %v3646 = vpop.f32.mrb[0].mxu0
      %v3647 = vadd.f32 0.0, %v3646
      %v3648 = vpop.f32.mrb[0].mxu0
      %3649 = vmatprep.mubr.f32.mxu0 0.0
      %3650 = vmatmul.mubr.f32.gmra.mrb[0].mxu0 %v3466
      %v3651 = vpop.f32.mrb[0].mxu0
      %v3652 = vadd.f32 0.0, %v3651
      %v3653 = vpop.f32.mrb[0].mxu0
      %3654 = vmatprep.mubr.f32.mxu0 0.0
      %3655 = vmatmul.mubr.f32.gmra.mrb[0].mxu0 %v3469
      %v3656 = vpop.f32.mrb[0].mxu0
      %v3657 = vadd.f32 0.0, %v3656
      %v3658 = vpop.f32.mrb[0].mxu0
      %3659 = vmatprep.mubr.f32.mxu0 0.0
      %3660 = vmatmul.mubr.f32.gmra.mrb[0].mxu0 %v3472
      %v3661 = vpop.f32.mrb[0].mxu0
      %v3662 = vadd.f32 0.0, %v3661
      %v3663 = vpop.f32.mrb[0].mxu0
      %3664 = vmatprep.mubr.f32.mxu0 0.0
      %3665 = vmatmul.mubr.f32.gmra.mrb[0].mxu0 %v3475
      %v3666 = vpop.f32.mrb[0].mxu0
      %v3667 = vadd.f32 0.0, %v3666
      %v3668 = vpop.f32.mrb[0].mxu0
      %3669 = vmatprep.mubr.f32.mxu0 0.0
      %3670 = vmatmul.mubr.f32.gmra.mrb[0].mxu0 %v3478
      %v3671 = vpop.f32.mrb[0].mxu0
      %v3672 = vadd.f32 0.0, %v3671
      %v3673 = vpop.f32.mrb[0].mxu0
      %3674 = vmatprep.mubr.f32.mxu0 0.0
      %3675 = vmatmul.mubr.f32.gmra.mrb[0].mxu0 %v3481
      %v3676 = vpop.f32.mrb[0].mxu0
      %v3677 = vadd.f32 0.0, %v3676
      %v3678 = vpop.f32.mrb[0].mxu0
      %3679 = vmatprep.mubr.f32.mxu0 0.0
      %3680 = vmatmul.mubr.f32.gmra.mrb[0].mxu0 %v3484
      %v3681 = vpop.f32.mrb[0].mxu0
      %v3682 = vadd.f32 0.0, %v3681
      %v3683 = vpop.f32.mrb[0].mxu0
      %3684 = vmatprep.mubr.f32.mxu0 0.0
      %3685 = vmatmul.mubr.f32.gmra.mrb[0].mxu0 %v3487
      %v3686 = vpop.f32.mrb[0].mxu0
      %v3687 = vadd.f32 0.0, %v3686
      %v3688 = vpop.f32.mrb[0].mxu0
      %3689 = vmatprep.mubr.f32.mxu0 0.0
      %3690 = vmatmul.mubr.f32.gmra.mrb[0].mxu0 %v3490
      %v3691 = vpop.f32.mrb[0].mxu0
      %v3692 = vadd.f32 0.0, %v3691
      %v3693 = vpop.f32.mrb[0].mxu0
      %3694 = vmatprep.mubr.f32.mxu0 0.0
      %3695 = vmatmul.mubr.f32.gmra.mrb[0].mxu0 %v3493
      %v3696 = vpop.f32.mrb[0].mxu0
      %v3697 = vadd.f32 0.0, %v3696
      %v3698 = vpop.f32.mrb[0].mxu0
      %3699 = vmatprep.mubr.f32.mxu0 0.0
      %3700 = vmatmul.mubr.f32.gmra.mrb[0].mxu0 %v3496
      %v3701 = vpop.f32.mrb[0].mxu0
      %v3702 = vadd.f32 0.0, %v3701
      %v3703 = vpop.f32.mrb[0].mxu0
      %3704 = vmatprep.mubr.f32.mxu0 0.0
      %3705 = vmatmul.mubr.f32.gmra.mrb[0].mxu0 %v3499
      %v3706 = vpop.f32.mrb[0].mxu0
      %v3707 = vadd.f32 0.0, %v3706
      %v3708 = vpop.f32.mrb[0].mxu0
      %3709 = vmatprep.mubr.f32.mxu0 0.0
      %3710 = vmatmul.mubr.f32.gmra.mrb[0].mxu0 %v3502
      %v3711 = vpop.f32.mrb[0].mxu0
      %v3712 = vadd.f32 0.0, %v3711
      %v3713 = vpop.f32.mrb[0].mxu0
      %3714 = vmatprep.mubr.f32.mxu0 0.0
      %3715 = vmatmul.mubr.f32.gmra.mrb[0].mxu0 %v3505
      %v3716 = vpop.f32.mrb[0].mxu0
      %v3717 = vadd.f32 0.0, %v3716
      %v3718 = vpop.f32.mrb[0].mxu0
      %3719 = vmatprep.mubr.f32.mxu0 0.0
      %3720 = vmatmul.mubr.f32.gmra.mrb[0].mxu0 %v3508
      %v3721 = vpop.f32.mrb[0].mxu0
      %v3722 = vadd.f32 0.0, %v3721
      %v3723 = vpop.f32.mrb[0].mxu0
      %3724 = vmatprep.mubr.f32.mxu0 0.0
      %3725 = vmatmul.mubr.f32.gmra.mrb[0].mxu0 %v3511
      %v3726 = vpop.f32.mrb[0].mxu0
      %v3727 = vadd.f32 0.0, %v3726
      %v3728 = vpop.f32.mrb[0].mxu0
      %3729 = vmatprep.mubr.f32.mxu0 0.0
      %3730 = vmatmul.mubr.f32.gmra.mrb[0].mxu0 %v3514
      %v3731 = vpop.f32.mrb[0].mxu0
      %v3732 = vadd.f32 0.0, %v3731
      %v3733 = vpop.f32.mrb[0].mxu0
      %3734 = vmatprep.mubr.f32.mxu0 0.0
      %3735 = vmatmul.mubr.f32.gmra.mrb[0].mxu0 %v3517
      %v3736 = vpop.f32.mrb[0].mxu0
      %v3737 = vadd.f32 0.0, %v3736
      %v3738 = vpop.f32.mrb[0].mxu0
      %3739 = vmatprep.mubr.f32.mxu0 0.0
      %3740 = vmatmul.mubr.f32.gmra.mrb[0].mxu0 %v3520
      %v3741 = vpop.f32.mrb[0].mxu0
      %v3742 = vadd.f32 0.0, %v3741
      %v3743 = vpop.f32.mrb[0].mxu0
      %3744 = vmatprep.mubr.f32.mxu0 0.0
      %3745 = vmatmul.mubr.f32.gmra.mrb[0].mxu0 %v3523
      %v3746 = vpop.f32.mrb[0].mxu0
      %v3747 = vadd.f32 0.0, %v3746
      %v3748 = vpop.f32.mrb[0].mxu0
      %3749 = vdwg.mxu0
      %v3750 = vadd.f32 %v3363, %v3592
      %v3751 = vadd.f32 %v3364, %v3597
      %v3752 = vadd.f32 %v3365, %v3602
      %v3753 = vadd.f32 %v3366, %v3607
      %v3754 = vadd.f32 %v3367, %v3612
      %v3755 = vadd.f32 %v3368, %v3617
      %v3756 = vadd.f32 %v3369, %v3622
      %v3757 = vadd.f32 %v3370, %v3627
      %v3758 = vadd.f32 %v3371, %v3632
      %v3759 = vadd.f32 %v3372, %v3637
      %v3760 = vadd.f32 %v3373, %v3642
      %v3761 = vadd.f32 %v3374, %v3647
      %v3762 = vadd.f32 %v3375, %v3652
      %v3763 = vadd.f32 %v3376, %v3657
      %v3764 = vadd.f32 %v3377, %v3662
      %v3765 = vadd.f32 %v3378, %v3667
      %v3766 = vadd.f32 %v3379, %v3672
      %v3767 = vadd.f32 %v3380, %v3677
      %v3768 = vadd.f32 %v3381, %v3682
      %v3769 = vadd.f32 %v3382, %v3687
      %v3770 = vadd.f32 %v3383, %v3692
      %v3771 = vadd.f32 %v3384, %v3697
      %v3772 = vadd.f32 %v3385, %v3702
      %v3773 = vadd.f32 %v3386, %v3707
      %v3774 = vadd.f32 %v3387, %v3712
      %v3775 = vadd.f32 %v3388, %v3717
      %v3776 = vadd.f32 %v3389, %v3722
      %v3777 = vadd.f32 %v3390, %v3727
      %v3778 = vadd.f32 %v3391, %v3732
      %v3779 = vadd.f32 %v3392, %v3737
      %v3780 = vadd.f32 %v3393, %v3742
      %v3781 = vadd.f32 %v3394, %v3747
      %v3782 = vld [vmem:[%s2] sm:$0x1]
      %v3784 = vlaneseq
      %v3785 = vshrl.u32 %v3784, 7
      %v3786 = vsub.s32 0, %v3785
      %v3787 = vrot.slane %v3782, %v3786
      %v3789 = vadd.f32 %v3750, %v3787
      %v3790 = vadd.f32 %v3751, %v3787
      %v3791 = vadd.f32 %v3752, %v3787
      %v3792 = vadd.f32 %v3753, %v3787
      %v3793 = vadd.f32 %v3754, %v3787
      %v3794 = vadd.f32 %v3755, %v3787
      %v3795 = vadd.f32 %v3756, %v3787
      %v3796 = vadd.f32 %v3757, %v3787
      %v3797 = vadd.f32 %v3758, %v3787
      %v3798 = vadd.f32 %v3759, %v3787
      %v3799 = vadd.f32 %v3760, %v3787
      %v3800 = vadd.f32 %v3761, %v3787
      %v3801 = vadd.f32 %v3762, %v3787
      %v3802 = vadd.f32 %v3763, %v3787
      %v3803 = vadd.f32 %v3764, %v3787
      %v3804 = vadd.f32 %v3765, %v3787
      %v3805 = vadd.f32 %v3766, %v3787
      %v3806 = vadd.f32 %v3767, %v3787
      %v3807 = vadd.f32 %v3768, %v3787
      %v3808 = vadd.f32 %v3769, %v3787
      %v3809 = vadd.f32 %v3770, %v3787
      %v3810 = vadd.f32 %v3771, %v3787
      %v3811 = vadd.f32 %v3772, %v3787
      %v3812 = vadd.f32 %v3773, %v3787
      %v3813 = vadd.f32 %v3774, %v3787
      %v3814 = vadd.f32 %v3775, %v3787
      %v3815 = vadd.f32 %v3776, %v3787
      %v3816 = vadd.f32 %v3777, %v3787
      %v3817 = vadd.f32 %v3778, %v3787
      %v3818 = vadd.f32 %v3779, %v3787
      %v3819 = vadd.f32 %v3780, %v3787
      %v3820 = vadd.f32 %v3781, %v3787
      %v3821 = vmax.f32 %v3789, 0.0
      %v3822 = vmax.f32 %v3790, 0.0
      %v3823 = vmax.f32 %v3791, 0.0
      %v3824 = vmax.f32 %v3792, 0.0
      %v3825 = vmax.f32 %v3793, 0.0
      %v3826 = vmax.f32 %v3794, 0.0
      %v3827 = vmax.f32 %v3795, 0.0
      %v3828 = vmax.f32 %v3796, 0.0
      %v3829 = vmax.f32 %v3797, 0.0
      %v3830 = vmax.f32 %v3798, 0.0
      %v3831 = vmax.f32 %v3799, 0.0
      %v3832 = vmax.f32 %v3800, 0.0
      %v3833 = vmax.f32 %v3801, 0.0
      %v3834 = vmax.f32 %v3802, 0.0
      %v3835 = vmax.f32 %v3803, 0.0
      %v3836 = vmax.f32 %v3804, 0.0
      %v3837 = vmax.f32 %v3805, 0.0
      %v3838 = vmax.f32 %v3806, 0.0
      %v3839 = vmax.f32 %v3807, 0.0
      %v3840 = vmax.f32 %v3808, 0.0
      %v3841 = vmax.f32 %v3809, 0.0
      %v3842 = vmax.f32 %v3810, 0.0
      %v3843 = vmax.f32 %v3811, 0.0
      %v3844 = vmax.f32 %v3812, 0.0
      %v3845 = vmax.f32 %v3813, 0.0
      %v3846 = vmax.f32 %v3814, 0.0
      %v3847 = vmax.f32 %v3815, 0.0
      %v3848 = vmax.f32 %v3816, 0.0
      %v3849 = vmax.f32 %v3817, 0.0
      %v3850 = vmax.f32 %v3818, 0.0
      %v3851 = vmax.f32 %v3819, 0.0
      %v3852 = vmax.f32 %v3820, 0.0
      %3853 = vst.msk [vmem:[%s330 + $0x8] sm:$0xff] %vm225, %v3821
      %3854 = vst.msk [vmem:[%s330 + $0x10] sm:$0xff] %vm225, %v3822
      %3855 = vst.msk [vmem:[%s330 + $0x28] sm:$0xff] %vm225, %v3823
      %3856 = vst.msk [vmem:[%s330 + $0x30] sm:$0xff] %vm225, %v3824
      %3857 = vst.msk [vmem:[%s330 + $0x48] sm:$0xff] %vm225, %v3825
      %3858 = vst.msk [vmem:[%s330 + $0x50] sm:$0xff] %vm225, %v3826
      %3859 = vst.msk [vmem:[%s330 + $0x68] sm:$0xff] %vm225, %v3827
      %3860 = vst.msk [vmem:[%s330 + $0x70] sm:$0xff] %vm225, %v3828
      %3861 = vst.msk [vmem:[%s330 + $0x88] sm:$0xff] %vm225, %v3829
      %3862 = vst.msk [vmem:[%s330 + $0x90] sm:$0xff] %vm225, %v3830
      %3863 = vst.msk [vmem:[%s330 + $0xa8] sm:$0xff] %vm225, %v3831
      %3864 = vst.msk [vmem:[%s330 + $0xb0] sm:$0xff] %vm225, %v3832
      %3865 = vst.msk [vmem:[%s330 + $0xc8] sm:$0xff] %vm225, %v3833
      %3866 = vst.msk [vmem:[%s330 + $0xd0] sm:$0xff] %vm225, %v3834
      %3867 = vst.msk [vmem:[%s330 + $0xe8] sm:$0xff] %vm225, %v3835
      %3868 = vst.msk [vmem:[%s330 + $0xf0] sm:$0xff] %vm225, %v3836
      %3869 = vst.msk [vmem:[%s330 + $0x108] sm:$0xff] %vm225, %v3837
      %3870 = vst.msk [vmem:[%s330 + $0x110] sm:$0xff] %vm225, %v3838
      %3871 = vst.msk [vmem:[%s330 + $0x128] sm:$0xff] %vm225, %v3839
      %3872 = vst.msk [vmem:[%s330 + $0x130] sm:$0xff] %vm225, %v3840
      %3873 = vst.msk [vmem:[%s330 + $0x148] sm:$0xff] %vm225, %v3841
      %3874 = vst.msk [vmem:[%s330 + $0x150] sm:$0xff] %vm225, %v3842
      %3875 = vst.msk [vmem:[%s330 + $0x168] sm:$0xff] %vm225, %v3843
      %3876 = vst.msk [vmem:[%s330 + $0x170] sm:$0xff] %vm225, %v3844
      %3877 = vst.msk [vmem:[%s330 + $0x188] sm:$0xff] %vm225, %v3845
      %3878 = vst.msk [vmem:[%s330 + $0x190] sm:$0xff] %vm225, %v3846
      %3879 = vst.msk [vmem:[%s330 + $0x1a8] sm:$0xff] %vm225, %v3847
      %3880 = vst.msk [vmem:[%s330 + $0x1b0] sm:$0xff] %vm225, %v3848
      %3881 = vst.msk [vmem:[%s330 + $0x1c8] sm:$0xff] %vm225, %v3849
      %3882 = vst.msk [vmem:[%s330 + $0x1d0] sm:$0xff] %vm225, %v3850
      %3883 = vst.msk [vmem:[%s330 + $0x1e8] sm:$0xff] %vm225, %v3851
      %3884 = vst.msk [vmem:[%s330 + $0x1f0] sm:$0xff] %vm225, %v3852
      %v3885 = vld [vmem:[#allocation2 + $0x7] sm:$0xff]
      %v3886 = vld [vmem:[#allocation2 + $0xf] sm:$0xff]
      %v3887 = vld [vmem:[#allocation2 + $0x27] sm:$0xff]
      %v3888 = vld [vmem:[#allocation2 + $0x2f] sm:$0xff]
      %v3889 = vld [vmem:[#allocation2 + $0x47] sm:$0xff]
      %v3890 = vld [vmem:[#allocation2 + $0x4f] sm:$0xff]
      %v3891 = vld [vmem:[#allocation2 + $0x67] sm:$0xff]
      %v3892 = vld [vmem:[#allocation2 + $0x6f] sm:$0xff]
      %v3893 = vld [vmem:[#allocation2 + $0x87] sm:$0xff]
      %v3894 = vld [vmem:[#allocation2 + $0x8f] sm:$0xff]
      %v3895 = vld [vmem:[#allocation2 + $0xa7] sm:$0xff]
      %v3896 = vld [vmem:[#allocation2 + $0xaf] sm:$0xff]
      %v3897 = vld [vmem:[#allocation2 + $0xc7] sm:$0xff]
      %v3898 = vld [vmem:[#allocation2 + $0xcf] sm:$0xff]
      %v3899 = vld [vmem:[#allocation2 + $0xe7] sm:$0xff]
      %v3900 = vld [vmem:[#allocation2 + $0xef] sm:$0xff]
      %v3901 = vld [vmem:[#allocation2 + $0x107] sm:$0xff]
      %v3902 = vld [vmem:[#allocation2 + $0x10f] sm:$0xff]
      %v3903 = vld [vmem:[#allocation2 + $0x127] sm:$0xff]
      %v3904 = vld [vmem:[#allocation2 + $0x12f] sm:$0xff]
      %v3905 = vld [vmem:[#allocation2 + $0x147] sm:$0xff]
      %v3906 = vld [vmem:[#allocation2 + $0x14f] sm:$0xff]
      %v3907 = vld [vmem:[#allocation2 + $0x167] sm:$0xff]
      %v3908 = vld [vmem:[#allocation2 + $0x16f] sm:$0xff]
      %v3909 = vld [vmem:[#allocation2 + $0x187] sm:$0xff]
      %v3910 = vld [vmem:[#allocation2 + $0x18f] sm:$0xff]
      %v3911 = vld [vmem:[#allocation2 + $0x1a7] sm:$0xff]
      %v3912 = vld [vmem:[#allocation2 + $0x1af] sm:$0xff]
      %v3913 = vld [vmem:[#allocation2 + $0x1c7] sm:$0xff]
      %v3914 = vld [vmem:[#allocation2 + $0x1cf] sm:$0xff]
      %v3915 = vld [vmem:[#allocation2 + $0x1e7] sm:$0xff]
      %v3916 = vld [vmem:[#allocation2 + $0x1ef] sm:$0xff]
      %v3917 = vld [vmem:[%s3] sm:$0xff]
      %v3918 = vld [vmem:[#allocation2 + $0x8] sm:$0xff]
      %v3919 = vld [vmem:[#allocation2 + $0x10] sm:$0xff]
      %v3920 = vld [vmem:[#allocation2 + $0x28] sm:$0xff]
      %v3921 = vld [vmem:[#allocation2 + $0x30] sm:$0xff]
      %v3922 = vld [vmem:[#allocation2 + $0x48] sm:$0xff]
      %v3923 = vld [vmem:[#allocation2 + $0x50] sm:$0xff]
      %v3924 = vld [vmem:[#allocation2 + $0x68] sm:$0xff]
      %v3925 = vld [vmem:[#allocation2 + $0x70] sm:$0xff]
      %v3926 = vld [vmem:[#allocation2 + $0x88] sm:$0xff]
      %v3927 = vld [vmem:[#allocation2 + $0x90] sm:$0xff]
      %v3928 = vld [vmem:[#allocation2 + $0xa8] sm:$0xff]
      %v3929 = vld [vmem:[#allocation2 + $0xb0] sm:$0xff]
      %v3930 = vld [vmem:[#allocation2 + $0xc8] sm:$0xff]
      %v3931 = vld [vmem:[#allocation2 + $0xd0] sm:$0xff]
      %v3932 = vld [vmem:[#allocation2 + $0xe8] sm:$0xff]
      %v3933 = vld [vmem:[#allocation2 + $0xf0] sm:$0xff]
      %v3934 = vld [vmem:[#allocation2 + $0x108] sm:$0xff]
      %v3935 = vld [vmem:[#allocation2 + $0x110] sm:$0xff]
      %v3936 = vld [vmem:[#allocation2 + $0x128] sm:$0xff]
      %v3937 = vld [vmem:[#allocation2 + $0x130] sm:$0xff]
      %v3938 = vld [vmem:[#allocation2 + $0x148] sm:$0xff]
      %v3939 = vld [vmem:[#allocation2 + $0x150] sm:$0xff]
      %v3940 = vld [vmem:[#allocation2 + $0x168] sm:$0xff]
      %v3941 = vld [vmem:[#allocation2 + $0x170] sm:$0xff]
      %v3942 = vld [vmem:[#allocation2 + $0x188] sm:$0xff]
      %v3943 = vld [vmem:[#allocation2 + $0x190] sm:$0xff]
      %v3944 = vld [vmem:[#allocation2 + $0x1a8] sm:$0xff]
      %v3945 = vld [vmem:[#allocation2 + $0x1b0] sm:$0xff]
      %v3946 = vld [vmem:[#allocation2 + $0x1c8] sm:$0xff]
      %v3947 = vld [vmem:[#allocation2 + $0x1d0] sm:$0xff]
      %v3948 = vld [vmem:[#allocation2 + $0x1e8] sm:$0xff]
      %v3949 = vld [vmem:[#allocation2 + $0x1f0] sm:$0xff]
      %s3950 = scalar_lea.vmem %s3, 8
      %v3951 = vld [vmem:[%s3950] sm:$0xff]
      %v3953 = vsel %vm225, %v3918, 0
      %v3956 = vsel %vm225, %v3919, 0
      %v3959 = vsel %vm225, %v3920, 0
      %v3962 = vsel %vm225, %v3921, 0
      %v3965 = vsel %vm225, %v3922, 0
      %v3968 = vsel %vm225, %v3923, 0
      %v3971 = vsel %vm225, %v3924, 0
      %v3974 = vsel %vm225, %v3925, 0
      %v3977 = vsel %vm225, %v3926, 0
      %v3980 = vsel %vm225, %v3927, 0
      %v3983 = vsel %vm225, %v3928, 0
      %v3986 = vsel %vm225, %v3929, 0
      %v3989 = vsel %vm225, %v3930, 0
      %v3992 = vsel %vm225, %v3931, 0
      %v3995 = vsel %vm225, %v3932, 0
      %v3998 = vsel %vm225, %v3933, 0
      %v4001 = vsel %vm225, %v3934, 0
      %v4004 = vsel %vm225, %v3935, 0
      %v4007 = vsel %vm225, %v3936, 0
      %v4010 = vsel %vm225, %v3937, 0
      %v4013 = vsel %vm225, %v3938, 0
      %v4016 = vsel %vm225, %v3939, 0
      %v4019 = vsel %vm225, %v3940, 0
      %v4022 = vsel %vm225, %v3941, 0
      %v4025 = vsel %vm225, %v3942, 0
      %v4028 = vsel %vm225, %v3943, 0
      %v4031 = vsel %vm225, %v3944, 0
      %v4034 = vsel %vm225, %v3945, 0
      %v4037 = vsel %vm225, %v3946, 0
      %v4040 = vsel %vm225, %v3947, 0
      %v4043 = vsel %vm225, %v3948, 0
      %v4046 = vsel %vm225, %v3949, 0
      %4048 = vmatprep.subr.mxu0 0.0
      %4049 = vmatpush1.msra.mxu0 %v3951
      %4050 = vmatprep.subr.mxu0 0.0
      %4051 = vmatpush1.msra.mxu0 0.0
      %4052 = vmatprep.subr.mxu0 0.0
      %4053 = vmatpush1.msra.mxu0 0.0
      %4054 = vmatprep.subr.mxu0 0.0
      %4055 = vmatpush1.msra.mxu0 0.0
      %4056 = vmatprep.subr.mxu0 0.0
      %4057 = vmatpush1.msra.mxu0 0.0
      %4058 = vmatprep.subr.mxu0 0.0
      %4059 = vmatpush1.msra.mxu0 0.0
      %4060 = vmatprep.subr.mxu0 0.0
      %4061 = vmatpush1.msra.mxu0 0.0
      %4062 = vmatprep.subr.mxu0 0.0
      %4063 = vmatpush1.msra.mxu0 0.0
      %4064 = vmatprep.subr.mxu0 0.0
      %4065 = vmatpush1.msra.mxu0 0.0
      %4066 = vmatprep.subr.mxu0 0.0
      %4067 = vmatpush1.msra.mxu0 0.0
      %4068 = vmatprep.subr.mxu0 0.0
      %4069 = vmatpush1.msra.mxu0 0.0
      %4070 = vmatprep.subr.mxu0 0.0
      %4071 = vmatpush1.msra.mxu0 0.0
      %4072 = vmatprep.subr.mxu0 0.0
      %4073 = vmatpush1.msra.mxu0 0.0
      %4074 = vmatprep.subr.mxu0 0.0
      %4075 = vmatpush1.msra.mxu0 0.0
      %4076 = vmatprep.subr.mxu0 0.0
      %4077 = vmatpush1.msra.mxu0 0.0
      %4078 = vmatprep.subr.mxu0 0.0
      %4079 = vmatpush1.msra.mxu0 0.0
      %4080 = vmatprep.subr.mxu0 0.0
      %4081 = vmatpush1.msra.mxu0 0.0
      %4082 = vmatprep.subr.mxu0 0.0
      %4083 = vmatpush1.msra.mxu0 0.0
      %4084 = vmatprep.subr.mxu0 0.0
      %4085 = vmatpush1.msra.mxu0 0.0
      %4086 = vmatprep.subr.mxu0 0.0
      %4087 = vmatpush1.msra.mxu0 0.0
      %4088 = vmatprep.subr.mxu0 0.0
      %4089 = vmatpush1.msra.mxu0 0.0
      %4090 = vmatprep.subr.mxu0 0.0
      %4091 = vmatpush1.msra.mxu0 0.0
      %4092 = vmatprep.subr.mxu0 0.0
      %4093 = vmatpush1.msra.mxu0 0.0
      %4094 = vmatprep.subr.mxu0 0.0
      %4095 = vmatpush1.msra.mxu0 0.0
      %4096 = vmatprep.subr.mxu0 0.0
      %4097 = vmatpush1.msra.mxu0 0.0
      %4098 = vmatprep.subr.mxu0 0.0
      %4099 = vmatpush1.msra.mxu0 0.0
      %4100 = vmatprep.subr.mxu0 0.0
      %4101 = vmatpush1.msra.mxu0 0.0
      %4102 = vmatprep.subr.mxu0 0.0
      %4103 = vmatpush1.msra.mxu0 0.0
      %4104 = vmatprep.subr.mxu0 0.0
      %4105 = vmatpush1.msra.mxu0 0.0
      %4106 = vmatprep.subr.mxu0 0.0
      %4107 = vmatpush1.msra.mxu0 0.0
      %4108 = vmatprep.subr.mxu0 0.0
      %4109 = vmatpush1.msra.mxu0 0.0
      %4110 = vmatprep.subr.mxu0 0.0
      %4111 = vmatpush1.msra.mxu0 0.0
      %4112 = vmatprep.mubr.f32.mxu0 0.0
      %4113 = vmatmul.mubr.f32.gmra.mrb[0].mxu0 %v3953
      %v4114 = vpop.f32.mrb[0].mxu0
      %v4115 = vadd.f32 0.0, %v4114
      %v4116 = vpop.f32.mrb[0].mxu0
      %4117 = vmatprep.mubr.f32.mxu0 0.0
      %4118 = vmatmul.mubr.f32.gmra.mrb[0].mxu0 %v3956
      %v4119 = vpop.f32.mrb[0].mxu0
      %v4120 = vadd.f32 0.0, %v4119
      %v4121 = vpop.f32.mrb[0].mxu0
      %4122 = vmatprep.mubr.f32.mxu0 0.0
      %4123 = vmatmul.mubr.f32.gmra.mrb[0].mxu0 %v3959
      %v4124 = vpop.f32.mrb[0].mxu0
      %v4125 = vadd.f32 0.0, %v4124
      %v4126 = vpop.f32.mrb[0].mxu0
      %4127 = vmatprep.mubr.f32.mxu0 0.0
      %4128 = vmatmul.mubr.f32.gmra.mrb[0].mxu0 %v3962
      %v4129 = vpop.f32.mrb[0].mxu0
      %v4130 = vadd.f32 0.0, %v4129
      %v4131 = vpop.f32.mrb[0].mxu0
      %4132 = vmatprep.mubr.f32.mxu0 0.0
      %4133 = vmatmul.mubr.f32.gmra.mrb[0].mxu0 %v3965
      %v4134 = vpop.f32.mrb[0].mxu0
      %v4135 = vadd.f32 0.0, %v4134
      %v4136 = vpop.f32.mrb[0].mxu0
      %4137 = vmatprep.mubr.f32.mxu0 0.0
      %4138 = vmatmul.mubr.f32.gmra.mrb[0].mxu0 %v3968
      %v4139 = vpop.f32.mrb[0].mxu0
      %v4140 = vadd.f32 0.0, %v4139
      %v4141 = vpop.f32.mrb[0].mxu0
      %4142 = vmatprep.mubr.f32.mxu0 0.0
      %4143 = vmatmul.mubr.f32.gmra.mrb[0].mxu0 %v3971
      %v4144 = vpop.f32.mrb[0].mxu0
      %v4145 = vadd.f32 0.0, %v4144
      %v4146 = vpop.f32.mrb[0].mxu0
      %4147 = vmatprep.mubr.f32.mxu0 0.0
      %4148 = vmatmul.mubr.f32.gmra.mrb[0].mxu0 %v3974
      %v4149 = vpop.f32.mrb[0].mxu0
      %v4150 = vadd.f32 0.0, %v4149
      %v4151 = vpop.f32.mrb[0].mxu0
      %4152 = vmatprep.mubr.f32.mxu0 0.0
      %4153 = vmatmul.mubr.f32.gmra.mrb[0].mxu0 %v3977
      %v4154 = vpop.f32.mrb[0].mxu0
      %v4155 = vadd.f32 0.0, %v4154
      %v4156 = vpop.f32.mrb[0].mxu0
      %4157 = vmatprep.mubr.f32.mxu0 0.0
      %4158 = vmatmul.mubr.f32.gmra.mrb[0].mxu0 %v3980
      %v4159 = vpop.f32.mrb[0].mxu0
      %v4160 = vadd.f32 0.0, %v4159
      %v4161 = vpop.f32.mrb[0].mxu0
      %4162 = vmatprep.mubr.f32.mxu0 0.0
      %4163 = vmatmul.mubr.f32.gmra.mrb[0].mxu0 %v3983
      %v4164 = vpop.f32.mrb[0].mxu0
      %v4165 = vadd.f32 0.0, %v4164
      %v4166 = vpop.f32.mrb[0].mxu0
      %4167 = vmatprep.mubr.f32.mxu0 0.0
      %4168 = vmatmul.mubr.f32.gmra.mrb[0].mxu0 %v3986
      %v4169 = vpop.f32.mrb[0].mxu0
      %v4170 = vadd.f32 0.0, %v4169
      %v4171 = vpop.f32.mrb[0].mxu0
      %4172 = vmatprep.mubr.f32.mxu0 0.0
      %4173 = vmatmul.mubr.f32.gmra.mrb[0].mxu0 %v3989
      %v4174 = vpop.f32.mrb[0].mxu0
      %v4175 = vadd.f32 0.0, %v4174
      %v4176 = vpop.f32.mrb[0].mxu0
      %4177 = vmatprep.mubr.f32.mxu0 0.0
      %4178 = vmatmul.mubr.f32.gmra.mrb[0].mxu0 %v3992
      %v4179 = vpop.f32.mrb[0].mxu0
      %v4180 = vadd.f32 0.0, %v4179
      %v4181 = vpop.f32.mrb[0].mxu0
      %4182 = vmatprep.mubr.f32.mxu0 0.0
      %4183 = vmatmul.mubr.f32.gmra.mrb[0].mxu0 %v3995
      %v4184 = vpop.f32.mrb[0].mxu0
      %v4185 = vadd.f32 0.0, %v4184
      %v4186 = vpop.f32.mrb[0].mxu0
      %4187 = vmatprep.mubr.f32.mxu0 0.0
      %4188 = vmatmul.mubr.f32.gmra.mrb[0].mxu0 %v3998
      %v4189 = vpop.f32.mrb[0].mxu0
      %v4190 = vadd.f32 0.0, %v4189
      %v4191 = vpop.f32.mrb[0].mxu0
      %4192 = vmatprep.mubr.f32.mxu0 0.0
      %4193 = vmatmul.mubr.f32.gmra.mrb[0].mxu0 %v4001
      %v4194 = vpop.f32.mrb[0].mxu0
      %v4195 = vadd.f32 0.0, %v4194
      %v4196 = vpop.f32.mrb[0].mxu0
      %4197 = vmatprep.mubr.f32.mxu0 0.0
      %4198 = vmatmul.mubr.f32.gmra.mrb[0].mxu0 %v4004
      %v4199 = vpop.f32.mrb[0].mxu0
      %v4200 = vadd.f32 0.0, %v4199
      %v4201 = vpop.f32.mrb[0].mxu0
      %4202 = vmatprep.mubr.f32.mxu0 0.0
      %4203 = vmatmul.mubr.f32.gmra.mrb[0].mxu0 %v4007
      %v4204 = vpop.f32.mrb[0].mxu0
      %v4205 = vadd.f32 0.0, %v4204
      %v4206 = vpop.f32.mrb[0].mxu0
      %4207 = vmatprep.mubr.f32.mxu0 0.0
      %4208 = vmatmul.mubr.f32.gmra.mrb[0].mxu0 %v4010
      %v4209 = vpop.f32.mrb[0].mxu0
      %v4210 = vadd.f32 0.0, %v4209
      %v4211 = vpop.f32.mrb[0].mxu0
      %4212 = vmatprep.mubr.f32.mxu0 0.0
      %4213 = vmatmul.mubr.f32.gmra.mrb[0].mxu0 %v4013
      %v4214 = vpop.f32.mrb[0].mxu0
      %v4215 = vadd.f32 0.0, %v4214
      %v4216 = vpop.f32.mrb[0].mxu0
      %4217 = vmatprep.mubr.f32.mxu0 0.0
      %4218 = vmatmul.mubr.f32.gmra.mrb[0].mxu0 %v4016
      %v4219 = vpop.f32.mrb[0].mxu0
      %v4220 = vadd.f32 0.0, %v4219
      %v4221 = vpop.f32.mrb[0].mxu0
      %4222 = vmatprep.mubr.f32.mxu0 0.0
      %4223 = vmatmul.mubr.f32.gmra.mrb[0].mxu0 %v4019
      %v4224 = vpop.f32.mrb[0].mxu0
      %v4225 = vadd.f32 0.0, %v4224
      %v4226 = vpop.f32.mrb[0].mxu0
      %4227 = vmatprep.mubr.f32.mxu0 0.0
      %4228 = vmatmul.mubr.f32.gmra.mrb[0].mxu0 %v4022
      %v4229 = vpop.f32.mrb[0].mxu0
      %v4230 = vadd.f32 0.0, %v4229
      %v4231 = vpop.f32.mrb[0].mxu0
      %4232 = vmatprep.mubr.f32.mxu0 0.0
      %4233 = vmatmul.mubr.f32.gmra.mrb[0].mxu0 %v4025
      %v4234 = vpop.f32.mrb[0].mxu0
      %v4235 = vadd.f32 0.0, %v4234
      %v4236 = vpop.f32.mrb[0].mxu0
      %4237 = vmatprep.mubr.f32.mxu0 0.0
      %4238 = vmatmul.mubr.f32.gmra.mrb[0].mxu0 %v4028
      %v4239 = vpop.f32.mrb[0].mxu0
      %v4240 = vadd.f32 0.0, %v4239
      %v4241 = vpop.f32.mrb[0].mxu0
      %4242 = vmatprep.mubr.f32.mxu0 0.0
      %4243 = vmatmul.mubr.f32.gmra.mrb[0].mxu0 %v4031
      %v4244 = vpop.f32.mrb[0].mxu0
      %v4245 = vadd.f32 0.0, %v4244
      %v4246 = vpop.f32.mrb[0].mxu0
      %4247 = vmatprep.mubr.f32.mxu0 0.0
      %4248 = vmatmul.mubr.f32.gmra.mrb[0].mxu0 %v4034
      %v4249 = vpop.f32.mrb[0].mxu0
      %v4250 = vadd.f32 0.0, %v4249
      %v4251 = vpop.f32.mrb[0].mxu0
      %4252 = vmatprep.mubr.f32.mxu0 0.0
      %4253 = vmatmul.mubr.f32.gmra.mrb[0].mxu0 %v4037
      %v4254 = vpop.f32.mrb[0].mxu0
      %v4255 = vadd.f32 0.0, %v4254
      %v4256 = vpop.f32.mrb[0].mxu0
      %4257 = vmatprep.mubr.f32.mxu0 0.0
      %4258 = vmatmul.mubr.f32.gmra.mrb[0].mxu0 %v4040
      %v4259 = vpop.f32.mrb[0].mxu0
      %v4260 = vadd.f32 0.0, %v4259
      %v4261 = vpop.f32.mrb[0].mxu0
      %4262 = vmatprep.mubr.f32.mxu0 0.0
      %4263 = vmatmul.mubr.f32.gmra.mrb[0].mxu0 %v4043
      %v4264 = vpop.f32.mrb[0].mxu0
      %v4265 = vadd.f32 0.0, %v4264
      %v4266 = vpop.f32.mrb[0].mxu0
      %4267 = vmatprep.mubr.f32.mxu0 0.0
      %4268 = vmatmul.mubr.f32.gmra.mrb[0].mxu0 %v4046
      %v4269 = vpop.f32.mrb[0].mxu0
      %v4270 = vadd.f32 0.0, %v4269
      %v4271 = vpop.f32.mrb[0].mxu0
      %4272 = vdwg.mxu0
      %v4274 = vsel %vm225, %v3885, 0
      %v4277 = vsel %vm225, %v3886, 0
      %v4280 = vsel %vm225, %v3887, 0
      %v4283 = vsel %vm225, %v3888, 0
      %v4286 = vsel %vm225, %v3889, 0
      %v4289 = vsel %vm225, %v3890, 0
      %v4292 = vsel %vm225, %v3891, 0
      %v4295 = vsel %vm225, %v3892, 0
      %v4298 = vsel %vm225, %v3893, 0
      %v4301 = vsel %vm225, %v3894, 0
      %v4304 = vsel %vm225, %v3895, 0
      %v4307 = vsel %vm225, %v3896, 0
      %v4310 = vsel %vm225, %v3897, 0
      %v4313 = vsel %vm225, %v3898, 0
      %v4316 = vsel %vm225, %v3899, 0
      %v4319 = vsel %vm225, %v3900, 0
      %v4322 = vsel %vm225, %v3901, 0
      %v4325 = vsel %vm225, %v3902, 0
      %v4328 = vsel %vm225, %v3903, 0
      %v4331 = vsel %vm225, %v3904, 0
      %v4334 = vsel %vm225, %v3905, 0
      %v4337 = vsel %vm225, %v3906, 0
      %v4340 = vsel %vm225, %v3907, 0
      %v4343 = vsel %vm225, %v3908, 0
      %v4346 = vsel %vm225, %v3909, 0
      %v4349 = vsel %vm225, %v3910, 0
      %v4352 = vsel %vm225, %v3911, 0
      %v4355 = vsel %vm225, %v3912, 0
      %v4358 = vsel %vm225, %v3913, 0
      %v4361 = vsel %vm225, %v3914, 0
      %v4364 = vsel %vm225, %v3915, 0
      %v4367 = vsel %vm225, %v3916, 0
      %4369 = vmatprep.subr.mxu0 0.0
      %4370 = vmatpush1.msra.mxu0 %v3917
      %4371 = vmatprep.subr.mxu0 0.0
      %4372 = vmatpush1.msra.mxu0 0.0
      %4373 = vmatprep.subr.mxu0 0.0
      %4374 = vmatpush1.msra.mxu0 0.0
      %4375 = vmatprep.subr.mxu0 0.0
      %4376 = vmatpush1.msra.mxu0 0.0
      %4377 = vmatprep.subr.mxu0 0.0
      %4378 = vmatpush1.msra.mxu0 0.0
      %4379 = vmatprep.subr.mxu0 0.0
      %4380 = vmatpush1.msra.mxu0 0.0
      %4381 = vmatprep.subr.mxu0 0.0
      %4382 = vmatpush1.msra.mxu0 0.0
      %4383 = vmatprep.subr.mxu0 0.0
      %4384 = vmatpush1.msra.mxu0 0.0
      %4385 = vmatprep.subr.mxu0 0.0
      %4386 = vmatpush1.msra.mxu0 0.0
      %4387 = vmatprep.subr.mxu0 0.0
      %4388 = vmatpush1.msra.mxu0 0.0
      %4389 = vmatprep.subr.mxu0 0.0
      %4390 = vmatpush1.msra.mxu0 0.0
      %4391 = vmatprep.subr.mxu0 0.0
      %4392 = vmatpush1.msra.mxu0 0.0
      %4393 = vmatprep.subr.mxu0 0.0
      %4394 = vmatpush1.msra.mxu0 0.0
      %4395 = vmatprep.subr.mxu0 0.0
      %4396 = vmatpush1.msra.mxu0 0.0
      %4397 = vmatprep.subr.mxu0 0.0
      %4398 = vmatpush1.msra.mxu0 0.0
      %4399 = vmatprep.subr.mxu0 0.0
      %4400 = vmatpush1.msra.mxu0 0.0
      %4401 = vmatprep.subr.mxu0 0.0
      %4402 = vmatpush1.msra.mxu0 0.0
      %4403 = vmatprep.subr.mxu0 0.0
      %4404 = vmatpush1.msra.mxu0 0.0
      %4405 = vmatprep.subr.mxu0 0.0
      %4406 = vmatpush1.msra.mxu0 0.0
      %4407 = vmatprep.subr.mxu0 0.0
      %4408 = vmatpush1.msra.mxu0 0.0
      %4409 = vmatprep.subr.mxu0 0.0
      %4410 = vmatpush1.msra.mxu0 0.0
      %4411 = vmatprep.subr.mxu0 0.0
      %4412 = vmatpush1.msra.mxu0 0.0
      %4413 = vmatprep.subr.mxu0 0.0
      %4414 = vmatpush1.msra.mxu0 0.0
      %4415 = vmatprep.subr.mxu0 0.0
      %4416 = vmatpush1.msra.mxu0 0.0
      %4417 = vmatprep.subr.mxu0 0.0
      %4418 = vmatpush1.msra.mxu0 0.0
      %4419 = vmatprep.subr.mxu0 0.0
      %4420 = vmatpush1.msra.mxu0 0.0
      %4421 = vmatprep.subr.mxu0 0.0
      %4422 = vmatpush1.msra.mxu0 0.0
      %4423 = vmatprep.subr.mxu0 0.0
      %4424 = vmatpush1.msra.mxu0 0.0
      %4425 = vmatprep.subr.mxu0 0.0
      %4426 = vmatpush1.msra.mxu0 0.0
      %4427 = vmatprep.subr.mxu0 0.0
      %4428 = vmatpush1.msra.mxu0 0.0
      %4429 = vmatprep.subr.mxu0 0.0
      %4430 = vmatpush1.msra.mxu0 0.0
      %4431 = vmatprep.subr.mxu0 0.0
      %4432 = vmatpush1.msra.mxu0 0.0
      %4433 = vmatprep.mubr.f32.mxu0 0.0
      %4434 = vmatmul.mubr.f32.gmra.mrb[0].mxu0 %v4274
      %v4435 = vpop.f32.mrb[0].mxu0
      %v4436 = vadd.f32 %v4115, %v4435
      %v4437 = vpop.f32.mrb[0].mxu0
      %4438 = vmatprep.mubr.f32.mxu0 0.0
      %4439 = vmatmul.mubr.f32.gmra.mrb[0].mxu0 %v4277
      %v4440 = vpop.f32.mrb[0].mxu0
      %v4441 = vadd.f32 %v4120, %v4440
      %v4442 = vpop.f32.mrb[0].mxu0
      %4443 = vmatprep.mubr.f32.mxu0 0.0
      %4444 = vmatmul.mubr.f32.gmra.mrb[0].mxu0 %v4280
      %v4445 = vpop.f32.mrb[0].mxu0
      %v4446 = vadd.f32 %v4125, %v4445
      %v4447 = vpop.f32.mrb[0].mxu0
      %4448 = vmatprep.mubr.f32.mxu0 0.0
      %4449 = vmatmul.mubr.f32.gmra.mrb[0].mxu0 %v4283
      %v4450 = vpop.f32.mrb[0].mxu0
      %v4451 = vadd.f32 %v4130, %v4450
      %v4452 = vpop.f32.mrb[0].mxu0
      %4453 = vmatprep.mubr.f32.mxu0 0.0
      %4454 = vmatmul.mubr.f32.gmra.mrb[0].mxu0 %v4286
      %v4455 = vpop.f32.mrb[0].mxu0
      %v4456 = vadd.f32 %v4135, %v4455
      %v4457 = vpop.f32.mrb[0].mxu0
      %4458 = vmatprep.mubr.f32.mxu0 0.0
      %4459 = vmatmul.mubr.f32.gmra.mrb[0].mxu0 %v4289
      %v4460 = vpop.f32.mrb[0].mxu0
      %v4461 = vadd.f32 %v4140, %v4460
      %v4462 = vpop.f32.mrb[0].mxu0
      %4463 = vmatprep.mubr.f32.mxu0 0.0
      %4464 = vmatmul.mubr.f32.gmra.mrb[0].mxu0 %v4292
      %v4465 = vpop.f32.mrb[0].mxu0
      %v4466 = vadd.f32 %v4145, %v4465
      %v4467 = vpop.f32.mrb[0].mxu0
      %4468 = vmatprep.mubr.f32.mxu0 0.0
      %4469 = vmatmul.mubr.f32.gmra.mrb[0].mxu0 %v4295
      %v4470 = vpop.f32.mrb[0].mxu0
      %v4471 = vadd.f32 %v4150, %v4470
      %v4472 = vpop.f32.mrb[0].mxu0
      %4473 = vmatprep.mubr.f32.mxu0 0.0
      %4474 = vmatmul.mubr.f32.gmra.mrb[0].mxu0 %v4298
      %v4475 = vpop.f32.mrb[0].mxu0
      %v4476 = vadd.f32 %v4155, %v4475
      %v4477 = vpop.f32.mrb[0].mxu0
      %4478 = vmatprep.mubr.f32.mxu0 0.0
      %4479 = vmatmul.mubr.f32.gmra.mrb[0].mxu0 %v4301
      %v4480 = vpop.f32.mrb[0].mxu0
      %v4481 = vadd.f32 %v4160, %v4480
      %v4482 = vpop.f32.mrb[0].mxu0
      %4483 = vmatprep.mubr.f32.mxu0 0.0
      %4484 = vmatmul.mubr.f32.gmra.mrb[0].mxu0 %v4304
      %v4485 = vpop.f32.mrb[0].mxu0
      %v4486 = vadd.f32 %v4165, %v4485
      %v4487 = vpop.f32.mrb[0].mxu0
      %4488 = vmatprep.mubr.f32.mxu0 0.0
      %4489 = vmatmul.mubr.f32.gmra.mrb[0].mxu0 %v4307
      %v4490 = vpop.f32.mrb[0].mxu0
      %v4491 = vadd.f32 %v4170, %v4490
      %v4492 = vpop.f32.mrb[0].mxu0
      %4493 = vmatprep.mubr.f32.mxu0 0.0
      %4494 = vmatmul.mubr.f32.gmra.mrb[0].mxu0 %v4310
      %v4495 = vpop.f32.mrb[0].mxu0
      %v4496 = vadd.f32 %v4175, %v4495
      %v4497 = vpop.f32.mrb[0].mxu0
      %4498 = vmatprep.mubr.f32.mxu0 0.0
      %4499 = vmatmul.mubr.f32.gmra.mrb[0].mxu0 %v4313
      %v4500 = vpop.f32.mrb[0].mxu0
      %v4501 = vadd.f32 %v4180, %v4500
      %v4502 = vpop.f32.mrb[0].mxu0
      %4503 = vmatprep.mubr.f32.mxu0 0.0
      %4504 = vmatmul.mubr.f32.gmra.mrb[0].mxu0 %v4316
      %v4505 = vpop.f32.mrb[0].mxu0
      %v4506 = vadd.f32 %v4185, %v4505
      %v4507 = vpop.f32.mrb[0].mxu0
      %4508 = vmatprep.mubr.f32.mxu0 0.0
      %4509 = vmatmul.mubr.f32.gmra.mrb[0].mxu0 %v4319
      %v4510 = vpop.f32.mrb[0].mxu0
      %v4511 = vadd.f32 %v4190, %v4510
      %v4512 = vpop.f32.mrb[0].mxu0
      %4513 = vmatprep.mubr.f32.mxu0 0.0
      %4514 = vmatmul.mubr.f32.gmra.mrb[0].mxu0 %v4322
      %v4515 = vpop.f32.mrb[0].mxu0
      %v4516 = vadd.f32 %v4195, %v4515
      %v4517 = vpop.f32.mrb[0].mxu0
      %4518 = vmatprep.mubr.f32.mxu0 0.0
      %4519 = vmatmul.mubr.f32.gmra.mrb[0].mxu0 %v4325
      %v4520 = vpop.f32.mrb[0].mxu0
      %v4521 = vadd.f32 %v4200, %v4520
      %v4522 = vpop.f32.mrb[0].mxu0
      %4523 = vmatprep.mubr.f32.mxu0 0.0
      %4524 = vmatmul.mubr.f32.gmra.mrb[0].mxu0 %v4328
      %v4525 = vpop.f32.mrb[0].mxu0
      %v4526 = vadd.f32 %v4205, %v4525
      %v4527 = vpop.f32.mrb[0].mxu0
      %4528 = vmatprep.mubr.f32.mxu0 0.0
      %4529 = vmatmul.mubr.f32.gmra.mrb[0].mxu0 %v4331
      %v4530 = vpop.f32.mrb[0].mxu0
      %v4531 = vadd.f32 %v4210, %v4530
      %v4532 = vpop.f32.mrb[0].mxu0
      %4533 = vmatprep.mubr.f32.mxu0 0.0
      %4534 = vmatmul.mubr.f32.gmra.mrb[0].mxu0 %v4334
      %v4535 = vpop.f32.mrb[0].mxu0
      %v4536 = vadd.f32 %v4215, %v4535
      %v4537 = vpop.f32.mrb[0].mxu0
      %4538 = vmatprep.mubr.f32.mxu0 0.0
      %4539 = vmatmul.mubr.f32.gmra.mrb[0].mxu0 %v4337
      %v4540 = vpop.f32.mrb[0].mxu0
      %v4541 = vadd.f32 %v4220, %v4540
      %v4542 = vpop.f32.mrb[0].mxu0
      %4543 = vmatprep.mubr.f32.mxu0 0.0
      %4544 = vmatmul.mubr.f32.gmra.mrb[0].mxu0 %v4340
      %v4545 = vpop.f32.mrb[0].mxu0
      %v4546 = vadd.f32 %v4225, %v4545
      %v4547 = vpop.f32.mrb[0].mxu0
      %4548 = vmatprep.mubr.f32.mxu0 0.0
      %4549 = vmatmul.mubr.f32.gmra.mrb[0].mxu0 %v4343
      %v4550 = vpop.f32.mrb[0].mxu0
      %v4551 = vadd.f32 %v4230, %v4550
      %v4552 = vpop.f32.mrb[0].mxu0
      %4553 = vmatprep.mubr.f32.mxu0 0.0
      %4554 = vmatmul.mubr.f32.gmra.mrb[0].mxu0 %v4346
      %v4555 = vpop.f32.mrb[0].mxu0
      %v4556 = vadd.f32 %v4235, %v4555
      %v4557 = vpop.f32.mrb[0].mxu0
      %4558 = vmatprep.mubr.f32.mxu0 0.0
      %4559 = vmatmul.mubr.f32.gmra.mrb[0].mxu0 %v4349
      %v4560 = vpop.f32.mrb[0].mxu0
      %v4561 = vadd.f32 %v4240, %v4560
      %v4562 = vpop.f32.mrb[0].mxu0
      %4563 = vmatprep.mubr.f32.mxu0 0.0
      %4564 = vmatmul.mubr.f32.gmra.mrb[0].mxu0 %v4352
      %v4565 = vpop.f32.mrb[0].mxu0
      %v4566 = vadd.f32 %v4245, %v4565
      %v4567 = vpop.f32.mrb[0].mxu0
      %4568 = vmatprep.mubr.f32.mxu0 0.0
      %4569 = vmatmul.mubr.f32.gmra.mrb[0].mxu0 %v4355
      %v4570 = vpop.f32.mrb[0].mxu0
      %v4571 = vadd.f32 %v4250, %v4570
      %v4572 = vpop.f32.mrb[0].mxu0
      %4573 = vmatprep.mubr.f32.mxu0 0.0
      %4574 = vmatmul.mubr.f32.gmra.mrb[0].mxu0 %v4358
      %v4575 = vpop.f32.mrb[0].mxu0
      %v4576 = vadd.f32 %v4255, %v4575
      %v4577 = vpop.f32.mrb[0].mxu0
      %4578 = vmatprep.mubr.f32.mxu0 0.0
      %4579 = vmatmul.mubr.f32.gmra.mrb[0].mxu0 %v4361
      %v4580 = vpop.f32.mrb[0].mxu0
      %v4581 = vadd.f32 %v4260, %v4580
      %v4582 = vpop.f32.mrb[0].mxu0
      %4583 = vmatprep.mubr.f32.mxu0 0.0
      %4584 = vmatmul.mubr.f32.gmra.mrb[0].mxu0 %v4364
      %v4585 = vpop.f32.mrb[0].mxu0
      %v4586 = vadd.f32 %v4265, %v4585
      %v4587 = vpop.f32.mrb[0].mxu0
      %4588 = vmatprep.mubr.f32.mxu0 0.0
      %4589 = vmatmul.mubr.f32.gmra.mrb[0].mxu0 %v4367
      %v4590 = vpop.f32.mrb[0].mxu0
      %v4591 = vadd.f32 %v4270, %v4590
      %v4592 = vpop.f32.mrb[0].mxu0
      %4593 = vdwg.mxu0
      %v4594 = vld [vmem:[#allocation2 + $0x9] sm:$0xff]
      %v4595 = vld [vmem:[#allocation2 + $0x11] sm:$0xff]
      %v4596 = vld [vmem:[#allocation2 + $0x29] sm:$0xff]
      %v4597 = vld [vmem:[#allocation2 + $0x31] sm:$0xff]
      %v4598 = vld [vmem:[#allocation2 + $0x49] sm:$0xff]
      %v4599 = vld [vmem:[#allocation2 + $0x51] sm:$0xff]
      %v4600 = vld [vmem:[#allocation2 + $0x69] sm:$0xff]
      %v4601 = vld [vmem:[#allocation2 + $0x71] sm:$0xff]
      %v4602 = vld [vmem:[#allocation2 + $0x89] sm:$0xff]
      %v4603 = vld [vmem:[#allocation2 + $0x91] sm:$0xff]
      %v4604 = vld [vmem:[#allocation2 + $0xa9] sm:$0xff]
      %v4605 = vld [vmem:[#allocation2 + $0xb1] sm:$0xff]
      %v4606 = vld [vmem:[#allocation2 + $0xc9] sm:$0xff]
      %v4607 = vld [vmem:[#allocation2 + $0xd1] sm:$0xff]
      %v4608 = vld [vmem:[#allocation2 + $0xe9] sm:$0xff]
      %v4609 = vld [vmem:[#allocation2 + $0xf1] sm:$0xff]
      %v4610 = vld [vmem:[#allocation2 + $0x109] sm:$0xff]
      %v4611 = vld [vmem:[#allocation2 + $0x111] sm:$0xff]
      %v4612 = vld [vmem:[#allocation2 + $0x129] sm:$0xff]
      %v4613 = vld [vmem:[#allocation2 + $0x131] sm:$0xff]
      %v4614 = vld [vmem:[#allocation2 + $0x149] sm:$0xff]
      %v4615 = vld [vmem:[#allocation2 + $0x151] sm:$0xff]
      %v4616 = vld [vmem:[#allocation2 + $0x169] sm:$0xff]
      %v4617 = vld [vmem:[#allocation2 + $0x171] sm:$0xff]
      %v4618 = vld [vmem:[#allocation2 + $0x189] sm:$0xff]
      %v4619 = vld [vmem:[#allocation2 + $0x191] sm:$0xff]
      %v4620 = vld [vmem:[#allocation2 + $0x1a9] sm:$0xff]
      %v4621 = vld [vmem:[#allocation2 + $0x1b1] sm:$0xff]
      %v4622 = vld [vmem:[#allocation2 + $0x1c9] sm:$0xff]
      %v4623 = vld [vmem:[#allocation2 + $0x1d1] sm:$0xff]
      %v4624 = vld [vmem:[#allocation2 + $0x1e9] sm:$0xff]
      %v4625 = vld [vmem:[#allocation2 + $0x1f1] sm:$0xff]
      %s4626 = scalar_lea.vmem %s3, 16
      %v4627 = vld [vmem:[%s4626] sm:$0xff]
      %v4629 = vsel %vm225, %v4594, 0
      %v4632 = vsel %vm225, %v4595, 0
      %v4635 = vsel %vm225, %v4596, 0
      %v4638 = vsel %vm225, %v4597, 0
      %v4641 = vsel %vm225, %v4598, 0
      %v4644 = vsel %vm225, %v4599, 0
      %v4647 = vsel %vm225, %v4600, 0
      %v4650 = vsel %vm225, %v4601, 0
      %v4653 = vsel %vm225, %v4602, 0
      %v4656 = vsel %vm225, %v4603, 0
      %v4659 = vsel %vm225, %v4604, 0
      %v4662 = vsel %vm225, %v4605, 0
      %v4665 = vsel %vm225, %v4606, 0
      %v4668 = vsel %vm225, %v4607, 0
      %v4671 = vsel %vm225, %v4608, 0
      %v4674 = vsel %vm225, %v4609, 0
      %v4677 = vsel %vm225, %v4610, 0
      %v4680 = vsel %vm225, %v4611, 0
      %v4683 = vsel %vm225, %v4612, 0
      %v4686 = vsel %vm225, %v4613, 0
      %v4689 = vsel %vm225, %v4614, 0
      %v4692 = vsel %vm225, %v4615, 0
      %v4695 = vsel %vm225, %v4616, 0
      %v4698 = vsel %vm225, %v4617, 0
      %v4701 = vsel %vm225, %v4618, 0
      %v4704 = vsel %vm225, %v4619, 0
      %v4707 = vsel %vm225, %v4620, 0
      %v4710 = vsel %vm225, %v4621, 0
      %v4713 = vsel %vm225, %v4622, 0
      %v4716 = vsel %vm225, %v4623, 0
      %v4719 = vsel %vm225, %v4624, 0
      %v4722 = vsel %vm225, %v4625, 0
      %4724 = vmatprep.subr.mxu0 0.0
      %4725 = vmatpush1.msra.mxu0 %v4627
      %4726 = vmatprep.subr.mxu0 0.0
      %4727 = vmatpush1.msra.mxu0 0.0
      %4728 = vmatprep.subr.mxu0 0.0
      %4729 = vmatpush1.msra.mxu0 0.0
      %4730 = vmatprep.subr.mxu0 0.0
      %4731 = vmatpush1.msra.mxu0 0.0
      %4732 = vmatprep.subr.mxu0 0.0
      %4733 = vmatpush1.msra.mxu0 0.0
      %4734 = vmatprep.subr.mxu0 0.0
      %4735 = vmatpush1.msra.mxu0 0.0
      %4736 = vmatprep.subr.mxu0 0.0
      %4737 = vmatpush1.msra.mxu0 0.0
      %4738 = vmatprep.subr.mxu0 0.0
      %4739 = vmatpush1.msra.mxu0 0.0
      %4740 = vmatprep.subr.mxu0 0.0
      %4741 = vmatpush1.msra.mxu0 0.0
      %4742 = vmatprep.subr.mxu0 0.0
      %4743 = vmatpush1.msra.mxu0 0.0
      %4744 = vmatprep.subr.mxu0 0.0
      %4745 = vmatpush1.msra.mxu0 0.0
      %4746 = vmatprep.subr.mxu0 0.0
      %4747 = vmatpush1.msra.mxu0 0.0
      %4748 = vmatprep.subr.mxu0 0.0
      %4749 = vmatpush1.msra.mxu0 0.0
      %4750 = vmatprep.subr.mxu0 0.0
      %4751 = vmatpush1.msra.mxu0 0.0
      %4752 = vmatprep.subr.mxu0 0.0
      %4753 = vmatpush1.msra.mxu0 0.0
      %4754 = vmatprep.subr.mxu0 0.0
      %4755 = vmatpush1.msra.mxu0 0.0
      %4756 = vmatprep.subr.mxu0 0.0
      %4757 = vmatpush1.msra.mxu0 0.0
      %4758 = vmatprep.subr.mxu0 0.0
      %4759 = vmatpush1.msra.mxu0 0.0
      %4760 = vmatprep.subr.mxu0 0.0
      %4761 = vmatpush1.msra.mxu0 0.0
      %4762 = vmatprep.subr.mxu0 0.0
      %4763 = vmatpush1.msra.mxu0 0.0
      %4764 = vmatprep.subr.mxu0 0.0
      %4765 = vmatpush1.msra.mxu0 0.0
      %4766 = vmatprep.subr.mxu0 0.0
      %4767 = vmatpush1.msra.mxu0 0.0
      %4768 = vmatprep.subr.mxu0 0.0
      %4769 = vmatpush1.msra.mxu0 0.0
      %4770 = vmatprep.subr.mxu0 0.0
      %4771 = vmatpush1.msra.mxu0 0.0
      %4772 = vmatprep.subr.mxu0 0.0
      %4773 = vmatpush1.msra.mxu0 0.0
      %4774 = vmatprep.subr.mxu0 0.0
      %4775 = vmatpush1.msra.mxu0 0.0
      %4776 = vmatprep.subr.mxu0 0.0
      %4777 = vmatpush1.msra.mxu0 0.0
      %4778 = vmatprep.subr.mxu0 0.0
      %4779 = vmatpush1.msra.mxu0 0.0
      %4780 = vmatprep.subr.mxu0 0.0
      %4781 = vmatpush1.msra.mxu0 0.0
      %4782 = vmatprep.subr.mxu0 0.0
      %4783 = vmatpush1.msra.mxu0 0.0
      %4784 = vmatprep.subr.mxu0 0.0
      %4785 = vmatpush1.msra.mxu0 0.0
      %4786 = vmatprep.subr.mxu0 0.0
      %4787 = vmatpush1.msra.mxu0 0.0
      %4788 = vmatprep.mubr.f32.mxu0 0.0
      %4789 = vmatmul.mubr.f32.gmra.mrb[0].mxu0 %v4629
      %v4790 = vpop.f32.mrb[0].mxu0
      %v4791 = vadd.f32 0.0, %v4790
      %v4792 = vpop.f32.mrb[0].mxu0
      %4793 = vmatprep.mubr.f32.mxu0 0.0
      %4794 = vmatmul.mubr.f32.gmra.mrb[0].mxu0 %v4632
      %v4795 = vpop.f32.mrb[0].mxu0
      %v4796 = vadd.f32 0.0, %v4795
      %v4797 = vpop.f32.mrb[0].mxu0
      %4798 = vmatprep.mubr.f32.mxu0 0.0
      %4799 = vmatmul.mubr.f32.gmra.mrb[0].mxu0 %v4635
      %v4800 = vpop.f32.mrb[0].mxu0
      %v4801 = vadd.f32 0.0, %v4800
      %v4802 = vpop.f32.mrb[0].mxu0
      %4803 = vmatprep.mubr.f32.mxu0 0.0
      %4804 = vmatmul.mubr.f32.gmra.mrb[0].mxu0 %v4638
      %v4805 = vpop.f32.mrb[0].mxu0
      %v4806 = vadd.f32 0.0, %v4805
      %v4807 = vpop.f32.mrb[0].mxu0
      %4808 = vmatprep.mubr.f32.mxu0 0.0
      %4809 = vmatmul.mubr.f32.gmra.mrb[0].mxu0 %v4641
      %v4810 = vpop.f32.mrb[0].mxu0
      %v4811 = vadd.f32 0.0, %v4810
      %v4812 = vpop.f32.mrb[0].mxu0
      %4813 = vmatprep.mubr.f32.mxu0 0.0
      %4814 = vmatmul.mubr.f32.gmra.mrb[0].mxu0 %v4644
      %v4815 = vpop.f32.mrb[0].mxu0
      %v4816 = vadd.f32 0.0, %v4815
      %v4817 = vpop.f32.mrb[0].mxu0
      %4818 = vmatprep.mubr.f32.mxu0 0.0
      %4819 = vmatmul.mubr.f32.gmra.mrb[0].mxu0 %v4647
      %v4820 = vpop.f32.mrb[0].mxu0
      %v4821 = vadd.f32 0.0, %v4820
      %v4822 = vpop.f32.mrb[0].mxu0
      %4823 = vmatprep.mubr.f32.mxu0 0.0
      %4824 = vmatmul.mubr.f32.gmra.mrb[0].mxu0 %v4650
      %v4825 = vpop.f32.mrb[0].mxu0
      %v4826 = vadd.f32 0.0, %v4825
      %v4827 = vpop.f32.mrb[0].mxu0
      %4828 = vmatprep.mubr.f32.mxu0 0.0
      %4829 = vmatmul.mubr.f32.gmra.mrb[0].mxu0 %v4653
      %v4830 = vpop.f32.mrb[0].mxu0
      %v4831 = vadd.f32 0.0, %v4830
      %v4832 = vpop.f32.mrb[0].mxu0
      %4833 = vmatprep.mubr.f32.mxu0 0.0
      %4834 = vmatmul.mubr.f32.gmra.mrb[0].mxu0 %v4656
      %v4835 = vpop.f32.mrb[0].mxu0
      %v4836 = vadd.f32 0.0, %v4835
      %v4837 = vpop.f32.mrb[0].mxu0
      %4838 = vmatprep.mubr.f32.mxu0 0.0
      %4839 = vmatmul.mubr.f32.gmra.mrb[0].mxu0 %v4659
      %v4840 = vpop.f32.mrb[0].mxu0
      %v4841 = vadd.f32 0.0, %v4840
      %v4842 = vpop.f32.mrb[0].mxu0
      %4843 = vmatprep.mubr.f32.mxu0 0.0
      %4844 = vmatmul.mubr.f32.gmra.mrb[0].mxu0 %v4662
      %v4845 = vpop.f32.mrb[0].mxu0
      %v4846 = vadd.f32 0.0, %v4845
      %v4847 = vpop.f32.mrb[0].mxu0
      %4848 = vmatprep.mubr.f32.mxu0 0.0
      %4849 = vmatmul.mubr.f32.gmra.mrb[0].mxu0 %v4665
      %v4850 = vpop.f32.mrb[0].mxu0
      %v4851 = vadd.f32 0.0, %v4850
      %v4852 = vpop.f32.mrb[0].mxu0
      %4853 = vmatprep.mubr.f32.mxu0 0.0
      %4854 = vmatmul.mubr.f32.gmra.mrb[0].mxu0 %v4668
      %v4855 = vpop.f32.mrb[0].mxu0
      %v4856 = vadd.f32 0.0, %v4855
      %v4857 = vpop.f32.mrb[0].mxu0
      %4858 = vmatprep.mubr.f32.mxu0 0.0
      %4859 = vmatmul.mubr.f32.gmra.mrb[0].mxu0 %v4671
      %v4860 = vpop.f32.mrb[0].mxu0
      %v4861 = vadd.f32 0.0, %v4860
      %v4862 = vpop.f32.mrb[0].mxu0
      %4863 = vmatprep.mubr.f32.mxu0 0.0
      %4864 = vmatmul.mubr.f32.gmra.mrb[0].mxu0 %v4674
      %v4865 = vpop.f32.mrb[0].mxu0
      %v4866 = vadd.f32 0.0, %v4865
      %v4867 = vpop.f32.mrb[0].mxu0
      %4868 = vmatprep.mubr.f32.mxu0 0.0
      %4869 = vmatmul.mubr.f32.gmra.mrb[0].mxu0 %v4677
      %v4870 = vpop.f32.mrb[0].mxu0
      %v4871 = vadd.f32 0.0, %v4870
      %v4872 = vpop.f32.mrb[0].mxu0
      %4873 = vmatprep.mubr.f32.mxu0 0.0
      %4874 = vmatmul.mubr.f32.gmra.mrb[0].mxu0 %v4680
      %v4875 = vpop.f32.mrb[0].mxu0
      %v4876 = vadd.f32 0.0, %v4875
      %v4877 = vpop.f32.mrb[0].mxu0
      %4878 = vmatprep.mubr.f32.mxu0 0.0
      %4879 = vmatmul.mubr.f32.gmra.mrb[0].mxu0 %v4683
      %v4880 = vpop.f32.mrb[0].mxu0
      %v4881 = vadd.f32 0.0, %v4880
      %v4882 = vpop.f32.mrb[0].mxu0
      %4883 = vmatprep.mubr.f32.mxu0 0.0
      %4884 = vmatmul.mubr.f32.gmra.mrb[0].mxu0 %v4686
      %v4885 = vpop.f32.mrb[0].mxu0
      %v4886 = vadd.f32 0.0, %v4885
      %v4887 = vpop.f32.mrb[0].mxu0
      %4888 = vmatprep.mubr.f32.mxu0 0.0
      %4889 = vmatmul.mubr.f32.gmra.mrb[0].mxu0 %v4689
      %v4890 = vpop.f32.mrb[0].mxu0
      %v4891 = vadd.f32 0.0, %v4890
      %v4892 = vpop.f32.mrb[0].mxu0
      %4893 = vmatprep.mubr.f32.mxu0 0.0
      %4894 = vmatmul.mubr.f32.gmra.mrb[0].mxu0 %v4692
      %v4895 = vpop.f32.mrb[0].mxu0
      %v4896 = vadd.f32 0.0, %v4895
      %v4897 = vpop.f32.mrb[0].mxu0
      %4898 = vmatprep.mubr.f32.mxu0 0.0
      %4899 = vmatmul.mubr.f32.gmra.mrb[0].mxu0 %v4695
      %v4900 = vpop.f32.mrb[0].mxu0
      %v4901 = vadd.f32 0.0, %v4900
      %v4902 = vpop.f32.mrb[0].mxu0
      %4903 = vmatprep.mubr.f32.mxu0 0.0
      %4904 = vmatmul.mubr.f32.gmra.mrb[0].mxu0 %v4698
      %v4905 = vpop.f32.mrb[0].mxu0
      %v4906 = vadd.f32 0.0, %v4905
      %v4907 = vpop.f32.mrb[0].mxu0
      %4908 = vmatprep.mubr.f32.mxu0 0.0
      %4909 = vmatmul.mubr.f32.gmra.mrb[0].mxu0 %v4701
      %v4910 = vpop.f32.mrb[0].mxu0
      %v4911 = vadd.f32 0.0, %v4910
      %v4912 = vpop.f32.mrb[0].mxu0
      %4913 = vmatprep.mubr.f32.mxu0 0.0
      %4914 = vmatmul.mubr.f32.gmra.mrb[0].mxu0 %v4704
      %v4915 = vpop.f32.mrb[0].mxu0
      %v4916 = vadd.f32 0.0, %v4915
      %v4917 = vpop.f32.mrb[0].mxu0
      %4918 = vmatprep.mubr.f32.mxu0 0.0
      %4919 = vmatmul.mubr.f32.gmra.mrb[0].mxu0 %v4707
      %v4920 = vpop.f32.mrb[0].mxu0
      %v4921 = vadd.f32 0.0, %v4920
      %v4922 = vpop.f32.mrb[0].mxu0
      %4923 = vmatprep.mubr.f32.mxu0 0.0
      %4924 = vmatmul.mubr.f32.gmra.mrb[0].mxu0 %v4710
      %v4925 = vpop.f32.mrb[0].mxu0
      %v4926 = vadd.f32 0.0, %v4925
      %v4927 = vpop.f32.mrb[0].mxu0
      %4928 = vmatprep.mubr.f32.mxu0 0.0
      %4929 = vmatmul.mubr.f32.gmra.mrb[0].mxu0 %v4713
      %v4930 = vpop.f32.mrb[0].mxu0
      %v4931 = vadd.f32 0.0, %v4930
      %v4932 = vpop.f32.mrb[0].mxu0
      %4933 = vmatprep.mubr.f32.mxu0 0.0
      %4934 = vmatmul.mubr.f32.gmra.mrb[0].mxu0 %v4716
      %v4935 = vpop.f32.mrb[0].mxu0
      %v4936 = vadd.f32 0.0, %v4935
      %v4937 = vpop.f32.mrb[0].mxu0
      %4938 = vmatprep.mubr.f32.mxu0 0.0
      %4939 = vmatmul.mubr.f32.gmra.mrb[0].mxu0 %v4719
      %v4940 = vpop.f32.mrb[0].mxu0
      %v4941 = vadd.f32 0.0, %v4940
      %v4942 = vpop.f32.mrb[0].mxu0
      %4943 = vmatprep.mubr.f32.mxu0 0.0
      %4944 = vmatmul.mubr.f32.gmra.mrb[0].mxu0 %v4722
      %v4945 = vpop.f32.mrb[0].mxu0
      %v4946 = vadd.f32 0.0, %v4945
      %v4947 = vpop.f32.mrb[0].mxu0
      %4948 = vdwg.mxu0
      %v4949 = vadd.f32 %v4436, %v4791
      %v4950 = vadd.f32 %v4441, %v4796
      %v4951 = vadd.f32 %v4446, %v4801
      %v4952 = vadd.f32 %v4451, %v4806
      %v4953 = vadd.f32 %v4456, %v4811
      %v4954 = vadd.f32 %v4461, %v4816
      %v4955 = vadd.f32 %v4466, %v4821
      %v4956 = vadd.f32 %v4471, %v4826
      %v4957 = vadd.f32 %v4476, %v4831
      %v4958 = vadd.f32 %v4481, %v4836
      %v4959 = vadd.f32 %v4486, %v4841
      %v4960 = vadd.f32 %v4491, %v4846
      %v4961 = vadd.f32 %v4496, %v4851
      %v4962 = vadd.f32 %v4501, %v4856
      %v4963 = vadd.f32 %v4506, %v4861
      %v4964 = vadd.f32 %v4511, %v4866
      %v4965 = vadd.f32 %v4516, %v4871
      %v4966 = vadd.f32 %v4521, %v4876
      %v4967 = vadd.f32 %v4526, %v4881
      %v4968 = vadd.f32 %v4531, %v4886
      %v4969 = vadd.f32 %v4536, %v4891
      %v4970 = vadd.f32 %v4541, %v4896
      %v4971 = vadd.f32 %v4546, %v4901
      %v4972 = vadd.f32 %v4551, %v4906
      %v4973 = vadd.f32 %v4556, %v4911
      %v4974 = vadd.f32 %v4561, %v4916
      %v4975 = vadd.f32 %v4566, %v4921
      %v4976 = vadd.f32 %v4571, %v4926
      %v4977 = vadd.f32 %v4576, %v4931
      %v4978 = vadd.f32 %v4581, %v4936
      %v4979 = vadd.f32 %v4586, %v4941
      %v4980 = vadd.f32 %v4591, %v4946
      %v4981 = vld [vmem:[%s330 + $0x7] sm:$0xff]
      %v4982 = vld [vmem:[%s330 + $0xf] sm:$0xff]
      %v4983 = vld [vmem:[%s330 + $0x27] sm:$0xff]
      %v4984 = vld [vmem:[%s330 + $0x2f] sm:$0xff]
      %v4985 = vld [vmem:[%s330 + $0x47] sm:$0xff]
      %v4986 = vld [vmem:[%s330 + $0x4f] sm:$0xff]
      %v4987 = vld [vmem:[%s330 + $0x67] sm:$0xff]
      %v4988 = vld [vmem:[%s330 + $0x6f] sm:$0xff]
      %v4989 = vld [vmem:[%s330 + $0x87] sm:$0xff]
      %v4990 = vld [vmem:[%s330 + $0x8f] sm:$0xff]
      %v4991 = vld [vmem:[%s330 + $0xa7] sm:$0xff]
      %v4992 = vld [vmem:[%s330 + $0xaf] sm:$0xff]
      %v4993 = vld [vmem:[%s330 + $0xc7] sm:$0xff]
      %v4994 = vld [vmem:[%s330 + $0xcf] sm:$0xff]
      %v4995 = vld [vmem:[%s330 + $0xe7] sm:$0xff]
      %v4996 = vld [vmem:[%s330 + $0xef] sm:$0xff]
      %v4997 = vld [vmem:[%s330 + $0x107] sm:$0xff]
      %v4998 = vld [vmem:[%s330 + $0x10f] sm:$0xff]
      %v4999 = vld [vmem:[%s330 + $0x127] sm:$0xff]
      %v5000 = vld [vmem:[%s330 + $0x12f] sm:$0xff]
      %v5001 = vld [vmem:[%s330 + $0x147] sm:$0xff]
      %v5002 = vld [vmem:[%s330 + $0x14f] sm:$0xff]
      %v5003 = vld [vmem:[%s330 + $0x167] sm:$0xff]
      %v5004 = vld [vmem:[%s330 + $0x16f] sm:$0xff]
      %v5005 = vld [vmem:[%s330 + $0x187] sm:$0xff]
      %v5006 = vld [vmem:[%s330 + $0x18f] sm:$0xff]
      %v5007 = vld [vmem:[%s330 + $0x1a7] sm:$0xff]
      %v5008 = vld [vmem:[%s330 + $0x1af] sm:$0xff]
      %v5009 = vld [vmem:[%s330 + $0x1c7] sm:$0xff]
      %v5010 = vld [vmem:[%s330 + $0x1cf] sm:$0xff]
      %v5011 = vld [vmem:[%s330 + $0x1e7] sm:$0xff]
      %v5012 = vld [vmem:[%s330 + $0x1ef] sm:$0xff]
      %s5013 = scalar_lea.vmem %s3, 24
      %v5014 = vld [vmem:[%s5013] sm:$0xff]
      %v5016 = vsel %vm225, %v4981, 0
      %v5019 = vsel %vm225, %v4982, 0
      %v5022 = vsel %vm225, %v4983, 0
      %v5025 = vsel %vm225, %v4984, 0
      %v5028 = vsel %vm225, %v4985, 0
      %v5031 = vsel %vm225, %v4986, 0
      %v5034 = vsel %vm225, %v4987, 0
      %v5037 = vsel %vm225, %v4988, 0
      %v5040 = vsel %vm225, %v4989, 0
      %v5043 = vsel %vm225, %v4990, 0
      %v5046 = vsel %vm225, %v4991, 0
      %v5049 = vsel %vm225, %v4992, 0
      %v5052 = vsel %vm225, %v4993, 0
      %v5055 = vsel %vm225, %v4994, 0
      %v5058 = vsel %vm225, %v4995, 0
      %v5061 = vsel %vm225, %v4996, 0
      %v5064 = vsel %vm225, %v4997, 0
      %v5067 = vsel %vm225, %v4998, 0
      %v5070 = vsel %vm225, %v4999, 0
      %v5073 = vsel %vm225, %v5000, 0
      %v5076 = vsel %vm225, %v5001, 0
      %v5079 = vsel %vm225, %v5002, 0
      %v5082 = vsel %vm225, %v5003, 0
      %v5085 = vsel %vm225, %v5004, 0
      %v5088 = vsel %vm225, %v5005, 0
      %v5091 = vsel %vm225, %v5006, 0
      %v5094 = vsel %vm225, %v5007, 0
      %v5097 = vsel %vm225, %v5008, 0
      %v5100 = vsel %vm225, %v5009, 0
      %v5103 = vsel %vm225, %v5010, 0
      %v5106 = vsel %vm225, %v5011, 0
      %v5109 = vsel %vm225, %v5012, 0
      %5111 = vmatprep.subr.mxu0 0.0
      %5112 = vmatpush1.msra.mxu0 %v5014
      %5113 = vmatprep.subr.mxu0 0.0
      %5114 = vmatpush1.msra.mxu0 0.0
      %5115 = vmatprep.subr.mxu0 0.0
      %5116 = vmatpush1.msra.mxu0 0.0
      %5117 = vmatprep.subr.mxu0 0.0
      %5118 = vmatpush1.msra.mxu0 0.0
      %5119 = vmatprep.subr.mxu0 0.0
      %5120 = vmatpush1.msra.mxu0 0.0
      %5121 = vmatprep.subr.mxu0 0.0
      %5122 = vmatpush1.msra.mxu0 0.0
      %5123 = vmatprep.subr.mxu0 0.0
      %5124 = vmatpush1.msra.mxu0 0.0
      %5125 = vmatprep.subr.mxu0 0.0
      %5126 = vmatpush1.msra.mxu0 0.0
      %5127 = vmatprep.subr.mxu0 0.0
      %5128 = vmatpush1.msra.mxu0 0.0
      %5129 = vmatprep.subr.mxu0 0.0
      %5130 = vmatpush1.msra.mxu0 0.0
      %5131 = vmatprep.subr.mxu0 0.0
      %5132 = vmatpush1.msra.mxu0 0.0
      %5133 = vmatprep.subr.mxu0 0.0
      %5134 = vmatpush1.msra.mxu0 0.0
      %5135 = vmatprep.subr.mxu0 0.0
      %5136 = vmatpush1.msra.mxu0 0.0
      %5137 = vmatprep.subr.mxu0 0.0
      %5138 = vmatpush1.msra.mxu0 0.0
      %5139 = vmatprep.subr.mxu0 0.0
      %5140 = vmatpush1.msra.mxu0 0.0
      %5141 = vmatprep.subr.mxu0 0.0
      %5142 = vmatpush1.msra.mxu0 0.0
      %5143 = vmatprep.subr.mxu0 0.0
      %5144 = vmatpush1.msra.mxu0 0.0
      %5145 = vmatprep.subr.mxu0 0.0
      %5146 = vmatpush1.msra.mxu0 0.0
      %5147 = vmatprep.subr.mxu0 0.0
      %5148 = vmatpush1.msra.mxu0 0.0
      %5149 = vmatprep.subr.mxu0 0.0
      %5150 = vmatpush1.msra.mxu0 0.0
      %5151 = vmatprep.subr.mxu0 0.0
      %5152 = vmatpush1.msra.mxu0 0.0
      %5153 = vmatprep.subr.mxu0 0.0
      %5154 = vmatpush1.msra.mxu0 0.0
      %5155 = vmatprep.subr.mxu0 0.0
      %5156 = vmatpush1.msra.mxu0 0.0
      %5157 = vmatprep.subr.mxu0 0.0
      %5158 = vmatpush1.msra.mxu0 0.0
      %5159 = vmatprep.subr.mxu0 0.0
      %5160 = vmatpush1.msra.mxu0 0.0
      %5161 = vmatprep.subr.mxu0 0.0
      %5162 = vmatpush1.msra.mxu0 0.0
      %5163 = vmatprep.subr.mxu0 0.0
      %5164 = vmatpush1.msra.mxu0 0.0
      %5165 = vmatprep.subr.mxu0 0.0
      %5166 = vmatpush1.msra.mxu0 0.0
      %5167 = vmatprep.subr.mxu0 0.0
      %5168 = vmatpush1.msra.mxu0 0.0
      %5169 = vmatprep.subr.mxu0 0.0
      %5170 = vmatpush1.msra.mxu0 0.0
      %5171 = vmatprep.subr.mxu0 0.0
      %5172 = vmatpush1.msra.mxu0 0.0
      %5173 = vmatprep.subr.mxu0 0.0
      %5174 = vmatpush1.msra.mxu0 0.0
      %5175 = vmatprep.mubr.f32.mxu0 0.0
      %5176 = vmatmul.mubr.f32.gmra.mrb[0].mxu0 %v5016
      %v5177 = vpop.f32.mrb[0].mxu0
      %v5178 = vadd.f32 0.0, %v5177
      %v5179 = vpop.f32.mrb[0].mxu0
      %5180 = vmatprep.mubr.f32.mxu0 0.0
      %5181 = vmatmul.mubr.f32.gmra.mrb[0].mxu0 %v5019
      %v5182 = vpop.f32.mrb[0].mxu0
      %v5183 = vadd.f32 0.0, %v5182
      %v5184 = vpop.f32.mrb[0].mxu0
      %5185 = vmatprep.mubr.f32.mxu0 0.0
      %5186 = vmatmul.mubr.f32.gmra.mrb[0].mxu0 %v5022
      %v5187 = vpop.f32.mrb[0].mxu0
      %v5188 = vadd.f32 0.0, %v5187
      %v5189 = vpop.f32.mrb[0].mxu0
      %5190 = vmatprep.mubr.f32.mxu0 0.0
      %5191 = vmatmul.mubr.f32.gmra.mrb[0].mxu0 %v5025
      %v5192 = vpop.f32.mrb[0].mxu0
      %v5193 = vadd.f32 0.0, %v5192
      %v5194 = vpop.f32.mrb[0].mxu0
      %5195 = vmatprep.mubr.f32.mxu0 0.0
      %5196 = vmatmul.mubr.f32.gmra.mrb[0].mxu0 %v5028
      %v5197 = vpop.f32.mrb[0].mxu0
      %v5198 = vadd.f32 0.0, %v5197
      %v5199 = vpop.f32.mrb[0].mxu0
      %5200 = vmatprep.mubr.f32.mxu0 0.0
      %5201 = vmatmul.mubr.f32.gmra.mrb[0].mxu0 %v5031
      %v5202 = vpop.f32.mrb[0].mxu0
      %v5203 = vadd.f32 0.0, %v5202
      %v5204 = vpop.f32.mrb[0].mxu0
      %5205 = vmatprep.mubr.f32.mxu0 0.0
      %5206 = vmatmul.mubr.f32.gmra.mrb[0].mxu0 %v5034
      %v5207 = vpop.f32.mrb[0].mxu0
      %v5208 = vadd.f32 0.0, %v5207
      %v5209 = vpop.f32.mrb[0].mxu0
      %5210 = vmatprep.mubr.f32.mxu0 0.0
      %5211 = vmatmul.mubr.f32.gmra.mrb[0].mxu0 %v5037
      %v5212 = vpop.f32.mrb[0].mxu0
      %v5213 = vadd.f32 0.0, %v5212
      %v5214 = vpop.f32.mrb[0].mxu0
      %5215 = vmatprep.mubr.f32.mxu0 0.0
      %5216 = vmatmul.mubr.f32.gmra.mrb[0].mxu0 %v5040
      %v5217 = vpop.f32.mrb[0].mxu0
      %v5218 = vadd.f32 0.0, %v5217
      %v5219 = vpop.f32.mrb[0].mxu0
      %5220 = vmatprep.mubr.f32.mxu0 0.0
      %5221 = vmatmul.mubr.f32.gmra.mrb[0].mxu0 %v5043
      %v5222 = vpop.f32.mrb[0].mxu0
      %v5223 = vadd.f32 0.0, %v5222
      %v5224 = vpop.f32.mrb[0].mxu0
      %5225 = vmatprep.mubr.f32.mxu0 0.0
      %5226 = vmatmul.mubr.f32.gmra.mrb[0].mxu0 %v5046
      %v5227 = vpop.f32.mrb[0].mxu0
      %v5228 = vadd.f32 0.0, %v5227
      %v5229 = vpop.f32.mrb[0].mxu0
      %5230 = vmatprep.mubr.f32.mxu0 0.0
      %5231 = vmatmul.mubr.f32.gmra.mrb[0].mxu0 %v5049
      %v5232 = vpop.f32.mrb[0].mxu0
      %v5233 = vadd.f32 0.0, %v5232
      %v5234 = vpop.f32.mrb[0].mxu0
      %5235 = vmatprep.mubr.f32.mxu0 0.0
      %5236 = vmatmul.mubr.f32.gmra.mrb[0].mxu0 %v5052
      %v5237 = vpop.f32.mrb[0].mxu0
      %v5238 = vadd.f32 0.0, %v5237
      %v5239 = vpop.f32.mrb[0].mxu0
      %5240 = vmatprep.mubr.f32.mxu0 0.0
      %5241 = vmatmul.mubr.f32.gmra.mrb[0].mxu0 %v5055
      %v5242 = vpop.f32.mrb[0].mxu0
      %v5243 = vadd.f32 0.0, %v5242
      %v5244 = vpop.f32.mrb[0].mxu0
      %5245 = vmatprep.mubr.f32.mxu0 0.0
      %5246 = vmatmul.mubr.f32.gmra.mrb[0].mxu0 %v5058
      %v5247 = vpop.f32.mrb[0].mxu0
      %v5248 = vadd.f32 0.0, %v5247
      %v5249 = vpop.f32.mrb[0].mxu0
      %5250 = vmatprep.mubr.f32.mxu0 0.0
      %5251 = vmatmul.mubr.f32.gmra.mrb[0].mxu0 %v5061
      %v5252 = vpop.f32.mrb[0].mxu0
      %v5253 = vadd.f32 0.0, %v5252
      %v5254 = vpop.f32.mrb[0].mxu0
      %5255 = vmatprep.mubr.f32.mxu0 0.0
      %5256 = vmatmul.mubr.f32.gmra.mrb[0].mxu0 %v5064
      %v5257 = vpop.f32.mrb[0].mxu0
      %v5258 = vadd.f32 0.0, %v5257
      %v5259 = vpop.f32.mrb[0].mxu0
      %5260 = vmatprep.mubr.f32.mxu0 0.0
      %5261 = vmatmul.mubr.f32.gmra.mrb[0].mxu0 %v5067
      %v5262 = vpop.f32.mrb[0].mxu0
      %v5263 = vadd.f32 0.0, %v5262
      %v5264 = vpop.f32.mrb[0].mxu0
      %5265 = vmatprep.mubr.f32.mxu0 0.0
      %5266 = vmatmul.mubr.f32.gmra.mrb[0].mxu0 %v5070
      %v5267 = vpop.f32.mrb[0].mxu0
      %v5268 = vadd.f32 0.0, %v5267
      %v5269 = vpop.f32.mrb[0].mxu0
      %5270 = vmatprep.mubr.f32.mxu0 0.0
      %5271 = vmatmul.mubr.f32.gmra.mrb[0].mxu0 %v5073
      %v5272 = vpop.f32.mrb[0].mxu0
      %v5273 = vadd.f32 0.0, %v5272
      %v5274 = vpop.f32.mrb[0].mxu0
      %5275 = vmatprep.mubr.f32.mxu0 0.0
      %5276 = vmatmul.mubr.f32.gmra.mrb[0].mxu0 %v5076
      %v5277 = vpop.f32.mrb[0].mxu0
      %v5278 = vadd.f32 0.0, %v5277
      %v5279 = vpop.f32.mrb[0].mxu0
      %5280 = vmatprep.mubr.f32.mxu0 0.0
      %5281 = vmatmul.mubr.f32.gmra.mrb[0].mxu0 %v5079
      %v5282 = vpop.f32.mrb[0].mxu0
      %v5283 = vadd.f32 0.0, %v5282
      %v5284 = vpop.f32.mrb[0].mxu0
      %5285 = vmatprep.mubr.f32.mxu0 0.0
      %5286 = vmatmul.mubr.f32.gmra.mrb[0].mxu0 %v5082
      %v5287 = vpop.f32.mrb[0].mxu0
      %v5288 = vadd.f32 0.0, %v5287
      %v5289 = vpop.f32.mrb[0].mxu0
      %5290 = vmatprep.mubr.f32.mxu0 0.0
      %5291 = vmatmul.mubr.f32.gmra.mrb[0].mxu0 %v5085
      %v5292 = vpop.f32.mrb[0].mxu0
      %v5293 = vadd.f32 0.0, %v5292
      %v5294 = vpop.f32.mrb[0].mxu0
      %5295 = vmatprep.mubr.f32.mxu0 0.0
      %5296 = vmatmul.mubr.f32.gmra.mrb[0].mxu0 %v5088
      %v5297 = vpop.f32.mrb[0].mxu0
      %v5298 = vadd.f32 0.0, %v5297
      %v5299 = vpop.f32.mrb[0].mxu0
      %5300 = vmatprep.mubr.f32.mxu0 0.0
      %5301 = vmatmul.mubr.f32.gmra.mrb[0].mxu0 %v5091
      %v5302 = vpop.f32.mrb[0].mxu0
      %v5303 = vadd.f32 0.0, %v5302
      %v5304 = vpop.f32.mrb[0].mxu0
      %5305 = vmatprep.mubr.f32.mxu0 0.0
      %5306 = vmatmul.mubr.f32.gmra.mrb[0].mxu0 %v5094
      %v5307 = vpop.f32.mrb[0].mxu0
      %v5308 = vadd.f32 0.0, %v5307
      %v5309 = vpop.f32.mrb[0].mxu0
      %5310 = vmatprep.mubr.f32.mxu0 0.0
      %5311 = vmatmul.mubr.f32.gmra.mrb[0].mxu0 %v5097
      %v5312 = vpop.f32.mrb[0].mxu0
      %v5313 = vadd.f32 0.0, %v5312
      %v5314 = vpop.f32.mrb[0].mxu0
      %5315 = vmatprep.mubr.f32.mxu0 0.0
      %5316 = vmatmul.mubr.f32.gmra.mrb[0].mxu0 %v5100
      %v5317 = vpop.f32.mrb[0].mxu0
      %v5318 = vadd.f32 0.0, %v5317
      %v5319 = vpop.f32.mrb[0].mxu0
      %5320 = vmatprep.mubr.f32.mxu0 0.0
      %5321 = vmatmul.mubr.f32.gmra.mrb[0].mxu0 %v5103
      %v5322 = vpop.f32.mrb[0].mxu0
      %v5323 = vadd.f32 0.0, %v5322
      %v5324 = vpop.f32.mrb[0].mxu0
      %5325 = vmatprep.mubr.f32.mxu0 0.0
      %5326 = vmatmul.mubr.f32.gmra.mrb[0].mxu0 %v5106
      %v5327 = vpop.f32.mrb[0].mxu0
      %v5328 = vadd.f32 0.0, %v5327
      %v5329 = vpop.f32.mrb[0].mxu0
      %5330 = vmatprep.mubr.f32.mxu0 0.0
      %5331 = vmatmul.mubr.f32.gmra.mrb[0].mxu0 %v5109
      %v5332 = vpop.f32.mrb[0].mxu0
      %v5333 = vadd.f32 0.0, %v5332
      %v5334 = vpop.f32.mrb[0].mxu0
      %5335 = vdwg.mxu0
      %v5336 = vadd.f32 %v4949, %v5178
      %v5337 = vadd.f32 %v4950, %v5183
      %v5338 = vadd.f32 %v4951, %v5188
      %v5339 = vadd.f32 %v4952, %v5193
      %v5340 = vadd.f32 %v4953, %v5198
      %v5341 = vadd.f32 %v4954, %v5203
      %v5342 = vadd.f32 %v4955, %v5208
      %v5343 = vadd.f32 %v4956, %v5213
      %v5344 = vadd.f32 %v4957, %v5218
      %v5345 = vadd.f32 %v4958, %v5223
      %v5346 = vadd.f32 %v4959, %v5228
      %v5347 = vadd.f32 %v4960, %v5233
      %v5348 = vadd.f32 %v4961, %v5238
      %v5349 = vadd.f32 %v4962, %v5243
      %v5350 = vadd.f32 %v4963, %v5248
      %v5351 = vadd.f32 %v4964, %v5253
      %v5352 = vadd.f32 %v4965, %v5258
      %v5353 = vadd.f32 %v4966, %v5263
      %v5354 = vadd.f32 %v4967, %v5268
      %v5355 = vadd.f32 %v4968, %v5273
      %v5356 = vadd.f32 %v4969, %v5278
      %v5357 = vadd.f32 %v4970, %v5283
      %v5358 = vadd.f32 %v4971, %v5288
      %v5359 = vadd.f32 %v4972, %v5293
      %v5360 = vadd.f32 %v4973, %v5298
      %v5361 = vadd.f32 %v4974, %v5303
      %v5362 = vadd.f32 %v4975, %v5308
      %v5363 = vadd.f32 %v4976, %v5313
      %v5364 = vadd.f32 %v4977, %v5318
      %v5365 = vadd.f32 %v4978, %v5323
      %v5366 = vadd.f32 %v4979, %v5328
      %v5367 = vadd.f32 %v4980, %v5333
      %v5368 = vld [vmem:[%s330 + $0x8] sm:$0xff]
      %v5369 = vld [vmem:[%s330 + $0x10] sm:$0xff]
      %v5370 = vld [vmem:[%s330 + $0x28] sm:$0xff]
      %v5371 = vld [vmem:[%s330 + $0x30] sm:$0xff]
      %v5372 = vld [vmem:[%s330 + $0x48] sm:$0xff]
      %v5373 = vld [vmem:[%s330 + $0x50] sm:$0xff]
      %v5374 = vld [vmem:[%s330 + $0x68] sm:$0xff]
      %v5375 = vld [vmem:[%s330 + $0x70] sm:$0xff]
      %v5376 = vld [vmem:[%s330 + $0x88] sm:$0xff]
      %v5377 = vld [vmem:[%s330 + $0x90] sm:$0xff]
      %v5378 = vld [vmem:[%s330 + $0xa8] sm:$0xff]
      %v5379 = vld [vmem:[%s330 + $0xb0] sm:$0xff]
      %v5380 = vld [vmem:[%s330 + $0xc8] sm:$0xff]
      %v5381 = vld [vmem:[%s330 + $0xd0] sm:$0xff]
      %v5382 = vld [vmem:[%s330 + $0xe8] sm:$0xff]
      %v5383 = vld [vmem:[%s330 + $0xf0] sm:$0xff]
      %v5384 = vld [vmem:[%s330 + $0x108] sm:$0xff]
      %v5385 = vld [vmem:[%s330 + $0x110] sm:$0xff]
      %v5386 = vld [vmem:[%s330 + $0x128] sm:$0xff]
      %v5387 = vld [vmem:[%s330 + $0x130] sm:$0xff]
      %v5388 = vld [vmem:[%s330 + $0x148] sm:$0xff]
      %v5389 = vld [vmem:[%s330 + $0x150] sm:$0xff]
      %v5390 = vld [vmem:[%s330 + $0x168] sm:$0xff]
      %v5391 = vld [vmem:[%s330 + $0x170] sm:$0xff]
      %v5392 = vld [vmem:[%s330 + $0x188] sm:$0xff]
      %v5393 = vld [vmem:[%s330 + $0x190] sm:$0xff]
      %v5394 = vld [vmem:[%s330 + $0x1a8] sm:$0xff]
      %v5395 = vld [vmem:[%s330 + $0x1b0] sm:$0xff]
      %v5396 = vld [vmem:[%s330 + $0x1c8] sm:$0xff]
      %v5397 = vld [vmem:[%s330 + $0x1d0] sm:$0xff]
      %v5398 = vld [vmem:[%s330 + $0x1e8] sm:$0xff]
      %v5399 = vld [vmem:[%s330 + $0x1f0] sm:$0xff]
      %s5400 = scalar_lea.vmem %s3, 32
      %v5401 = vld [vmem:[%s5400] sm:$0xff]
      %v5403 = vsel %vm225, %v5368, 0
      %v5406 = vsel %vm225, %v5369, 0
      %v5409 = vsel %vm225, %v5370, 0
      %v5412 = vsel %vm225, %v5371, 0
      %v5415 = vsel %vm225, %v5372, 0
      %v5418 = vsel %vm225, %v5373, 0
      %v5421 = vsel %vm225, %v5374, 0
      %v5424 = vsel %vm225, %v5375, 0
      %v5427 = vsel %vm225, %v5376, 0
      %v5430 = vsel %vm225, %v5377, 0
      %v5433 = vsel %vm225, %v5378, 0
      %v5436 = vsel %vm225, %v5379, 0
      %v5439 = vsel %vm225, %v5380, 0
      %v5442 = vsel %vm225, %v5381, 0
      %v5445 = vsel %vm225, %v5382, 0
      %v5448 = vsel %vm225, %v5383, 0
      %v5451 = vsel %vm225, %v5384, 0
      %v5454 = vsel %vm225, %v5385, 0
      %v5457 = vsel %vm225, %v5386, 0
      %v5460 = vsel %vm225, %v5387, 0
      %v5463 = vsel %vm225, %v5388, 0
      %v5466 = vsel %vm225, %v5389, 0
      %v5469 = vsel %vm225, %v5390, 0
      %v5472 = vsel %vm225, %v5391, 0
      %v5475 = vsel %vm225, %v5392, 0
      %v5478 = vsel %vm225, %v5393, 0
      %v5481 = vsel %vm225, %v5394, 0
      %v5484 = vsel %vm225, %v5395, 0
      %v5487 = vsel %vm225, %v5396, 0
      %v5490 = vsel %vm225, %v5397, 0
      %v5493 = vsel %vm225, %v5398, 0
      %v5496 = vsel %vm225, %v5399, 0
      %5498 = vmatprep.subr.mxu0 0.0
      %5499 = vmatpush1.msra.mxu0 %v5401
      %5500 = vmatprep.subr.mxu0 0.0
      %5501 = vmatpush1.msra.mxu0 0.0
      %5502 = vmatprep.subr.mxu0 0.0
      %5503 = vmatpush1.msra.mxu0 0.0
      %5504 = vmatprep.subr.mxu0 0.0
      %5505 = vmatpush1.msra.mxu0 0.0
      %5506 = vmatprep.subr.mxu0 0.0
      %5507 = vmatpush1.msra.mxu0 0.0
      %5508 = vmatprep.subr.mxu0 0.0
      %5509 = vmatpush1.msra.mxu0 0.0
      %5510 = vmatprep.subr.mxu0 0.0
      %5511 = vmatpush1.msra.mxu0 0.0
      %5512 = vmatprep.subr.mxu0 0.0
      %5513 = vmatpush1.msra.mxu0 0.0
      %5514 = vmatprep.subr.mxu0 0.0
      %5515 = vmatpush1.msra.mxu0 0.0
      %5516 = vmatprep.subr.mxu0 0.0
      %5517 = vmatpush1.msra.mxu0 0.0
      %5518 = vmatprep.subr.mxu0 0.0
      %5519 = vmatpush1.msra.mxu0 0.0
      %5520 = vmatprep.subr.mxu0 0.0
      %5521 = vmatpush1.msra.mxu0 0.0
      %5522 = vmatprep.subr.mxu0 0.0
      %5523 = vmatpush1.msra.mxu0 0.0
      %5524 = vmatprep.subr.mxu0 0.0
      %5525 = vmatpush1.msra.mxu0 0.0
      %5526 = vmatprep.subr.mxu0 0.0
      %5527 = vmatpush1.msra.mxu0 0.0
      %5528 = vmatprep.subr.mxu0 0.0
      %5529 = vmatpush1.msra.mxu0 0.0
      %5530 = vmatprep.subr.mxu0 0.0
      %5531 = vmatpush1.msra.mxu0 0.0
      %5532 = vmatprep.subr.mxu0 0.0
      %5533 = vmatpush1.msra.mxu0 0.0
      %5534 = vmatprep.subr.mxu0 0.0
      %5535 = vmatpush1.msra.mxu0 0.0
      %5536 = vmatprep.subr.mxu0 0.0
      %5537 = vmatpush1.msra.mxu0 0.0
      %5538 = vmatprep.subr.mxu0 0.0
      %5539 = vmatpush1.msra.mxu0 0.0
      %5540 = vmatprep.subr.mxu0 0.0
      %5541 = vmatpush1.msra.mxu0 0.0
      %5542 = vmatprep.subr.mxu0 0.0
      %5543 = vmatpush1.msra.mxu0 0.0
      %5544 = vmatprep.subr.mxu0 0.0
      %5545 = vmatpush1.msra.mxu0 0.0
      %5546 = vmatprep.subr.mxu0 0.0
      %5547 = vmatpush1.msra.mxu0 0.0
      %5548 = vmatprep.subr.mxu0 0.0
      %5549 = vmatpush1.msra.mxu0 0.0
      %5550 = vmatprep.subr.mxu0 0.0
      %5551 = vmatpush1.msra.mxu0 0.0
      %5552 = vmatprep.subr.mxu0 0.0
      %5553 = vmatpush1.msra.mxu0 0.0
      %5554 = vmatprep.subr.mxu0 0.0
      %5555 = vmatpush1.msra.mxu0 0.0
      %5556 = vmatprep.subr.mxu0 0.0
      %5557 = vmatpush1.msra.mxu0 0.0
      %5558 = vmatprep.subr.mxu0 0.0
      %5559 = vmatpush1.msra.mxu0 0.0
      %5560 = vmatprep.subr.mxu0 0.0
      %5561 = vmatpush1.msra.mxu0 0.0
      %5562 = vmatprep.mubr.f32.mxu0 0.0
      %5563 = vmatmul.mubr.f32.gmra.mrb[0].mxu0 %v5403
      %v5564 = vpop.f32.mrb[0].mxu0
      %v5565 = vadd.f32 0.0, %v5564
      %v5566 = vpop.f32.mrb[0].mxu0
      %5567 = vmatprep.mubr.f32.mxu0 0.0
      %5568 = vmatmul.mubr.f32.gmra.mrb[0].mxu0 %v5406
      %v5569 = vpop.f32.mrb[0].mxu0
      %v5570 = vadd.f32 0.0, %v5569
      %v5571 = vpop.f32.mrb[0].mxu0
      %5572 = vmatprep.mubr.f32.mxu0 0.0
      %5573 = vmatmul.mubr.f32.gmra.mrb[0].mxu0 %v5409
      %v5574 = vpop.f32.mrb[0].mxu0
      %v5575 = vadd.f32 0.0, %v5574
      %v5576 = vpop.f32.mrb[0].mxu0
      %5577 = vmatprep.mubr.f32.mxu0 0.0
      %5578 = vmatmul.mubr.f32.gmra.mrb[0].mxu0 %v5412
      %v5579 = vpop.f32.mrb[0].mxu0
      %v5580 = vadd.f32 0.0, %v5579
      %v5581 = vpop.f32.mrb[0].mxu0
      %5582 = vmatprep.mubr.f32.mxu0 0.0
      %5583 = vmatmul.mubr.f32.gmra.mrb[0].mxu0 %v5415
      %v5584 = vpop.f32.mrb[0].mxu0
      %v5585 = vadd.f32 0.0, %v5584
      %v5586 = vpop.f32.mrb[0].mxu0
      %5587 = vmatprep.mubr.f32.mxu0 0.0
      %5588 = vmatmul.mubr.f32.gmra.mrb[0].mxu0 %v5418
      %v5589 = vpop.f32.mrb[0].mxu0
      %v5590 = vadd.f32 0.0, %v5589
      %v5591 = vpop.f32.mrb[0].mxu0
      %5592 = vmatprep.mubr.f32.mxu0 0.0
      %5593 = vmatmul.mubr.f32.gmra.mrb[0].mxu0 %v5421
      %v5594 = vpop.f32.mrb[0].mxu0
      %v5595 = vadd.f32 0.0, %v5594
      %v5596 = vpop.f32.mrb[0].mxu0
      %5597 = vmatprep.mubr.f32.mxu0 0.0
      %5598 = vmatmul.mubr.f32.gmra.mrb[0].mxu0 %v5424
      %v5599 = vpop.f32.mrb[0].mxu0
      %v5600 = vadd.f32 0.0, %v5599
      %v5601 = vpop.f32.mrb[0].mxu0
      %5602 = vmatprep.mubr.f32.mxu0 0.0
      %5603 = vmatmul.mubr.f32.gmra.mrb[0].mxu0 %v5427
      %v5604 = vpop.f32.mrb[0].mxu0
      %v5605 = vadd.f32 0.0, %v5604
      %v5606 = vpop.f32.mrb[0].mxu0
      %5607 = vmatprep.mubr.f32.mxu0 0.0
      %5608 = vmatmul.mubr.f32.gmra.mrb[0].mxu0 %v5430
      %v5609 = vpop.f32.mrb[0].mxu0
      %v5610 = vadd.f32 0.0, %v5609
      %v5611 = vpop.f32.mrb[0].mxu0
      %5612 = vmatprep.mubr.f32.mxu0 0.0
      %5613 = vmatmul.mubr.f32.gmra.mrb[0].mxu0 %v5433
      %v5614 = vpop.f32.mrb[0].mxu0
      %v5615 = vadd.f32 0.0, %v5614
      %v5616 = vpop.f32.mrb[0].mxu0
      %5617 = vmatprep.mubr.f32.mxu0 0.0
      %5618 = vmatmul.mubr.f32.gmra.mrb[0].mxu0 %v5436
      %v5619 = vpop.f32.mrb[0].mxu0
      %v5620 = vadd.f32 0.0, %v5619
      %v5621 = vpop.f32.mrb[0].mxu0
      %5622 = vmatprep.mubr.f32.mxu0 0.0
      %5623 = vmatmul.mubr.f32.gmra.mrb[0].mxu0 %v5439
      %v5624 = vpop.f32.mrb[0].mxu0
      %v5625 = vadd.f32 0.0, %v5624
      %v5626 = vpop.f32.mrb[0].mxu0
      %5627 = vmatprep.mubr.f32.mxu0 0.0
      %5628 = vmatmul.mubr.f32.gmra.mrb[0].mxu0 %v5442
      %v5629 = vpop.f32.mrb[0].mxu0
      %v5630 = vadd.f32 0.0, %v5629
      %v5631 = vpop.f32.mrb[0].mxu0
      %5632 = vmatprep.mubr.f32.mxu0 0.0
      %5633 = vmatmul.mubr.f32.gmra.mrb[0].mxu0 %v5445
      %v5634 = vpop.f32.mrb[0].mxu0
      %v5635 = vadd.f32 0.0, %v5634
      %v5636 = vpop.f32.mrb[0].mxu0
      %5637 = vmatprep.mubr.f32.mxu0 0.0
      %5638 = vmatmul.mubr.f32.gmra.mrb[0].mxu0 %v5448
      %v5639 = vpop.f32.mrb[0].mxu0
      %v5640 = vadd.f32 0.0, %v5639
      %v5641 = vpop.f32.mrb[0].mxu0
      %5642 = vmatprep.mubr.f32.mxu0 0.0
      %5643 = vmatmul.mubr.f32.gmra.mrb[0].mxu0 %v5451
      %v5644 = vpop.f32.mrb[0].mxu0
      %v5645 = vadd.f32 0.0, %v5644
      %v5646 = vpop.f32.mrb[0].mxu0
      %5647 = vmatprep.mubr.f32.mxu0 0.0
      %5648 = vmatmul.mubr.f32.gmra.mrb[0].mxu0 %v5454
      %v5649 = vpop.f32.mrb[0].mxu0
      %v5650 = vadd.f32 0.0, %v5649
      %v5651 = vpop.f32.mrb[0].mxu0
      %5652 = vmatprep.mubr.f32.mxu0 0.0
      %5653 = vmatmul.mubr.f32.gmra.mrb[0].mxu0 %v5457
      %v5654 = vpop.f32.mrb[0].mxu0
      %v5655 = vadd.f32 0.0, %v5654
      %v5656 = vpop.f32.mrb[0].mxu0
      %5657 = vmatprep.mubr.f32.mxu0 0.0
      %5658 = vmatmul.mubr.f32.gmra.mrb[0].mxu0 %v5460
      %v5659 = vpop.f32.mrb[0].mxu0
      %v5660 = vadd.f32 0.0, %v5659
      %v5661 = vpop.f32.mrb[0].mxu0
      %5662 = vmatprep.mubr.f32.mxu0 0.0
      %5663 = vmatmul.mubr.f32.gmra.mrb[0].mxu0 %v5463
      %v5664 = vpop.f32.mrb[0].mxu0
      %v5665 = vadd.f32 0.0, %v5664
      %v5666 = vpop.f32.mrb[0].mxu0
      %5667 = vmatprep.mubr.f32.mxu0 0.0
      %5668 = vmatmul.mubr.f32.gmra.mrb[0].mxu0 %v5466
      %v5669 = vpop.f32.mrb[0].mxu0
      %v5670 = vadd.f32 0.0, %v5669
      %v5671 = vpop.f32.mrb[0].mxu0
      %5672 = vmatprep.mubr.f32.mxu0 0.0
      %5673 = vmatmul.mubr.f32.gmra.mrb[0].mxu0 %v5469
      %v5674 = vpop.f32.mrb[0].mxu0
      %v5675 = vadd.f32 0.0, %v5674
      %v5676 = vpop.f32.mrb[0].mxu0
      %5677 = vmatprep.mubr.f32.mxu0 0.0
      %5678 = vmatmul.mubr.f32.gmra.mrb[0].mxu0 %v5472
      %v5679 = vpop.f32.mrb[0].mxu0
      %v5680 = vadd.f32 0.0, %v5679
      %v5681 = vpop.f32.mrb[0].mxu0
      %5682 = vmatprep.mubr.f32.mxu0 0.0
      %5683 = vmatmul.mubr.f32.gmra.mrb[0].mxu0 %v5475
      %v5684 = vpop.f32.mrb[0].mxu0
      %v5685 = vadd.f32 0.0, %v5684
      %v5686 = vpop.f32.mrb[0].mxu0
      %5687 = vmatprep.mubr.f32.mxu0 0.0
      %5688 = vmatmul.mubr.f32.gmra.mrb[0].mxu0 %v5478
      %v5689 = vpop.f32.mrb[0].mxu0
      %v5690 = vadd.f32 0.0, %v5689
      %v5691 = vpop.f32.mrb[0].mxu0
      %5692 = vmatprep.mubr.f32.mxu0 0.0
      %5693 = vmatmul.mubr.f32.gmra.mrb[0].mxu0 %v5481
      %v5694 = vpop.f32.mrb[0].mxu0
      %v5695 = vadd.f32 0.0, %v5694
      %v5696 = vpop.f32.mrb[0].mxu0
      %5697 = vmatprep.mubr.f32.mxu0 0.0
      %5698 = vmatmul.mubr.f32.gmra.mrb[0].mxu0 %v5484
      %v5699 = vpop.f32.mrb[0].mxu0
      %v5700 = vadd.f32 0.0, %v5699
      %v5701 = vpop.f32.mrb[0].mxu0
      %5702 = vmatprep.mubr.f32.mxu0 0.0
      %5703 = vmatmul.mubr.f32.gmra.mrb[0].mxu0 %v5487
      %v5704 = vpop.f32.mrb[0].mxu0
      %v5705 = vadd.f32 0.0, %v5704
      %v5706 = vpop.f32.mrb[0].mxu0
      %5707 = vmatprep.mubr.f32.mxu0 0.0
      %5708 = vmatmul.mubr.f32.gmra.mrb[0].mxu0 %v5490
      %v5709 = vpop.f32.mrb[0].mxu0
      %v5710 = vadd.f32 0.0, %v5709
      %v5711 = vpop.f32.mrb[0].mxu0
      %5712 = vmatprep.mubr.f32.mxu0 0.0
      %5713 = vmatmul.mubr.f32.gmra.mrb[0].mxu0 %v5493
      %v5714 = vpop.f32.mrb[0].mxu0
      %v5715 = vadd.f32 0.0, %v5714
      %v5716 = vpop.f32.mrb[0].mxu0
      %5717 = vmatprep.mubr.f32.mxu0 0.0
      %5718 = vmatmul.mubr.f32.gmra.mrb[0].mxu0 %v5496
      %v5719 = vpop.f32.mrb[0].mxu0
      %v5720 = vadd.f32 0.0, %v5719
      %v5721 = vpop.f32.mrb[0].mxu0
      %5722 = vdwg.mxu0
      %v5723 = vadd.f32 %v5336, %v5565
      %v5724 = vadd.f32 %v5337, %v5570
      %v5725 = vadd.f32 %v5338, %v5575
      %v5726 = vadd.f32 %v5339, %v5580
      %v5727 = vadd.f32 %v5340, %v5585
      %v5728 = vadd.f32 %v5341, %v5590
      %v5729 = vadd.f32 %v5342, %v5595
      %v5730 = vadd.f32 %v5343, %v5600
      %v5731 = vadd.f32 %v5344, %v5605
      %v5732 = vadd.f32 %v5345, %v5610
      %v5733 = vadd.f32 %v5346, %v5615
      %v5734 = vadd.f32 %v5347, %v5620
      %v5735 = vadd.f32 %v5348, %v5625
      %v5736 = vadd.f32 %v5349, %v5630
      %v5737 = vadd.f32 %v5350, %v5635
      %v5738 = vadd.f32 %v5351, %v5640
      %v5739 = vadd.f32 %v5352, %v5645
      %v5740 = vadd.f32 %v5353, %v5650
      %v5741 = vadd.f32 %v5354, %v5655
      %v5742 = vadd.f32 %v5355, %v5660
      %v5743 = vadd.f32 %v5356, %v5665
      %v5744 = vadd.f32 %v5357, %v5670
      %v5745 = vadd.f32 %v5358, %v5675
      %v5746 = vadd.f32 %v5359, %v5680
      %v5747 = vadd.f32 %v5360, %v5685
      %v5748 = vadd.f32 %v5361, %v5690
      %v5749 = vadd.f32 %v5362, %v5695
      %v5750 = vadd.f32 %v5363, %v5700
      %v5751 = vadd.f32 %v5364, %v5705
      %v5752 = vadd.f32 %v5365, %v5710
      %v5753 = vadd.f32 %v5366, %v5715
      %v5754 = vadd.f32 %v5367, %v5720
      %v5755 = vld [vmem:[%s330 + $0x9] sm:$0xff]
      %v5756 = vld [vmem:[%s330 + $0x11] sm:$0xff]
      %v5757 = vld [vmem:[%s330 + $0x29] sm:$0xff]
      %v5758 = vld [vmem:[%s330 + $0x31] sm:$0xff]
      %v5759 = vld [vmem:[%s330 + $0x49] sm:$0xff]
      %v5760 = vld [vmem:[%s330 + $0x51] sm:$0xff]
      %v5761 = vld [vmem:[%s330 + $0x69] sm:$0xff]
      %v5762 = vld [vmem:[%s330 + $0x71] sm:$0xff]
      %v5763 = vld [vmem:[%s330 + $0x89] sm:$0xff]
      %v5764 = vld [vmem:[%s330 + $0x91] sm:$0xff]
      %v5765 = vld [vmem:[%s330 + $0xa9] sm:$0xff]
      %v5766 = vld [vmem:[%s330 + $0xb1] sm:$0xff]
      %v5767 = vld [vmem:[%s330 + $0xc9] sm:$0xff]
      %v5768 = vld [vmem:[%s330 + $0xd1] sm:$0xff]
      %v5769 = vld [vmem:[%s330 + $0xe9] sm:$0xff]
      %v5770 = vld [vmem:[%s330 + $0xf1] sm:$0xff]
      %v5771 = vld [vmem:[%s330 + $0x109] sm:$0xff]
      %v5772 = vld [vmem:[%s330 + $0x111] sm:$0xff]
      %v5773 = vld [vmem:[%s330 + $0x129] sm:$0xff]
      %v5774 = vld [vmem:[%s330 + $0x131] sm:$0xff]
      %v5775 = vld [vmem:[%s330 + $0x149] sm:$0xff]
      %v5776 = vld [vmem:[%s330 + $0x151] sm:$0xff]
      %v5777 = vld [vmem:[%s330 + $0x169] sm:$0xff]
      %v5778 = vld [vmem:[%s330 + $0x171] sm:$0xff]
      %v5779 = vld [vmem:[%s330 + $0x189] sm:$0xff]
      %v5780 = vld [vmem:[%s330 + $0x191] sm:$0xff]
      %v5781 = vld [vmem:[%s330 + $0x1a9] sm:$0xff]
      %v5782 = vld [vmem:[%s330 + $0x1b1] sm:$0xff]
      %v5783 = vld [vmem:[%s330 + $0x1c9] sm:$0xff]
      %v5784 = vld [vmem:[%s330 + $0x1d1] sm:$0xff]
      %v5785 = vld [vmem:[%s330 + $0x1e9] sm:$0xff]
      %v5786 = vld [vmem:[%s330 + $0x1f1] sm:$0xff]
      %s5787 = scalar_lea.vmem %s3, 40
      %v5788 = vld [vmem:[%s5787] sm:$0xff]
      %v5790 = vsel %vm225, %v5755, 0
      %v5793 = vsel %vm225, %v5756, 0
      %v5796 = vsel %vm225, %v5757, 0
      %v5799 = vsel %vm225, %v5758, 0
      %v5802 = vsel %vm225, %v5759, 0
      %v5805 = vsel %vm225, %v5760, 0
      %v5808 = vsel %vm225, %v5761, 0
      %v5811 = vsel %vm225, %v5762, 0
      %v5814 = vsel %vm225, %v5763, 0
      %v5817 = vsel %vm225, %v5764, 0
      %v5820 = vsel %vm225, %v5765, 0
      %v5823 = vsel %vm225, %v5766, 0
      %v5826 = vsel %vm225, %v5767, 0
      %v5829 = vsel %vm225, %v5768, 0
      %v5832 = vsel %vm225, %v5769, 0
      %v5835 = vsel %vm225, %v5770, 0
      %v5838 = vsel %vm225, %v5771, 0
      %v5841 = vsel %vm225, %v5772, 0
      %v5844 = vsel %vm225, %v5773, 0
      %v5847 = vsel %vm225, %v5774, 0
      %v5850 = vsel %vm225, %v5775, 0
      %v5853 = vsel %vm225, %v5776, 0
      %v5856 = vsel %vm225, %v5777, 0
      %v5859 = vsel %vm225, %v5778, 0
      %v5862 = vsel %vm225, %v5779, 0
      %v5865 = vsel %vm225, %v5780, 0
      %v5868 = vsel %vm225, %v5781, 0
      %v5871 = vsel %vm225, %v5782, 0
      %v5874 = vsel %vm225, %v5783, 0
      %v5877 = vsel %vm225, %v5784, 0
      %v5880 = vsel %vm225, %v5785, 0
      %v5883 = vsel %vm225, %v5786, 0
      %5885 = vmatprep.subr.mxu0 0.0
      %5886 = vmatpush1.msra.mxu0 %v5788
      %5887 = vmatprep.subr.mxu0 0.0
      %5888 = vmatpush1.msra.mxu0 0.0
      %5889 = vmatprep.subr.mxu0 0.0
      %5890 = vmatpush1.msra.mxu0 0.0
      %5891 = vmatprep.subr.mxu0 0.0
      %5892 = vmatpush1.msra.mxu0 0.0
      %5893 = vmatprep.subr.mxu0 0.0
      %5894 = vmatpush1.msra.mxu0 0.0
      %5895 = vmatprep.subr.mxu0 0.0
      %5896 = vmatpush1.msra.mxu0 0.0
      %5897 = vmatprep.subr.mxu0 0.0
      %5898 = vmatpush1.msra.mxu0 0.0
      %5899 = vmatprep.subr.mxu0 0.0
      %5900 = vmatpush1.msra.mxu0 0.0
      %5901 = vmatprep.subr.mxu0 0.0
      %5902 = vmatpush1.msra.mxu0 0.0
      %5903 = vmatprep.subr.mxu0 0.0
      %5904 = vmatpush1.msra.mxu0 0.0
      %5905 = vmatprep.subr.mxu0 0.0
      %5906 = vmatpush1.msra.mxu0 0.0
      %5907 = vmatprep.subr.mxu0 0.0
      %5908 = vmatpush1.msra.mxu0 0.0
      %5909 = vmatprep.subr.mxu0 0.0
      %5910 = vmatpush1.msra.mxu0 0.0
      %5911 = vmatprep.subr.mxu0 0.0
      %5912 = vmatpush1.msra.mxu0 0.0
      %5913 = vmatprep.subr.mxu0 0.0
      %5914 = vmatpush1.msra.mxu0 0.0
      %5915 = vmatprep.subr.mxu0 0.0
      %5916 = vmatpush1.msra.mxu0 0.0
      %5917 = vmatprep.subr.mxu0 0.0
      %5918 = vmatpush1.msra.mxu0 0.0
      %5919 = vmatprep.subr.mxu0 0.0
      %5920 = vmatpush1.msra.mxu0 0.0
      %5921 = vmatprep.subr.mxu0 0.0
      %5922 = vmatpush1.msra.mxu0 0.0
      %5923 = vmatprep.subr.mxu0 0.0
      %5924 = vmatpush1.msra.mxu0 0.0
      %5925 = vmatprep.subr.mxu0 0.0
      %5926 = vmatpush1.msra.mxu0 0.0
      %5927 = vmatprep.subr.mxu0 0.0
      %5928 = vmatpush1.msra.mxu0 0.0
      %5929 = vmatprep.subr.mxu0 0.0
      %5930 = vmatpush1.msra.mxu0 0.0
      %5931 = vmatprep.subr.mxu0 0.0
      %5932 = vmatpush1.msra.mxu0 0.0
      %5933 = vmatprep.subr.mxu0 0.0
      %5934 = vmatpush1.msra.mxu0 0.0
      %5935 = vmatprep.subr.mxu0 0.0
      %5936 = vmatpush1.msra.mxu0 0.0
      %5937 = vmatprep.subr.mxu0 0.0
      %5938 = vmatpush1.msra.mxu0 0.0
      %5939 = vmatprep.subr.mxu0 0.0
      %5940 = vmatpush1.msra.mxu0 0.0
      %5941 = vmatprep.subr.mxu0 0.0
      %5942 = vmatpush1.msra.mxu0 0.0
      %5943 = vmatprep.subr.mxu0 0.0
      %5944 = vmatpush1.msra.mxu0 0.0
      %5945 = vmatprep.subr.mxu0 0.0
      %5946 = vmatpush1.msra.mxu0 0.0
      %5947 = vmatprep.subr.mxu0 0.0
      %5948 = vmatpush1.msra.mxu0 0.0
      %5949 = vmatprep.mubr.f32.mxu0 0.0
      %5950 = vmatmul.mubr.f32.gmra.mrb[0].mxu0 %v5790
      %v5951 = vpop.f32.mrb[0].mxu0
      %v5952 = vadd.f32 0.0, %v5951
      %v5953 = vpop.f32.mrb[0].mxu0
      %5954 = vmatprep.mubr.f32.mxu0 0.0
      %5955 = vmatmul.mubr.f32.gmra.mrb[0].mxu0 %v5793
      %v5956 = vpop.f32.mrb[0].mxu0
      %v5957 = vadd.f32 0.0, %v5956
      %v5958 = vpop.f32.mrb[0].mxu0
      %5959 = vmatprep.mubr.f32.mxu0 0.0
      %5960 = vmatmul.mubr.f32.gmra.mrb[0].mxu0 %v5796
      %v5961 = vpop.f32.mrb[0].mxu0
      %v5962 = vadd.f32 0.0, %v5961
      %v5963 = vpop.f32.mrb[0].mxu0
      %5964 = vmatprep.mubr.f32.mxu0 0.0
      %5965 = vmatmul.mubr.f32.gmra.mrb[0].mxu0 %v5799
      %v5966 = vpop.f32.mrb[0].mxu0
      %v5967 = vadd.f32 0.0, %v5966
      %v5968 = vpop.f32.mrb[0].mxu0
      %5969 = vmatprep.mubr.f32.mxu0 0.0
      %5970 = vmatmul.mubr.f32.gmra.mrb[0].mxu0 %v5802
      %v5971 = vpop.f32.mrb[0].mxu0
      %v5972 = vadd.f32 0.0, %v5971
      %v5973 = vpop.f32.mrb[0].mxu0
      %5974 = vmatprep.mubr.f32.mxu0 0.0
      %5975 = vmatmul.mubr.f32.gmra.mrb[0].mxu0 %v5805
      %v5976 = vpop.f32.mrb[0].mxu0
      %v5977 = vadd.f32 0.0, %v5976
      %v5978 = vpop.f32.mrb[0].mxu0
      %5979 = vmatprep.mubr.f32.mxu0 0.0
      %5980 = vmatmul.mubr.f32.gmra.mrb[0].mxu0 %v5808
      %v5981 = vpop.f32.mrb[0].mxu0
      %v5982 = vadd.f32 0.0, %v5981
      %v5983 = vpop.f32.mrb[0].mxu0
      %5984 = vmatprep.mubr.f32.mxu0 0.0
      %5985 = vmatmul.mubr.f32.gmra.mrb[0].mxu0 %v5811
      %v5986 = vpop.f32.mrb[0].mxu0
      %v5987 = vadd.f32 0.0, %v5986
      %v5988 = vpop.f32.mrb[0].mxu0
      %5989 = vmatprep.mubr.f32.mxu0 0.0
      %5990 = vmatmul.mubr.f32.gmra.mrb[0].mxu0 %v5814
      %v5991 = vpop.f32.mrb[0].mxu0
      %v5992 = vadd.f32 0.0, %v5991
      %v5993 = vpop.f32.mrb[0].mxu0
      %5994 = vmatprep.mubr.f32.mxu0 0.0
      %5995 = vmatmul.mubr.f32.gmra.mrb[0].mxu0 %v5817
      %v5996 = vpop.f32.mrb[0].mxu0
      %v5997 = vadd.f32 0.0, %v5996
      %v5998 = vpop.f32.mrb[0].mxu0
      %5999 = vmatprep.mubr.f32.mxu0 0.0
      %6000 = vmatmul.mubr.f32.gmra.mrb[0].mxu0 %v5820
      %v6001 = vpop.f32.mrb[0].mxu0
      %v6002 = vadd.f32 0.0, %v6001
      %v6003 = vpop.f32.mrb[0].mxu0
      %6004 = vmatprep.mubr.f32.mxu0 0.0
      %6005 = vmatmul.mubr.f32.gmra.mrb[0].mxu0 %v5823
      %v6006 = vpop.f32.mrb[0].mxu0
      %v6007 = vadd.f32 0.0, %v6006
      %v6008 = vpop.f32.mrb[0].mxu0
      %6009 = vmatprep.mubr.f32.mxu0 0.0
      %6010 = vmatmul.mubr.f32.gmra.mrb[0].mxu0 %v5826
      %v6011 = vpop.f32.mrb[0].mxu0
      %v6012 = vadd.f32 0.0, %v6011
      %v6013 = vpop.f32.mrb[0].mxu0
      %6014 = vmatprep.mubr.f32.mxu0 0.0
      %6015 = vmatmul.mubr.f32.gmra.mrb[0].mxu0 %v5829
      %v6016 = vpop.f32.mrb[0].mxu0
      %v6017 = vadd.f32 0.0, %v6016
      %v6018 = vpop.f32.mrb[0].mxu0
      %6019 = vmatprep.mubr.f32.mxu0 0.0
      %6020 = vmatmul.mubr.f32.gmra.mrb[0].mxu0 %v5832
      %v6021 = vpop.f32.mrb[0].mxu0
      %v6022 = vadd.f32 0.0, %v6021
      %v6023 = vpop.f32.mrb[0].mxu0
      %6024 = vmatprep.mubr.f32.mxu0 0.0
      %6025 = vmatmul.mubr.f32.gmra.mrb[0].mxu0 %v5835
      %v6026 = vpop.f32.mrb[0].mxu0
      %v6027 = vadd.f32 0.0, %v6026
      %v6028 = vpop.f32.mrb[0].mxu0
      %6029 = vmatprep.mubr.f32.mxu0 0.0
      %6030 = vmatmul.mubr.f32.gmra.mrb[0].mxu0 %v5838
      %v6031 = vpop.f32.mrb[0].mxu0
      %v6032 = vadd.f32 0.0, %v6031
      %v6033 = vpop.f32.mrb[0].mxu0
      %6034 = vmatprep.mubr.f32.mxu0 0.0
      %6035 = vmatmul.mubr.f32.gmra.mrb[0].mxu0 %v5841
      %v6036 = vpop.f32.mrb[0].mxu0
      %v6037 = vadd.f32 0.0, %v6036
      %v6038 = vpop.f32.mrb[0].mxu0
      %6039 = vmatprep.mubr.f32.mxu0 0.0
      %6040 = vmatmul.mubr.f32.gmra.mrb[0].mxu0 %v5844
      %v6041 = vpop.f32.mrb[0].mxu0
      %v6042 = vadd.f32 0.0, %v6041
      %v6043 = vpop.f32.mrb[0].mxu0
      %6044 = vmatprep.mubr.f32.mxu0 0.0
      %6045 = vmatmul.mubr.f32.gmra.mrb[0].mxu0 %v5847
      %v6046 = vpop.f32.mrb[0].mxu0
      %v6047 = vadd.f32 0.0, %v6046
      %v6048 = vpop.f32.mrb[0].mxu0
      %6049 = vmatprep.mubr.f32.mxu0 0.0
      %6050 = vmatmul.mubr.f32.gmra.mrb[0].mxu0 %v5850
      %v6051 = vpop.f32.mrb[0].mxu0
      %v6052 = vadd.f32 0.0, %v6051
      %v6053 = vpop.f32.mrb[0].mxu0
      %6054 = vmatprep.mubr.f32.mxu0 0.0
      %6055 = vmatmul.mubr.f32.gmra.mrb[0].mxu0 %v5853
      %v6056 = vpop.f32.mrb[0].mxu0
      %v6057 = vadd.f32 0.0, %v6056
      %v6058 = vpop.f32.mrb[0].mxu0
      %6059 = vmatprep.mubr.f32.mxu0 0.0
      %6060 = vmatmul.mubr.f32.gmra.mrb[0].mxu0 %v5856
      %v6061 = vpop.f32.mrb[0].mxu0
      %v6062 = vadd.f32 0.0, %v6061
      %v6063 = vpop.f32.mrb[0].mxu0
      %6064 = vmatprep.mubr.f32.mxu0 0.0
      %6065 = vmatmul.mubr.f32.gmra.mrb[0].mxu0 %v5859
      %v6066 = vpop.f32.mrb[0].mxu0
      %v6067 = vadd.f32 0.0, %v6066
      %v6068 = vpop.f32.mrb[0].mxu0
      %6069 = vmatprep.mubr.f32.mxu0 0.0
      %6070 = vmatmul.mubr.f32.gmra.mrb[0].mxu0 %v5862
      %v6071 = vpop.f32.mrb[0].mxu0
      %v6072 = vadd.f32 0.0, %v6071
      %v6073 = vpop.f32.mrb[0].mxu0
      %6074 = vmatprep.mubr.f32.mxu0 0.0
      %6075 = vmatmul.mubr.f32.gmra.mrb[0].mxu0 %v5865
      %v6076 = vpop.f32.mrb[0].mxu0
      %v6077 = vadd.f32 0.0, %v6076
      %v6078 = vpop.f32.mrb[0].mxu0
      %6079 = vmatprep.mubr.f32.mxu0 0.0
      %6080 = vmatmul.mubr.f32.gmra.mrb[0].mxu0 %v5868
      %v6081 = vpop.f32.mrb[0].mxu0
      %v6082 = vadd.f32 0.0, %v6081
      %v6083 = vpop.f32.mrb[0].mxu0
      %6084 = vmatprep.mubr.f32.mxu0 0.0
      %6085 = vmatmul.mubr.f32.gmra.mrb[0].mxu0 %v5871
      %v6086 = vpop.f32.mrb[0].mxu0
      %v6087 = vadd.f32 0.0, %v6086
      %v6088 = vpop.f32.mrb[0].mxu0
      %6089 = vmatprep.mubr.f32.mxu0 0.0
      %6090 = vmatmul.mubr.f32.gmra.mrb[0].mxu0 %v5874
      %v6091 = vpop.f32.mrb[0].mxu0
      %v6092 = vadd.f32 0.0, %v6091
      %v6093 = vpop.f32.mrb[0].mxu0
      %6094 = vmatprep.mubr.f32.mxu0 0.0
      %6095 = vmatmul.mubr.f32.gmra.mrb[0].mxu0 %v5877
      %v6096 = vpop.f32.mrb[0].mxu0
      %v6097 = vadd.f32 0.0, %v6096
      %v6098 = vpop.f32.mrb[0].mxu0
      %6099 = vmatprep.mubr.f32.mxu0 0.0
      %6100 = vmatmul.mubr.f32.gmra.mrb[0].mxu0 %v5880
      %v6101 = vpop.f32.mrb[0].mxu0
      %v6102 = vadd.f32 0.0, %v6101
      %v6103 = vpop.f32.mrb[0].mxu0
      %6104 = vmatprep.mubr.f32.mxu0 0.0
      %6105 = vmatmul.mubr.f32.gmra.mrb[0].mxu0 %v5883
      %v6106 = vpop.f32.mrb[0].mxu0
      %v6107 = vadd.f32 0.0, %v6106
      %v6108 = vpop.f32.mrb[0].mxu0
      %6109 = vdwg.mxu0
      %v6110 = vadd.f32 %v5723, %v5952
      %v6111 = vadd.f32 %v5724, %v5957
      %v6112 = vadd.f32 %v5725, %v5962
      %v6113 = vadd.f32 %v5726, %v5967
      %v6114 = vadd.f32 %v5727, %v5972
      %v6115 = vadd.f32 %v5728, %v5977
      %v6116 = vadd.f32 %v5729, %v5982
      %v6117 = vadd.f32 %v5730, %v5987
      %v6118 = vadd.f32 %v5731, %v5992
      %v6119 = vadd.f32 %v5732, %v5997
      %v6120 = vadd.f32 %v5733, %v6002
      %v6121 = vadd.f32 %v5734, %v6007
      %v6122 = vadd.f32 %v5735, %v6012
      %v6123 = vadd.f32 %v5736, %v6017
      %v6124 = vadd.f32 %v5737, %v6022
      %v6125 = vadd.f32 %v5738, %v6027
      %v6126 = vadd.f32 %v5739, %v6032
      %v6127 = vadd.f32 %v5740, %v6037
      %v6128 = vadd.f32 %v5741, %v6042
      %v6129 = vadd.f32 %v5742, %v6047
      %v6130 = vadd.f32 %v5743, %v6052
      %v6131 = vadd.f32 %v5744, %v6057
      %v6132 = vadd.f32 %v5745, %v6062
      %v6133 = vadd.f32 %v5746, %v6067
      %v6134 = vadd.f32 %v5747, %v6072
      %v6135 = vadd.f32 %v5748, %v6077
      %v6136 = vadd.f32 %v5749, %v6082
      %v6137 = vadd.f32 %v5750, %v6087
      %v6138 = vadd.f32 %v5751, %v6092
      %v6139 = vadd.f32 %v5752, %v6097
      %v6140 = vadd.f32 %v5753, %v6102
      %v6141 = vadd.f32 %v5754, %v6107
      %v6142 = vld [vmem:[%s2620 + $0x7] sm:$0xff]
      %v6143 = vld [vmem:[%s2620 + $0xf] sm:$0xff]
      %v6144 = vld [vmem:[%s2620 + $0x27] sm:$0xff]
      %v6145 = vld [vmem:[%s2620 + $0x2f] sm:$0xff]
      %v6146 = vld [vmem:[%s2620 + $0x47] sm:$0xff]
      %v6147 = vld [vmem:[%s2620 + $0x4f] sm:$0xff]
      %v6148 = vld [vmem:[%s2620 + $0x67] sm:$0xff]
      %v6149 = vld [vmem:[%s2620 + $0x6f] sm:$0xff]
      %v6150 = vld [vmem:[%s2620 + $0x87] sm:$0xff]
      %v6151 = vld [vmem:[%s2620 + $0x8f] sm:$0xff]
      %v6152 = vld [vmem:[%s2620 + $0xa7] sm:$0xff]
      %v6153 = vld [vmem:[%s2620 + $0xaf] sm:$0xff]
      %v6154 = vld [vmem:[%s2620 + $0xc7] sm:$0xff]
      %v6155 = vld [vmem:[%s2620 + $0xcf] sm:$0xff]
      %v6156 = vld [vmem:[%s2620 + $0xe7] sm:$0xff]
      %v6157 = vld [vmem:[%s2620 + $0xef] sm:$0xff]
      %v6158 = vld [vmem:[%s2620 + $0x107] sm:$0xff]
      %v6159 = vld [vmem:[%s2620 + $0x10f] sm:$0xff]
      %v6160 = vld [vmem:[%s2620 + $0x127] sm:$0xff]
      %v6161 = vld [vmem:[%s2620 + $0x12f] sm:$0xff]
      %v6162 = vld [vmem:[%s2620 + $0x147] sm:$0xff]
      %v6163 = vld [vmem:[%s2620 + $0x14f] sm:$0xff]
      %v6164 = vld [vmem:[%s2620 + $0x167] sm:$0xff]
      %v6165 = vld [vmem:[%s2620 + $0x16f] sm:$0xff]
      %v6166 = vld [vmem:[%s2620 + $0x187] sm:$0xff]
      %v6167 = vld [vmem:[%s2620 + $0x18f] sm:$0xff]
      %v6168 = vld [vmem:[%s2620 + $0x1a7] sm:$0xff]
      %v6169 = vld [vmem:[%s2620 + $0x1af] sm:$0xff]
      %v6170 = vld [vmem:[%s2620 + $0x1c7] sm:$0xff]
      %v6171 = vld [vmem:[%s2620 + $0x1cf] sm:$0xff]
      %v6172 = vld [vmem:[%s2620 + $0x1e7] sm:$0xff]
      %v6173 = vld [vmem:[%s2620 + $0x1ef] sm:$0xff]
      %s6174 = scalar_lea.vmem %s3, 48
      %v6175 = vld [vmem:[%s6174] sm:$0xff]
      %v6177 = vsel %vm225, %v6142, 0
      %v6180 = vsel %vm225, %v6143, 0
      %v6183 = vsel %vm225, %v6144, 0
      %v6186 = vsel %vm225, %v6145, 0
      %v6189 = vsel %vm225, %v6146, 0
      %v6192 = vsel %vm225, %v6147, 0
      %v6195 = vsel %vm225, %v6148, 0
      %v6198 = vsel %vm225, %v6149, 0
      %v6201 = vsel %vm225, %v6150, 0
      %v6204 = vsel %vm225, %v6151, 0
      %v6207 = vsel %vm225, %v6152, 0
      %v6210 = vsel %vm225, %v6153, 0
      %v6213 = vsel %vm225, %v6154, 0
      %v6216 = vsel %vm225, %v6155, 0
      %v6219 = vsel %vm225, %v6156, 0
      %v6222 = vsel %vm225, %v6157, 0
      %v6225 = vsel %vm225, %v6158, 0
      %v6228 = vsel %vm225, %v6159, 0
      %v6231 = vsel %vm225, %v6160, 0
      %v6234 = vsel %vm225, %v6161, 0
      %v6237 = vsel %vm225, %v6162, 0
      %v6240 = vsel %vm225, %v6163, 0
      %v6243 = vsel %vm225, %v6164, 0
      %v6246 = vsel %vm225, %v6165, 0
      %v6249 = vsel %vm225, %v6166, 0
      %v6252 = vsel %vm225, %v6167, 0
      %v6255 = vsel %vm225, %v6168, 0
      %v6258 = vsel %vm225, %v6169, 0
      %v6261 = vsel %vm225, %v6170, 0
      %v6264 = vsel %vm225, %v6171, 0
      %v6267 = vsel %vm225, %v6172, 0
      %v6270 = vsel %vm225, %v6173, 0
      %6272 = vmatprep.subr.mxu0 0.0
      %6273 = vmatpush1.msra.mxu0 %v6175
      %6274 = vmatprep.subr.mxu0 0.0
      %6275 = vmatpush1.msra.mxu0 0.0
      %6276 = vmatprep.subr.mxu0 0.0
      %6277 = vmatpush1.msra.mxu0 0.0
      %6278 = vmatprep.subr.mxu0 0.0
      %6279 = vmatpush1.msra.mxu0 0.0
      %6280 = vmatprep.subr.mxu0 0.0
      %6281 = vmatpush1.msra.mxu0 0.0
      %6282 = vmatprep.subr.mxu0 0.0
      %6283 = vmatpush1.msra.mxu0 0.0
      %6284 = vmatprep.subr.mxu0 0.0
      %6285 = vmatpush1.msra.mxu0 0.0
      %6286 = vmatprep.subr.mxu0 0.0
      %6287 = vmatpush1.msra.mxu0 0.0
      %6288 = vmatprep.subr.mxu0 0.0
      %6289 = vmatpush1.msra.mxu0 0.0
      %6290 = vmatprep.subr.mxu0 0.0
      %6291 = vmatpush1.msra.mxu0 0.0
      %6292 = vmatprep.subr.mxu0 0.0
      %6293 = vmatpush1.msra.mxu0 0.0
      %6294 = vmatprep.subr.mxu0 0.0
      %6295 = vmatpush1.msra.mxu0 0.0
      %6296 = vmatprep.subr.mxu0 0.0
      %6297 = vmatpush1.msra.mxu0 0.0
      %6298 = vmatprep.subr.mxu0 0.0
      %6299 = vmatpush1.msra.mxu0 0.0
      %6300 = vmatprep.subr.mxu0 0.0
      %6301 = vmatpush1.msra.mxu0 0.0
      %6302 = vmatprep.subr.mxu0 0.0
      %6303 = vmatpush1.msra.mxu0 0.0
      %6304 = vmatprep.subr.mxu0 0.0
      %6305 = vmatpush1.msra.mxu0 0.0
      %6306 = vmatprep.subr.mxu0 0.0
      %6307 = vmatpush1.msra.mxu0 0.0
      %6308 = vmatprep.subr.mxu0 0.0
      %6309 = vmatpush1.msra.mxu0 0.0
      %6310 = vmatprep.subr.mxu0 0.0
      %6311 = vmatpush1.msra.mxu0 0.0
      %6312 = vmatprep.subr.mxu0 0.0
      %6313 = vmatpush1.msra.mxu0 0.0
      %6314 = vmatprep.subr.mxu0 0.0
      %6315 = vmatpush1.msra.mxu0 0.0
      %6316 = vmatprep.subr.mxu0 0.0
      %6317 = vmatpush1.msra.mxu0 0.0
      %6318 = vmatprep.subr.mxu0 0.0
      %6319 = vmatpush1.msra.mxu0 0.0
      %6320 = vmatprep.subr.mxu0 0.0
      %6321 = vmatpush1.msra.mxu0 0.0
      %6322 = vmatprep.subr.mxu0 0.0
      %6323 = vmatpush1.msra.mxu0 0.0
      %6324 = vmatprep.subr.mxu0 0.0
      %6325 = vmatpush1.msra.mxu0 0.0
      %6326 = vmatprep.subr.mxu0 0.0
      %6327 = vmatpush1.msra.mxu0 0.0
      %6328 = vmatprep.subr.mxu0 0.0
      %6329 = vmatpush1.msra.mxu0 0.0
      %6330 = vmatprep.subr.mxu0 0.0
      %6331 = vmatpush1.msra.mxu0 0.0
      %6332 = vmatprep.subr.mxu0 0.0
      %6333 = vmatpush1.msra.mxu0 0.0
      %6334 = vmatprep.subr.mxu0 0.0
      %6335 = vmatpush1.msra.mxu0 0.0
      %6336 = vmatprep.mubr.f32.mxu0 0.0
      %6337 = vmatmul.mubr.f32.gmra.mrb[0].mxu0 %v6177
      %v6338 = vpop.f32.mrb[0].mxu0
      %v6339 = vadd.f32 0.0, %v6338
      %v6340 = vpop.f32.mrb[0].mxu0
      %6341 = vmatprep.mubr.f32.mxu0 0.0
      %6342 = vmatmul.mubr.f32.gmra.mrb[0].mxu0 %v6180
      %v6343 = vpop.f32.mrb[0].mxu0
      %v6344 = vadd.f32 0.0, %v6343
      %v6345 = vpop.f32.mrb[0].mxu0
      %6346 = vmatprep.mubr.f32.mxu0 0.0
      %6347 = vmatmul.mubr.f32.gmra.mrb[0].mxu0 %v6183
      %v6348 = vpop.f32.mrb[0].mxu0
      %v6349 = vadd.f32 0.0, %v6348
      %v6350 = vpop.f32.mrb[0].mxu0
      %6351 = vmatprep.mubr.f32.mxu0 0.0
      %6352 = vmatmul.mubr.f32.gmra.mrb[0].mxu0 %v6186
      %v6353 = vpop.f32.mrb[0].mxu0
      %v6354 = vadd.f32 0.0, %v6353
      %v6355 = vpop.f32.mrb[0].mxu0
      %6356 = vmatprep.mubr.f32.mxu0 0.0
      %6357 = vmatmul.mubr.f32.gmra.mrb[0].mxu0 %v6189
      %v6358 = vpop.f32.mrb[0].mxu0
      %v6359 = vadd.f32 0.0, %v6358
      %v6360 = vpop.f32.mrb[0].mxu0
      %6361 = vmatprep.mubr.f32.mxu0 0.0
      %6362 = vmatmul.mubr.f32.gmra.mrb[0].mxu0 %v6192
      %v6363 = vpop.f32.mrb[0].mxu0
      %v6364 = vadd.f32 0.0, %v6363
      %v6365 = vpop.f32.mrb[0].mxu0
      %6366 = vmatprep.mubr.f32.mxu0 0.0
      %6367 = vmatmul.mubr.f32.gmra.mrb[0].mxu0 %v6195
      %v6368 = vpop.f32.mrb[0].mxu0
      %v6369 = vadd.f32 0.0, %v6368
      %v6370 = vpop.f32.mrb[0].mxu0
      %6371 = vmatprep.mubr.f32.mxu0 0.0
      %6372 = vmatmul.mubr.f32.gmra.mrb[0].mxu0 %v6198
      %v6373 = vpop.f32.mrb[0].mxu0
      %v6374 = vadd.f32 0.0, %v6373
      %v6375 = vpop.f32.mrb[0].mxu0
      %6376 = vmatprep.mubr.f32.mxu0 0.0
      %6377 = vmatmul.mubr.f32.gmra.mrb[0].mxu0 %v6201
      %v6378 = vpop.f32.mrb[0].mxu0
      %v6379 = vadd.f32 0.0, %v6378
      %v6380 = vpop.f32.mrb[0].mxu0
      %6381 = vmatprep.mubr.f32.mxu0 0.0
      %6382 = vmatmul.mubr.f32.gmra.mrb[0].mxu0 %v6204
      %v6383 = vpop.f32.mrb[0].mxu0
      %v6384 = vadd.f32 0.0, %v6383
      %v6385 = vpop.f32.mrb[0].mxu0
      %6386 = vmatprep.mubr.f32.mxu0 0.0
      %6387 = vmatmul.mubr.f32.gmra.mrb[0].mxu0 %v6207
      %v6388 = vpop.f32.mrb[0].mxu0
      %v6389 = vadd.f32 0.0, %v6388
      %v6390 = vpop.f32.mrb[0].mxu0
      %6391 = vmatprep.mubr.f32.mxu0 0.0
      %6392 = vmatmul.mubr.f32.gmra.mrb[0].mxu0 %v6210
      %v6393 = vpop.f32.mrb[0].mxu0
      %v6394 = vadd.f32 0.0, %v6393
      %v6395 = vpop.f32.mrb[0].mxu0
      %6396 = vmatprep.mubr.f32.mxu0 0.0
      %6397 = vmatmul.mubr.f32.gmra.mrb[0].mxu0 %v6213
      %v6398 = vpop.f32.mrb[0].mxu0
      %v6399 = vadd.f32 0.0, %v6398
      %v6400 = vpop.f32.mrb[0].mxu0
      %6401 = vmatprep.mubr.f32.mxu0 0.0
      %6402 = vmatmul.mubr.f32.gmra.mrb[0].mxu0 %v6216
      %v6403 = vpop.f32.mrb[0].mxu0
      %v6404 = vadd.f32 0.0, %v6403
      %v6405 = vpop.f32.mrb[0].mxu0
      %6406 = vmatprep.mubr.f32.mxu0 0.0
      %6407 = vmatmul.mubr.f32.gmra.mrb[0].mxu0 %v6219
      %v6408 = vpop.f32.mrb[0].mxu0
      %v6409 = vadd.f32 0.0, %v6408
      %v6410 = vpop.f32.mrb[0].mxu0
      %6411 = vmatprep.mubr.f32.mxu0 0.0
      %6412 = vmatmul.mubr.f32.gmra.mrb[0].mxu0 %v6222
      %v6413 = vpop.f32.mrb[0].mxu0
      %v6414 = vadd.f32 0.0, %v6413
      %v6415 = vpop.f32.mrb[0].mxu0
      %6416 = vmatprep.mubr.f32.mxu0 0.0
      %6417 = vmatmul.mubr.f32.gmra.mrb[0].mxu0 %v6225
      %v6418 = vpop.f32.mrb[0].mxu0
      %v6419 = vadd.f32 0.0, %v6418
      %v6420 = vpop.f32.mrb[0].mxu0
      %6421 = vmatprep.mubr.f32.mxu0 0.0
      %6422 = vmatmul.mubr.f32.gmra.mrb[0].mxu0 %v6228
      %v6423 = vpop.f32.mrb[0].mxu0
      %v6424 = vadd.f32 0.0, %v6423
      %v6425 = vpop.f32.mrb[0].mxu0
      %6426 = vmatprep.mubr.f32.mxu0 0.0
      %6427 = vmatmul.mubr.f32.gmra.mrb[0].mxu0 %v6231
      %v6428 = vpop.f32.mrb[0].mxu0
      %v6429 = vadd.f32 0.0, %v6428
      %v6430 = vpop.f32.mrb[0].mxu0
      %6431 = vmatprep.mubr.f32.mxu0 0.0
      %6432 = vmatmul.mubr.f32.gmra.mrb[0].mxu0 %v6234
      %v6433 = vpop.f32.mrb[0].mxu0
      %v6434 = vadd.f32 0.0, %v6433
      %v6435 = vpop.f32.mrb[0].mxu0
      %6436 = vmatprep.mubr.f32.mxu0 0.0
      %6437 = vmatmul.mubr.f32.gmra.mrb[0].mxu0 %v6237
      %v6438 = vpop.f32.mrb[0].mxu0
      %v6439 = vadd.f32 0.0, %v6438
      %v6440 = vpop.f32.mrb[0].mxu0
      %6441 = vmatprep.mubr.f32.mxu0 0.0
      %6442 = vmatmul.mubr.f32.gmra.mrb[0].mxu0 %v6240
      %v6443 = vpop.f32.mrb[0].mxu0
      %v6444 = vadd.f32 0.0, %v6443
      %v6445 = vpop.f32.mrb[0].mxu0
      %6446 = vmatprep.mubr.f32.mxu0 0.0
      %6447 = vmatmul.mubr.f32.gmra.mrb[0].mxu0 %v6243
      %v6448 = vpop.f32.mrb[0].mxu0
      %v6449 = vadd.f32 0.0, %v6448
      %v6450 = vpop.f32.mrb[0].mxu0
      %6451 = vmatprep.mubr.f32.mxu0 0.0
      %6452 = vmatmul.mubr.f32.gmra.mrb[0].mxu0 %v6246
      %v6453 = vpop.f32.mrb[0].mxu0
      %v6454 = vadd.f32 0.0, %v6453
      %v6455 = vpop.f32.mrb[0].mxu0
      %6456 = vmatprep.mubr.f32.mxu0 0.0
      %6457 = vmatmul.mubr.f32.gmra.mrb[0].mxu0 %v6249
      %v6458 = vpop.f32.mrb[0].mxu0
      %v6459 = vadd.f32 0.0, %v6458
      %v6460 = vpop.f32.mrb[0].mxu0
      %6461 = vmatprep.mubr.f32.mxu0 0.0
      %6462 = vmatmul.mubr.f32.gmra.mrb[0].mxu0 %v6252
      %v6463 = vpop.f32.mrb[0].mxu0
      %v6464 = vadd.f32 0.0, %v6463
      %v6465 = vpop.f32.mrb[0].mxu0
      %6466 = vmatprep.mubr.f32.mxu0 0.0
      %6467 = vmatmul.mubr.f32.gmra.mrb[0].mxu0 %v6255
      %v6468 = vpop.f32.mrb[0].mxu0
      %v6469 = vadd.f32 0.0, %v6468
      %v6470 = vpop.f32.mrb[0].mxu0
      %6471 = vmatprep.mubr.f32.mxu0 0.0
      %6472 = vmatmul.mubr.f32.gmra.mrb[0].mxu0 %v6258
      %v6473 = vpop.f32.mrb[0].mxu0
      %v6474 = vadd.f32 0.0, %v6473
      %v6475 = vpop.f32.mrb[0].mxu0
      %6476 = vmatprep.mubr.f32.mxu0 0.0
      %6477 = vmatmul.mubr.f32.gmra.mrb[0].mxu0 %v6261
      %v6478 = vpop.f32.mrb[0].mxu0
      %v6479 = vadd.f32 0.0, %v6478
      %v6480 = vpop.f32.mrb[0].mxu0
      %6481 = vmatprep.mubr.f32.mxu0 0.0
      %6482 = vmatmul.mubr.f32.gmra.mrb[0].mxu0 %v6264
      %v6483 = vpop.f32.mrb[0].mxu0
      %v6484 = vadd.f32 0.0, %v6483
      %v6485 = vpop.f32.mrb[0].mxu0
      %6486 = vmatprep.mubr.f32.mxu0 0.0
      %6487 = vmatmul.mubr.f32.gmra.mrb[0].mxu0 %v6267
      %v6488 = vpop.f32.mrb[0].mxu0
      %v6489 = vadd.f32 0.0, %v6488
      %v6490 = vpop.f32.mrb[0].mxu0
      %6491 = vmatprep.mubr.f32.mxu0 0.0
      %6492 = vmatmul.mubr.f32.gmra.mrb[0].mxu0 %v6270
      %v6493 = vpop.f32.mrb[0].mxu0
      %v6494 = vadd.f32 0.0, %v6493
      %v6495 = vpop.f32.mrb[0].mxu0
      %6496 = vdwg.mxu0
      %v6497 = vadd.f32 %v6110, %v6339
      %v6498 = vadd.f32 %v6111, %v6344
      %v6499 = vadd.f32 %v6112, %v6349
      %v6500 = vadd.f32 %v6113, %v6354
      %v6501 = vadd.f32 %v6114, %v6359
      %v6502 = vadd.f32 %v6115, %v6364
      %v6503 = vadd.f32 %v6116, %v6369
      %v6504 = vadd.f32 %v6117, %v6374
      %v6505 = vadd.f32 %v6118, %v6379
      %v6506 = vadd.f32 %v6119, %v6384
      %v6507 = vadd.f32 %v6120, %v6389
      %v6508 = vadd.f32 %v6121, %v6394
      %v6509 = vadd.f32 %v6122, %v6399
      %v6510 = vadd.f32 %v6123, %v6404
      %v6511 = vadd.f32 %v6124, %v6409
      %v6512 = vadd.f32 %v6125, %v6414
      %v6513 = vadd.f32 %v6126, %v6419
      %v6514 = vadd.f32 %v6127, %v6424
      %v6515 = vadd.f32 %v6128, %v6429
      %v6516 = vadd.f32 %v6129, %v6434
      %v6517 = vadd.f32 %v6130, %v6439
      %v6518 = vadd.f32 %v6131, %v6444
      %v6519 = vadd.f32 %v6132, %v6449
      %v6520 = vadd.f32 %v6133, %v6454
      %v6521 = vadd.f32 %v6134, %v6459
      %v6522 = vadd.f32 %v6135, %v6464
      %v6523 = vadd.f32 %v6136, %v6469
      %v6524 = vadd.f32 %v6137, %v6474
      %v6525 = vadd.f32 %v6138, %v6479
      %v6526 = vadd.f32 %v6139, %v6484
      %v6527 = vadd.f32 %v6140, %v6489
      %v6528 = vadd.f32 %v6141, %v6494
      %v6529 = vld [vmem:[%s2620 + $0x8] sm:$0xff]
      %v6530 = vld [vmem:[%s2620 + $0x10] sm:$0xff]
      %v6531 = vld [vmem:[%s2620 + $0x28] sm:$0xff]
      %v6532 = vld [vmem:[%s2620 + $0x30] sm:$0xff]
      %v6533 = vld [vmem:[%s2620 + $0x48] sm:$0xff]
      %v6534 = vld [vmem:[%s2620 + $0x50] sm:$0xff]
      %v6535 = vld [vmem:[%s2620 + $0x68] sm:$0xff]
      %v6536 = vld [vmem:[%s2620 + $0x70] sm:$0xff]
      %v6537 = vld [vmem:[%s2620 + $0x88] sm:$0xff]
      %v6538 = vld [vmem:[%s2620 + $0x90] sm:$0xff]
      %v6539 = vld [vmem:[%s2620 + $0xa8] sm:$0xff]
      %v6540 = vld [vmem:[%s2620 + $0xb0] sm:$0xff]
      %v6541 = vld [vmem:[%s2620 + $0xc8] sm:$0xff]
      %v6542 = vld [vmem:[%s2620 + $0xd0] sm:$0xff]
      %v6543 = vld [vmem:[%s2620 + $0xe8] sm:$0xff]
      %v6544 = vld [vmem:[%s2620 + $0xf0] sm:$0xff]
      %v6545 = vld [vmem:[%s2620 + $0x108] sm:$0xff]
      %v6546 = vld [vmem:[%s2620 + $0x110] sm:$0xff]
      %v6547 = vld [vmem:[%s2620 + $0x128] sm:$0xff]
      %v6548 = vld [vmem:[%s2620 + $0x130] sm:$0xff]
      %v6549 = vld [vmem:[%s2620 + $0x148] sm:$0xff]
      %v6550 = vld [vmem:[%s2620 + $0x150] sm:$0xff]
      %v6551 = vld [vmem:[%s2620 + $0x168] sm:$0xff]
      %v6552 = vld [vmem:[%s2620 + $0x170] sm:$0xff]
      %v6553 = vld [vmem:[%s2620 + $0x188] sm:$0xff]
      %v6554 = vld [vmem:[%s2620 + $0x190] sm:$0xff]
      %v6555 = vld [vmem:[%s2620 + $0x1a8] sm:$0xff]
      %v6556 = vld [vmem:[%s2620 + $0x1b0] sm:$0xff]
      %v6557 = vld [vmem:[%s2620 + $0x1c8] sm:$0xff]
      %v6558 = vld [vmem:[%s2620 + $0x1d0] sm:$0xff]
      %v6559 = vld [vmem:[%s2620 + $0x1e8] sm:$0xff]
      %v6560 = vld [vmem:[%s2620 + $0x1f0] sm:$0xff]
      %s6561 = scalar_lea.vmem %s3, 56
      %v6562 = vld [vmem:[%s6561] sm:$0xff]
      %v6564 = vsel %vm225, %v6529, 0
      %v6567 = vsel %vm225, %v6530, 0
      %v6570 = vsel %vm225, %v6531, 0
      %v6573 = vsel %vm225, %v6532, 0
      %v6576 = vsel %vm225, %v6533, 0
      %v6579 = vsel %vm225, %v6534, 0
      %v6582 = vsel %vm225, %v6535, 0
      %v6585 = vsel %vm225, %v6536, 0
      %v6588 = vsel %vm225, %v6537, 0
      %v6591 = vsel %vm225, %v6538, 0
      %v6594 = vsel %vm225, %v6539, 0
      %v6597 = vsel %vm225, %v6540, 0
      %v6600 = vsel %vm225, %v6541, 0
      %v6603 = vsel %vm225, %v6542, 0
      %v6606 = vsel %vm225, %v6543, 0
      %v6609 = vsel %vm225, %v6544, 0
      %v6612 = vsel %vm225, %v6545, 0
      %v6615 = vsel %vm225, %v6546, 0
      %v6618 = vsel %vm225, %v6547, 0
      %v6621 = vsel %vm225, %v6548, 0
      %v6624 = vsel %vm225, %v6549, 0
      %v6627 = vsel %vm225, %v6550, 0
      %v6630 = vsel %vm225, %v6551, 0
      %v6633 = vsel %vm225, %v6552, 0
      %v6636 = vsel %vm225, %v6553, 0
      %v6639 = vsel %vm225, %v6554, 0
      %v6642 = vsel %vm225, %v6555, 0
      %v6645 = vsel %vm225, %v6556, 0
      %v6648 = vsel %vm225, %v6557, 0
      %v6651 = vsel %vm225, %v6558, 0
      %v6654 = vsel %vm225, %v6559, 0
      %v6657 = vsel %vm225, %v6560, 0
      %6659 = vmatprep.subr.mxu0 0.0
      %6660 = vmatpush1.msra.mxu0 %v6562
      %6661 = vmatprep.subr.mxu0 0.0
      %6662 = vmatpush1.msra.mxu0 0.0
      %6663 = vmatprep.subr.mxu0 0.0
      %6664 = vmatpush1.msra.mxu0 0.0
      %6665 = vmatprep.subr.mxu0 0.0
      %6666 = vmatpush1.msra.mxu0 0.0
      %6667 = vmatprep.subr.mxu0 0.0
      %6668 = vmatpush1.msra.mxu0 0.0
      %6669 = vmatprep.subr.mxu0 0.0
      %6670 = vmatpush1.msra.mxu0 0.0
      %6671 = vmatprep.subr.mxu0 0.0
      %6672 = vmatpush1.msra.mxu0 0.0
      %6673 = vmatprep.subr.mxu0 0.0
      %6674 = vmatpush1.msra.mxu0 0.0
      %6675 = vmatprep.subr.mxu0 0.0
      %6676 = vmatpush1.msra.mxu0 0.0
      %6677 = vmatprep.subr.mxu0 0.0
      %6678 = vmatpush1.msra.mxu0 0.0
      %6679 = vmatprep.subr.mxu0 0.0
      %6680 = vmatpush1.msra.mxu0 0.0
      %6681 = vmatprep.subr.mxu0 0.0
      %6682 = vmatpush1.msra.mxu0 0.0
      %6683 = vmatprep.subr.mxu0 0.0
      %6684 = vmatpush1.msra.mxu0 0.0
      %6685 = vmatprep.subr.mxu0 0.0
      %6686 = vmatpush1.msra.mxu0 0.0
      %6687 = vmatprep.subr.mxu0 0.0
      %6688 = vmatpush1.msra.mxu0 0.0
      %6689 = vmatprep.subr.mxu0 0.0
      %6690 = vmatpush1.msra.mxu0 0.0
      %6691 = vmatprep.subr.mxu0 0.0
      %6692 = vmatpush1.msra.mxu0 0.0
      %6693 = vmatprep.subr.mxu0 0.0
      %6694 = vmatpush1.msra.mxu0 0.0
      %6695 = vmatprep.subr.mxu0 0.0
      %6696 = vmatpush1.msra.mxu0 0.0
      %6697 = vmatprep.subr.mxu0 0.0
      %6698 = vmatpush1.msra.mxu0 0.0
      %6699 = vmatprep.subr.mxu0 0.0
      %6700 = vmatpush1.msra.mxu0 0.0
      %6701 = vmatprep.subr.mxu0 0.0
      %6702 = vmatpush1.msra.mxu0 0.0
      %6703 = vmatprep.subr.mxu0 0.0
      %6704 = vmatpush1.msra.mxu0 0.0
      %6705 = vmatprep.subr.mxu0 0.0
      %6706 = vmatpush1.msra.mxu0 0.0
      %6707 = vmatprep.subr.mxu0 0.0
      %6708 = vmatpush1.msra.mxu0 0.0
      %6709 = vmatprep.subr.mxu0 0.0
      %6710 = vmatpush1.msra.mxu0 0.0
      %6711 = vmatprep.subr.mxu0 0.0
      %6712 = vmatpush1.msra.mxu0 0.0
      %6713 = vmatprep.subr.mxu0 0.0
      %6714 = vmatpush1.msra.mxu0 0.0
      %6715 = vmatprep.subr.mxu0 0.0
      %6716 = vmatpush1.msra.mxu0 0.0
      %6717 = vmatprep.subr.mxu0 0.0
      %6718 = vmatpush1.msra.mxu0 0.0
      %6719 = vmatprep.subr.mxu0 0.0
      %6720 = vmatpush1.msra.mxu0 0.0
      %6721 = vmatprep.subr.mxu0 0.0
      %6722 = vmatpush1.msra.mxu0 0.0
      %6723 = vmatprep.mubr.f32.mxu0 0.0
      %6724 = vmatmul.mubr.f32.gmra.mrb[0].mxu0 %v6564
      %v6725 = vpop.f32.mrb[0].mxu0
      %v6726 = vadd.f32 0.0, %v6725
      %v6727 = vpop.f32.mrb[0].mxu0
      %6728 = vmatprep.mubr.f32.mxu0 0.0
      %6729 = vmatmul.mubr.f32.gmra.mrb[0].mxu0 %v6567
      %v6730 = vpop.f32.mrb[0].mxu0
      %v6731 = vadd.f32 0.0, %v6730
      %v6732 = vpop.f32.mrb[0].mxu0
      %6733 = vmatprep.mubr.f32.mxu0 0.0
      %6734 = vmatmul.mubr.f32.gmra.mrb[0].mxu0 %v6570
      %v6735 = vpop.f32.mrb[0].mxu0
      %v6736 = vadd.f32 0.0, %v6735
      %v6737 = vpop.f32.mrb[0].mxu0
      %6738 = vmatprep.mubr.f32.mxu0 0.0
      %6739 = vmatmul.mubr.f32.gmra.mrb[0].mxu0 %v6573
      %v6740 = vpop.f32.mrb[0].mxu0
      %v6741 = vadd.f32 0.0, %v6740
      %v6742 = vpop.f32.mrb[0].mxu0
      %6743 = vmatprep.mubr.f32.mxu0 0.0
      %6744 = vmatmul.mubr.f32.gmra.mrb[0].mxu0 %v6576
      %v6745 = vpop.f32.mrb[0].mxu0
      %v6746 = vadd.f32 0.0, %v6745
      %v6747 = vpop.f32.mrb[0].mxu0
      %6748 = vmatprep.mubr.f32.mxu0 0.0
      %6749 = vmatmul.mubr.f32.gmra.mrb[0].mxu0 %v6579
      %v6750 = vpop.f32.mrb[0].mxu0
      %v6751 = vadd.f32 0.0, %v6750
      %v6752 = vpop.f32.mrb[0].mxu0
      %6753 = vmatprep.mubr.f32.mxu0 0.0
      %6754 = vmatmul.mubr.f32.gmra.mrb[0].mxu0 %v6582
      %v6755 = vpop.f32.mrb[0].mxu0
      %v6756 = vadd.f32 0.0, %v6755
      %v6757 = vpop.f32.mrb[0].mxu0
      %6758 = vmatprep.mubr.f32.mxu0 0.0
      %6759 = vmatmul.mubr.f32.gmra.mrb[0].mxu0 %v6585
      %v6760 = vpop.f32.mrb[0].mxu0
      %v6761 = vadd.f32 0.0, %v6760
      %v6762 = vpop.f32.mrb[0].mxu0
      %6763 = vmatprep.mubr.f32.mxu0 0.0
      %6764 = vmatmul.mubr.f32.gmra.mrb[0].mxu0 %v6588
      %v6765 = vpop.f32.mrb[0].mxu0
      %v6766 = vadd.f32 0.0, %v6765
      %v6767 = vpop.f32.mrb[0].mxu0
      %6768 = vmatprep.mubr.f32.mxu0 0.0
      %6769 = vmatmul.mubr.f32.gmra.mrb[0].mxu0 %v6591
      %v6770 = vpop.f32.mrb[0].mxu0
      %v6771 = vadd.f32 0.0, %v6770
      %v6772 = vpop.f32.mrb[0].mxu0
      %6773 = vmatprep.mubr.f32.mxu0 0.0
      %6774 = vmatmul.mubr.f32.gmra.mrb[0].mxu0 %v6594
      %v6775 = vpop.f32.mrb[0].mxu0
      %v6776 = vadd.f32 0.0, %v6775
      %v6777 = vpop.f32.mrb[0].mxu0
      %6778 = vmatprep.mubr.f32.mxu0 0.0
      %6779 = vmatmul.mubr.f32.gmra.mrb[0].mxu0 %v6597
      %v6780 = vpop.f32.mrb[0].mxu0
      %v6781 = vadd.f32 0.0, %v6780
      %v6782 = vpop.f32.mrb[0].mxu0
      %6783 = vmatprep.mubr.f32.mxu0 0.0
      %6784 = vmatmul.mubr.f32.gmra.mrb[0].mxu0 %v6600
      %v6785 = vpop.f32.mrb[0].mxu0
      %v6786 = vadd.f32 0.0, %v6785
      %v6787 = vpop.f32.mrb[0].mxu0
      %6788 = vmatprep.mubr.f32.mxu0 0.0
      %6789 = vmatmul.mubr.f32.gmra.mrb[0].mxu0 %v6603
      %v6790 = vpop.f32.mrb[0].mxu0
      %v6791 = vadd.f32 0.0, %v6790
      %v6792 = vpop.f32.mrb[0].mxu0
      %6793 = vmatprep.mubr.f32.mxu0 0.0
      %6794 = vmatmul.mubr.f32.gmra.mrb[0].mxu0 %v6606
      %v6795 = vpop.f32.mrb[0].mxu0
      %v6796 = vadd.f32 0.0, %v6795
      %v6797 = vpop.f32.mrb[0].mxu0
      %6798 = vmatprep.mubr.f32.mxu0 0.0
      %6799 = vmatmul.mubr.f32.gmra.mrb[0].mxu0 %v6609
      %v6800 = vpop.f32.mrb[0].mxu0
      %v6801 = vadd.f32 0.0, %v6800
      %v6802 = vpop.f32.mrb[0].mxu0
      %6803 = vmatprep.mubr.f32.mxu0 0.0
      %6804 = vmatmul.mubr.f32.gmra.mrb[0].mxu0 %v6612
      %v6805 = vpop.f32.mrb[0].mxu0
      %v6806 = vadd.f32 0.0, %v6805
      %v6807 = vpop.f32.mrb[0].mxu0
      %6808 = vmatprep.mubr.f32.mxu0 0.0
      %6809 = vmatmul.mubr.f32.gmra.mrb[0].mxu0 %v6615
      %v6810 = vpop.f32.mrb[0].mxu0
      %v6811 = vadd.f32 0.0, %v6810
      %v6812 = vpop.f32.mrb[0].mxu0
      %6813 = vmatprep.mubr.f32.mxu0 0.0
      %6814 = vmatmul.mubr.f32.gmra.mrb[0].mxu0 %v6618
      %v6815 = vpop.f32.mrb[0].mxu0
      %v6816 = vadd.f32 0.0, %v6815
      %v6817 = vpop.f32.mrb[0].mxu0
      %6818 = vmatprep.mubr.f32.mxu0 0.0
      %6819 = vmatmul.mubr.f32.gmra.mrb[0].mxu0 %v6621
      %v6820 = vpop.f32.mrb[0].mxu0
      %v6821 = vadd.f32 0.0, %v6820
      %v6822 = vpop.f32.mrb[0].mxu0
      %6823 = vmatprep.mubr.f32.mxu0 0.0
      %6824 = vmatmul.mubr.f32.gmra.mrb[0].mxu0 %v6624
      %v6825 = vpop.f32.mrb[0].mxu0
      %v6826 = vadd.f32 0.0, %v6825
      %v6827 = vpop.f32.mrb[0].mxu0
      %6828 = vmatprep.mubr.f32.mxu0 0.0
      %6829 = vmatmul.mubr.f32.gmra.mrb[0].mxu0 %v6627
      %v6830 = vpop.f32.mrb[0].mxu0
      %v6831 = vadd.f32 0.0, %v6830
      %v6832 = vpop.f32.mrb[0].mxu0
      %6833 = vmatprep.mubr.f32.mxu0 0.0
      %6834 = vmatmul.mubr.f32.gmra.mrb[0].mxu0 %v6630
      %v6835 = vpop.f32.mrb[0].mxu0
      %v6836 = vadd.f32 0.0, %v6835
      %v6837 = vpop.f32.mrb[0].mxu0
      %6838 = vmatprep.mubr.f32.mxu0 0.0
      %6839 = vmatmul.mubr.f32.gmra.mrb[0].mxu0 %v6633
      %v6840 = vpop.f32.mrb[0].mxu0
      %v6841 = vadd.f32 0.0, %v6840
      %v6842 = vpop.f32.mrb[0].mxu0
      %6843 = vmatprep.mubr.f32.mxu0 0.0
      %6844 = vmatmul.mubr.f32.gmra.mrb[0].mxu0 %v6636
      %v6845 = vpop.f32.mrb[0].mxu0
      %v6846 = vadd.f32 0.0, %v6845
      %v6847 = vpop.f32.mrb[0].mxu0
      %6848 = vmatprep.mubr.f32.mxu0 0.0
      %6849 = vmatmul.mubr.f32.gmra.mrb[0].mxu0 %v6639
      %v6850 = vpop.f32.mrb[0].mxu0
      %v6851 = vadd.f32 0.0, %v6850
      %v6852 = vpop.f32.mrb[0].mxu0
      %6853 = vmatprep.mubr.f32.mxu0 0.0
      %6854 = vmatmul.mubr.f32.gmra.mrb[0].mxu0 %v6642
      %v6855 = vpop.f32.mrb[0].mxu0
      %v6856 = vadd.f32 0.0, %v6855
      %v6857 = vpop.f32.mrb[0].mxu0
      %6858 = vmatprep.mubr.f32.mxu0 0.0
      %6859 = vmatmul.mubr.f32.gmra.mrb[0].mxu0 %v6645
      %v6860 = vpop.f32.mrb[0].mxu0
      %v6861 = vadd.f32 0.0, %v6860
      %v6862 = vpop.f32.mrb[0].mxu0
      %6863 = vmatprep.mubr.f32.mxu0 0.0
      %6864 = vmatmul.mubr.f32.gmra.mrb[0].mxu0 %v6648
      %v6865 = vpop.f32.mrb[0].mxu0
      %v6866 = vadd.f32 0.0, %v6865
      %v6867 = vpop.f32.mrb[0].mxu0
      %6868 = vmatprep.mubr.f32.mxu0 0.0
      %6869 = vmatmul.mubr.f32.gmra.mrb[0].mxu0 %v6651
      %v6870 = vpop.f32.mrb[0].mxu0
      %v6871 = vadd.f32 0.0, %v6870
      %v6872 = vpop.f32.mrb[0].mxu0
      %6873 = vmatprep.mubr.f32.mxu0 0.0
      %6874 = vmatmul.mubr.f32.gmra.mrb[0].mxu0 %v6654
      %v6875 = vpop.f32.mrb[0].mxu0
      %v6876 = vadd.f32 0.0, %v6875
      %v6877 = vpop.f32.mrb[0].mxu0
      %6878 = vmatprep.mubr.f32.mxu0 0.0
      %6879 = vmatmul.mubr.f32.gmra.mrb[0].mxu0 %v6657
      %v6880 = vpop.f32.mrb[0].mxu0
      %v6881 = vadd.f32 0.0, %v6880
      %v6882 = vpop.f32.mrb[0].mxu0
      %6883 = vdwg.mxu0
      %v6884 = vadd.f32 %v6497, %v6726
      %v6885 = vadd.f32 %v6498, %v6731
      %v6886 = vadd.f32 %v6499, %v6736
      %v6887 = vadd.f32 %v6500, %v6741
      %v6888 = vadd.f32 %v6501, %v6746
      %v6889 = vadd.f32 %v6502, %v6751
      %v6890 = vadd.f32 %v6503, %v6756
      %v6891 = vadd.f32 %v6504, %v6761
      %v6892 = vadd.f32 %v6505, %v6766
      %v6893 = vadd.f32 %v6506, %v6771
      %v6894 = vadd.f32 %v6507, %v6776
      %v6895 = vadd.f32 %v6508, %v6781
      %v6896 = vadd.f32 %v6509, %v6786
      %v6897 = vadd.f32 %v6510, %v6791
      %v6898 = vadd.f32 %v6511, %v6796
      %v6899 = vadd.f32 %v6512, %v6801
      %v6900 = vadd.f32 %v6513, %v6806
      %v6901 = vadd.f32 %v6514, %v6811
      %v6902 = vadd.f32 %v6515, %v6816
      %v6903 = vadd.f32 %v6516, %v6821
      %v6904 = vadd.f32 %v6517, %v6826
      %v6905 = vadd.f32 %v6518, %v6831
      %v6906 = vadd.f32 %v6519, %v6836
      %v6907 = vadd.f32 %v6520, %v6841
      %v6908 = vadd.f32 %v6521, %v6846
      %v6909 = vadd.f32 %v6522, %v6851
      %v6910 = vadd.f32 %v6523, %v6856
      %v6911 = vadd.f32 %v6524, %v6861
      %v6912 = vadd.f32 %v6525, %v6866
      %v6913 = vadd.f32 %v6526, %v6871
      %v6914 = vadd.f32 %v6527, %v6876
      %v6915 = vadd.f32 %v6528, %v6881
      %v6916 = vld [vmem:[%s2620 + $0x9] sm:$0xff]
      %v6917 = vld [vmem:[%s2620 + $0x11] sm:$0xff]
      %v6918 = vld [vmem:[%s2620 + $0x29] sm:$0xff]
      %v6919 = vld [vmem:[%s2620 + $0x31] sm:$0xff]
      %v6920 = vld [vmem:[%s2620 + $0x49] sm:$0xff]
      %v6921 = vld [vmem:[%s2620 + $0x51] sm:$0xff]
      %v6922 = vld [vmem:[%s2620 + $0x69] sm:$0xff]
      %v6923 = vld [vmem:[%s2620 + $0x71] sm:$0xff]
      %v6924 = vld [vmem:[%s2620 + $0x89] sm:$0xff]
      %v6925 = vld [vmem:[%s2620 + $0x91] sm:$0xff]
      %v6926 = vld [vmem:[%s2620 + $0xa9] sm:$0xff]
      %v6927 = vld [vmem:[%s2620 + $0xb1] sm:$0xff]
      %v6928 = vld [vmem:[%s2620 + $0xc9] sm:$0xff]
      %v6929 = vld [vmem:[%s2620 + $0xd1] sm:$0xff]
      %v6930 = vld [vmem:[%s2620 + $0xe9] sm:$0xff]
      %v6931 = vld [vmem:[%s2620 + $0xf1] sm:$0xff]
      %v6932 = vld [vmem:[%s2620 + $0x109] sm:$0xff]
      %v6933 = vld [vmem:[%s2620 + $0x111] sm:$0xff]
      %v6934 = vld [vmem:[%s2620 + $0x129] sm:$0xff]
      %v6935 = vld [vmem:[%s2620 + $0x131] sm:$0xff]
      %v6936 = vld [vmem:[%s2620 + $0x149] sm:$0xff]
      %v6937 = vld [vmem:[%s2620 + $0x151] sm:$0xff]
      %v6938 = vld [vmem:[%s2620 + $0x169] sm:$0xff]
      %v6939 = vld [vmem:[%s2620 + $0x171] sm:$0xff]
      %v6940 = vld [vmem:[%s2620 + $0x189] sm:$0xff]
      %v6941 = vld [vmem:[%s2620 + $0x191] sm:$0xff]
      %v6942 = vld [vmem:[%s2620 + $0x1a9] sm:$0xff]
      %v6943 = vld [vmem:[%s2620 + $0x1b1] sm:$0xff]
      %v6944 = vld [vmem:[%s2620 + $0x1c9] sm:$0xff]
      %v6945 = vld [vmem:[%s2620 + $0x1d1] sm:$0xff]
      %v6946 = vld [vmem:[%s2620 + $0x1e9] sm:$0xff]
      %v6947 = vld [vmem:[%s2620 + $0x1f1] sm:$0xff]
      %s6948 = scalar_lea.vmem %s3, 64
      %v6949 = vld [vmem:[%s6948] sm:$0xff]
      %v6951 = vsel %vm225, %v6916, 0
      %v6954 = vsel %vm225, %v6917, 0
      %v6957 = vsel %vm225, %v6918, 0
      %v6960 = vsel %vm225, %v6919, 0
      %v6963 = vsel %vm225, %v6920, 0
      %v6966 = vsel %vm225, %v6921, 0
      %v6969 = vsel %vm225, %v6922, 0
      %v6972 = vsel %vm225, %v6923, 0
      %v6975 = vsel %vm225, %v6924, 0
      %v6978 = vsel %vm225, %v6925, 0
      %v6981 = vsel %vm225, %v6926, 0
      %v6984 = vsel %vm225, %v6927, 0
      %v6987 = vsel %vm225, %v6928, 0
      %v6990 = vsel %vm225, %v6929, 0
      %v6993 = vsel %vm225, %v6930, 0
      %v6996 = vsel %vm225, %v6931, 0
      %v6999 = vsel %vm225, %v6932, 0
      %v7002 = vsel %vm225, %v6933, 0
      %v7005 = vsel %vm225, %v6934, 0
      %v7008 = vsel %vm225, %v6935, 0
      %v7011 = vsel %vm225, %v6936, 0
      %v7014 = vsel %vm225, %v6937, 0
      %v7017 = vsel %vm225, %v6938, 0
      %v7020 = vsel %vm225, %v6939, 0
      %v7023 = vsel %vm225, %v6940, 0
      %v7026 = vsel %vm225, %v6941, 0
      %v7029 = vsel %vm225, %v6942, 0
      %v7032 = vsel %vm225, %v6943, 0
      %v7035 = vsel %vm225, %v6944, 0
      %v7038 = vsel %vm225, %v6945, 0
      %v7041 = vsel %vm225, %v6946, 0
      %v7044 = vsel %vm225, %v6947, 0
      %7046 = vmatprep.subr.mxu0 0.0
      %7047 = vmatpush1.msra.mxu0 %v6949
      %7048 = vmatprep.subr.mxu0 0.0
      %7049 = vmatpush1.msra.mxu0 0.0
      %7050 = vmatprep.subr.mxu0 0.0
      %7051 = vmatpush1.msra.mxu0 0.0
      %7052 = vmatprep.subr.mxu0 0.0
      %7053 = vmatpush1.msra.mxu0 0.0
      %7054 = vmatprep.subr.mxu0 0.0
      %7055 = vmatpush1.msra.mxu0 0.0
      %7056 = vmatprep.subr.mxu0 0.0
      %7057 = vmatpush1.msra.mxu0 0.0
      %7058 = vmatprep.subr.mxu0 0.0
      %7059 = vmatpush1.msra.mxu0 0.0
      %7060 = vmatprep.subr.mxu0 0.0
      %7061 = vmatpush1.msra.mxu0 0.0
      %7062 = vmatprep.subr.mxu0 0.0
      %7063 = vmatpush1.msra.mxu0 0.0
      %7064 = vmatprep.subr.mxu0 0.0
      %7065 = vmatpush1.msra.mxu0 0.0
      %7066 = vmatprep.subr.mxu0 0.0
      %7067 = vmatpush1.msra.mxu0 0.0
      %7068 = vmatprep.subr.mxu0 0.0
      %7069 = vmatpush1.msra.mxu0 0.0
      %7070 = vmatprep.subr.mxu0 0.0
      %7071 = vmatpush1.msra.mxu0 0.0
      %7072 = vmatprep.subr.mxu0 0.0
      %7073 = vmatpush1.msra.mxu0 0.0
      %7074 = vmatprep.subr.mxu0 0.0
      %7075 = vmatpush1.msra.mxu0 0.0
      %7076 = vmatprep.subr.mxu0 0.0
      %7077 = vmatpush1.msra.mxu0 0.0
      %7078 = vmatprep.subr.mxu0 0.0
      %7079 = vmatpush1.msra.mxu0 0.0
      %7080 = vmatprep.subr.mxu0 0.0
      %7081 = vmatpush1.msra.mxu0 0.0
      %7082 = vmatprep.subr.mxu0 0.0
      %7083 = vmatpush1.msra.mxu0 0.0
      %7084 = vmatprep.subr.mxu0 0.0
      %7085 = vmatpush1.msra.mxu0 0.0
      %7086 = vmatprep.subr.mxu0 0.0
      %7087 = vmatpush1.msra.mxu0 0.0
      %7088 = vmatprep.subr.mxu0 0.0
      %7089 = vmatpush1.msra.mxu0 0.0
      %7090 = vmatprep.subr.mxu0 0.0
      %7091 = vmatpush1.msra.mxu0 0.0
      %7092 = vmatprep.subr.mxu0 0.0
      %7093 = vmatpush1.msra.mxu0 0.0
      %7094 = vmatprep.subr.mxu0 0.0
      %7095 = vmatpush1.msra.mxu0 0.0
      %7096 = vmatprep.subr.mxu0 0.0
      %7097 = vmatpush1.msra.mxu0 0.0
      %7098 = vmatprep.subr.mxu0 0.0
      %7099 = vmatpush1.msra.mxu0 0.0
      %7100 = vmatprep.subr.mxu0 0.0
      %7101 = vmatpush1.msra.mxu0 0.0
      %7102 = vmatprep.subr.mxu0 0.0
      %7103 = vmatpush1.msra.mxu0 0.0
      %7104 = vmatprep.subr.mxu0 0.0
      %7105 = vmatpush1.msra.mxu0 0.0
      %7106 = vmatprep.subr.mxu0 0.0
      %7107 = vmatpush1.msra.mxu0 0.0
      %7108 = vmatprep.subr.mxu0 0.0
      %7109 = vmatpush1.msra.mxu0 0.0
      %7110 = vmatprep.mubr.f32.mxu0 0.0
      %7111 = vmatmul.mubr.f32.gmra.mrb[0].mxu0 %v6951
      %v7112 = vpop.f32.mrb[0].mxu0
      %v7113 = vadd.f32 0.0, %v7112
      %v7114 = vpop.f32.mrb[0].mxu0
      %7115 = vmatprep.mubr.f32.mxu0 0.0
      %7116 = vmatmul.mubr.f32.gmra.mrb[0].mxu0 %v6954
      %v7117 = vpop.f32.mrb[0].mxu0
      %v7118 = vadd.f32 0.0, %v7117
      %v7119 = vpop.f32.mrb[0].mxu0
      %7120 = vmatprep.mubr.f32.mxu0 0.0
      %7121 = vmatmul.mubr.f32.gmra.mrb[0].mxu0 %v6957
      %v7122 = vpop.f32.mrb[0].mxu0
      %v7123 = vadd.f32 0.0, %v7122
      %v7124 = vpop.f32.mrb[0].mxu0
      %7125 = vmatprep.mubr.f32.mxu0 0.0
      %7126 = vmatmul.mubr.f32.gmra.mrb[0].mxu0 %v6960
      %v7127 = vpop.f32.mrb[0].mxu0
      %v7128 = vadd.f32 0.0, %v7127
      %v7129 = vpop.f32.mrb[0].mxu0
      %7130 = vmatprep.mubr.f32.mxu0 0.0
      %7131 = vmatmul.mubr.f32.gmra.mrb[0].mxu0 %v6963
      %v7132 = vpop.f32.mrb[0].mxu0
      %v7133 = vadd.f32 0.0, %v7132
      %v7134 = vpop.f32.mrb[0].mxu0
      %7135 = vmatprep.mubr.f32.mxu0 0.0
      %7136 = vmatmul.mubr.f32.gmra.mrb[0].mxu0 %v6966
      %v7137 = vpop.f32.mrb[0].mxu0
      %v7138 = vadd.f32 0.0, %v7137
      %v7139 = vpop.f32.mrb[0].mxu0
      %7140 = vmatprep.mubr.f32.mxu0 0.0
      %7141 = vmatmul.mubr.f32.gmra.mrb[0].mxu0 %v6969
      %v7142 = vpop.f32.mrb[0].mxu0
      %v7143 = vadd.f32 0.0, %v7142
      %v7144 = vpop.f32.mrb[0].mxu0
      %7145 = vmatprep.mubr.f32.mxu0 0.0
      %7146 = vmatmul.mubr.f32.gmra.mrb[0].mxu0 %v6972
      %v7147 = vpop.f32.mrb[0].mxu0
      %v7148 = vadd.f32 0.0, %v7147
      %v7149 = vpop.f32.mrb[0].mxu0
      %7150 = vmatprep.mubr.f32.mxu0 0.0
      %7151 = vmatmul.mubr.f32.gmra.mrb[0].mxu0 %v6975
      %v7152 = vpop.f32.mrb[0].mxu0
      %v7153 = vadd.f32 0.0, %v7152
      %v7154 = vpop.f32.mrb[0].mxu0
      %7155 = vmatprep.mubr.f32.mxu0 0.0
      %7156 = vmatmul.mubr.f32.gmra.mrb[0].mxu0 %v6978
      %v7157 = vpop.f32.mrb[0].mxu0
      %v7158 = vadd.f32 0.0, %v7157
      %v7159 = vpop.f32.mrb[0].mxu0
      %7160 = vmatprep.mubr.f32.mxu0 0.0
      %7161 = vmatmul.mubr.f32.gmra.mrb[0].mxu0 %v6981
      %v7162 = vpop.f32.mrb[0].mxu0
      %v7163 = vadd.f32 0.0, %v7162
      %v7164 = vpop.f32.mrb[0].mxu0
      %7165 = vmatprep.mubr.f32.mxu0 0.0
      %7166 = vmatmul.mubr.f32.gmra.mrb[0].mxu0 %v6984
      %v7167 = vpop.f32.mrb[0].mxu0
      %v7168 = vadd.f32 0.0, %v7167
      %v7169 = vpop.f32.mrb[0].mxu0
      %7170 = vmatprep.mubr.f32.mxu0 0.0
      %7171 = vmatmul.mubr.f32.gmra.mrb[0].mxu0 %v6987
      %v7172 = vpop.f32.mrb[0].mxu0
      %v7173 = vadd.f32 0.0, %v7172
      %v7174 = vpop.f32.mrb[0].mxu0
      %7175 = vmatprep.mubr.f32.mxu0 0.0
      %7176 = vmatmul.mubr.f32.gmra.mrb[0].mxu0 %v6990
      %v7177 = vpop.f32.mrb[0].mxu0
      %v7178 = vadd.f32 0.0, %v7177
      %v7179 = vpop.f32.mrb[0].mxu0
      %7180 = vmatprep.mubr.f32.mxu0 0.0
      %7181 = vmatmul.mubr.f32.gmra.mrb[0].mxu0 %v6993
      %v7182 = vpop.f32.mrb[0].mxu0
      %v7183 = vadd.f32 0.0, %v7182
      %v7184 = vpop.f32.mrb[0].mxu0
      %7185 = vmatprep.mubr.f32.mxu0 0.0
      %7186 = vmatmul.mubr.f32.gmra.mrb[0].mxu0 %v6996
      %v7187 = vpop.f32.mrb[0].mxu0
      %v7188 = vadd.f32 0.0, %v7187
      %v7189 = vpop.f32.mrb[0].mxu0
      %7190 = vmatprep.mubr.f32.mxu0 0.0
      %7191 = vmatmul.mubr.f32.gmra.mrb[0].mxu0 %v6999
      %v7192 = vpop.f32.mrb[0].mxu0
      %v7193 = vadd.f32 0.0, %v7192
      %v7194 = vpop.f32.mrb[0].mxu0
      %7195 = vmatprep.mubr.f32.mxu0 0.0
      %7196 = vmatmul.mubr.f32.gmra.mrb[0].mxu0 %v7002
      %v7197 = vpop.f32.mrb[0].mxu0
      %v7198 = vadd.f32 0.0, %v7197
      %v7199 = vpop.f32.mrb[0].mxu0
      %7200 = vmatprep.mubr.f32.mxu0 0.0
      %7201 = vmatmul.mubr.f32.gmra.mrb[0].mxu0 %v7005
      %v7202 = vpop.f32.mrb[0].mxu0
      %v7203 = vadd.f32 0.0, %v7202
      %v7204 = vpop.f32.mrb[0].mxu0
      %7205 = vmatprep.mubr.f32.mxu0 0.0
      %7206 = vmatmul.mubr.f32.gmra.mrb[0].mxu0 %v7008
      %v7207 = vpop.f32.mrb[0].mxu0
      %v7208 = vadd.f32 0.0, %v7207
      %v7209 = vpop.f32.mrb[0].mxu0
      %7210 = vmatprep.mubr.f32.mxu0 0.0
      %7211 = vmatmul.mubr.f32.gmra.mrb[0].mxu0 %v7011
      %v7212 = vpop.f32.mrb[0].mxu0
      %v7213 = vadd.f32 0.0, %v7212
      %v7214 = vpop.f32.mrb[0].mxu0
      %7215 = vmatprep.mubr.f32.mxu0 0.0
      %7216 = vmatmul.mubr.f32.gmra.mrb[0].mxu0 %v7014
      %v7217 = vpop.f32.mrb[0].mxu0
      %v7218 = vadd.f32 0.0, %v7217
      %v7219 = vpop.f32.mrb[0].mxu0
      %7220 = vmatprep.mubr.f32.mxu0 0.0
      %7221 = vmatmul.mubr.f32.gmra.mrb[0].mxu0 %v7017
      %v7222 = vpop.f32.mrb[0].mxu0
      %v7223 = vadd.f32 0.0, %v7222
      %v7224 = vpop.f32.mrb[0].mxu0
      %7225 = vmatprep.mubr.f32.mxu0 0.0
      %7226 = vmatmul.mubr.f32.gmra.mrb[0].mxu0 %v7020
      %v7227 = vpop.f32.mrb[0].mxu0
      %v7228 = vadd.f32 0.0, %v7227
      %v7229 = vpop.f32.mrb[0].mxu0
      %7230 = vmatprep.mubr.f32.mxu0 0.0
      %7231 = vmatmul.mubr.f32.gmra.mrb[0].mxu0 %v7023
      %v7232 = vpop.f32.mrb[0].mxu0
      %v7233 = vadd.f32 0.0, %v7232
      %v7234 = vpop.f32.mrb[0].mxu0
      %7235 = vmatprep.mubr.f32.mxu0 0.0
      %7236 = vmatmul.mubr.f32.gmra.mrb[0].mxu0 %v7026
      %v7237 = vpop.f32.mrb[0].mxu0
      %v7238 = vadd.f32 0.0, %v7237
      %v7239 = vpop.f32.mrb[0].mxu0
      %7240 = vmatprep.mubr.f32.mxu0 0.0
      %7241 = vmatmul.mubr.f32.gmra.mrb[0].mxu0 %v7029
      %v7242 = vpop.f32.mrb[0].mxu0
      %v7243 = vadd.f32 0.0, %v7242
      %v7244 = vpop.f32.mrb[0].mxu0
      %7245 = vmatprep.mubr.f32.mxu0 0.0
      %7246 = vmatmul.mubr.f32.gmra.mrb[0].mxu0 %v7032
      %v7247 = vpop.f32.mrb[0].mxu0
      %v7248 = vadd.f32 0.0, %v7247
      %v7249 = vpop.f32.mrb[0].mxu0
      %7250 = vmatprep.mubr.f32.mxu0 0.0
      %7251 = vmatmul.mubr.f32.gmra.mrb[0].mxu0 %v7035
      %v7252 = vpop.f32.mrb[0].mxu0
      %v7253 = vadd.f32 0.0, %v7252
      %v7254 = vpop.f32.mrb[0].mxu0
      %7255 = vmatprep.mubr.f32.mxu0 0.0
      %7256 = vmatmul.mubr.f32.gmra.mrb[0].mxu0 %v7038
      %v7257 = vpop.f32.mrb[0].mxu0
      %v7258 = vadd.f32 0.0, %v7257
      %v7259 = vpop.f32.mrb[0].mxu0
      %7260 = vmatprep.mubr.f32.mxu0 0.0
      %7261 = vmatmul.mubr.f32.gmra.mrb[0].mxu0 %v7041
      %v7262 = vpop.f32.mrb[0].mxu0
      %v7263 = vadd.f32 0.0, %v7262
      %v7264 = vpop.f32.mrb[0].mxu0
      %7265 = vmatprep.mubr.f32.mxu0 0.0
      %7266 = vmatmul.mubr.f32.gmra.mrb[0].mxu0 %v7044
      %v7267 = vpop.f32.mrb[0].mxu0
      %v7268 = vadd.f32 0.0, %v7267
      %v7269 = vpop.f32.mrb[0].mxu0
      %7270 = vdwg.mxu0
      %v7271 = vadd.f32 %v6884, %v7113
      %v7272 = vadd.f32 %v6885, %v7118
      %v7273 = vadd.f32 %v6886, %v7123
      %v7274 = vadd.f32 %v6887, %v7128
      %v7275 = vadd.f32 %v6888, %v7133
      %v7276 = vadd.f32 %v6889, %v7138
      %v7277 = vadd.f32 %v6890, %v7143
      %v7278 = vadd.f32 %v6891, %v7148
      %v7279 = vadd.f32 %v6892, %v7153
      %v7280 = vadd.f32 %v6893, %v7158
      %v7281 = vadd.f32 %v6894, %v7163
      %v7282 = vadd.f32 %v6895, %v7168
      %v7283 = vadd.f32 %v6896, %v7173
      %v7284 = vadd.f32 %v6897, %v7178
      %v7285 = vadd.f32 %v6898, %v7183
      %v7286 = vadd.f32 %v6899, %v7188
      %v7287 = vadd.f32 %v6900, %v7193
      %v7288 = vadd.f32 %v6901, %v7198
      %v7289 = vadd.f32 %v6902, %v7203
      %v7290 = vadd.f32 %v6903, %v7208
      %v7291 = vadd.f32 %v6904, %v7213
      %v7292 = vadd.f32 %v6905, %v7218
      %v7293 = vadd.f32 %v6906, %v7223
      %v7294 = vadd.f32 %v6907, %v7228
      %v7295 = vadd.f32 %v6908, %v7233
      %v7296 = vadd.f32 %v6909, %v7238
      %v7297 = vadd.f32 %v6910, %v7243
      %v7298 = vadd.f32 %v6911, %v7248
      %v7299 = vadd.f32 %v6912, %v7253
      %v7300 = vadd.f32 %v6913, %v7258
      %v7301 = vadd.f32 %v6914, %v7263
      %v7302 = vadd.f32 %v6915, %v7268
      %v7303 = vld [vmem:[%s4] sm:$0x1]
      %v7305 = vlaneseq
      %v7306 = vshrl.u32 %v7305, 7
      %v7307 = vsub.s32 0, %v7306
      %v7308 = vrot.slane %v7303, %v7307
      %v7310 = vadd.f32 %v7271, %v7308
      %v7311 = vadd.f32 %v7272, %v7308
      %v7312 = vadd.f32 %v7273, %v7308
      %v7313 = vadd.f32 %v7274, %v7308
      %v7314 = vadd.f32 %v7275, %v7308
      %v7315 = vadd.f32 %v7276, %v7308
      %v7316 = vadd.f32 %v7277, %v7308
      %v7317 = vadd.f32 %v7278, %v7308
      %v7318 = vadd.f32 %v7279, %v7308
      %v7319 = vadd.f32 %v7280, %v7308
      %v7320 = vadd.f32 %v7281, %v7308
      %v7321 = vadd.f32 %v7282, %v7308
      %v7322 = vadd.f32 %v7283, %v7308
      %v7323 = vadd.f32 %v7284, %v7308
      %v7324 = vadd.f32 %v7285, %v7308
      %v7325 = vadd.f32 %v7286, %v7308
      %v7326 = vadd.f32 %v7287, %v7308
      %v7327 = vadd.f32 %v7288, %v7308
      %v7328 = vadd.f32 %v7289, %v7308
      %v7329 = vadd.f32 %v7290, %v7308
      %v7330 = vadd.f32 %v7291, %v7308
      %v7331 = vadd.f32 %v7292, %v7308
      %v7332 = vadd.f32 %v7293, %v7308
      %v7333 = vadd.f32 %v7294, %v7308
      %v7334 = vadd.f32 %v7295, %v7308
      %v7335 = vadd.f32 %v7296, %v7308
      %v7336 = vadd.f32 %v7297, %v7308
      %v7337 = vadd.f32 %v7298, %v7308
      %v7338 = vadd.f32 %v7299, %v7308
      %v7339 = vadd.f32 %v7300, %v7308
      %v7340 = vadd.f32 %v7301, %v7308
      %v7341 = vadd.f32 %v7302, %v7308
      %v7342 = vadd.f32 %v7310, %v298
      %v7343 = vadd.f32 %v7311, %v299
      %v7344 = vadd.f32 %v7312, %v300
      %v7345 = vadd.f32 %v7313, %v301
      %v7346 = vadd.f32 %v7314, %v302
      %v7347 = vadd.f32 %v7315, %v303
      %v7348 = vadd.f32 %v7316, %v304
      %v7349 = vadd.f32 %v7317, %v305
      %v7350 = vadd.f32 %v7318, %v306
      %v7351 = vadd.f32 %v7319, %v307
      %v7352 = vadd.f32 %v7320, %v308
      %v7353 = vadd.f32 %v7321, %v309
      %v7354 = vadd.f32 %v7322, %v310
      %v7355 = vadd.f32 %v7323, %v311
      %v7356 = vadd.f32 %v7324, %v312
      %v7357 = vadd.f32 %v7325, %v313
      %v7358 = vadd.f32 %v7326, %v314
      %v7359 = vadd.f32 %v7327, %v315
      %v7360 = vadd.f32 %v7328, %v316
      %v7361 = vadd.f32 %v7329, %v317
      %v7362 = vadd.f32 %v7330, %v318
      %v7363 = vadd.f32 %v7331, %v319
      %v7364 = vadd.f32 %v7332, %v320
      %v7365 = vadd.f32 %v7333, %v321
      %v7366 = vadd.f32 %v7334, %v322
      %v7367 = vadd.f32 %v7335, %v323
      %v7368 = vadd.f32 %v7336, %v324
      %v7369 = vadd.f32 %v7337, %v325
      %v7370 = vadd.f32 %v7338, %v326
      %v7371 = vadd.f32 %v7339, %v327
      %v7372 = vadd.f32 %v7340, %v328
      %v7373 = vadd.f32 %v7341, %v329
      %v7374 = vmax.f32 %v7342, 0.0
      %v7375 = vmax.f32 %v7343, 0.0
      %v7376 = vmax.f32 %v7344, 0.0
      %v7377 = vmax.f32 %v7345, 0.0
      %v7378 = vmax.f32 %v7346, 0.0
      %v7379 = vmax.f32 %v7347, 0.0
      %v7380 = vmax.f32 %v7348, 0.0
      %v7381 = vmax.f32 %v7349, 0.0
      %v7382 = vmax.f32 %v7350, 0.0
      %v7383 = vmax.f32 %v7351, 0.0
      %v7384 = vmax.f32 %v7352, 0.0
      %v7385 = vmax.f32 %v7353, 0.0
      %v7386 = vmax.f32 %v7354, 0.0
      %v7387 = vmax.f32 %v7355, 0.0
      %v7388 = vmax.f32 %v7356, 0.0
      %v7389 = vmax.f32 %v7357, 0.0
      %v7390 = vmax.f32 %v7358, 0.0
      %v7391 = vmax.f32 %v7359, 0.0
      %v7392 = vmax.f32 %v7360, 0.0
      %v7393 = vmax.f32 %v7361, 0.0
      %v7394 = vmax.f32 %v7362, 0.0
      %v7395 = vmax.f32 %v7363, 0.0
      %v7396 = vmax.f32 %v7364, 0.0
      %v7397 = vmax.f32 %v7365, 0.0
      %v7398 = vmax.f32 %v7366, 0.0
      %v7399 = vmax.f32 %v7367, 0.0
      %v7400 = vmax.f32 %v7368, 0.0
      %v7401 = vmax.f32 %v7369, 0.0
      %v7402 = vmax.f32 %v7370, 0.0
      %v7403 = vmax.f32 %v7371, 0.0
      %v7404 = vmax.f32 %v7372, 0.0
      %v7405 = vmax.f32 %v7373, 0.0
      %7406 = vst.msk [vmem:[%s224] sm:$0xff] %vm225, %v7374
      %7407 = vst.msk [vmem:[%s224 + $0x8] sm:$0xff] %vm225, %v7375
      %7408 = vst.msk [vmem:[%s224 + $0x10] sm:$0xff] %vm225, %v7376
      %7409 = vst.msk [vmem:[%s224 + $0x18] sm:$0xff] %vm225, %v7377
      %7410 = vst.msk [vmem:[%s224 + $0x20] sm:$0xff] %vm225, %v7378
      %7411 = vst.msk [vmem:[%s224 + $0x28] sm:$0xff] %vm225, %v7379
      %7412 = vst.msk [vmem:[%s224 + $0x30] sm:$0xff] %vm225, %v7380
      %7413 = vst.msk [vmem:[%s224 + $0x38] sm:$0xff] %vm225, %v7381
      %7414 = vst.msk [vmem:[%s224 + $0x40] sm:$0xff] %vm225, %v7382
      %7415 = vst.msk [vmem:[%s224 + $0x48] sm:$0xff] %vm225, %v7383
      %7416 = vst.msk [vmem:[%s224 + $0x50] sm:$0xff] %vm225, %v7384
      %7417 = vst.msk [vmem:[%s224 + $0x58] sm:$0xff] %vm225, %v7385
      %7418 = vst.msk [vmem:[%s224 + $0x60] sm:$0xff] %vm225, %v7386
      %7419 = vst.msk [vmem:[%s224 + $0x68] sm:$0xff] %vm225, %v7387
      %7420 = vst.msk [vmem:[%s224 + $0x70] sm:$0xff] %vm225, %v7388
      %7421 = vst.msk [vmem:[%s224 + $0x78] sm:$0xff] %vm225, %v7389
      %7422 = vst.msk [vmem:[%s224 + $0x80] sm:$0xff] %vm225, %v7390
      %7423 = vst.msk [vmem:[%s224 + $0x88] sm:$0xff] %vm225, %v7391
      %7424 = vst.msk [vmem:[%s224 + $0x90] sm:$0xff] %vm225, %v7392
      %7425 = vst.msk [vmem:[%s224 + $0x98] sm:$0xff] %vm225, %v7393
      %7426 = vst.msk [vmem:[%s224 + $0xa0] sm:$0xff] %vm225, %v7394
      %7427 = vst.msk [vmem:[%s224 + $0xa8] sm:$0xff] %vm225, %v7395
      %7428 = vst.msk [vmem:[%s224 + $0xb0] sm:$0xff] %vm225, %v7396
      %7429 = vst.msk [vmem:[%s224 + $0xb8] sm:$0xff] %vm225, %v7397
      %7430 = vst.msk [vmem:[%s224 + $0xc0] sm:$0xff] %vm225, %v7398
      %7431 = vst.msk [vmem:[%s224 + $0xc8] sm:$0xff] %vm225, %v7399
      %7432 = vst.msk [vmem:[%s224 + $0xd0] sm:$0xff] %vm225, %v7400
      %7433 = vst.msk [vmem:[%s224 + $0xd8] sm:$0xff] %vm225, %v7401
      %7434 = vst.msk [vmem:[%s224 + $0xe0] sm:$0xff] %vm225, %v7402
      %7435 = vst.msk [vmem:[%s224 + $0xe8] sm:$0xff] %vm225, %v7403
      %7436 = vst.msk [vmem:[%s224 + $0xf0] sm:$0xff] %vm225, %v7404
      %7437 = vst.msk [vmem:[%s224 + $0xf8] sm:$0xff] %vm225, %v7405
      %p7438 = scmp.lt.s32.totalorder %s16, 1
      %s7439 = scalar_select %p7438, %s16, 1
      %s7440 = smul.addr %s7439, 32
      %s7441 = smul.addr %s7440, 8
      %s7442 = scalar_lea.vmem %s5, %s7441
      // Predicated region
      $region41: #{tpu_custom_call.1} parent=39 // pred_check
        %p7443 = pneg %p144
      $region42: #{tpu_custom_call.1} parent=39 // pred_check_branch
        %7445 = sbr.rel (%p7443) target = $region44
      $region43: #{tpu_custom_call.1} parent=39 // pred_region
        _
      $region44: #{tpu_custom_call.1} parent=39 // pred_fallthru
        _
    $region40: #{tpu_custom_call.1} parent=5 // pred_fallthru
      _
    %p7446 = scmp.le.s32.totalorder 2, %s11
    // Predicated region
    $region45: #{tpu_custom_call.1} parent=5 // pred_check
      %p7447 = pneg %p7446
    $region46: #{tpu_custom_call.1} parent=5 // pred_check_branch
      %7449 = sbr.rel (%p7447) target = $region48
    $region47: #{tpu_custom_call.1} parent=5 // pred_region
      %s7450 = ssub.s32 %s11, 2
      // Predicated region
      $region49: #{tpu_custom_call.1} parent=47 // pred_check
        %p7451 = pneg %p150
      $region50: #{tpu_custom_call.1} parent=47 // pred_check_branch
        %7453 = sbr.rel (%p7451) target = $region52
      $region51: #{tpu_custom_call.1} parent=47 // pred_region
        %p7454 = scmp.lt.s32.totalorder %s17, 1
        %s7455 = scalar_select %p7454, %s17, 1
        %s7456 = smul.addr %s7455, 32
        %s7457 = smul.addr %s7456, 8
        %s7458 = scalar_lea.vmem %s5, %s7457
      $region52: #{tpu_custom_call.1} parent=47 // pred_fallthru
        _
    $region48: #{tpu_custom_call.1} parent=5 // pred_fallthru
      _
  $region6: #{tpu_custom_call.1} parent=0 // loop_footer
    %s15 = sadd.s32 1, %s11
  $region7: #{tpu_custom_call.1} parent=0 // loop_footer_branch
    %10 = sbr.rel target = $region3
  $region8: #{tpu_custom_call.1} parent=0 // loop_exit
    _

</llo_original>
